<compile_context>
chip_gen: v7x
topology: tpu7x:2x2x1
jax: 0.10.0
libtpu: 0.0.40
codegen_flags: <defaults>
</compile_context>

<pallas_src>
import math
import jax
import jax.numpy as jnp
from jax import lax
from jax.experimental import pallas as pl
from jax.experimental.pallas import tpu as pltpu

# ---- module hyper-parameters (SelfAttention(4, 768, 768, 0.1) is hard-coded) ----
D = 768            # attention input/hidden size
H = 4              # attention heads
HD = D // H        # head size (192)
HDP = 256          # head size padded to a lane-aligned 256 (MXU pads 192->256 anyway)
HCTX = H * HDP     # 1024: concatenated padded heads
K = 8              # extracter_kernel_num
KS = 3             # extracter_kernel_size
OUT_DIM = 4        # extracter_out_dim
LN_EPS = 1e-12
BN_EPS = 1e-5
NEG_INF = float(-2 ** 31)
ROWS_TARGET = 512  # target MXU M rows (BB*S) per grid step


def extracter_kernel(lens_ref,                       # (BB, 1) int32 seq lengths
                     x_ref,                          # (BB, S, D) f32
                     wqkv_ref, bqkv_ref,             # merged QKV (heads padded to 256)
                     wd_ref, bd_ref, lnw_ref, lnb_ref,
                     w1_ref, b1_ref, w5_ref, b5_ref,
                     out_ref):                       # (BB, K) f32
    x = x_ref[...]
    BB, S, _ = x.shape
    xf = x.reshape(BB * S, D)
    xb = xf.astype(jnp.bfloat16)                     # bf16 operand for MXU matmuls

    # Vectorized additive key-padding mask (0 for valid keys, -2^31 for padded).
    lens = lens_ref[...].reshape(BB, 1, 1)
    key_idx = lax.broadcasted_iota(jnp.int32, (BB, S, S), 2)
    mask_bias = jnp.where(key_idx < lens, 0.0, NEG_INF)          # (BB, S, S) f32

    # ---- multi-head self-attention (1/sqrt(HD) pre-folded into Wq/bq) -------------
    # TODO(synk): nn.Dropout (attn_dropout / out_dropout) implemented as identity (eval mode).
    # One merged full-width QKV projection: (BB*S, D) @ (D, 3*H*HDP).
    qkv = jnp.dot(xb, wqkv_ref[...], preferred_element_type=jnp.float32) + bqkv_ref[...]

    ctx_heads = []
    for h in range(H):                               # static loop; 256-lane aligned slices
        q3 = qkv[:, h * HDP:(h + 1) * HDP].reshape(BB, S, HDP)
        k3 = qkv[:, HCTX + h * HDP:HCTX + (h + 1) * HDP].reshape(BB, S, HDP)
        v3 = qkv[:, 2 * HCTX + h * HDP:2 * HCTX + (h + 1) * HDP].reshape(BB, S, HDP)
        s = jnp.einsum('bik,bjk->bij', q3, k3,
                       preferred_element_type=jnp.float32) + mask_bias
        s = s - jnp.max(s, axis=-1, keepdims=True)
        p = jnp.exp(s)
        p = p * pl.reciprocal(jnp.sum(p, axis=-1, keepdims=True), approx=True)
        ctx = jnp.einsum('bij,bjk->bik', p, v3, preferred_element_type=jnp.float32)
        ctx_heads.append(ctx.reshape(BB * S, HDP))   # padded lanes are exactly zero

    # Single dense/output projection over the concatenated padded heads.
    ctx_all = jnp.concatenate(ctx_heads, axis=-1)    # (BB*S, HCTX), lane-aligned concat
    hid = jnp.dot(ctx_all.astype(jnp.bfloat16), wd_ref[...],
                  preferred_element_type=jnp.float32)
    hid = hid + bd_ref[...] + xf                     # dense bias + residual

    # Single-pass LayerNorm statistics; rsqrt on the EUP.
    u = jnp.mean(hid, axis=-1, keepdims=True)
    m2 = jnp.mean(hid * hid, axis=-1, keepdims=True)
    var = jnp.maximum(m2 - u * u, 0.0)
    attn = lnw_ref[...] * ((hid - u) * lax.rsqrt(var + LN_EPS)) + lnb_ref[...]  # (BB*S, D)

    # ---- CONV1: Conv2d(1, K, (KS, D)) as one fused (BB*S, D) @ (D, KS*K) matmul ----
    S1 = S - KS + 1
    z1 = jnp.dot(attn.astype(jnp.bfloat16), w1_ref[...],
                 preferred_element_type=jnp.float32).reshape(BB, S, KS * K)
    y1 = jnp.zeros((BB, S1, K), jnp.float32)
    for dk in range(KS):
        y1 = y1 + z1[:, dk:dk + S1, dk * K:(dk + 1) * K]
    y1 = y1 + b1_ref[...]                            # (BB, S1, K)

    # ---- permute(0,3,2,1) + CONV5: Conv2d(1, K, (KS, K)) fused the same way --------
    S2 = S1 - KS + 1
    z5 = jnp.dot(y1.reshape(BB * S1, K), w5_ref[...],
                 preferred_element_type=jnp.float32).reshape(BB, S1, KS * K)
    y5 = jnp.zeros((BB, S2, K), jnp.float32)
    for dk in range(KS):
        y5 = y5 + z5[:, dk:dk + S2, dk * K:(dk + 1) * K]
    y5 = y5 + b5_ref[...]                            # (BB, S2, K)

    # ---- AdaptiveAvgPool2d((1,1)) -> mean over the remaining positions -------------
    out_ref[...] = jnp.mean(y5, axis=1)              # (BB, K)


def extracter_forward(x, seq_len, p):
    B, S, _ = x.shape

    # Batch-block heuristic: ~ROWS_TARGET MXU rows (BB*S) per grid step; prefer at
    # least 2 grid steps when the batch is big enough so the "parallel" axis shards
    # across both TensorCores on v7x; keep BB a multiple of 8 when tiled.
    BB = min(B, max(8, ROWS_TARGET // S))
    if BB >= B and B >= 16:
        BB = (B + 1) // 2
    if BB < B:
        BB = max(8, (BB // 8) * 8)
    Bp = -(-B // BB) * BB

    lens = seq_len.astype(jnp.int32).reshape(B, 1)
    if Bp != B:
        x = jnp.pad(x, ((0, Bp - B), (0, 0), (0, 0)))
        lens = jnp.pad(lens, ((0, Bp - B), (0, 0)), constant_values=S)

    full2 = lambda g: (0, 0)

    grid_spec = pltpu.PrefetchScalarGridSpec(
        num_scalar_prefetch=0,
        grid=(Bp // BB,),
        in_specs=[
            pl.BlockSpec((BB, 1), lambda g: (g, 0)),                        # seq lens
            pl.BlockSpec((BB, S, D), lambda g: (g, 0, 0)),                  # x
            pl.BlockSpec((D, 3 * HCTX), full2),                             # merged QKV w (bf16)
            pl.BlockSpec((1, 3 * HCTX), full2),                             # merged QKV b
            pl.BlockSpec((HCTX, D), full2), pl.BlockSpec((1, D), full2),    # dense w (bf16), b
            pl.BlockSpec((1, D), full2), pl.BlockSpec((1, D), full2),       # LN w, b
            pl.BlockSpec((D, KS * K), full2), pl.BlockSpec((1, K), full2),  # conv1
            pl.BlockSpec((K, KS * K), full2), pl.BlockSpec((1, K), full2),  # conv5
        ],
        out_specs=pl.BlockSpec((BB, K), lambda g: (g, 0)),
    )

    pooled = pl.pallas_call(
        extracter_kernel,
        out_shape=jax.ShapeDtypeStruct((Bp, K), jnp.float32),
        grid_spec=grid_spec,
        compiler_params=pltpu.CompilerParams(
            dimension_semantics=("parallel",),
            vmem_limit_bytes=48 << 20),
    )(lens, x,
      p["wqkv"], p["bqkv"], p["wd"], p["bd"], p["lnw"], p["lnb"],
      p["w1"], p["b1"], p["w5"], p["b5"])

    pooled = pooled[:B]                               # drop batch padding

    # Tiny head: fresh nn.BatchNorm1d (training-mode batch stats, gamma=1, beta=0),
    # tanh, Linear(K, OUT_DIM).  A few hundred FLOPs on (B, K) -> plain XLA; a
    # pallas_call here would be pure launch/DMA overhead.
    mu = jnp.mean(pooled, axis=0, keepdims=True)
    var = jnp.mean((pooled - mu) ** 2, axis=0, keepdims=True)
    y = jnp.tanh((pooled - mu) / jnp.sqrt(var + BN_EPS))
    return jnp.dot(y, p["wfc"]) + p["bfc"]


# ---------------- parameter construction (torch layouts -> kernel layouts) ----------------
def init_torch_params(key):
    ks = jax.random.split(key, 14)
    n = lambda k, shape, s=0.02: jax.random.normal(k, shape, jnp.float32) * s
    return {
        # nn.Linear weight layout: (out_features, in_features); bias: (out_features,)
        "q_w": n(ks[0], (D, D)), "q_b": n(ks[1], (D,), 0.01),
        "k_w": n(ks[2], (D, D)), "k_b": n(ks[3], (D,), 0.01),
        "v_w": n(ks[4], (D, D)), "v_b": n(ks[5], (D,), 0.01),
        "d_w": n(ks[6], (D, D)), "d_b": n(ks[7], (D,), 0.01),
        "ln_w": jnp.ones((D,), jnp.float32), "ln_b": jnp.zeros((D,), jnp.float32),
        # nn.Conv2d weight layout: (out_ch, in_ch, kH, kW)
        "c1_w": n(ks[8], (K, 1, KS, D), 0.05), "c1_b": n(ks[9], (K,), 0.01),
        "c5_w": n(ks[10], (K, 1, KS, K), 0.1), "c5_b": n(ks[11], (K,), 0.01),
        "fc_w": n(ks[12], (OUT_DIM, K), 0.1), "fc_b": n(ks[13], (OUT_DIM,), 0.01),
    }


def prepare_params(tp):
    """PyTorch layouts -> kernel layouts: merged QKV with each head zero-padded to
    256 lanes, single padded dense weight, fused conv taps, 1/sqrt(HD) folded into
    Wq/bq, matmul weights cast to bf16."""
    inv = 1.0 / math.sqrt(HD)

    def split_pad_heads(w, scale=1.0):
        # torch (out, in) -> (in, H*HDP); head h occupies lanes [h*HDP, h*HDP+HD),
        # remaining lanes are zero (lane-aligned slices, zero extra MXU cost).
        wh = (w.T * scale).reshape(D, H, HD)
        wh = jnp.pad(wh, ((0, 0), (0, 0), (0, HDP - HD)))
        return wh.reshape(D, H * HDP)

    def pad_bias_heads(b, scale=1.0):
        bh = (b * scale).reshape(H, HD)
        bh = jnp.pad(bh, ((0, 0), (0, HDP - HD)))
        return bh.reshape(1, H * HDP)

    wqkv = jnp.concatenate([split_pad_heads(tp["q_w"], inv),
                            split_pad_heads(tp["k_w"]),
                            split_pad_heads(tp["v_w"])], axis=1)      # (D, 3*HCTX)
    bqkv = jnp.concatenate([pad_bias_heads(tp["q_b"], inv),
                            pad_bias_heads(tp["k_b"]),
                            pad_bias_heads(tp["v_b"])], axis=1)       # (1, 3*HCTX)

    # dense: ctx (BB*S, HCTX) @ wd (HCTX, D); rows for padded lanes are zero.
    wd = jnp.pad(tp["d_w"].T.reshape(H, HD, D),
                 ((0, 0), (0, HDP - HD), (0, 0))).reshape(HCTX, D)

    # conv tap fusion: w1[d, dk*K + o] = c1_w[o, 0, dk, d]
    w1 = jnp.transpose(tp["c1_w"][:, 0], (2, 1, 0)).reshape(D, KS * K)
    w5 = jnp.transpose(tp["c5_w"][:, 0], (2, 1, 0)).reshape(K, KS * K)

    return {
        "wqkv": wqkv.astype(jnp.bfloat16), "bqkv": bqkv,
        "wd": wd.astype(jnp.bfloat16), "bd": tp["d_b"].reshape(1, D),
        "lnw": tp["ln_w"].reshape(1, D), "lnb": tp["ln_b"].reshape(1, D),
        "w1": w1.astype(jnp.bfloat16), "b1": tp["c1_b"].reshape(1, K),
        "w5": w5, "b5": tp["c5_b"].reshape(1, K),                     # tiny: keep f32
        "wfc": tp["fc_w"].T, "bfc": tp["fc_b"].reshape(1, OUT_DIM),
    }


if __name__ == "__main__":
    key = jax.random.PRNGKey(0)
    kx, kp = jax.random.split(key)
    B, S = 2, 8
    x = jax.random.normal(kx, (B, S, D), jnp.float32)
    # max(seq_len) must equal S (the torch mask broadcast requires it)
    seq_len = jnp.array([S, 5], dtype=jnp.int32)
    params = prepare_params(init_torch_params(kp))

    out = extracter_forward(x, seq_len, params)
    out = jax.block_until_ready(out)
    assert out.shape == (B, OUT_DIM) and out.dtype == jnp.float32
    print("KERNEL_OK")
</pallas_src>

<mosaic_0001>
module attributes {stable_mosaic.version = 11 : i64} {
  func.func @extracter_kernel(%arg0: i32, %arg1: memref<2x1xi32, #tpu.memory_space<vmem>>, %arg2: memref<2x8x768xf32, #tpu.memory_space<vmem>>, %arg3: memref<768x3072xbf16, #tpu.memory_space<vmem>>, %arg4: memref<1x3072xf32, #tpu.memory_space<vmem>>, %arg5: memref<1024x768xbf16, #tpu.memory_space<vmem>>, %arg6: memref<1x768xf32, #tpu.memory_space<vmem>>, %arg7: memref<1x768xf32, #tpu.memory_space<vmem>>, %arg8: memref<1x768xf32, #tpu.memory_space<vmem>>, %arg9: memref<768x24xbf16, #tpu.memory_space<vmem>>, %arg10: memref<1x8xf32, #tpu.memory_space<vmem>>, %arg11: memref<8x24xf32, #tpu.memory_space<vmem>>, %arg12: memref<1x8xf32, #tpu.memory_space<vmem>>, %arg13: memref<2x8xf32, #tpu.memory_space<vmem>>) attributes {dimension_semantics = [#tpu.dimension_semantics<parallel>], iteration_bounds = array<i64: 1>, scalar_prefetch = 0 : i64, scratch_operands = 0 : i64, tpu.core_type = #tpu.core_type<tc>, window_params = [{transform_indices = @transform_0, window_bounds = array<i64: 2, 1>}, {transform_indices = @transform_1, window_bounds = array<i64: 2, 8, 768>}, {pipeline_mode = #tpu.pipeline_mode<synchronous>, transform_indices = @transform_2, window_bounds = array<i64: 768, 3072>}, {pipeline_mode = #tpu.pipeline_mode<synchronous>, transform_indices = @transform_3, window_bounds = array<i64: 1, 3072>}, {pipeline_mode = #tpu.pipeline_mode<synchronous>, transform_indices = @transform_4, window_bounds = array<i64: 1024, 768>}, {pipeline_mode = #tpu.pipeline_mode<synchronous>, transform_indices = @transform_5, window_bounds = array<i64: 1, 768>}, {pipeline_mode = #tpu.pipeline_mode<synchronous>, transform_indices = @transform_6, window_bounds = array<i64: 1, 768>}, {pipeline_mode = #tpu.pipeline_mode<synchronous>, transform_indices = @transform_7, window_bounds = array<i64: 1, 768>}, {pipeline_mode = #tpu.pipeline_mode<synchronous>, transform_indices = @transform_8, window_bounds = array<i64: 768, 24>}, {pipeline_mode = #tpu.pipeline_mode<synchronous>, transform_indices = @transform_9, window_bounds = array<i64: 1, 8>}, {pipeline_mode = #tpu.pipeline_mode<synchronous>, transform_indices = @transform_10, window_bounds = array<i64: 8, 24>}, {pipeline_mode = #tpu.pipeline_mode<synchronous>, transform_indices = @transform_11, window_bounds = array<i64: 1, 8>}, {transform_indices = @transform_12, window_bounds = array<i64: 2, 8>}]} {
    %c0 = arith.constant 0 : index
    %c0_0 = arith.constant 0 : index
    %c0_1 = arith.constant 0 : index
    %0 = vector.load %arg2[%c0, %c0_0, %c0_1] : memref<2x8x768xf32, #tpu.memory_space<vmem>>, vector<2x8x768xf32>
    %1 = vector.shape_cast %0 : vector<2x8x768xf32> to vector<16x768xf32>
    %2 = arith.truncf %1 : vector<16x768xf32> to vector<16x768xbf16>
    %c0_2 = arith.constant 0 : index
    %c0_3 = arith.constant 0 : index
    %3 = vector.load %arg1[%c0_2, %c0_3] : memref<2x1xi32, #tpu.memory_space<vmem>>, vector<2x1xi32>
    %4 = vector.shape_cast %3 : vector<2x1xi32> to vector<2x1x1xi32>
    %5 = tpu.iota {dimensions = array<i32: 2>} : vector<2x8x8xi32>
    %6 = vector.broadcast %4 : vector<2x1x1xi32> to vector<2x8x8xi32>
    %7 = arith.cmpi slt, %5, %6 : vector<2x8x8xi32>
    %cst = arith.constant 0.000000e+00 : f32
    %cst_4 = arith.constant -2.14748365E+9 : f32
    %8 = vector.broadcast %cst : f32 to vector<2x8x8xf32>
    %9 = vector.broadcast %cst_4 : f32 to vector<2x8x8xf32>
    %10 = arith.select %7, %8, %9 : vector<2x8x8xi1>, vector<2x8x8xf32>
    %c0_5 = arith.constant 0 : index
    %c0_6 = arith.constant 0 : index
    %11 = vector.load %arg3[%c0_5, %c0_6] : memref<768x3072xbf16, #tpu.memory_space<vmem>>, vector<768x3072xbf16>
    %cst_7 = arith.constant dense<0.000000e+00> : vector<16x3072xf32>
    %12 = tpu.matmul %2, %11, %cst_7 {dimension_numbers = #tpu.dot_dimension_numbers<[1], [0], [0], [1], [0, 0, 1, 1], [], []>} : vector<16x768xbf16>, vector<768x3072xbf16>, vector<16x3072xf32> -> vector<16x3072xf32>
    %c0_8 = arith.constant 0 : index
    %c0_9 = arith.constant 0 : index
    %13 = vector.load %arg4[%c0_8, %c0_9] : memref<1x3072xf32, #tpu.memory_space<vmem>>, vector<1x3072xf32>
    %14 = vector.broadcast %13 : vector<1x3072xf32> to vector<16x3072xf32>
    %15 = arith.addf %12, %14 : vector<16x3072xf32>
    %16 = vector.extract_strided_slice %15 {offsets = [0, 0], sizes = [16, 256], strides = [1, 1]} : vector<16x3072xf32> to vector<16x256xf32>
    %17 = vector.shape_cast %16 : vector<16x256xf32> to vector<2x8x256xf32>
    %18 = vector.extract_strided_slice %15 {offsets = [0, 1024], sizes = [16, 256], strides = [1, 1]} : vector<16x3072xf32> to vector<16x256xf32>
    %19 = vector.shape_cast %18 : vector<16x256xf32> to vector<2x8x256xf32>
    %20 = vector.extract_strided_slice %15 {offsets = [0, 2048], sizes = [16, 256], strides = [1, 1]} : vector<16x3072xf32> to vector<16x256xf32>
    %21 = vector.shape_cast %20 : vector<16x256xf32> to vector<2x8x256xf32>
    "tpu.trace_start"() <{level = 10 : i32, message = "bik,bjk->bij"}> : () -> ()
    %cst_10 = arith.constant dense<0.000000e+00> : vector<2x8x8xf32>
    %22 = tpu.matmul %17, %19, %cst_10 {dimension_numbers = #tpu.dot_dimension_numbers<[2], [2], [1], [1], [0, 0, 0, 1, 1, 1], [0], [0]>} : vector<2x8x256xf32>, vector<2x8x256xf32>, vector<2x8x8xf32> -> vector<2x8x8xf32>
    "tpu.trace_stop"() : () -> ()
    %23 = arith.addf %22, %10 : vector<2x8x8xf32>
    %cst_11 = arith.constant dense<0xFF800000> : vector<2x8xf32>
    %24 = vector.multi_reduction <maximumf>, %23, %cst_11 [2] : vector<2x8x8xf32> to vector<2x8xf32>
    %25 = vector.shape_cast %24 : vector<2x8xf32> to vector<2x8x1xf32>
    %26 = vector.broadcast %25 : vector<2x8x1xf32> to vector<2x8x8xf32>
    %27 = arith.subf %23, %26 : vector<2x8x8xf32>
    %28 = math.exp %27 : vector<2x8x8xf32>
    %cst_12 = arith.constant dense<0.000000e+00> : vector<2x8xf32>
    %29 = vector.multi_reduction <add>, %28, %cst_12 [2] : vector<2x8x8xf32> to vector<2x8xf32>
    %30 = vector.shape_cast %29 : vector<2x8xf32> to vector<2x8x1xf32>
    %31 = tpu.reciprocal %30 {approx = true} : vector<2x8x1xf32> -> vector<2x8x1xf32>
    %32 = vector.broadcast %31 : vector<2x8x1xf32> to vector<2x8x8xf32>
    %33 = arith.mulf %28, %32 : vector<2x8x8xf32>
    "tpu.trace_start"() <{level = 10 : i32, message = "bij,bjk->bik"}> : () -> ()
    %cst_13 = arith.constant dense<0.000000e+00> : vector<2x8x256xf32>
    %34 = tpu.matmul %33, %21, %cst_13 {dimension_numbers = #tpu.dot_dimension_numbers<[2], [1], [1], [2], [0, 0, 0, 1, 1, 2], [0], [0]>} : vector<2x8x8xf32>, vector<2x8x256xf32>, vector<2x8x256xf32> -> vector<2x8x256xf32>
    "tpu.trace_stop"() : () -> ()
    %35 = vector.shape_cast %34 : vector<2x8x256xf32> to vector<16x256xf32>
    %36 = vector.extract_strided_slice %15 {offsets = [0, 256], sizes = [16, 256], strides = [1, 1]} : vector<16x3072xf32> to vector<16x256xf32>
    %37 = vector.shape_cast %36 : vector<16x256xf32> to vector<2x8x256xf32>
    %38 = vector.extract_strided_slice %15 {offsets = [0, 1280], sizes = [16, 256], strides = [1, 1]} : vector<16x3072xf32> to vector<16x256xf32>
    %39 = vector.shape_cast %38 : vector<16x256xf32> to vector<2x8x256xf32>
    %40 = vector.extract_strided_slice %15 {offsets = [0, 2304], sizes = [16, 256], strides = [1, 1]} : vector<16x3072xf32> to vector<16x256xf32>
    %41 = vector.shape_cast %40 : vector<16x256xf32> to vector<2x8x256xf32>
    "tpu.trace_start"() <{level = 10 : i32, message = "bik,bjk->bij"}> : () -> ()
    %cst_14 = arith.constant dense<0.000000e+00> : vector<2x8x8xf32>
    %42 = tpu.matmul %37, %39, %cst_14 {dimension_numbers = #tpu.dot_dimension_numbers<[2], [2], [1], [1], [0, 0, 0, 1, 1, 1], [0], [0]>} : vector<2x8x256xf32>, vector<2x8x256xf32>, vector<2x8x8xf32> -> vector<2x8x8xf32>
    "tpu.trace_stop"() : () -> ()
    %43 = arith.addf %42, %10 : vector<2x8x8xf32>
    %cst_15 = arith.constant dense<0xFF800000> : vector<2x8xf32>
    %44 = vector.multi_reduction <maximumf>, %43, %cst_15 [2] : vector<2x8x8xf32> to vector<2x8xf32>
    %45 = vector.shape_cast %44 : vector<2x8xf32> to vector<2x8x1xf32>
    %46 = vector.broadcast %45 : vector<2x8x1xf32> to vector<2x8x8xf32>
    %47 = arith.subf %43, %46 : vector<2x8x8xf32>
    %48 = math.exp %47 : vector<2x8x8xf32>
    %cst_16 = arith.constant dense<0.000000e+00> : vector<2x8xf32>
    %49 = vector.multi_reduction <add>, %48, %cst_16 [2] : vector<2x8x8xf32> to vector<2x8xf32>
    %50 = vector.shape_cast %49 : vector<2x8xf32> to vector<2x8x1xf32>
    %51 = tpu.reciprocal %50 {approx = true} : vector<2x8x1xf32> -> vector<2x8x1xf32>
    %52 = vector.broadcast %51 : vector<2x8x1xf32> to vector<2x8x8xf32>
    %53 = arith.mulf %48, %52 : vector<2x8x8xf32>
    "tpu.trace_start"() <{level = 10 : i32, message = "bij,bjk->bik"}> : () -> ()
    %cst_17 = arith.constant dense<0.000000e+00> : vector<2x8x256xf32>
    %54 = tpu.matmul %53, %41, %cst_17 {dimension_numbers = #tpu.dot_dimension_numbers<[2], [1], [1], [2], [0, 0, 0, 1, 1, 2], [0], [0]>} : vector<2x8x8xf32>, vector<2x8x256xf32>, vector<2x8x256xf32> -> vector<2x8x256xf32>
    "tpu.trace_stop"() : () -> ()
    %55 = vector.shape_cast %54 : vector<2x8x256xf32> to vector<16x256xf32>
    %56 = vector.extract_strided_slice %15 {offsets = [0, 512], sizes = [16, 256], strides = [1, 1]} : vector<16x3072xf32> to vector<16x256xf32>
    %57 = vector.shape_cast %56 : vector<16x256xf32> to vector<2x8x256xf32>
    %58 = vector.extract_strided_slice %15 {offsets = [0, 1536], sizes = [16, 256], strides = [1, 1]} : vector<16x3072xf32> to vector<16x256xf32>
    %59 = vector.shape_cast %58 : vector<16x256xf32> to vector<2x8x256xf32>
    %60 = vector.extract_strided_slice %15 {offsets = [0, 2560], sizes = [16, 256], strides = [1, 1]} : vector<16x3072xf32> to vector<16x256xf32>
    %61 = vector.shape_cast %60 : vector<16x256xf32> to vector<2x8x256xf32>
    "tpu.trace_start"() <{level = 10 : i32, message = "bik,bjk->bij"}> : () -> ()
    %cst_18 = arith.constant dense<0.000000e+00> : vector<2x8x8xf32>
    %62 = tpu.matmul %57, %59, %cst_18 {dimension_numbers = #tpu.dot_dimension_numbers<[2], [2], [1], [1], [0, 0, 0, 1, 1, 1], [0], [0]>} : vector<2x8x256xf32>, vector<2x8x256xf32>, vector<2x8x8xf32> -> vector<2x8x8xf32>
    "tpu.trace_stop"() : () -> ()
    %63 = arith.addf %62, %10 : vector<2x8x8xf32>
    %cst_19 = arith.constant dense<0xFF800000> : vector<2x8xf32>
    %64 = vector.multi_reduction <maximumf>, %63, %cst_19 [2] : vector<2x8x8xf32> to vector<2x8xf32>
    %65 = vector.shape_cast %64 : vector<2x8xf32> to vector<2x8x1xf32>
    %66 = vector.broadcast %65 : vector<2x8x1xf32> to vector<2x8x8xf32>
    %67 = arith.subf %63, %66 : vector<2x8x8xf32>
    %68 = math.exp %67 : vector<2x8x8xf32>
    %cst_20 = arith.constant dense<0.000000e+00> : vector<2x8xf32>
    %69 = vector.multi_reduction <add>, %68, %cst_20 [2] : vector<2x8x8xf32> to vector<2x8xf32>
    %70 = vector.shape_cast %69 : vector<2x8xf32> to vector<2x8x1xf32>
    %71 = tpu.reciprocal %70 {approx = true} : vector<2x8x1xf32> -> vector<2x8x1xf32>
    %72 = vector.broadcast %71 : vector<2x8x1xf32> to vector<2x8x8xf32>
    %73 = arith.mulf %68, %72 : vector<2x8x8xf32>
    "tpu.trace_start"() <{level = 10 : i32, message = "bij,bjk->bik"}> : () -> ()
    %cst_21 = arith.constant dense<0.000000e+00> : vector<2x8x256xf32>
    %74 = tpu.matmul %73, %61, %cst_21 {dimension_numbers = #tpu.dot_dimension_numbers<[2], [1], [1], [2], [0, 0, 0, 1, 1, 2], [0], [0]>} : vector<2x8x8xf32>, vector<2x8x256xf32>, vector<2x8x256xf32> -> vector<2x8x256xf32>
    "tpu.trace_stop"() : () -> ()
    %75 = vector.shape_cast %74 : vector<2x8x256xf32> to vector<16x256xf32>
    %76 = vector.extract_strided_slice %15 {offsets = [0, 768], sizes = [16, 256], strides = [1, 1]} : vector<16x3072xf32> to vector<16x256xf32>
    %77 = vector.shape_cast %76 : vector<16x256xf32> to vector<2x8x256xf32>
    %78 = vector.extract_strided_slice %15 {offsets = [0, 1792], sizes = [16, 256], strides = [1, 1]} : vector<16x3072xf32> to vector<16x256xf32>
    %79 = vector.shape_cast %78 : vector<16x256xf32> to vector<2x8x256xf32>
    %80 = vector.extract_strided_slice %15 {offsets = [0, 2816], sizes = [16, 256], strides = [1, 1]} : vector<16x3072xf32> to vector<16x256xf32>
    %81 = vector.shape_cast %80 : vector<16x256xf32> to vector<2x8x256xf32>
    "tpu.trace_start"() <{level = 10 : i32, message = "bik,bjk->bij"}> : () -> ()
    %cst_22 = arith.constant dense<0.000000e+00> : vector<2x8x8xf32>
    %82 = tpu.matmul %77, %79, %cst_22 {dimension_numbers = #tpu.dot_dimension_numbers<[2], [2], [1], [1], [0, 0, 0, 1, 1, 1], [0], [0]>} : vector<2x8x256xf32>, vector<2x8x256xf32>, vector<2x8x8xf32> -> vector<2x8x8xf32>
    "tpu.trace_stop"() : () -> ()
    %83 = arith.addf %82, %10 : vector<2x8x8xf32>
    %cst_23 = arith.constant dense<0xFF800000> : vector<2x8xf32>
    %84 = vector.multi_reduction <maximumf>, %83, %cst_23 [2] : vector<2x8x8xf32> to vector<2x8xf32>
    %85 = vector.shape_cast %84 : vector<2x8xf32> to vector<2x8x1xf32>
    %86 = vector.broadcast %85 : vector<2x8x1xf32> to vector<2x8x8xf32>
    %87 = arith.subf %83, %86 : vector<2x8x8xf32>
    %88 = math.exp %87 : vector<2x8x8xf32>
    %cst_24 = arith.constant dense<0.000000e+00> : vector<2x8xf32>
    %89 = vector.multi_reduction <add>, %88, %cst_24 [2] : vector<2x8x8xf32> to vector<2x8xf32>
    %90 = vector.shape_cast %89 : vector<2x8xf32> to vector<2x8x1xf32>
    %91 = tpu.reciprocal %90 {approx = true} : vector<2x8x1xf32> -> vector<2x8x1xf32>
    %92 = vector.broadcast %91 : vector<2x8x1xf32> to vector<2x8x8xf32>
    %93 = arith.mulf %88, %92 : vector<2x8x8xf32>
    "tpu.trace_start"() <{level = 10 : i32, message = "bij,bjk->bik"}> : () -> ()
    %cst_25 = arith.constant dense<0.000000e+00> : vector<2x8x256xf32>
    %94 = tpu.matmul %93, %81, %cst_25 {dimension_numbers = #tpu.dot_dimension_numbers<[2], [1], [1], [2], [0, 0, 0, 1, 1, 2], [0], [0]>} : vector<2x8x8xf32>, vector<2x8x256xf32>, vector<2x8x256xf32> -> vector<2x8x256xf32>
    "tpu.trace_stop"() : () -> ()
    %95 = vector.shape_cast %94 : vector<2x8x256xf32> to vector<16x256xf32>
    %96 = tpu.concatenate %35, %55, %75, %95 in 1 : vector<16x256xf32>, vector<16x256xf32>, vector<16x256xf32>, vector<16x256xf32> -> vector<16x1024xf32>
    %97 = arith.truncf %96 : vector<16x1024xf32> to vector<16x1024xbf16>
    %c0_26 = arith.constant 0 : index
    %c0_27 = arith.constant 0 : index
    %98 = vector.load %arg5[%c0_26, %c0_27] : memref<1024x768xbf16, #tpu.memory_space<vmem>>, vector<1024x768xbf16>
    %cst_28 = arith.constant dense<0.000000e+00> : vector<16x768xf32>
    %99 = tpu.matmul %97, %98, %cst_28 {dimension_numbers = #tpu.dot_dimension_numbers<[1], [0], [0], [1], [0, 0, 1, 1], [], []>} : vector<16x1024xbf16>, vector<1024x768xbf16>, vector<16x768xf32> -> vector<16x768xf32>
    %c0_29 = arith.constant 0 : index
    %c0_30 = arith.constant 0 : index
    %100 = vector.load %arg6[%c0_29, %c0_30] : memref<1x768xf32, #tpu.memory_space<vmem>>, vector<1x768xf32>
    %101 = vector.broadcast %100 : vector<1x768xf32> to vector<16x768xf32>
    %102 = arith.addf %99, %101 : vector<16x768xf32>
    %103 = arith.addf %102, %1 : vector<16x768xf32>
    %cst_31 = arith.constant dense<0.000000e+00> : vector<16xf32>
    %104 = vector.multi_reduction <add>, %103, %cst_31 [1] : vector<16x768xf32> to vector<16xf32>
    %105 = vector.shape_cast %104 : vector<16xf32> to vector<16x1xf32>
    %cst_32 = arith.constant 7.680000e+02 : f32
    %106 = vector.broadcast %cst_32 : f32 to vector<16x1xf32>
    %107 = arith.divf %105, %106 : vector<16x1xf32>
    %108 = arith.mulf %103, %103 : vector<16x768xf32>
    %cst_33 = arith.constant dense<0.000000e+00> : vector<16xf32>
    %109 = vector.multi_reduction <add>, %108, %cst_33 [1] : vector<16x768xf32> to vector<16xf32>
    %110 = vector.shape_cast %109 : vector<16xf32> to vector<16x1xf32>
    %cst_34 = arith.constant 7.680000e+02 : f32
    %111 = vector.broadcast %cst_34 : f32 to vector<16x1xf32>
    %112 = arith.divf %110, %111 : vector<16x1xf32>
    %113 = arith.mulf %107, %107 : vector<16x1xf32>
    %114 = arith.subf %112, %113 : vector<16x1xf32>
    %cst_35 = arith.constant 0.000000e+00 : f32
    %115 = vector.broadcast %cst_35 : f32 to vector<16x1xf32>
    %116 = arith.maximumf %114, %115 : vector<16x1xf32>
    %c0_36 = arith.constant 0 : index
    %c0_37 = arith.constant 0 : index
    %117 = vector.load %arg7[%c0_36, %c0_37] : memref<1x768xf32, #tpu.memory_space<vmem>>, vector<1x768xf32>
    %118 = vector.broadcast %107 : vector<16x1xf32> to vector<16x768xf32>
    %119 = arith.subf %103, %118 : vector<16x768xf32>
    %cst_38 = arith.constant 9.99999996E-13 : f32
    %120 = vector.broadcast %cst_38 : f32 to vector<16x1xf32>
    %121 = arith.addf %116, %120 : vector<16x1xf32>
    %122 = math.rsqrt %121 : vector<16x1xf32>
    %123 = vector.broadcast %122 : vector<16x1xf32> to vector<16x768xf32>
    %124 = arith.mulf %119, %123 : vector<16x768xf32>
    %125 = vector.broadcast %117 : vector<1x768xf32> to vector<16x768xf32>
    %126 = arith.mulf %125, %124 : vector<16x768xf32>
    %c0_39 = arith.constant 0 : index
    %c0_40 = arith.constant 0 : index
    %127 = vector.load %arg8[%c0_39, %c0_40] : memref<1x768xf32, #tpu.memory_space<vmem>>, vector<1x768xf32>
    %128 = vector.broadcast %127 : vector<1x768xf32> to vector<16x768xf32>
    %129 = arith.addf %126, %128 : vector<16x768xf32>
    %130 = arith.truncf %129 : vector<16x768xf32> to vector<16x768xbf16>
    %c0_41 = arith.constant 0 : index
    %c0_42 = arith.constant 0 : index
    %131 = vector.load %arg9[%c0_41, %c0_42] : memref<768x24xbf16, #tpu.memory_space<vmem>>, vector<768x24xbf16>
    %cst_43 = arith.constant dense<0.000000e+00> : vector<16x24xf32>
    %132 = tpu.matmul %130, %131, %cst_43 {dimension_numbers = #tpu.dot_dimension_numbers<[1], [0], [0], [1], [0, 0, 1, 1], [], []>} : vector<16x768xbf16>, vector<768x24xbf16>, vector<16x24xf32> -> vector<16x24xf32>
    %133 = vector.shape_cast %132 : vector<16x24xf32> to vector<2x8x24xf32>
    %cst_44 = arith.constant 0.000000e+00 : f32
    %134 = vector.broadcast %cst_44 : f32 to vector<2x6x8xf32>
    %135 = vector.extract_strided_slice %133 {offsets = [0, 0, 0], sizes = [2, 6, 8], strides = [1, 1, 1]} : vector<2x8x24xf32> to vector<2x6x8xf32>
    %136 = arith.addf %134, %135 : vector<2x6x8xf32>
    %137 = vector.extract_strided_slice %133 {offsets = [0, 1, 8], sizes = [2, 6, 8], strides = [1, 1, 1]} : vector<2x8x24xf32> to vector<2x6x8xf32>
    %138 = arith.addf %136, %137 : vector<2x6x8xf32>
    %139 = vector.extract_strided_slice %133 {offsets = [0, 2, 16], sizes = [2, 6, 8], strides = [1, 1, 1]} : vector<2x8x24xf32> to vector<2x6x8xf32>
    %140 = arith.addf %138, %139 : vector<2x6x8xf32>
    %c0_45 = arith.constant 0 : index
    %c0_46 = arith.constant 0 : index
    %141 = vector.load %arg10[%c0_45, %c0_46] : memref<1x8xf32, #tpu.memory_space<vmem>>, vector<1x8xf32>
    %142 = vector.shape_cast %141 : vector<1x8xf32> to vector<1x1x8xf32>
    %143 = vector.broadcast %142 : vector<1x1x8xf32> to vector<2x6x8xf32>
    %144 = arith.addf %140, %143 : vector<2x6x8xf32>
    %145 = vector.shape_cast %144 : vector<2x6x8xf32> to vector<12x8xf32>
    %c0_47 = arith.constant 0 : index
    %c0_48 = arith.constant 0 : index
    %146 = vector.load %arg11[%c0_47, %c0_48] : memref<8x24xf32, #tpu.memory_space<vmem>>, vector<8x24xf32>
    %cst_49 = arith.constant dense<0.000000e+00> : vector<12x24xf32>
    %147 = tpu.matmul %145, %146, %cst_49 {dimension_numbers = #tpu.dot_dimension_numbers<[1], [0], [0], [1], [0, 0, 1, 1], [], []>} : vector<12x8xf32>, vector<8x24xf32>, vector<12x24xf32> -> vector<12x24xf32>
    %148 = vector.shape_cast %147 : vector<12x24xf32> to vector<2x6x24xf32>
    %cst_50 = arith.constant 0.000000e+00 : f32
    %149 = vector.broadcast %cst_50 : f32 to vector<2x4x8xf32>
    %150 = vector.extract_strided_slice %148 {offsets = [0, 0, 0], sizes = [2, 4, 8], strides = [1, 1, 1]} : vector<2x6x24xf32> to vector<2x4x8xf32>
    %151 = arith.addf %149, %150 : vector<2x4x8xf32>
    %152 = vector.extract_strided_slice %148 {offsets = [0, 1, 8], sizes = [2, 4, 8], strides = [1, 1, 1]} : vector<2x6x24xf32> to vector<2x4x8xf32>
    %153 = arith.addf %151, %152 : vector<2x4x8xf32>
    %154 = vector.extract_strided_slice %148 {offsets = [0, 2, 16], sizes = [2, 4, 8], strides = [1, 1, 1]} : vector<2x6x24xf32> to vector<2x4x8xf32>
    %155 = arith.addf %153, %154 : vector<2x4x8xf32>
    %c0_51 = arith.constant 0 : index
    %c0_52 = arith.constant 0 : index
    %156 = vector.load %arg12[%c0_51, %c0_52] : memref<1x8xf32, #tpu.memory_space<vmem>>, vector<1x8xf32>
    %157 = vector.shape_cast %156 : vector<1x8xf32> to vector<1x1x8xf32>
    %158 = vector.broadcast %157 : vector<1x1x8xf32> to vector<2x4x8xf32>
    %159 = arith.addf %155, %158 : vector<2x4x8xf32>
    %cst_53 = arith.constant dense<0.000000e+00> : vector<2x8xf32>
    %160 = vector.multi_reduction <add>, %159, %cst_53 [1] : vector<2x4x8xf32> to vector<2x8xf32>
    %cst_54 = arith.constant 4.000000e+00 : f32
    %161 = vector.broadcast %cst_54 : f32 to vector<2x8xf32>
    %162 = arith.divf %160, %161 : vector<2x8xf32>
    %c0_55 = arith.constant 0 : index
    %c0_56 = arith.constant 0 : index
    %163 = vector.load %arg13[%c0_55, %c0_56] : memref<2x8xf32, #tpu.memory_space<vmem>>, vector<2x8xf32>
    tpu.vector_store %arg13[%c0_55, %c0_56], %162 {strides = array<i32>} : memref<2x8xf32, #tpu.memory_space<vmem>>, vector<2x8xf32>,
    return
  }
  func.func @transform_0(%arg0: i32) -> (i32, i32) {
    %c0_i32 = arith.constant 0 : i32
    %c0_i32_0 = arith.constant 0 : i32
    return %arg0, %c0_i32 : i32, i32
  }
  func.func @transform_1(%arg0: i32) -> (i32, i32, i32) {
    %c0_i32 = arith.constant 0 : i32
    %c0_i32_0 = arith.constant 0 : i32
    %c0_i32_1 = arith.constant 0 : i32
    return %arg0, %c0_i32, %c0_i32_0 : i32, i32, i32
  }
  func.func @transform_2(%arg0: i32) -> (i32, i32) {
    %c0_i32 = arith.constant 0 : i32
    %c0_i32_0 = arith.constant 0 : i32
    %c0_i32_1 = arith.constant 0 : i32
    return %c0_i32, %c0_i32_0 : i32, i32
  }
  func.func @transform_3(%arg0: i32) -> (i32, i32) {
    %c0_i32 = arith.constant 0 : i32
    %c0_i32_0 = arith.constant 0 : i32
    %c0_i32_1 = arith.constant 0 : i32
    return %c0_i32, %c0_i32_0 : i32, i32
  }
  func.func @transform_4(%arg0: i32) -> (i32, i32) {
    %c0_i32 = arith.constant 0 : i32
    %c0_i32_0 = arith.constant 0 : i32
    %c0_i32_1 = arith.constant 0 : i32
    return %c0_i32, %c0_i32_0 : i32, i32
  }
  func.func @transform_5(%arg0: i32) -> (i32, i32) {
    %c0_i32 = arith.constant 0 : i32
    %c0_i32_0 = arith.constant 0 : i32
    %c0_i32_1 = arith.constant 0 : i32
    return %c0_i32, %c0_i32_0 : i32, i32
  }
  func.func @transform_6(%arg0: i32) -> (i32, i32) {
    %c0_i32 = arith.constant 0 : i32
    %c0_i32_0 = arith.constant 0 : i32
    %c0_i32_1 = arith.constant 0 : i32
    return %c0_i32, %c0_i32_0 : i32, i32
  }
  func.func @transform_7(%arg0: i32) -> (i32, i32) {
    %c0_i32 = arith.constant 0 : i32
    %c0_i32_0 = arith.constant 0 : i32
    %c0_i32_1 = arith.constant 0 : i32
    return %c0_i32, %c0_i32_0 : i32, i32
  }
  func.func @transform_8(%arg0: i32) -> (i32, i32) {
    %c0_i32 = arith.constant 0 : i32
    %c0_i32_0 = arith.constant 0 : i32
    %c0_i32_1 = arith.constant 0 : i32
    return %c0_i32, %c0_i32_0 : i32, i32
  }
  func.func @transform_9(%arg0: i32) -> (i32, i32) {
    %c0_i32 = arith.constant 0 : i32
    %c0_i32_0 = arith.constant 0 : i32
    %c0_i32_1 = arith.constant 0 : i32
    return %c0_i32, %c0_i32_0 : i32, i32
  }
  func.func @transform_10(%arg0: i32) -> (i32, i32) {
    %c0_i32 = arith.constant 0 : i32
    %c0_i32_0 = arith.constant 0 : i32
    %c0_i32_1 = arith.constant 0 : i32
    return %c0_i32, %c0_i32_0 : i32, i32
  }
  func.func @transform_11(%arg0: i32) -> (i32, i32) {
    %c0_i32 = arith.constant 0 : i32
    %c0_i32_0 = arith.constant 0 : i32
    %c0_i32_1 = arith.constant 0 : i32
    return %c0_i32, %c0_i32_0 : i32, i32
  }
  func.func @transform_12(%arg0: i32) -> (i32, i32) {
    %c0_i32 = arith.constant 0 : i32
    %c0_i32_0 = arith.constant 0 : i32
    return %arg0, %c0_i32 : i32, i32
  }
}

</mosaic_0001>

<llo_original>
// kernel: tpu_custom_call.1
$region0: #{tpu_custom_call.1}
  #allocation0 [shape = 'u32[]', space=smem, size = 0x4, offset = 0x4, fixed_abs, tag = 'smem constant byte address 0x4 - core index']
  #allocation1 [shape = 'u32[144,128]{1,0:T(1,128)}', space=vmem, size = 0x12000, scoped, tag = 'internal scratch']
  %s0 = inlined_call_operand.vmem [shape: s32[2,1], index: 0, kind: input, shape index: {}]
  %s1 = inlined_call_operand.hbm [shape: f32[2,8,768], index: 1, kind: input, shape index: {}]
  %s2 = inlined_call_operand.hbm [shape: bf16[768,3072], index: 2, kind: input, shape index: {}]
  %s3 = inlined_call_operand.hbm [shape: f32[1,3072], index: 3, kind: input, shape index: {}]
  %s4 = inlined_call_operand.hbm [shape: bf16[1024,768], index: 4, kind: input, shape index: {}]
  %s5 = inlined_call_operand.hbm [shape: f32[1,768], index: 5, kind: input, shape index: {}]
  %s6 = inlined_call_operand.hbm [shape: f32[1,768], index: 6, kind: input, shape index: {}]
  %s7 = inlined_call_operand.hbm [shape: f32[1,768], index: 7, kind: input, shape index: {}]
  %s8 = inlined_call_operand.vmem [shape: bf16[768,24], index: 8, kind: input, shape index: {}]
  %s9 = inlined_call_operand.hbm [shape: f32[1,8], index: 9, kind: input, shape index: {}]
  %s10 = inlined_call_operand.hbm [shape: f32[8,24], index: 10, kind: input, shape index: {}]
  %s11 = inlined_call_operand.hbm [shape: f32[1,8], index: 11, kind: input, shape index: {}]
  %s12 = inlined_call_operand.hbm [shape: f32[2,8], index: 12, kind: output, shape index: {}]
  %s13 = sld [smem:[#allocation0]]
  $region98: #{tpu_custom_call.1} parent=0
    _
  %s15 = ssub.s32 1, %s13
  %s16 = scalar_select 0, %s15, %s13
  $region1: #{tpu_custom_call.1} parent=0
    #allocation2 [shape = 'u8[49152]{0}', space=vmem, size = 0xc000, scoped, tag = 'input window, operand 1, single buffered']
    #allocation3 [shape = 's32[1]{0}', space=sflag, size = 0x4, scoped, tag = 'scoped memory for tpu_custom_call.1']
    #allocation4 [shape = 's32[1]{0}', space=sflag, size = 0x4, scoped, tag = 'scoped memory for tpu_custom_call.1']
    #allocation5 [shape = 'u8[4718592]{0}', space=vmem, size = 0x480000, scoped, tag = 'input window, operand 2, single buffered']
    #allocation6 [shape = 's32[1]{0}', space=sflag, size = 0x4, scoped, tag = 'scoped memory for tpu_custom_call.1']
    #allocation7 [shape = 'u8[12288]{0}', space=vmem, size = 0x3000, scoped, tag = 'input window, operand 3, single buffered']
    #allocation8 [shape = 'u8[1572864]{0}', space=vmem, size = 0x180000, scoped, tag = 'input window, operand 4, single buffered']
    #allocation9 [shape = 's32[1]{0}', space=sflag, size = 0x4, scoped, tag = 'scoped memory for tpu_custom_call.1']
    #allocation10 [shape = 'u8[3072]{0}', space=vmem, size = 0xc00, scoped, tag = 'input window, operand 5, single buffered']
    #allocation11 [shape = 'u8[3072]{0}', space=vmem, size = 0xc00, scoped, tag = 'input window, operand 6, single buffered']
    #allocation12 [shape = 's32[1]{0}', space=sflag, size = 0x4, scoped, tag = 'scoped memory for tpu_custom_call.1']
    #allocation13 [shape = 'u8[3072]{0}', space=vmem, size = 0xc00, scoped, tag = 'input window, operand 7, single buffered']
    #allocation14 [shape = 'u8[512]{0}', space=vmem, size = 0x400, scoped, tag = 'input window, operand 9, single buffered']
    #allocation15 [shape = 's32[1]{0}', space=sflag, size = 0x4, scoped, tag = 'scoped memory for tpu_custom_call.1']
    #allocation16 [shape = 'u8[4096]{0}', space=vmem, size = 0x1000, scoped, tag = 'input window, operand 10, single buffered']
    #allocation17 [shape = 'u8[512]{0}', space=vmem, size = 0x400, scoped, tag = 'input window, operand 11, single buffered']
    #allocation18 [shape = 's32[1]{0}', space=sflag, size = 0x4, scoped, tag = 'scoped memory for tpu_custom_call.1']
    #allocation19 [shape = 'u8[1024]{0}', space=vmem, size = 0x400, scoped, tag = 'output window, operand 0, single buffered']
    %17 = vsyncpa [#allocation3], 0
    %18 = vsyncpa [#allocation6], 0
    %19 = vsyncpa [#allocation9], 0
    %20 = vsyncpa [#allocation12], 0
    %21 = vsyncpa [#allocation15], 0
    %22 = vsyncpa [#allocation18], 0
    %23 = vsyncpa [#allocation4], 0
    // Predicated region
    $region2: #{tpu_custom_call.1} parent=1 // pred_check
      _
    $region3: #{tpu_custom_call.1} parent=1 // pred_check_branch
      %25 = sbr.rel (0) target = $region5
    $region4: #{tpu_custom_call.1} parent=1 // pred_region
      _
    $region5: #{tpu_custom_call.1} parent=1 // pred_fallthru
      _
    // Predicated region
    $region6: #{tpu_custom_call.1} parent=1 // pred_check
      _
    $region7: #{tpu_custom_call.1} parent=1 // pred_check_branch
      %27 = sbr.rel (0) target = $region9
    $region8: #{tpu_custom_call.1} parent=1 // pred_region
      %s29 = ssub.s32 1536, 1536
      %30 = vsyncadd [#allocation3], %s29
      %s31 = sshll.u32 [#allocation2], 4
      %s32 = int_to_ptr.vmem [resolvable:$true] %s31
      %37 = dma.hbm_to_vmem [thread:$0]  %s1, 1536, %s32, [#allocation3], 768, 768, 48
    $region9: #{tpu_custom_call.1} parent=1 // pred_fallthru
      _
    // Predicated region
    $region10: #{tpu_custom_call.1} parent=1 // pred_check
      _
    $region11: #{tpu_custom_call.1} parent=1 // pred_check_branch
      %39 = sbr.rel (0) target = $region13
    $region12: #{tpu_custom_call.1} parent=1 // pred_region
      %s41 = ssub.s32 147456, 147456
      %42 = vsyncadd [#allocation6], %s41
      %s43 = sshll.u32 [#allocation5], 4
      %s44 = int_to_ptr.vmem [resolvable:$true] %s43
      %49 = dma.hbm_to_vmem [thread:$0]  %s2, 147456, %s44, [#allocation6], 1536, 1536, 96
    $region13: #{tpu_custom_call.1} parent=1 // pred_fallthru
      _
    // Predicated region
    $region14: #{tpu_custom_call.1} parent=1 // pred_check
      _
    $region15: #{tpu_custom_call.1} parent=1 // pred_check_branch
      %51 = sbr.rel (0) target = $region17
    $region16: #{tpu_custom_call.1} parent=1 // pred_region
      %s53 = ssub.s32 384, 384
      %54 = vsyncadd [#allocation6], %s53
      %s56 = sshll.u32 [#allocation7], 4
      %s57 = int_to_ptr.vmem [resolvable:$true] %s56
      %59 = dma.hbm_to_vmem [thread:$0]  %s3, 384, %s57, [#allocation6]
    $region17: #{tpu_custom_call.1} parent=1 // pred_fallthru
      _
    // Predicated region
    $region18: #{tpu_custom_call.1} parent=1 // pred_check
      _
    $region19: #{tpu_custom_call.1} parent=1 // pred_check_branch
      %61 = sbr.rel (0) target = $region21
    $region20: #{tpu_custom_call.1} parent=1 // pred_region
      %s63 = ssub.s32 49152, 49152
      %64 = vsyncadd [#allocation9], %s63
      %s65 = sshll.u32 [#allocation8], 4
      %s66 = int_to_ptr.vmem [resolvable:$true] %s65
      %71 = dma.hbm_to_vmem [thread:$0]  %s4, 49152, %s66, [#allocation9], 384, 384, 24
    $region21: #{tpu_custom_call.1} parent=1 // pred_fallthru
      _
    // Predicated region
    $region22: #{tpu_custom_call.1} parent=1 // pred_check
      _
    $region23: #{tpu_custom_call.1} parent=1 // pred_check_branch
      %73 = sbr.rel (0) target = $region25
    $region24: #{tpu_custom_call.1} parent=1 // pred_region
      %s75 = ssub.s32 96, 96
      %76 = vsyncadd [#allocation9], %s75
      %s78 = sshll.u32 [#allocation10], 4
      %s79 = int_to_ptr.vmem [resolvable:$true] %s78
      %81 = dma.hbm_to_vmem [thread:$0]  %s5, 96, %s79, [#allocation9]
    $region25: #{tpu_custom_call.1} parent=1 // pred_fallthru
      _
    // Predicated region
    $region26: #{tpu_custom_call.1} parent=1 // pred_check
      _
    $region27: #{tpu_custom_call.1} parent=1 // pred_check_branch
      %83 = sbr.rel (0) target = $region29
    $region28: #{tpu_custom_call.1} parent=1 // pred_region
      %s85 = ssub.s32 96, 96
      %86 = vsyncadd [#allocation12], %s85
      %s88 = sshll.u32 [#allocation11], 4
      %s89 = int_to_ptr.vmem [resolvable:$true] %s88
      %91 = dma.hbm_to_vmem [thread:$0]  %s6, 96, %s89, [#allocation12]
    $region29: #{tpu_custom_call.1} parent=1 // pred_fallthru
      _
    // Predicated region
    $region30: #{tpu_custom_call.1} parent=1 // pred_check
      _
    $region31: #{tpu_custom_call.1} parent=1 // pred_check_branch
      %93 = sbr.rel (0) target = $region33
    $region32: #{tpu_custom_call.1} parent=1 // pred_region
      %s95 = ssub.s32 96, 96
      %96 = vsyncadd [#allocation12], %s95
      %s98 = sshll.u32 [#allocation13], 4
      %s99 = int_to_ptr.vmem [resolvable:$true] %s98
      %101 = dma.hbm_to_vmem [thread:$0]  %s7, 96, %s99, [#allocation12]
    $region33: #{tpu_custom_call.1} parent=1 // pred_fallthru
      _
    // Predicated region
    $region34: #{tpu_custom_call.1} parent=1 // pred_check
      _
    $region35: #{tpu_custom_call.1} parent=1 // pred_check_branch
      %103 = sbr.rel (0) target = $region37
    $region36: #{tpu_custom_call.1} parent=1 // pred_region
      _
    $region37: #{tpu_custom_call.1} parent=1 // pred_fallthru
      _
    // Predicated region
    $region38: #{tpu_custom_call.1} parent=1 // pred_check
      _
    $region39: #{tpu_custom_call.1} parent=1 // pred_check_branch
      %105 = sbr.rel (0) target = $region41
    $region40: #{tpu_custom_call.1} parent=1 // pred_region
      %s107 = ssub.s32 16, 16
      %108 = vsyncadd [#allocation15], %s107
      %s110 = sshll.u32 [#allocation14], 4
      %s111 = int_to_ptr.vmem [resolvable:$true] %s110
      %113 = dma.hbm_to_vmem [thread:$0]  %s9, 16, %s111, [#allocation15]
    $region41: #{tpu_custom_call.1} parent=1 // pred_fallthru
      _
    // Predicated region
    $region42: #{tpu_custom_call.1} parent=1 // pred_check
      _
    $region43: #{tpu_custom_call.1} parent=1 // pred_check_branch
      %115 = sbr.rel (0) target = $region45
    $region44: #{tpu_custom_call.1} parent=1 // pred_region
      %s117 = ssub.s32 128, 128
      %118 = vsyncadd [#allocation15], %s117
      %s120 = sshll.u32 [#allocation16], 4
      %s121 = int_to_ptr.vmem [resolvable:$true] %s120
      %123 = dma.hbm_to_vmem [thread:$0]  %s10, 128, %s121, [#allocation15]
    $region45: #{tpu_custom_call.1} parent=1 // pred_fallthru
      _
    // Predicated region
    $region46: #{tpu_custom_call.1} parent=1 // pred_check
      _
    $region47: #{tpu_custom_call.1} parent=1 // pred_check_branch
      %125 = sbr.rel (0) target = $region49
    $region48: #{tpu_custom_call.1} parent=1 // pred_region
      %s127 = ssub.s32 16, 16
      %128 = vsyncadd [#allocation18], %s127
      %s130 = sshll.u32 [#allocation17], 4
      %s131 = int_to_ptr.vmem [resolvable:$true] %s130
      %133 = dma.hbm_to_vmem [thread:$0]  %s11, 16, %s131, [#allocation18]
    $region49: #{tpu_custom_call.1} parent=1 // pred_fallthru
      _
    // Predicated region
    $region50: #{tpu_custom_call.1} parent=1 // pred_check
      _
    $region51: #{tpu_custom_call.1} parent=1 // pred_check_branch
      %135 = sbr.rel (0) target = $region53
    $region52: #{tpu_custom_call.1} parent=1 // pred_region
      %136 = dma.done [#allocation3], 1536
    $region53: #{tpu_custom_call.1} parent=1 // pred_fallthru
      _
    // Predicated region
    $region54: #{tpu_custom_call.1} parent=1 // pred_check
      _
    $region55: #{tpu_custom_call.1} parent=1 // pred_check_branch
      %138 = sbr.rel (0) target = $region57
    $region56: #{tpu_custom_call.1} parent=1 // pred_region
      %139 = dma.done [#allocation6], 147456
    $region57: #{tpu_custom_call.1} parent=1 // pred_fallthru
      _
    // Predicated region
    $region58: #{tpu_custom_call.1} parent=1 // pred_check
      _
    $region59: #{tpu_custom_call.1} parent=1 // pred_check_branch
      %141 = sbr.rel (0) target = $region61
    $region60: #{tpu_custom_call.1} parent=1 // pred_region
      %142 = dma.done [#allocation6], 384
    $region61: #{tpu_custom_call.1} parent=1 // pred_fallthru
      _
    // Predicated region
    $region62: #{tpu_custom_call.1} parent=1 // pred_check
      _
    $region63: #{tpu_custom_call.1} parent=1 // pred_check_branch
      %144 = sbr.rel (0) target = $region65
    $region64: #{tpu_custom_call.1} parent=1 // pred_region
      %145 = dma.done [#allocation9], 49152
    $region65: #{tpu_custom_call.1} parent=1 // pred_fallthru
      _
    // Predicated region
    $region66: #{tpu_custom_call.1} parent=1 // pred_check
      _
    $region67: #{tpu_custom_call.1} parent=1 // pred_check_branch
      %147 = sbr.rel (0) target = $region69
    $region68: #{tpu_custom_call.1} parent=1 // pred_region
      %148 = dma.done [#allocation9], 96
    $region69: #{tpu_custom_call.1} parent=1 // pred_fallthru
      _
    // Predicated region
    $region70: #{tpu_custom_call.1} parent=1 // pred_check
      _
    $region71: #{tpu_custom_call.1} parent=1 // pred_check_branch
      %150 = sbr.rel (0) target = $region73
    $region72: #{tpu_custom_call.1} parent=1 // pred_region
      %151 = dma.done [#allocation12], 96
    $region73: #{tpu_custom_call.1} parent=1 // pred_fallthru
      _
    // Predicated region
    $region74: #{tpu_custom_call.1} parent=1 // pred_check
      _
    $region75: #{tpu_custom_call.1} parent=1 // pred_check_branch
      %153 = sbr.rel (0) target = $region77
    $region76: #{tpu_custom_call.1} parent=1 // pred_region
      %154 = dma.done [#allocation12], 96
    $region77: #{tpu_custom_call.1} parent=1 // pred_fallthru
      _
    // Predicated region
    $region78: #{tpu_custom_call.1} parent=1 // pred_check
      _
    $region79: #{tpu_custom_call.1} parent=1 // pred_check_branch
      %156 = sbr.rel (0) target = $region81
    $region80: #{tpu_custom_call.1} parent=1 // pred_region
      %157 = dma.done [#allocation15], 16
    $region81: #{tpu_custom_call.1} parent=1 // pred_fallthru
      _
    // Predicated region
    $region82: #{tpu_custom_call.1} parent=1 // pred_check
      _
    $region83: #{tpu_custom_call.1} parent=1 // pred_check_branch
      %159 = sbr.rel (0) target = $region85
    $region84: #{tpu_custom_call.1} parent=1 // pred_region
      %160 = dma.done [#allocation15], 128
    $region85: #{tpu_custom_call.1} parent=1 // pred_fallthru
      _
    // Predicated region
    $region86: #{tpu_custom_call.1} parent=1 // pred_check
      _
    $region87: #{tpu_custom_call.1} parent=1 // pred_check_branch
      %162 = sbr.rel (0) target = $region89
    $region88: #{tpu_custom_call.1} parent=1 // pred_region
      %163 = dma.done [#allocation18], 16
    $region89: #{tpu_custom_call.1} parent=1 // pred_fallthru
      _
    %v165 = vld [vmem:[#allocation2] sm:$0xff]
    %v166 = vld [vmem:[#allocation2 + $0x8] sm:$0xff]
    %v167 = vld [vmem:[#allocation2 + $0x10] sm:$0xff]
    %v168 = vld [vmem:[#allocation2 + $0x18] sm:$0xff]
    %v169 = vld [vmem:[#allocation2 + $0x20] sm:$0xff]
    %v170 = vld [vmem:[#allocation2 + $0x28] sm:$0xff]
    %v171 = vld [vmem:[#allocation2 + $0x30] sm:$0xff]
    %v172 = vld [vmem:[#allocation2 + $0x38] sm:$0xff]
    %v173 = vld [vmem:[#allocation2 + $0x40] sm:$0xff]
    %v174 = vld [vmem:[#allocation2 + $0x48] sm:$0xff]
    %v175 = vld [vmem:[#allocation2 + $0x50] sm:$0xff]
    %v176 = vld [vmem:[#allocation2 + $0x58] sm:$0xff]
    %v177 = vpack.c.bf16 %v171, %v165
    %v178 = vpack.c.bf16 %v172, %v166
    %v179 = vpack.c.bf16 %v173, %v167
    %v180 = vpack.c.bf16 %v174, %v168
    %v181 = vpack.c.bf16 %v175, %v169
    %v182 = vpack.c.bf16 %v176, %v170
    %v183 = vld [vmem:[%s0] sm:$0x3]
    %v185 = vunpack.c.l.s4 1966171168
    %v186 = vunpack.c.0.s8 %v185
    %v187 = vlaneseq
    %v188 = vshrl.u32 %v187, 7
    %v189 = vsub.s32 %v186, %v188
    %v190 = vrot.slane %v183, %v189
    %v191 = vcombine.high %v190, %v190
    %v193 = vunpack.c.l.s4 1966171168
    %v194 = vunpack.c.0.s8 %v193
    %v195 = vlaneseq
    %v196 = vshrl.u32 %v195, 7
    %v197 = vsub.s32 %v194, %v196
    %v198 = vrot.slane %v190, %v197
    %v200 = vunpack.c.l.s4 1966171168
    %v201 = vunpack.c.0.s8 %v200
    %v202 = vlaneseq
    %v203 = vshrl.u32 %v202, 7
    %v204 = vsub.s32 %v201, %v203
    %v205 = vrot.slane %v191, %v204
    %v206 = vlaneseq
    %v207 = vand.u32 %v206, 127
    %v208 = vlaneseq
    %v209 = vshrl.u32 %v208, 7
    %v210 = vsub.s32 0, %v209
    %v211 = vrot.slane %v198, %v210
    %v212 = vlaneseq
    %v213 = vshrl.u32 %v212, 7
    %v214 = vsub.s32 0, %v213
    %v215 = vrot.slane %v205, %v214
    %216 = vset.pattern.permute.xlu0 0
    %217 = vperm.xlu0 %216, %v211
    %v218 = vpop.permute.xlu0 %217
    %219 = vset.pattern.permute.xlu0 0
    %220 = vperm.xlu0 %219, %v215
    %v221 = vpop.permute.xlu0 %220
    %vm222 = vcmp.lt.s32.totalorder %v207, %v218
    %vm223 = vcmp.lt.s32.totalorder %v207, %v221
    %v224 = vsel %vm222, 0.0, -2.1474836e+09
    %v225 = vsel %vm223, 0.0, -2.1474836e+09
    %v226 = vld [vmem:[#allocation5] sm:$0xff]
    %v227 = vld [vmem:[#allocation5 + $0x8] sm:$0xff]
    %v228 = vld [vmem:[#allocation5 + $0x10] sm:$0xff]
    %v229 = vld [vmem:[#allocation5 + $0x18] sm:$0xff]
    %v230 = vld [vmem:[#allocation5 + $0x20] sm:$0xff]
    %v231 = vld [vmem:[#allocation5 + $0x28] sm:$0xff]
    %v232 = vld [vmem:[#allocation5 + $0x30] sm:$0xff]
    %v233 = vld [vmem:[#allocation5 + $0x38] sm:$0xff]
    %v234 = vld [vmem:[#allocation5 + $0x40] sm:$0xff]
    %v235 = vld [vmem:[#allocation5 + $0x48] sm:$0xff]
    %v236 = vld [vmem:[#allocation5 + $0x50] sm:$0xff]
    %v237 = vld [vmem:[#allocation5 + $0x58] sm:$0xff]
    %v238 = vld [vmem:[#allocation5 + $0x60] sm:$0xff]
    %v239 = vld [vmem:[#allocation5 + $0x68] sm:$0xff]
    %v240 = vld [vmem:[#allocation5 + $0x70] sm:$0xff]
    %v241 = vld [vmem:[#allocation5 + $0x78] sm:$0xff]
    %v242 = vld [vmem:[#allocation5 + $0x80] sm:$0xff]
    %v243 = vld [vmem:[#allocation5 + $0x88] sm:$0xff]
    %v244 = vld [vmem:[#allocation5 + $0x90] sm:$0xff]
    %v245 = vld [vmem:[#allocation5 + $0x98] sm:$0xff]
    %v246 = vld [vmem:[#allocation5 + $0xa0] sm:$0xff]
    %v247 = vld [vmem:[#allocation5 + $0xa8] sm:$0xff]
    %v248 = vld [vmem:[#allocation5 + $0xb0] sm:$0xff]
    %v249 = vld [vmem:[#allocation5 + $0xb8] sm:$0xff]
    %v250 = vld [vmem:[#allocation5 + $0xc0] sm:$0xff]
    %v251 = vld [vmem:[#allocation5 + $0xc8] sm:$0xff]
    %v252 = vld [vmem:[#allocation5 + $0xd0] sm:$0xff]
    %v253 = vld [vmem:[#allocation5 + $0xd8] sm:$0xff]
    %v254 = vld [vmem:[#allocation5 + $0xe0] sm:$0xff]
    %v255 = vld [vmem:[#allocation5 + $0xe8] sm:$0xff]
    %v256 = vld [vmem:[#allocation5 + $0xf0] sm:$0xff]
    %v257 = vld [vmem:[#allocation5 + $0xf8] sm:$0xff]
    %v258 = vld [vmem:[#allocation5 + $0x100] sm:$0xff]
    %v259 = vld [vmem:[#allocation5 + $0x108] sm:$0xff]
    %v260 = vld [vmem:[#allocation5 + $0x110] sm:$0xff]
    %v261 = vld [vmem:[#allocation5 + $0x118] sm:$0xff]
    %v262 = vld [vmem:[#allocation5 + $0x120] sm:$0xff]
    %v263 = vld [vmem:[#allocation5 + $0x128] sm:$0xff]
    %v264 = vld [vmem:[#allocation5 + $0x130] sm:$0xff]
    %v265 = vld [vmem:[#allocation5 + $0x138] sm:$0xff]
    %v266 = vld [vmem:[#allocation5 + $0x140] sm:$0xff]
    %v267 = vld [vmem:[#allocation5 + $0x148] sm:$0xff]
    %v268 = vld [vmem:[#allocation5 + $0x150] sm:$0xff]
    %v269 = vld [vmem:[#allocation5 + $0x158] sm:$0xff]
    %v270 = vld [vmem:[#allocation5 + $0x160] sm:$0xff]
    %v271 = vld [vmem:[#allocation5 + $0x168] sm:$0xff]
    %v272 = vld [vmem:[#allocation5 + $0x170] sm:$0xff]
    %v273 = vld [vmem:[#allocation5 + $0x178] sm:$0xff]
    %v274 = vld [vmem:[#allocation5 + $0x180] sm:$0xff]
    %v275 = vld [vmem:[#allocation5 + $0x188] sm:$0xff]
    %v276 = vld [vmem:[#allocation5 + $0x190] sm:$0xff]
    %v277 = vld [vmem:[#allocation5 + $0x198] sm:$0xff]
    %v278 = vld [vmem:[#allocation5 + $0x1a0] sm:$0xff]
    %v279 = vld [vmem:[#allocation5 + $0x1a8] sm:$0xff]
    %v280 = vld [vmem:[#allocation5 + $0x1b0] sm:$0xff]
    %v281 = vld [vmem:[#allocation5 + $0x1b8] sm:$0xff]
    %v282 = vld [vmem:[#allocation5 + $0x1c0] sm:$0xff]
    %v283 = vld [vmem:[#allocation5 + $0x1c8] sm:$0xff]
    %v284 = vld [vmem:[#allocation5 + $0x1d0] sm:$0xff]
    %v285 = vld [vmem:[#allocation5 + $0x1d8] sm:$0xff]
    %v286 = vld [vmem:[#allocation5 + $0x1e0] sm:$0xff]
    %v287 = vld [vmem:[#allocation5 + $0x1e8] sm:$0xff]
    %v288 = vld [vmem:[#allocation5 + $0x1f0] sm:$0xff]
    %v289 = vld [vmem:[#allocation5 + $0x1f8] sm:$0xff]
    %v290 = vld [vmem:[#allocation5 + $0x200] sm:$0xff]
    %v291 = vld [vmem:[#allocation5 + $0x208] sm:$0xff]
    %v292 = vld [vmem:[#allocation5 + $0x210] sm:$0xff]
    %v293 = vld [vmem:[#allocation5 + $0x218] sm:$0xff]
    %v294 = vld [vmem:[#allocation5 + $0x220] sm:$0xff]
    %v295 = vld [vmem:[#allocation5 + $0x228] sm:$0xff]
    %v296 = vld [vmem:[#allocation5 + $0x230] sm:$0xff]
    %v297 = vld [vmem:[#allocation5 + $0x238] sm:$0xff]
    %v298 = vld [vmem:[#allocation5 + $0x240] sm:$0xff]
    %v299 = vld [vmem:[#allocation5 + $0x248] sm:$0xff]
    %v300 = vld [vmem:[#allocation5 + $0x250] sm:$0xff]
    %v301 = vld [vmem:[#allocation5 + $0x258] sm:$0xff]
    %v302 = vld [vmem:[#allocation5 + $0x260] sm:$0xff]
    %v303 = vld [vmem:[#allocation5 + $0x268] sm:$0xff]
    %v304 = vld [vmem:[#allocation5 + $0x270] sm:$0xff]
    %v305 = vld [vmem:[#allocation5 + $0x278] sm:$0xff]
    %v306 = vld [vmem:[#allocation5 + $0x280] sm:$0xff]
    %v307 = vld [vmem:[#allocation5 + $0x288] sm:$0xff]
    %v308 = vld [vmem:[#allocation5 + $0x290] sm:$0xff]
    %v309 = vld [vmem:[#allocation5 + $0x298] sm:$0xff]
    %v310 = vld [vmem:[#allocation5 + $0x2a0] sm:$0xff]
    %v311 = vld [vmem:[#allocation5 + $0x2a8] sm:$0xff]
    %v312 = vld [vmem:[#allocation5 + $0x2b0] sm:$0xff]
    %v313 = vld [vmem:[#allocation5 + $0x2b8] sm:$0xff]
    %v314 = vld [vmem:[#allocation5 + $0x2c0] sm:$0xff]
    %v315 = vld [vmem:[#allocation5 + $0x2c8] sm:$0xff]
    %v316 = vld [vmem:[#allocation5 + $0x2d0] sm:$0xff]
    %v317 = vld [vmem:[#allocation5 + $0x2d8] sm:$0xff]
    %v318 = vld [vmem:[#allocation5 + $0x2e0] sm:$0xff]
    %v319 = vld [vmem:[#allocation5 + $0x2e8] sm:$0xff]
    %v320 = vld [vmem:[#allocation5 + $0x2f0] sm:$0xff]
    %v321 = vld [vmem:[#allocation5 + $0x2f8] sm:$0xff]
    %v322 = vld [vmem:[#allocation5 + $0x300] sm:$0xff]
    %v323 = vld [vmem:[#allocation5 + $0x308] sm:$0xff]
    %v324 = vld [vmem:[#allocation5 + $0x310] sm:$0xff]
    %v325 = vld [vmem:[#allocation5 + $0x318] sm:$0xff]
    %v326 = vld [vmem:[#allocation5 + $0x320] sm:$0xff]
    %v327 = vld [vmem:[#allocation5 + $0x328] sm:$0xff]
    %v328 = vld [vmem:[#allocation5 + $0x330] sm:$0xff]
    %v329 = vld [vmem:[#allocation5 + $0x338] sm:$0xff]
    %v330 = vld [vmem:[#allocation5 + $0x340] sm:$0xff]
    %v331 = vld [vmem:[#allocation5 + $0x348] sm:$0xff]
    %v332 = vld [vmem:[#allocation5 + $0x350] sm:$0xff]
    %v333 = vld [vmem:[#allocation5 + $0x358] sm:$0xff]
    %v334 = vld [vmem:[#allocation5 + $0x360] sm:$0xff]
    %v335 = vld [vmem:[#allocation5 + $0x368] sm:$0xff]
    %v336 = vld [vmem:[#allocation5 + $0x370] sm:$0xff]
    %v337 = vld [vmem:[#allocation5 + $0x378] sm:$0xff]
    %v338 = vld [vmem:[#allocation5 + $0x380] sm:$0xff]
    %v339 = vld [vmem:[#allocation5 + $0x388] sm:$0xff]
    %v340 = vld [vmem:[#allocation5 + $0x390] sm:$0xff]
    %v341 = vld [vmem:[#allocation5 + $0x398] sm:$0xff]
    %v342 = vld [vmem:[#allocation5 + $0x3a0] sm:$0xff]
    %v343 = vld [vmem:[#allocation5 + $0x3a8] sm:$0xff]
    %v344 = vld [vmem:[#allocation5 + $0x3b0] sm:$0xff]
    %v345 = vld [vmem:[#allocation5 + $0x3b8] sm:$0xff]
    %v346 = vld [vmem:[#allocation5 + $0x3c0] sm:$0xff]
    %v347 = vld [vmem:[#allocation5 + $0x3c8] sm:$0xff]
    %v348 = vld [vmem:[#allocation5 + $0x3d0] sm:$0xff]
    %v349 = vld [vmem:[#allocation5 + $0x3d8] sm:$0xff]
    %v350 = vld [vmem:[#allocation5 + $0x3e0] sm:$0xff]
    %v351 = vld [vmem:[#allocation5 + $0x3e8] sm:$0xff]
    %v352 = vld [vmem:[#allocation5 + $0x3f0] sm:$0xff]
    %v353 = vld [vmem:[#allocation5 + $0x3f8] sm:$0xff]
    %v354 = vld [vmem:[#allocation5 + $0x400] sm:$0xff]
    %v355 = vld [vmem:[#allocation5 + $0x408] sm:$0xff]
    %v356 = vld [vmem:[#allocation5 + $0x410] sm:$0xff]
    %v357 = vld [vmem:[#allocation5 + $0x418] sm:$0xff]
    %v358 = vld [vmem:[#allocation5 + $0x420] sm:$0xff]
    %v359 = vld [vmem:[#allocation5 + $0x428] sm:$0xff]
    %v360 = vld [vmem:[#allocation5 + $0x430] sm:$0xff]
    %v361 = vld [vmem:[#allocation5 + $0x438] sm:$0xff]
    %v362 = vld [vmem:[#allocation5 + $0x440] sm:$0xff]
    %v363 = vld [vmem:[#allocation5 + $0x448] sm:$0xff]
    %v364 = vld [vmem:[#allocation5 + $0x450] sm:$0xff]
    %v365 = vld [vmem:[#allocation5 + $0x458] sm:$0xff]
    %v366 = vld [vmem:[#allocation5 + $0x460] sm:$0xff]
    %v367 = vld [vmem:[#allocation5 + $0x468] sm:$0xff]
    %v368 = vld [vmem:[#allocation5 + $0x470] sm:$0xff]
    %v369 = vld [vmem:[#allocation5 + $0x478] sm:$0xff]
    %v370 = vld [vmem:[#allocation5 + $0x480] sm:$0xff]
    %v371 = vld [vmem:[#allocation5 + $0x488] sm:$0xff]
    %v372 = vld [vmem:[#allocation5 + $0x490] sm:$0xff]
    %v373 = vld [vmem:[#allocation5 + $0x498] sm:$0xff]
    %v374 = vld [vmem:[#allocation5 + $0x4a0] sm:$0xff]
    %v375 = vld [vmem:[#allocation5 + $0x4a8] sm:$0xff]
    %v376 = vld [vmem:[#allocation5 + $0x4b0] sm:$0xff]
    %v377 = vld [vmem:[#allocation5 + $0x4b8] sm:$0xff]
    %v378 = vld [vmem:[#allocation5 + $0x4c0] sm:$0xff]
    %v379 = vld [vmem:[#allocation5 + $0x4c8] sm:$0xff]
    %v380 = vld [vmem:[#allocation5 + $0x4d0] sm:$0xff]
    %v381 = vld [vmem:[#allocation5 + $0x4d8] sm:$0xff]
    %v382 = vld [vmem:[#allocation5 + $0x4e0] sm:$0xff]
    %v383 = vld [vmem:[#allocation5 + $0x4e8] sm:$0xff]
    %v384 = vld [vmem:[#allocation5 + $0x4f0] sm:$0xff]
    %v385 = vld [vmem:[#allocation5 + $0x4f8] sm:$0xff]
    %v386 = vld [vmem:[#allocation5 + $0x500] sm:$0xff]
    %v387 = vld [vmem:[#allocation5 + $0x508] sm:$0xff]
    %v388 = vld [vmem:[#allocation5 + $0x510] sm:$0xff]
    %v389 = vld [vmem:[#allocation5 + $0x518] sm:$0xff]
    %v390 = vld [vmem:[#allocation5 + $0x520] sm:$0xff]
    %v391 = vld [vmem:[#allocation5 + $0x528] sm:$0xff]
    %v392 = vld [vmem:[#allocation5 + $0x530] sm:$0xff]
    %v393 = vld [vmem:[#allocation5 + $0x538] sm:$0xff]
    %v394 = vld [vmem:[#allocation5 + $0x540] sm:$0xff]
    %v395 = vld [vmem:[#allocation5 + $0x548] sm:$0xff]
    %v396 = vld [vmem:[#allocation5 + $0x550] sm:$0xff]
    %v397 = vld [vmem:[#allocation5 + $0x558] sm:$0xff]
    %v398 = vld [vmem:[#allocation5 + $0x560] sm:$0xff]
    %v399 = vld [vmem:[#allocation5 + $0x568] sm:$0xff]
    %v400 = vld [vmem:[#allocation5 + $0x570] sm:$0xff]
    %v401 = vld [vmem:[#allocation5 + $0x578] sm:$0xff]
    %v402 = vld [vmem:[#allocation5 + $0x580] sm:$0xff]
    %v403 = vld [vmem:[#allocation5 + $0x588] sm:$0xff]
    %v404 = vld [vmem:[#allocation5 + $0x590] sm:$0xff]
    %v405 = vld [vmem:[#allocation5 + $0x598] sm:$0xff]
    %v406 = vld [vmem:[#allocation5 + $0x5a0] sm:$0xff]
    %v407 = vld [vmem:[#allocation5 + $0x5a8] sm:$0xff]
    %v408 = vld [vmem:[#allocation5 + $0x5b0] sm:$0xff]
    %v409 = vld [vmem:[#allocation5 + $0x5b8] sm:$0xff]
    %v410 = vld [vmem:[#allocation5 + $0x5c0] sm:$0xff]
    %v411 = vld [vmem:[#allocation5 + $0x5c8] sm:$0xff]
    %v412 = vld [vmem:[#allocation5 + $0x5d0] sm:$0xff]
    %v413 = vld [vmem:[#allocation5 + $0x5d8] sm:$0xff]
    %v414 = vld [vmem:[#allocation5 + $0x5e0] sm:$0xff]
    %v415 = vld [vmem:[#allocation5 + $0x5e8] sm:$0xff]
    %v416 = vld [vmem:[#allocation5 + $0x5f0] sm:$0xff]
    %v417 = vld [vmem:[#allocation5 + $0x5f8] sm:$0xff]
    %v418 = vld [vmem:[#allocation5 + $0x600] sm:$0xff]
    %v419 = vld [vmem:[#allocation5 + $0x608] sm:$0xff]
    %v420 = vld [vmem:[#allocation5 + $0x610] sm:$0xff]
    %v421 = vld [vmem:[#allocation5 + $0x618] sm:$0xff]
    %v422 = vld [vmem:[#allocation5 + $0x620] sm:$0xff]
    %v423 = vld [vmem:[#allocation5 + $0x628] sm:$0xff]
    %v424 = vld [vmem:[#allocation5 + $0x630] sm:$0xff]
    %v425 = vld [vmem:[#allocation5 + $0x638] sm:$0xff]
    %v426 = vld [vmem:[#allocation5 + $0x640] sm:$0xff]
    %v427 = vld [vmem:[#allocation5 + $0x648] sm:$0xff]
    %v428 = vld [vmem:[#allocation5 + $0x650] sm:$0xff]
    %v429 = vld [vmem:[#allocation5 + $0x658] sm:$0xff]
    %v430 = vld [vmem:[#allocation5 + $0x660] sm:$0xff]
    %v431 = vld [vmem:[#allocation5 + $0x668] sm:$0xff]
    %v432 = vld [vmem:[#allocation5 + $0x670] sm:$0xff]
    %v433 = vld [vmem:[#allocation5 + $0x678] sm:$0xff]
    %v434 = vld [vmem:[#allocation5 + $0x680] sm:$0xff]
    %v435 = vld [vmem:[#allocation5 + $0x688] sm:$0xff]
    %v436 = vld [vmem:[#allocation5 + $0x690] sm:$0xff]
    %v437 = vld [vmem:[#allocation5 + $0x698] sm:$0xff]
    %v438 = vld [vmem:[#allocation5 + $0x6a0] sm:$0xff]
    %v439 = vld [vmem:[#allocation5 + $0x6a8] sm:$0xff]
    %v440 = vld [vmem:[#allocation5 + $0x6b0] sm:$0xff]
    %v441 = vld [vmem:[#allocation5 + $0x6b8] sm:$0xff]
    %v442 = vld [vmem:[#allocation5 + $0x6c0] sm:$0xff]
    %v443 = vld [vmem:[#allocation5 + $0x6c8] sm:$0xff]
    %v444 = vld [vmem:[#allocation5 + $0x6d0] sm:$0xff]
    %v445 = vld [vmem:[#allocation5 + $0x6d8] sm:$0xff]
    %v446 = vld [vmem:[#allocation5 + $0x6e0] sm:$0xff]
    %v447 = vld [vmem:[#allocation5 + $0x6e8] sm:$0xff]
    %v448 = vld [vmem:[#allocation5 + $0x6f0] sm:$0xff]
    %v449 = vld [vmem:[#allocation5 + $0x6f8] sm:$0xff]
    %v450 = vld [vmem:[#allocation5 + $0x700] sm:$0xff]
    %v451 = vld [vmem:[#allocation5 + $0x708] sm:$0xff]
    %v452 = vld [vmem:[#allocation5 + $0x710] sm:$0xff]
    %v453 = vld [vmem:[#allocation5 + $0x718] sm:$0xff]
    %v454 = vld [vmem:[#allocation5 + $0x720] sm:$0xff]
    %v455 = vld [vmem:[#allocation5 + $0x728] sm:$0xff]
    %v456 = vld [vmem:[#allocation5 + $0x730] sm:$0xff]
    %v457 = vld [vmem:[#allocation5 + $0x738] sm:$0xff]
    %v458 = vld [vmem:[#allocation5 + $0x740] sm:$0xff]
    %v459 = vld [vmem:[#allocation5 + $0x748] sm:$0xff]
    %v460 = vld [vmem:[#allocation5 + $0x750] sm:$0xff]
    %v461 = vld [vmem:[#allocation5 + $0x758] sm:$0xff]
    %v462 = vld [vmem:[#allocation5 + $0x760] sm:$0xff]
    %v463 = vld [vmem:[#allocation5 + $0x768] sm:$0xff]
    %v464 = vld [vmem:[#allocation5 + $0x770] sm:$0xff]
    %v465 = vld [vmem:[#allocation5 + $0x778] sm:$0xff]
    %v466 = vld [vmem:[#allocation5 + $0x780] sm:$0xff]
    %v467 = vld [vmem:[#allocation5 + $0x788] sm:$0xff]
    %v468 = vld [vmem:[#allocation5 + $0x790] sm:$0xff]
    %v469 = vld [vmem:[#allocation5 + $0x798] sm:$0xff]
    %v470 = vld [vmem:[#allocation5 + $0x7a0] sm:$0xff]
    %v471 = vld [vmem:[#allocation5 + $0x7a8] sm:$0xff]
    %v472 = vld [vmem:[#allocation5 + $0x7b0] sm:$0xff]
    %v473 = vld [vmem:[#allocation5 + $0x7b8] sm:$0xff]
    %v474 = vld [vmem:[#allocation5 + $0x7c0] sm:$0xff]
    %v475 = vld [vmem:[#allocation5 + $0x7c8] sm:$0xff]
    %v476 = vld [vmem:[#allocation5 + $0x7d0] sm:$0xff]
    %v477 = vld [vmem:[#allocation5 + $0x7d8] sm:$0xff]
    %v478 = vld [vmem:[#allocation5 + $0x7e0] sm:$0xff]
    %v479 = vld [vmem:[#allocation5 + $0x7e8] sm:$0xff]
    %v480 = vld [vmem:[#allocation5 + $0x7f0] sm:$0xff]
    %v481 = vld [vmem:[#allocation5 + $0x7f8] sm:$0xff]
    %v482 = vld [vmem:[#allocation5 + $0x800] sm:$0xff]
    %v483 = vld [vmem:[#allocation5 + $0x808] sm:$0xff]
    %v484 = vld [vmem:[#allocation5 + $0x810] sm:$0xff]
    %v485 = vld [vmem:[#allocation5 + $0x818] sm:$0xff]
    %v486 = vld [vmem:[#allocation5 + $0x820] sm:$0xff]
    %v487 = vld [vmem:[#allocation5 + $0x828] sm:$0xff]
    %v488 = vld [vmem:[#allocation5 + $0x830] sm:$0xff]
    %v489 = vld [vmem:[#allocation5 + $0x838] sm:$0xff]
    %v490 = vld [vmem:[#allocation5 + $0x840] sm:$0xff]
    %v491 = vld [vmem:[#allocation5 + $0x848] sm:$0xff]
    %v492 = vld [vmem:[#allocation5 + $0x850] sm:$0xff]
    %v493 = vld [vmem:[#allocation5 + $0x858] sm:$0xff]
    %v494 = vld [vmem:[#allocation5 + $0x860] sm:$0xff]
    %v495 = vld [vmem:[#allocation5 + $0x868] sm:$0xff]
    %v496 = vld [vmem:[#allocation5 + $0x870] sm:$0xff]
    %v497 = vld [vmem:[#allocation5 + $0x878] sm:$0xff]
    %v498 = vld [vmem:[#allocation5 + $0x880] sm:$0xff]
    %v499 = vld [vmem:[#allocation5 + $0x888] sm:$0xff]
    %v500 = vld [vmem:[#allocation5 + $0x890] sm:$0xff]
    %v501 = vld [vmem:[#allocation5 + $0x898] sm:$0xff]
    %v502 = vld [vmem:[#allocation5 + $0x8a0] sm:$0xff]
    %v503 = vld [vmem:[#allocation5 + $0x8a8] sm:$0xff]
    %v504 = vld [vmem:[#allocation5 + $0x8b0] sm:$0xff]
    %v505 = vld [vmem:[#allocation5 + $0x8b8] sm:$0xff]
    %v506 = vld [vmem:[#allocation5 + $0x8c0] sm:$0xff]
    %v507 = vld [vmem:[#allocation5 + $0x8c8] sm:$0xff]
    %v508 = vld [vmem:[#allocation5 + $0x8d0] sm:$0xff]
    %v509 = vld [vmem:[#allocation5 + $0x8d8] sm:$0xff]
    %v510 = vld [vmem:[#allocation5 + $0x8e0] sm:$0xff]
    %v511 = vld [vmem:[#allocation5 + $0x8e8] sm:$0xff]
    %v512 = vld [vmem:[#allocation5 + $0x8f0] sm:$0xff]
    %v513 = vld [vmem:[#allocation5 + $0x8f8] sm:$0xff]
    %v514 = vld [vmem:[#allocation5 + $0x900] sm:$0xff]
    %v515 = vld [vmem:[#allocation5 + $0x908] sm:$0xff]
    %v516 = vld [vmem:[#allocation5 + $0x910] sm:$0xff]
    %v517 = vld [vmem:[#allocation5 + $0x918] sm:$0xff]
    %v518 = vld [vmem:[#allocation5 + $0x920] sm:$0xff]
    %v519 = vld [vmem:[#allocation5 + $0x928] sm:$0xff]
    %v520 = vld [vmem:[#allocation5 + $0x930] sm:$0xff]
    %v521 = vld [vmem:[#allocation5 + $0x938] sm:$0xff]
    %v522 = vld [vmem:[#allocation5 + $0x940] sm:$0xff]
    %v523 = vld [vmem:[#allocation5 + $0x948] sm:$0xff]
    %v524 = vld [vmem:[#allocation5 + $0x950] sm:$0xff]
    %v525 = vld [vmem:[#allocation5 + $0x958] sm:$0xff]
    %v526 = vld [vmem:[#allocation5 + $0x960] sm:$0xff]
    %v527 = vld [vmem:[#allocation5 + $0x968] sm:$0xff]
    %v528 = vld [vmem:[#allocation5 + $0x970] sm:$0xff]
    %v529 = vld [vmem:[#allocation5 + $0x978] sm:$0xff]
    %v530 = vld [vmem:[#allocation5 + $0x980] sm:$0xff]
    %v531 = vld [vmem:[#allocation5 + $0x988] sm:$0xff]
    %v532 = vld [vmem:[#allocation5 + $0x990] sm:$0xff]
    %v533 = vld [vmem:[#allocation5 + $0x998] sm:$0xff]
    %v534 = vld [vmem:[#allocation5 + $0x9a0] sm:$0xff]
    %v535 = vld [vmem:[#allocation5 + $0x9a8] sm:$0xff]
    %v536 = vld [vmem:[#allocation5 + $0x9b0] sm:$0xff]
    %v537 = vld [vmem:[#allocation5 + $0x9b8] sm:$0xff]
    %v538 = vld [vmem:[#allocation5 + $0x9c0] sm:$0xff]
    %v539 = vld [vmem:[#allocation5 + $0x9c8] sm:$0xff]
    %v540 = vld [vmem:[#allocation5 + $0x9d0] sm:$0xff]
    %v541 = vld [vmem:[#allocation5 + $0x9d8] sm:$0xff]
    %v542 = vld [vmem:[#allocation5 + $0x9e0] sm:$0xff]
    %v543 = vld [vmem:[#allocation5 + $0x9e8] sm:$0xff]
    %v544 = vld [vmem:[#allocation5 + $0x9f0] sm:$0xff]
    %v545 = vld [vmem:[#allocation5 + $0x9f8] sm:$0xff]
    %v546 = vld [vmem:[#allocation5 + $0xa00] sm:$0xff]
    %v547 = vld [vmem:[#allocation5 + $0xa08] sm:$0xff]
    %v548 = vld [vmem:[#allocation5 + $0xa10] sm:$0xff]
    %v549 = vld [vmem:[#allocation5 + $0xa18] sm:$0xff]
    %v550 = vld [vmem:[#allocation5 + $0xa20] sm:$0xff]
    %v551 = vld [vmem:[#allocation5 + $0xa28] sm:$0xff]
    %v552 = vld [vmem:[#allocation5 + $0xa30] sm:$0xff]
    %v553 = vld [vmem:[#allocation5 + $0xa38] sm:$0xff]
    %v554 = vld [vmem:[#allocation5 + $0xa40] sm:$0xff]
    %v555 = vld [vmem:[#allocation5 + $0xa48] sm:$0xff]
    %v556 = vld [vmem:[#allocation5 + $0xa50] sm:$0xff]
    %v557 = vld [vmem:[#allocation5 + $0xa58] sm:$0xff]
    %v558 = vld [vmem:[#allocation5 + $0xa60] sm:$0xff]
    %v559 = vld [vmem:[#allocation5 + $0xa68] sm:$0xff]
    %v560 = vld [vmem:[#allocation5 + $0xa70] sm:$0xff]
    %v561 = vld [vmem:[#allocation5 + $0xa78] sm:$0xff]
    %v562 = vld [vmem:[#allocation5 + $0xa80] sm:$0xff]
    %v563 = vld [vmem:[#allocation5 + $0xa88] sm:$0xff]
    %v564 = vld [vmem:[#allocation5 + $0xa90] sm:$0xff]
    %v565 = vld [vmem:[#allocation5 + $0xa98] sm:$0xff]
    %v566 = vld [vmem:[#allocation5 + $0xaa0] sm:$0xff]
    %v567 = vld [vmem:[#allocation5 + $0xaa8] sm:$0xff]
    %v568 = vld [vmem:[#allocation5 + $0xab0] sm:$0xff]
    %v569 = vld [vmem:[#allocation5 + $0xab8] sm:$0xff]
    %v570 = vld [vmem:[#allocation5 + $0xac0] sm:$0xff]
    %v571 = vld [vmem:[#allocation5 + $0xac8] sm:$0xff]
    %v572 = vld [vmem:[#allocation5 + $0xad0] sm:$0xff]
    %v573 = vld [vmem:[#allocation5 + $0xad8] sm:$0xff]
    %v574 = vld [vmem:[#allocation5 + $0xae0] sm:$0xff]
    %v575 = vld [vmem:[#allocation5 + $0xae8] sm:$0xff]
    %v576 = vld [vmem:[#allocation5 + $0xaf0] sm:$0xff]
    %v577 = vld [vmem:[#allocation5 + $0xaf8] sm:$0xff]
    %v578 = vld [vmem:[#allocation5 + $0xb00] sm:$0xff]
    %v579 = vld [vmem:[#allocation5 + $0xb08] sm:$0xff]
    %v580 = vld [vmem:[#allocation5 + $0xb10] sm:$0xff]
    %v581 = vld [vmem:[#allocation5 + $0xb18] sm:$0xff]
    %v582 = vld [vmem:[#allocation5 + $0xb20] sm:$0xff]
    %v583 = vld [vmem:[#allocation5 + $0xb28] sm:$0xff]
    %v584 = vld [vmem:[#allocation5 + $0xb30] sm:$0xff]
    %v585 = vld [vmem:[#allocation5 + $0xb38] sm:$0xff]
    %v586 = vld [vmem:[#allocation5 + $0xb40] sm:$0xff]
    %v587 = vld [vmem:[#allocation5 + $0xb48] sm:$0xff]
    %v588 = vld [vmem:[#allocation5 + $0xb50] sm:$0xff]
    %v589 = vld [vmem:[#allocation5 + $0xb58] sm:$0xff]
    %v590 = vld [vmem:[#allocation5 + $0xb60] sm:$0xff]
    %v591 = vld [vmem:[#allocation5 + $0xb68] sm:$0xff]
    %v592 = vld [vmem:[#allocation5 + $0xb70] sm:$0xff]
    %v593 = vld [vmem:[#allocation5 + $0xb78] sm:$0xff]
    %v594 = vld [vmem:[#allocation5 + $0xb80] sm:$0xff]
    %v595 = vld [vmem:[#allocation5 + $0xb88] sm:$0xff]
    %v596 = vld [vmem:[#allocation5 + $0xb90] sm:$0xff]
    %v597 = vld [vmem:[#allocation5 + $0xb98] sm:$0xff]
    %v598 = vld [vmem:[#allocation5 + $0xba0] sm:$0xff]
    %v599 = vld [vmem:[#allocation5 + $0xba8] sm:$0xff]
    %v600 = vld [vmem:[#allocation5 + $0xbb0] sm:$0xff]
    %v601 = vld [vmem:[#allocation5 + $0xbb8] sm:$0xff]
    %v602 = vld [vmem:[#allocation5 + $0xbc0] sm:$0xff]
    %v603 = vld [vmem:[#allocation5 + $0xbc8] sm:$0xff]
    %v604 = vld [vmem:[#allocation5 + $0xbd0] sm:$0xff]
    %v605 = vld [vmem:[#allocation5 + $0xbd8] sm:$0xff]
    %v606 = vld [vmem:[#allocation5 + $0xbe0] sm:$0xff]
    %v607 = vld [vmem:[#allocation5 + $0xbe8] sm:$0xff]
    %v608 = vld [vmem:[#allocation5 + $0xbf0] sm:$0xff]
    %v609 = vld [vmem:[#allocation5 + $0xbf8] sm:$0xff]
    %v610 = vld [vmem:[#allocation5 + $0xc00] sm:$0xff]
    %v611 = vld [vmem:[#allocation5 + $0xc08] sm:$0xff]
    %v612 = vld [vmem:[#allocation5 + $0xc10] sm:$0xff]
    %v613 = vld [vmem:[#allocation5 + $0xc18] sm:$0xff]
    %v614 = vld [vmem:[#allocation5 + $0xc20] sm:$0xff]
    %v615 = vld [vmem:[#allocation5 + $0xc28] sm:$0xff]
    %v616 = vld [vmem:[#allocation5 + $0xc30] sm:$0xff]
    %v617 = vld [vmem:[#allocation5 + $0xc38] sm:$0xff]
    %v618 = vld [vmem:[#allocation5 + $0xc40] sm:$0xff]
    %v619 = vld [vmem:[#allocation5 + $0xc48] sm:$0xff]
    %v620 = vld [vmem:[#allocation5 + $0xc50] sm:$0xff]
    %v621 = vld [vmem:[#allocation5 + $0xc58] sm:$0xff]
    %v622 = vld [vmem:[#allocation5 + $0xc60] sm:$0xff]
    %v623 = vld [vmem:[#allocation5 + $0xc68] sm:$0xff]
    %v624 = vld [vmem:[#allocation5 + $0xc70] sm:$0xff]
    %v625 = vld [vmem:[#allocation5 + $0xc78] sm:$0xff]
    %v626 = vld [vmem:[#allocation5 + $0xc80] sm:$0xff]
    %v627 = vld [vmem:[#allocation5 + $0xc88] sm:$0xff]
    %v628 = vld [vmem:[#allocation5 + $0xc90] sm:$0xff]
    %v629 = vld [vmem:[#allocation5 + $0xc98] sm:$0xff]
    %v630 = vld [vmem:[#allocation5 + $0xca0] sm:$0xff]
    %v631 = vld [vmem:[#allocation5 + $0xca8] sm:$0xff]
    %v632 = vld [vmem:[#allocation5 + $0xcb0] sm:$0xff]
    %v633 = vld [vmem:[#allocation5 + $0xcb8] sm:$0xff]
    %v634 = vld [vmem:[#allocation5 + $0xcc0] sm:$0xff]
    %v635 = vld [vmem:[#allocation5 + $0xcc8] sm:$0xff]
    %v636 = vld [vmem:[#allocation5 + $0xcd0] sm:$0xff]
    %v637 = vld [vmem:[#allocation5 + $0xcd8] sm:$0xff]
    %v638 = vld [vmem:[#allocation5 + $0xce0] sm:$0xff]
    %v639 = vld [vmem:[#allocation5 + $0xce8] sm:$0xff]
    %v640 = vld [vmem:[#allocation5 + $0xcf0] sm:$0xff]
    %v641 = vld [vmem:[#allocation5 + $0xcf8] sm:$0xff]
    %v642 = vld [vmem:[#allocation5 + $0xd00] sm:$0xff]
    %v643 = vld [vmem:[#allocation5 + $0xd08] sm:$0xff]
    %v644 = vld [vmem:[#allocation5 + $0xd10] sm:$0xff]
    %v645 = vld [vmem:[#allocation5 + $0xd18] sm:$0xff]
    %v646 = vld [vmem:[#allocation5 + $0xd20] sm:$0xff]
    %v647 = vld [vmem:[#allocation5 + $0xd28] sm:$0xff]
    %v648 = vld [vmem:[#allocation5 + $0xd30] sm:$0xff]
    %v649 = vld [vmem:[#allocation5 + $0xd38] sm:$0xff]
    %v650 = vld [vmem:[#allocation5 + $0xd40] sm:$0xff]
    %v651 = vld [vmem:[#allocation5 + $0xd48] sm:$0xff]
    %v652 = vld [vmem:[#allocation5 + $0xd50] sm:$0xff]
    %v653 = vld [vmem:[#allocation5 + $0xd58] sm:$0xff]
    %v654 = vld [vmem:[#allocation5 + $0xd60] sm:$0xff]
    %v655 = vld [vmem:[#allocation5 + $0xd68] sm:$0xff]
    %v656 = vld [vmem:[#allocation5 + $0xd70] sm:$0xff]
    %v657 = vld [vmem:[#allocation5 + $0xd78] sm:$0xff]
    %v658 = vld [vmem:[#allocation5 + $0xd80] sm:$0xff]
    %v659 = vld [vmem:[#allocation5 + $0xd88] sm:$0xff]
    %v660 = vld [vmem:[#allocation5 + $0xd90] sm:$0xff]
    %v661 = vld [vmem:[#allocation5 + $0xd98] sm:$0xff]
    %v662 = vld [vmem:[#allocation5 + $0xda0] sm:$0xff]
    %v663 = vld [vmem:[#allocation5 + $0xda8] sm:$0xff]
    %v664 = vld [vmem:[#allocation5 + $0xdb0] sm:$0xff]
    %v665 = vld [vmem:[#allocation5 + $0xdb8] sm:$0xff]
    %v666 = vld [vmem:[#allocation5 + $0xdc0] sm:$0xff]
    %v667 = vld [vmem:[#allocation5 + $0xdc8] sm:$0xff]
    %v668 = vld [vmem:[#allocation5 + $0xdd0] sm:$0xff]
    %v669 = vld [vmem:[#allocation5 + $0xdd8] sm:$0xff]
    %v670 = vld [vmem:[#allocation5 + $0xde0] sm:$0xff]
    %v671 = vld [vmem:[#allocation5 + $0xde8] sm:$0xff]
    %v672 = vld [vmem:[#allocation5 + $0xdf0] sm:$0xff]
    %v673 = vld [vmem:[#allocation5 + $0xdf8] sm:$0xff]
    %v674 = vld [vmem:[#allocation5 + $0xe00] sm:$0xff]
    %v675 = vld [vmem:[#allocation5 + $0xe08] sm:$0xff]
    %v676 = vld [vmem:[#allocation5 + $0xe10] sm:$0xff]
    %v677 = vld [vmem:[#allocation5 + $0xe18] sm:$0xff]
    %v678 = vld [vmem:[#allocation5 + $0xe20] sm:$0xff]
    %v679 = vld [vmem:[#allocation5 + $0xe28] sm:$0xff]
    %v680 = vld [vmem:[#allocation5 + $0xe30] sm:$0xff]
    %v681 = vld [vmem:[#allocation5 + $0xe38] sm:$0xff]
    %v682 = vld [vmem:[#allocation5 + $0xe40] sm:$0xff]
    %v683 = vld [vmem:[#allocation5 + $0xe48] sm:$0xff]
    %v684 = vld [vmem:[#allocation5 + $0xe50] sm:$0xff]
    %v685 = vld [vmem:[#allocation5 + $0xe58] sm:$0xff]
    %v686 = vld [vmem:[#allocation5 + $0xe60] sm:$0xff]
    %v687 = vld [vmem:[#allocation5 + $0xe68] sm:$0xff]
    %v688 = vld [vmem:[#allocation5 + $0xe70] sm:$0xff]
    %v689 = vld [vmem:[#allocation5 + $0xe78] sm:$0xff]
    %v690 = vld [vmem:[#allocation5 + $0xe80] sm:$0xff]
    %v691 = vld [vmem:[#allocation5 + $0xe88] sm:$0xff]
    %v692 = vld [vmem:[#allocation5 + $0xe90] sm:$0xff]
    %v693 = vld [vmem:[#allocation5 + $0xe98] sm:$0xff]
    %v694 = vld [vmem:[#allocation5 + $0xea0] sm:$0xff]
    %v695 = vld [vmem:[#allocation5 + $0xea8] sm:$0xff]
    %v696 = vld [vmem:[#allocation5 + $0xeb0] sm:$0xff]
    %v697 = vld [vmem:[#allocation5 + $0xeb8] sm:$0xff]
    %v698 = vld [vmem:[#allocation5 + $0xec0] sm:$0xff]
    %v699 = vld [vmem:[#allocation5 + $0xec8] sm:$0xff]
    %v700 = vld [vmem:[#allocation5 + $0xed0] sm:$0xff]
    %v701 = vld [vmem:[#allocation5 + $0xed8] sm:$0xff]
    %v702 = vld [vmem:[#allocation5 + $0xee0] sm:$0xff]
    %v703 = vld [vmem:[#allocation5 + $0xee8] sm:$0xff]
    %v704 = vld [vmem:[#allocation5 + $0xef0] sm:$0xff]
    %v705 = vld [vmem:[#allocation5 + $0xef8] sm:$0xff]
    %v706 = vld [vmem:[#allocation5 + $0xf00] sm:$0xff]
    %v707 = vld [vmem:[#allocation5 + $0xf08] sm:$0xff]
    %v708 = vld [vmem:[#allocation5 + $0xf10] sm:$0xff]
    %v709 = vld [vmem:[#allocation5 + $0xf18] sm:$0xff]
    %v710 = vld [vmem:[#allocation5 + $0xf20] sm:$0xff]
    %v711 = vld [vmem:[#allocation5 + $0xf28] sm:$0xff]
    %v712 = vld [vmem:[#allocation5 + $0xf30] sm:$0xff]
    %v713 = vld [vmem:[#allocation5 + $0xf38] sm:$0xff]
    %v714 = vld [vmem:[#allocation5 + $0xf40] sm:$0xff]
    %v715 = vld [vmem:[#allocation5 + $0xf48] sm:$0xff]
    %v716 = vld [vmem:[#allocation5 + $0xf50] sm:$0xff]
    %v717 = vld [vmem:[#allocation5 + $0xf58] sm:$0xff]
    %v718 = vld [vmem:[#allocation5 + $0xf60] sm:$0xff]
    %v719 = vld [vmem:[#allocation5 + $0xf68] sm:$0xff]
    %v720 = vld [vmem:[#allocation5 + $0xf70] sm:$0xff]
    %v721 = vld [vmem:[#allocation5 + $0xf78] sm:$0xff]
    %v722 = vld [vmem:[#allocation5 + $0xf80] sm:$0xff]
    %v723 = vld [vmem:[#allocation5 + $0xf88] sm:$0xff]
    %v724 = vld [vmem:[#allocation5 + $0xf90] sm:$0xff]
    %v725 = vld [vmem:[#allocation5 + $0xf98] sm:$0xff]
    %v726 = vld [vmem:[#allocation5 + $0xfa0] sm:$0xff]
    %v727 = vld [vmem:[#allocation5 + $0xfa8] sm:$0xff]
    %v728 = vld [vmem:[#allocation5 + $0xfb0] sm:$0xff]
    %v729 = vld [vmem:[#allocation5 + $0xfb8] sm:$0xff]
    %v730 = vld [vmem:[#allocation5 + $0xfc0] sm:$0xff]
    %v731 = vld [vmem:[#allocation5 + $0xfc8] sm:$0xff]
    %v732 = vld [vmem:[#allocation5 + $0xfd0] sm:$0xff]
    %v733 = vld [vmem:[#allocation5 + $0xfd8] sm:$0xff]
    %v734 = vld [vmem:[#allocation5 + $0xfe0] sm:$0xff]
    %v735 = vld [vmem:[#allocation5 + $0xfe8] sm:$0xff]
    %v736 = vld [vmem:[#allocation5 + $0xff0] sm:$0xff]
    %v737 = vld [vmem:[#allocation5 + $0xff8] sm:$0xff]
    %v738 = vld [vmem:[#allocation5 + $0x1000] sm:$0xff]
    %v739 = vld [vmem:[#allocation5 + $0x1008] sm:$0xff]
    %v740 = vld [vmem:[#allocation5 + $0x1010] sm:$0xff]
    %v741 = vld [vmem:[#allocation5 + $0x1018] sm:$0xff]
    %v742 = vld [vmem:[#allocation5 + $0x1020] sm:$0xff]
    %v743 = vld [vmem:[#allocation5 + $0x1028] sm:$0xff]
    %v744 = vld [vmem:[#allocation5 + $0x1030] sm:$0xff]
    %v745 = vld [vmem:[#allocation5 + $0x1038] sm:$0xff]
    %v746 = vld [vmem:[#allocation5 + $0x1040] sm:$0xff]
    %v747 = vld [vmem:[#allocation5 + $0x1048] sm:$0xff]
    %v748 = vld [vmem:[#allocation5 + $0x1050] sm:$0xff]
    %v749 = vld [vmem:[#allocation5 + $0x1058] sm:$0xff]
    %v750 = vld [vmem:[#allocation5 + $0x1060] sm:$0xff]
    %v751 = vld [vmem:[#allocation5 + $0x1068] sm:$0xff]
    %v752 = vld [vmem:[#allocation5 + $0x1070] sm:$0xff]
    %v753 = vld [vmem:[#allocation5 + $0x1078] sm:$0xff]
    %v754 = vld [vmem:[#allocation5 + $0x1080] sm:$0xff]
    %v755 = vld [vmem:[#allocation5 + $0x1088] sm:$0xff]
    %v756 = vld [vmem:[#allocation5 + $0x1090] sm:$0xff]
    %v757 = vld [vmem:[#allocation5 + $0x1098] sm:$0xff]
    %v758 = vld [vmem:[#allocation5 + $0x10a0] sm:$0xff]
    %v759 = vld [vmem:[#allocation5 + $0x10a8] sm:$0xff]
    %v760 = vld [vmem:[#allocation5 + $0x10b0] sm:$0xff]
    %v761 = vld [vmem:[#allocation5 + $0x10b8] sm:$0xff]
    %v762 = vld [vmem:[#allocation5 + $0x10c0] sm:$0xff]
    %v763 = vld [vmem:[#allocation5 + $0x10c8] sm:$0xff]
    %v764 = vld [vmem:[#allocation5 + $0x10d0] sm:$0xff]
    %v765 = vld [vmem:[#allocation5 + $0x10d8] sm:$0xff]
    %v766 = vld [vmem:[#allocation5 + $0x10e0] sm:$0xff]
    %v767 = vld [vmem:[#allocation5 + $0x10e8] sm:$0xff]
    %v768 = vld [vmem:[#allocation5 + $0x10f0] sm:$0xff]
    %v769 = vld [vmem:[#allocation5 + $0x10f8] sm:$0xff]
    %v770 = vld [vmem:[#allocation5 + $0x1100] sm:$0xff]
    %v771 = vld [vmem:[#allocation5 + $0x1108] sm:$0xff]
    %v772 = vld [vmem:[#allocation5 + $0x1110] sm:$0xff]
    %v773 = vld [vmem:[#allocation5 + $0x1118] sm:$0xff]
    %v774 = vld [vmem:[#allocation5 + $0x1120] sm:$0xff]
    %v775 = vld [vmem:[#allocation5 + $0x1128] sm:$0xff]
    %v776 = vld [vmem:[#allocation5 + $0x1130] sm:$0xff]
    %v777 = vld [vmem:[#allocation5 + $0x1138] sm:$0xff]
    %v778 = vld [vmem:[#allocation5 + $0x1140] sm:$0xff]
    %v779 = vld [vmem:[#allocation5 + $0x1148] sm:$0xff]
    %v780 = vld [vmem:[#allocation5 + $0x1150] sm:$0xff]
    %v781 = vld [vmem:[#allocation5 + $0x1158] sm:$0xff]
    %v782 = vld [vmem:[#allocation5 + $0x1160] sm:$0xff]
    %v783 = vld [vmem:[#allocation5 + $0x1168] sm:$0xff]
    %v784 = vld [vmem:[#allocation5 + $0x1170] sm:$0xff]
    %v785 = vld [vmem:[#allocation5 + $0x1178] sm:$0xff]
    %v786 = vld [vmem:[#allocation5 + $0x1180] sm:$0xff]
    %v787 = vld [vmem:[#allocation5 + $0x1188] sm:$0xff]
    %v788 = vld [vmem:[#allocation5 + $0x1190] sm:$0xff]
    %v789 = vld [vmem:[#allocation5 + $0x1198] sm:$0xff]
    %v790 = vld [vmem:[#allocation5 + $0x11a0] sm:$0xff]
    %v791 = vld [vmem:[#allocation5 + $0x11a8] sm:$0xff]
    %v792 = vld [vmem:[#allocation5 + $0x11b0] sm:$0xff]
    %v793 = vld [vmem:[#allocation5 + $0x11b8] sm:$0xff]
    %v794 = vld [vmem:[#allocation5 + $0x11c0] sm:$0xff]
    %v795 = vld [vmem:[#allocation5 + $0x11c8] sm:$0xff]
    %v796 = vld [vmem:[#allocation5 + $0x11d0] sm:$0xff]
    %v797 = vld [vmem:[#allocation5 + $0x11d8] sm:$0xff]
    %v798 = vld [vmem:[#allocation5 + $0x11e0] sm:$0xff]
    %v799 = vld [vmem:[#allocation5 + $0x11e8] sm:$0xff]
    %v800 = vld [vmem:[#allocation5 + $0x11f0] sm:$0xff]
    %v801 = vld [vmem:[#allocation5 + $0x11f8] sm:$0xff]
    %v802 = vld [vmem:[#allocation5 + $0x1200] sm:$0xff]
    %v803 = vld [vmem:[#allocation5 + $0x1208] sm:$0xff]
    %v804 = vld [vmem:[#allocation5 + $0x1210] sm:$0xff]
    %v805 = vld [vmem:[#allocation5 + $0x1218] sm:$0xff]
    %v806 = vld [vmem:[#allocation5 + $0x1220] sm:$0xff]
    %v807 = vld [vmem:[#allocation5 + $0x1228] sm:$0xff]
    %v808 = vld [vmem:[#allocation5 + $0x1230] sm:$0xff]
    %v809 = vld [vmem:[#allocation5 + $0x1238] sm:$0xff]
    %v810 = vld [vmem:[#allocation5 + $0x1240] sm:$0xff]
    %v811 = vld [vmem:[#allocation5 + $0x1248] sm:$0xff]
    %v812 = vld [vmem:[#allocation5 + $0x1250] sm:$0xff]
    %v813 = vld [vmem:[#allocation5 + $0x1258] sm:$0xff]
    %v814 = vld [vmem:[#allocation5 + $0x1260] sm:$0xff]
    %v815 = vld [vmem:[#allocation5 + $0x1268] sm:$0xff]
    %v816 = vld [vmem:[#allocation5 + $0x1270] sm:$0xff]
    %v817 = vld [vmem:[#allocation5 + $0x1278] sm:$0xff]
    %v818 = vld [vmem:[#allocation5 + $0x1280] sm:$0xff]
    %v819 = vld [vmem:[#allocation5 + $0x1288] sm:$0xff]
    %v820 = vld [vmem:[#allocation5 + $0x1290] sm:$0xff]
    %v821 = vld [vmem:[#allocation5 + $0x1298] sm:$0xff]
    %v822 = vld [vmem:[#allocation5 + $0x12a0] sm:$0xff]
    %v823 = vld [vmem:[#allocation5 + $0x12a8] sm:$0xff]
    %v824 = vld [vmem:[#allocation5 + $0x12b0] sm:$0xff]
    %v825 = vld [vmem:[#allocation5 + $0x12b8] sm:$0xff]
    %v826 = vld [vmem:[#allocation5 + $0x12c0] sm:$0xff]
    %v827 = vld [vmem:[#allocation5 + $0x12c8] sm:$0xff]
    %v828 = vld [vmem:[#allocation5 + $0x12d0] sm:$0xff]
    %v829 = vld [vmem:[#allocation5 + $0x12d8] sm:$0xff]
    %v830 = vld [vmem:[#allocation5 + $0x12e0] sm:$0xff]
    %v831 = vld [vmem:[#allocation5 + $0x12e8] sm:$0xff]
    %v832 = vld [vmem:[#allocation5 + $0x12f0] sm:$0xff]
    %v833 = vld [vmem:[#allocation5 + $0x12f8] sm:$0xff]
    %v834 = vld [vmem:[#allocation5 + $0x1300] sm:$0xff]
    %v835 = vld [vmem:[#allocation5 + $0x1308] sm:$0xff]
    %v836 = vld [vmem:[#allocation5 + $0x1310] sm:$0xff]
    %v837 = vld [vmem:[#allocation5 + $0x1318] sm:$0xff]
    %v838 = vld [vmem:[#allocation5 + $0x1320] sm:$0xff]
    %v839 = vld [vmem:[#allocation5 + $0x1328] sm:$0xff]
    %v840 = vld [vmem:[#allocation5 + $0x1330] sm:$0xff]
    %v841 = vld [vmem:[#allocation5 + $0x1338] sm:$0xff]
    %v842 = vld [vmem:[#allocation5 + $0x1340] sm:$0xff]
    %v843 = vld [vmem:[#allocation5 + $0x1348] sm:$0xff]
    %v844 = vld [vmem:[#allocation5 + $0x1350] sm:$0xff]
    %v845 = vld [vmem:[#allocation5 + $0x1358] sm:$0xff]
    %v846 = vld [vmem:[#allocation5 + $0x1360] sm:$0xff]
    %v847 = vld [vmem:[#allocation5 + $0x1368] sm:$0xff]
    %v848 = vld [vmem:[#allocation5 + $0x1370] sm:$0xff]
    %v849 = vld [vmem:[#allocation5 + $0x1378] sm:$0xff]
    %v850 = vld [vmem:[#allocation5 + $0x1380] sm:$0xff]
    %v851 = vld [vmem:[#allocation5 + $0x1388] sm:$0xff]
    %v852 = vld [vmem:[#allocation5 + $0x1390] sm:$0xff]
    %v853 = vld [vmem:[#allocation5 + $0x1398] sm:$0xff]
    %v854 = vld [vmem:[#allocation5 + $0x13a0] sm:$0xff]
    %v855 = vld [vmem:[#allocation5 + $0x13a8] sm:$0xff]
    %v856 = vld [vmem:[#allocation5 + $0x13b0] sm:$0xff]
    %v857 = vld [vmem:[#allocation5 + $0x13b8] sm:$0xff]
    %v858 = vld [vmem:[#allocation5 + $0x13c0] sm:$0xff]
    %v859 = vld [vmem:[#allocation5 + $0x13c8] sm:$0xff]
    %v860 = vld [vmem:[#allocation5 + $0x13d0] sm:$0xff]
    %v861 = vld [vmem:[#allocation5 + $0x13d8] sm:$0xff]
    %v862 = vld [vmem:[#allocation5 + $0x13e0] sm:$0xff]
    %v863 = vld [vmem:[#allocation5 + $0x13e8] sm:$0xff]
    %v864 = vld [vmem:[#allocation5 + $0x13f0] sm:$0xff]
    %v865 = vld [vmem:[#allocation5 + $0x13f8] sm:$0xff]
    %v866 = vld [vmem:[#allocation5 + $0x1400] sm:$0xff]
    %v867 = vld [vmem:[#allocation5 + $0x1408] sm:$0xff]
    %v868 = vld [vmem:[#allocation5 + $0x1410] sm:$0xff]
    %v869 = vld [vmem:[#allocation5 + $0x1418] sm:$0xff]
    %v870 = vld [vmem:[#allocation5 + $0x1420] sm:$0xff]
    %v871 = vld [vmem:[#allocation5 + $0x1428] sm:$0xff]
    %v872 = vld [vmem:[#allocation5 + $0x1430] sm:$0xff]
    %v873 = vld [vmem:[#allocation5 + $0x1438] sm:$0xff]
    %v874 = vld [vmem:[#allocation5 + $0x1440] sm:$0xff]
    %v875 = vld [vmem:[#allocation5 + $0x1448] sm:$0xff]
    %v876 = vld [vmem:[#allocation5 + $0x1450] sm:$0xff]
    %v877 = vld [vmem:[#allocation5 + $0x1458] sm:$0xff]
    %v878 = vld [vmem:[#allocation5 + $0x1460] sm:$0xff]
    %v879 = vld [vmem:[#allocation5 + $0x1468] sm:$0xff]
    %v880 = vld [vmem:[#allocation5 + $0x1470] sm:$0xff]
    %v881 = vld [vmem:[#allocation5 + $0x1478] sm:$0xff]
    %v882 = vld [vmem:[#allocation5 + $0x1480] sm:$0xff]
    %v883 = vld [vmem:[#allocation5 + $0x1488] sm:$0xff]
    %v884 = vld [vmem:[#allocation5 + $0x1490] sm:$0xff]
    %v885 = vld [vmem:[#allocation5 + $0x1498] sm:$0xff]
    %v886 = vld [vmem:[#allocation5 + $0x14a0] sm:$0xff]
    %v887 = vld [vmem:[#allocation5 + $0x14a8] sm:$0xff]
    %v888 = vld [vmem:[#allocation5 + $0x14b0] sm:$0xff]
    %v889 = vld [vmem:[#allocation5 + $0x14b8] sm:$0xff]
    %v890 = vld [vmem:[#allocation5 + $0x14c0] sm:$0xff]
    %v891 = vld [vmem:[#allocation5 + $0x14c8] sm:$0xff]
    %v892 = vld [vmem:[#allocation5 + $0x14d0] sm:$0xff]
    %v893 = vld [vmem:[#allocation5 + $0x14d8] sm:$0xff]
    %v894 = vld [vmem:[#allocation5 + $0x14e0] sm:$0xff]
    %v895 = vld [vmem:[#allocation5 + $0x14e8] sm:$0xff]
    %v896 = vld [vmem:[#allocation5 + $0x14f0] sm:$0xff]
    %v897 = vld [vmem:[#allocation5 + $0x14f8] sm:$0xff]
    %v898 = vld [vmem:[#allocation5 + $0x1500] sm:$0xff]
    %v899 = vld [vmem:[#allocation5 + $0x1508] sm:$0xff]
    %v900 = vld [vmem:[#allocation5 + $0x1510] sm:$0xff]
    %v901 = vld [vmem:[#allocation5 + $0x1518] sm:$0xff]
    %v902 = vld [vmem:[#allocation5 + $0x1520] sm:$0xff]
    %v903 = vld [vmem:[#allocation5 + $0x1528] sm:$0xff]
    %v904 = vld [vmem:[#allocation5 + $0x1530] sm:$0xff]
    %v905 = vld [vmem:[#allocation5 + $0x1538] sm:$0xff]
    %v906 = vld [vmem:[#allocation5 + $0x1540] sm:$0xff]
    %v907 = vld [vmem:[#allocation5 + $0x1548] sm:$0xff]
    %v908 = vld [vmem:[#allocation5 + $0x1550] sm:$0xff]
    %v909 = vld [vmem:[#allocation5 + $0x1558] sm:$0xff]
    %v910 = vld [vmem:[#allocation5 + $0x1560] sm:$0xff]
    %v911 = vld [vmem:[#allocation5 + $0x1568] sm:$0xff]
    %v912 = vld [vmem:[#allocation5 + $0x1570] sm:$0xff]
    %v913 = vld [vmem:[#allocation5 + $0x1578] sm:$0xff]
    %v914 = vld [vmem:[#allocation5 + $0x1580] sm:$0xff]
    %v915 = vld [vmem:[#allocation5 + $0x1588] sm:$0xff]
    %v916 = vld [vmem:[#allocation5 + $0x1590] sm:$0xff]
    %v917 = vld [vmem:[#allocation5 + $0x1598] sm:$0xff]
    %v918 = vld [vmem:[#allocation5 + $0x15a0] sm:$0xff]
    %v919 = vld [vmem:[#allocation5 + $0x15a8] sm:$0xff]
    %v920 = vld [vmem:[#allocation5 + $0x15b0] sm:$0xff]
    %v921 = vld [vmem:[#allocation5 + $0x15b8] sm:$0xff]
    %v922 = vld [vmem:[#allocation5 + $0x15c0] sm:$0xff]
    %v923 = vld [vmem:[#allocation5 + $0x15c8] sm:$0xff]
    %v924 = vld [vmem:[#allocation5 + $0x15d0] sm:$0xff]
    %v925 = vld [vmem:[#allocation5 + $0x15d8] sm:$0xff]
    %v926 = vld [vmem:[#allocation5 + $0x15e0] sm:$0xff]
    %v927 = vld [vmem:[#allocation5 + $0x15e8] sm:$0xff]
    %v928 = vld [vmem:[#allocation5 + $0x15f0] sm:$0xff]
    %v929 = vld [vmem:[#allocation5 + $0x15f8] sm:$0xff]
    %v930 = vld [vmem:[#allocation5 + $0x1600] sm:$0xff]
    %v931 = vld [vmem:[#allocation5 + $0x1608] sm:$0xff]
    %v932 = vld [vmem:[#allocation5 + $0x1610] sm:$0xff]
    %v933 = vld [vmem:[#allocation5 + $0x1618] sm:$0xff]
    %v934 = vld [vmem:[#allocation5 + $0x1620] sm:$0xff]
    %v935 = vld [vmem:[#allocation5 + $0x1628] sm:$0xff]
    %v936 = vld [vmem:[#allocation5 + $0x1630] sm:$0xff]
    %v937 = vld [vmem:[#allocation5 + $0x1638] sm:$0xff]
    %v938 = vld [vmem:[#allocation5 + $0x1640] sm:$0xff]
    %v939 = vld [vmem:[#allocation5 + $0x1648] sm:$0xff]
    %v940 = vld [vmem:[#allocation5 + $0x1650] sm:$0xff]
    %v941 = vld [vmem:[#allocation5 + $0x1658] sm:$0xff]
    %v942 = vld [vmem:[#allocation5 + $0x1660] sm:$0xff]
    %v943 = vld [vmem:[#allocation5 + $0x1668] sm:$0xff]
    %v944 = vld [vmem:[#allocation5 + $0x1670] sm:$0xff]
    %v945 = vld [vmem:[#allocation5 + $0x1678] sm:$0xff]
    %v946 = vld [vmem:[#allocation5 + $0x1680] sm:$0xff]
    %v947 = vld [vmem:[#allocation5 + $0x1688] sm:$0xff]
    %v948 = vld [vmem:[#allocation5 + $0x1690] sm:$0xff]
    %v949 = vld [vmem:[#allocation5 + $0x1698] sm:$0xff]
    %v950 = vld [vmem:[#allocation5 + $0x16a0] sm:$0xff]
    %v951 = vld [vmem:[#allocation5 + $0x16a8] sm:$0xff]
    %v952 = vld [vmem:[#allocation5 + $0x16b0] sm:$0xff]
    %v953 = vld [vmem:[#allocation5 + $0x16b8] sm:$0xff]
    %v954 = vld [vmem:[#allocation5 + $0x16c0] sm:$0xff]
    %v955 = vld [vmem:[#allocation5 + $0x16c8] sm:$0xff]
    %v956 = vld [vmem:[#allocation5 + $0x16d0] sm:$0xff]
    %v957 = vld [vmem:[#allocation5 + $0x16d8] sm:$0xff]
    %v958 = vld [vmem:[#allocation5 + $0x16e0] sm:$0xff]
    %v959 = vld [vmem:[#allocation5 + $0x16e8] sm:$0xff]
    %v960 = vld [vmem:[#allocation5 + $0x16f0] sm:$0xff]
    %v961 = vld [vmem:[#allocation5 + $0x16f8] sm:$0xff]
    %v962 = vld [vmem:[#allocation5 + $0x1700] sm:$0xff]
    %v963 = vld [vmem:[#allocation5 + $0x1708] sm:$0xff]
    %v964 = vld [vmem:[#allocation5 + $0x1710] sm:$0xff]
    %v965 = vld [vmem:[#allocation5 + $0x1718] sm:$0xff]
    %v966 = vld [vmem:[#allocation5 + $0x1720] sm:$0xff]
    %v967 = vld [vmem:[#allocation5 + $0x1728] sm:$0xff]
    %v968 = vld [vmem:[#allocation5 + $0x1730] sm:$0xff]
    %v969 = vld [vmem:[#allocation5 + $0x1738] sm:$0xff]
    %v970 = vld [vmem:[#allocation5 + $0x1740] sm:$0xff]
    %v971 = vld [vmem:[#allocation5 + $0x1748] sm:$0xff]
    %v972 = vld [vmem:[#allocation5 + $0x1750] sm:$0xff]
    %v973 = vld [vmem:[#allocation5 + $0x1758] sm:$0xff]
    %v974 = vld [vmem:[#allocation5 + $0x1760] sm:$0xff]
    %v975 = vld [vmem:[#allocation5 + $0x1768] sm:$0xff]
    %v976 = vld [vmem:[#allocation5 + $0x1770] sm:$0xff]
    %v977 = vld [vmem:[#allocation5 + $0x1778] sm:$0xff]
    %v978 = vld [vmem:[#allocation5 + $0x1780] sm:$0xff]
    %v979 = vld [vmem:[#allocation5 + $0x1788] sm:$0xff]
    %v980 = vld [vmem:[#allocation5 + $0x1790] sm:$0xff]
    %v981 = vld [vmem:[#allocation5 + $0x1798] sm:$0xff]
    %v982 = vld [vmem:[#allocation5 + $0x17a0] sm:$0xff]
    %v983 = vld [vmem:[#allocation5 + $0x17a8] sm:$0xff]
    %v984 = vld [vmem:[#allocation5 + $0x17b0] sm:$0xff]
    %v985 = vld [vmem:[#allocation5 + $0x17b8] sm:$0xff]
    %v986 = vld [vmem:[#allocation5 + $0x17c0] sm:$0xff]
    %v987 = vld [vmem:[#allocation5 + $0x17c8] sm:$0xff]
    %v988 = vld [vmem:[#allocation5 + $0x17d0] sm:$0xff]
    %v989 = vld [vmem:[#allocation5 + $0x17d8] sm:$0xff]
    %v990 = vld [vmem:[#allocation5 + $0x17e0] sm:$0xff]
    %v991 = vld [vmem:[#allocation5 + $0x17e8] sm:$0xff]
    %v992 = vld [vmem:[#allocation5 + $0x17f0] sm:$0xff]
    %v993 = vld [vmem:[#allocation5 + $0x17f8] sm:$0xff]
    %v994 = vld [vmem:[#allocation5 + $0x1800] sm:$0xff]
    %v995 = vld [vmem:[#allocation5 + $0x1808] sm:$0xff]
    %v996 = vld [vmem:[#allocation5 + $0x1810] sm:$0xff]
    %v997 = vld [vmem:[#allocation5 + $0x1818] sm:$0xff]
    %v998 = vld [vmem:[#allocation5 + $0x1820] sm:$0xff]
    %v999 = vld [vmem:[#allocation5 + $0x1828] sm:$0xff]
    %v1000 = vld [vmem:[#allocation5 + $0x1830] sm:$0xff]
    %v1001 = vld [vmem:[#allocation5 + $0x1838] sm:$0xff]
    %v1002 = vld [vmem:[#allocation5 + $0x1840] sm:$0xff]
    %v1003 = vld [vmem:[#allocation5 + $0x1848] sm:$0xff]
    %v1004 = vld [vmem:[#allocation5 + $0x1850] sm:$0xff]
    %v1005 = vld [vmem:[#allocation5 + $0x1858] sm:$0xff]
    %v1006 = vld [vmem:[#allocation5 + $0x1860] sm:$0xff]
    %v1007 = vld [vmem:[#allocation5 + $0x1868] sm:$0xff]
    %v1008 = vld [vmem:[#allocation5 + $0x1870] sm:$0xff]
    %v1009 = vld [vmem:[#allocation5 + $0x1878] sm:$0xff]
    %v1010 = vld [vmem:[#allocation5 + $0x1880] sm:$0xff]
    %v1011 = vld [vmem:[#allocation5 + $0x1888] sm:$0xff]
    %v1012 = vld [vmem:[#allocation5 + $0x1890] sm:$0xff]
    %v1013 = vld [vmem:[#allocation5 + $0x1898] sm:$0xff]
    %v1014 = vld [vmem:[#allocation5 + $0x18a0] sm:$0xff]
    %v1015 = vld [vmem:[#allocation5 + $0x18a8] sm:$0xff]
    %v1016 = vld [vmem:[#allocation5 + $0x18b0] sm:$0xff]
    %v1017 = vld [vmem:[#allocation5 + $0x18b8] sm:$0xff]
    %v1018 = vld [vmem:[#allocation5 + $0x18c0] sm:$0xff]
    %v1019 = vld [vmem:[#allocation5 + $0x18c8] sm:$0xff]
    %v1020 = vld [vmem:[#allocation5 + $0x18d0] sm:$0xff]
    %v1021 = vld [vmem:[#allocation5 + $0x18d8] sm:$0xff]
    %v1022 = vld [vmem:[#allocation5 + $0x18e0] sm:$0xff]
    %v1023 = vld [vmem:[#allocation5 + $0x18e8] sm:$0xff]
    %v1024 = vld [vmem:[#allocation5 + $0x18f0] sm:$0xff]
    %v1025 = vld [vmem:[#allocation5 + $0x18f8] sm:$0xff]
    %v1026 = vld [vmem:[#allocation5 + $0x1900] sm:$0xff]
    %v1027 = vld [vmem:[#allocation5 + $0x1908] sm:$0xff]
    %v1028 = vld [vmem:[#allocation5 + $0x1910] sm:$0xff]
    %v1029 = vld [vmem:[#allocation5 + $0x1918] sm:$0xff]
    %v1030 = vld [vmem:[#allocation5 + $0x1920] sm:$0xff]
    %v1031 = vld [vmem:[#allocation5 + $0x1928] sm:$0xff]
    %v1032 = vld [vmem:[#allocation5 + $0x1930] sm:$0xff]
    %v1033 = vld [vmem:[#allocation5 + $0x1938] sm:$0xff]
    %v1034 = vld [vmem:[#allocation5 + $0x1940] sm:$0xff]
    %v1035 = vld [vmem:[#allocation5 + $0x1948] sm:$0xff]
    %v1036 = vld [vmem:[#allocation5 + $0x1950] sm:$0xff]
    %v1037 = vld [vmem:[#allocation5 + $0x1958] sm:$0xff]
    %v1038 = vld [vmem:[#allocation5 + $0x1960] sm:$0xff]
    %v1039 = vld [vmem:[#allocation5 + $0x1968] sm:$0xff]
    %v1040 = vld [vmem:[#allocation5 + $0x1970] sm:$0xff]
    %v1041 = vld [vmem:[#allocation5 + $0x1978] sm:$0xff]
    %v1042 = vld [vmem:[#allocation5 + $0x1980] sm:$0xff]
    %v1043 = vld [vmem:[#allocation5 + $0x1988] sm:$0xff]
    %v1044 = vld [vmem:[#allocation5 + $0x1990] sm:$0xff]
    %v1045 = vld [vmem:[#allocation5 + $0x1998] sm:$0xff]
    %v1046 = vld [vmem:[#allocation5 + $0x19a0] sm:$0xff]
    %v1047 = vld [vmem:[#allocation5 + $0x19a8] sm:$0xff]
    %v1048 = vld [vmem:[#allocation5 + $0x19b0] sm:$0xff]
    %v1049 = vld [vmem:[#allocation5 + $0x19b8] sm:$0xff]
    %v1050 = vld [vmem:[#allocation5 + $0x19c0] sm:$0xff]
    %v1051 = vld [vmem:[#allocation5 + $0x19c8] sm:$0xff]
    %v1052 = vld [vmem:[#allocation5 + $0x19d0] sm:$0xff]
    %v1053 = vld [vmem:[#allocation5 + $0x19d8] sm:$0xff]
    %v1054 = vld [vmem:[#allocation5 + $0x19e0] sm:$0xff]
    %v1055 = vld [vmem:[#allocation5 + $0x19e8] sm:$0xff]
    %v1056 = vld [vmem:[#allocation5 + $0x19f0] sm:$0xff]
    %v1057 = vld [vmem:[#allocation5 + $0x19f8] sm:$0xff]
    %v1058 = vld [vmem:[#allocation5 + $0x1a00] sm:$0xff]
    %v1059 = vld [vmem:[#allocation5 + $0x1a08] sm:$0xff]
    %v1060 = vld [vmem:[#allocation5 + $0x1a10] sm:$0xff]
    %v1061 = vld [vmem:[#allocation5 + $0x1a18] sm:$0xff]
    %v1062 = vld [vmem:[#allocation5 + $0x1a20] sm:$0xff]
    %v1063 = vld [vmem:[#allocation5 + $0x1a28] sm:$0xff]
    %v1064 = vld [vmem:[#allocation5 + $0x1a30] sm:$0xff]
    %v1065 = vld [vmem:[#allocation5 + $0x1a38] sm:$0xff]
    %v1066 = vld [vmem:[#allocation5 + $0x1a40] sm:$0xff]
    %v1067 = vld [vmem:[#allocation5 + $0x1a48] sm:$0xff]
    %v1068 = vld [vmem:[#allocation5 + $0x1a50] sm:$0xff]
    %v1069 = vld [vmem:[#allocation5 + $0x1a58] sm:$0xff]
    %v1070 = vld [vmem:[#allocation5 + $0x1a60] sm:$0xff]
    %v1071 = vld [vmem:[#allocation5 + $0x1a68] sm:$0xff]
    %v1072 = vld [vmem:[#allocation5 + $0x1a70] sm:$0xff]
    %v1073 = vld [vmem:[#allocation5 + $0x1a78] sm:$0xff]
    %v1074 = vld [vmem:[#allocation5 + $0x1a80] sm:$0xff]
    %v1075 = vld [vmem:[#allocation5 + $0x1a88] sm:$0xff]
    %v1076 = vld [vmem:[#allocation5 + $0x1a90] sm:$0xff]
    %v1077 = vld [vmem:[#allocation5 + $0x1a98] sm:$0xff]
    %v1078 = vld [vmem:[#allocation5 + $0x1aa0] sm:$0xff]
    %v1079 = vld [vmem:[#allocation5 + $0x1aa8] sm:$0xff]
    %v1080 = vld [vmem:[#allocation5 + $0x1ab0] sm:$0xff]
    %v1081 = vld [vmem:[#allocation5 + $0x1ab8] sm:$0xff]
    %v1082 = vld [vmem:[#allocation5 + $0x1ac0] sm:$0xff]
    %v1083 = vld [vmem:[#allocation5 + $0x1ac8] sm:$0xff]
    %v1084 = vld [vmem:[#allocation5 + $0x1ad0] sm:$0xff]
    %v1085 = vld [vmem:[#allocation5 + $0x1ad8] sm:$0xff]
    %v1086 = vld [vmem:[#allocation5 + $0x1ae0] sm:$0xff]
    %v1087 = vld [vmem:[#allocation5 + $0x1ae8] sm:$0xff]
    %v1088 = vld [vmem:[#allocation5 + $0x1af0] sm:$0xff]
    %v1089 = vld [vmem:[#allocation5 + $0x1af8] sm:$0xff]
    %v1090 = vld [vmem:[#allocation5 + $0x1b00] sm:$0xff]
    %v1091 = vld [vmem:[#allocation5 + $0x1b08] sm:$0xff]
    %v1092 = vld [vmem:[#allocation5 + $0x1b10] sm:$0xff]
    %v1093 = vld [vmem:[#allocation5 + $0x1b18] sm:$0xff]
    %v1094 = vld [vmem:[#allocation5 + $0x1b20] sm:$0xff]
    %v1095 = vld [vmem:[#allocation5 + $0x1b28] sm:$0xff]
    %v1096 = vld [vmem:[#allocation5 + $0x1b30] sm:$0xff]
    %v1097 = vld [vmem:[#allocation5 + $0x1b38] sm:$0xff]
    %v1098 = vld [vmem:[#allocation5 + $0x1b40] sm:$0xff]
    %v1099 = vld [vmem:[#allocation5 + $0x1b48] sm:$0xff]
    %v1100 = vld [vmem:[#allocation5 + $0x1b50] sm:$0xff]
    %v1101 = vld [vmem:[#allocation5 + $0x1b58] sm:$0xff]
    %v1102 = vld [vmem:[#allocation5 + $0x1b60] sm:$0xff]
    %v1103 = vld [vmem:[#allocation5 + $0x1b68] sm:$0xff]
    %v1104 = vld [vmem:[#allocation5 + $0x1b70] sm:$0xff]
    %v1105 = vld [vmem:[#allocation5 + $0x1b78] sm:$0xff]
    %v1106 = vld [vmem:[#allocation5 + $0x1b80] sm:$0xff]
    %v1107 = vld [vmem:[#allocation5 + $0x1b88] sm:$0xff]
    %v1108 = vld [vmem:[#allocation5 + $0x1b90] sm:$0xff]
    %v1109 = vld [vmem:[#allocation5 + $0x1b98] sm:$0xff]
    %v1110 = vld [vmem:[#allocation5 + $0x1ba0] sm:$0xff]
    %v1111 = vld [vmem:[#allocation5 + $0x1ba8] sm:$0xff]
    %v1112 = vld [vmem:[#allocation5 + $0x1bb0] sm:$0xff]
    %v1113 = vld [vmem:[#allocation5 + $0x1bb8] sm:$0xff]
    %v1114 = vld [vmem:[#allocation5 + $0x1bc0] sm:$0xff]
    %v1115 = vld [vmem:[#allocation5 + $0x1bc8] sm:$0xff]
    %v1116 = vld [vmem:[#allocation5 + $0x1bd0] sm:$0xff]
    %v1117 = vld [vmem:[#allocation5 + $0x1bd8] sm:$0xff]
    %v1118 = vld [vmem:[#allocation5 + $0x1be0] sm:$0xff]
    %v1119 = vld [vmem:[#allocation5 + $0x1be8] sm:$0xff]
    %v1120 = vld [vmem:[#allocation5 + $0x1bf0] sm:$0xff]
    %v1121 = vld [vmem:[#allocation5 + $0x1bf8] sm:$0xff]
    %v1122 = vld [vmem:[#allocation5 + $0x1c00] sm:$0xff]
    %v1123 = vld [vmem:[#allocation5 + $0x1c08] sm:$0xff]
    %v1124 = vld [vmem:[#allocation5 + $0x1c10] sm:$0xff]
    %v1125 = vld [vmem:[#allocation5 + $0x1c18] sm:$0xff]
    %v1126 = vld [vmem:[#allocation5 + $0x1c20] sm:$0xff]
    %v1127 = vld [vmem:[#allocation5 + $0x1c28] sm:$0xff]
    %v1128 = vld [vmem:[#allocation5 + $0x1c30] sm:$0xff]
    %v1129 = vld [vmem:[#allocation5 + $0x1c38] sm:$0xff]
    %v1130 = vld [vmem:[#allocation5 + $0x1c40] sm:$0xff]
    %v1131 = vld [vmem:[#allocation5 + $0x1c48] sm:$0xff]
    %v1132 = vld [vmem:[#allocation5 + $0x1c50] sm:$0xff]
    %v1133 = vld [vmem:[#allocation5 + $0x1c58] sm:$0xff]
    %v1134 = vld [vmem:[#allocation5 + $0x1c60] sm:$0xff]
    %v1135 = vld [vmem:[#allocation5 + $0x1c68] sm:$0xff]
    %v1136 = vld [vmem:[#allocation5 + $0x1c70] sm:$0xff]
    %v1137 = vld [vmem:[#allocation5 + $0x1c78] sm:$0xff]
    %v1138 = vld [vmem:[#allocation5 + $0x1c80] sm:$0xff]
    %v1139 = vld [vmem:[#allocation5 + $0x1c88] sm:$0xff]
    %v1140 = vld [vmem:[#allocation5 + $0x1c90] sm:$0xff]
    %v1141 = vld [vmem:[#allocation5 + $0x1c98] sm:$0xff]
    %v1142 = vld [vmem:[#allocation5 + $0x1ca0] sm:$0xff]
    %v1143 = vld [vmem:[#allocation5 + $0x1ca8] sm:$0xff]
    %v1144 = vld [vmem:[#allocation5 + $0x1cb0] sm:$0xff]
    %v1145 = vld [vmem:[#allocation5 + $0x1cb8] sm:$0xff]
    %v1146 = vld [vmem:[#allocation5 + $0x1cc0] sm:$0xff]
    %v1147 = vld [vmem:[#allocation5 + $0x1cc8] sm:$0xff]
    %v1148 = vld [vmem:[#allocation5 + $0x1cd0] sm:$0xff]
    %v1149 = vld [vmem:[#allocation5 + $0x1cd8] sm:$0xff]
    %v1150 = vld [vmem:[#allocation5 + $0x1ce0] sm:$0xff]
    %v1151 = vld [vmem:[#allocation5 + $0x1ce8] sm:$0xff]
    %v1152 = vld [vmem:[#allocation5 + $0x1cf0] sm:$0xff]
    %v1153 = vld [vmem:[#allocation5 + $0x1cf8] sm:$0xff]
    %v1154 = vld [vmem:[#allocation5 + $0x1d00] sm:$0xff]
    %v1155 = vld [vmem:[#allocation5 + $0x1d08] sm:$0xff]
    %v1156 = vld [vmem:[#allocation5 + $0x1d10] sm:$0xff]
    %v1157 = vld [vmem:[#allocation5 + $0x1d18] sm:$0xff]
    %v1158 = vld [vmem:[#allocation5 + $0x1d20] sm:$0xff]
    %v1159 = vld [vmem:[#allocation5 + $0x1d28] sm:$0xff]
    %v1160 = vld [vmem:[#allocation5 + $0x1d30] sm:$0xff]
    %v1161 = vld [vmem:[#allocation5 + $0x1d38] sm:$0xff]
    %v1162 = vld [vmem:[#allocation5 + $0x1d40] sm:$0xff]
    %v1163 = vld [vmem:[#allocation5 + $0x1d48] sm:$0xff]
    %v1164 = vld [vmem:[#allocation5 + $0x1d50] sm:$0xff]
    %v1165 = vld [vmem:[#allocation5 + $0x1d58] sm:$0xff]
    %v1166 = vld [vmem:[#allocation5 + $0x1d60] sm:$0xff]
    %v1167 = vld [vmem:[#allocation5 + $0x1d68] sm:$0xff]
    %v1168 = vld [vmem:[#allocation5 + $0x1d70] sm:$0xff]
    %v1169 = vld [vmem:[#allocation5 + $0x1d78] sm:$0xff]
    %v1170 = vld [vmem:[#allocation5 + $0x1d80] sm:$0xff]
    %v1171 = vld [vmem:[#allocation5 + $0x1d88] sm:$0xff]
    %v1172 = vld [vmem:[#allocation5 + $0x1d90] sm:$0xff]
    %v1173 = vld [vmem:[#allocation5 + $0x1d98] sm:$0xff]
    %v1174 = vld [vmem:[#allocation5 + $0x1da0] sm:$0xff]
    %v1175 = vld [vmem:[#allocation5 + $0x1da8] sm:$0xff]
    %v1176 = vld [vmem:[#allocation5 + $0x1db0] sm:$0xff]
    %v1177 = vld [vmem:[#allocation5 + $0x1db8] sm:$0xff]
    %v1178 = vld [vmem:[#allocation5 + $0x1dc0] sm:$0xff]
    %v1179 = vld [vmem:[#allocation5 + $0x1dc8] sm:$0xff]
    %v1180 = vld [vmem:[#allocation5 + $0x1dd0] sm:$0xff]
    %v1181 = vld [vmem:[#allocation5 + $0x1dd8] sm:$0xff]
    %v1182 = vld [vmem:[#allocation5 + $0x1de0] sm:$0xff]
    %v1183 = vld [vmem:[#allocation5 + $0x1de8] sm:$0xff]
    %v1184 = vld [vmem:[#allocation5 + $0x1df0] sm:$0xff]
    %v1185 = vld [vmem:[#allocation5 + $0x1df8] sm:$0xff]
    %v1186 = vld [vmem:[#allocation5 + $0x1e00] sm:$0xff]
    %v1187 = vld [vmem:[#allocation5 + $0x1e08] sm:$0xff]
    %v1188 = vld [vmem:[#allocation5 + $0x1e10] sm:$0xff]
    %v1189 = vld [vmem:[#allocation5 + $0x1e18] sm:$0xff]
    %v1190 = vld [vmem:[#allocation5 + $0x1e20] sm:$0xff]
    %v1191 = vld [vmem:[#allocation5 + $0x1e28] sm:$0xff]
    %v1192 = vld [vmem:[#allocation5 + $0x1e30] sm:$0xff]
    %v1193 = vld [vmem:[#allocation5 + $0x1e38] sm:$0xff]
    %v1194 = vld [vmem:[#allocation5 + $0x1e40] sm:$0xff]
    %v1195 = vld [vmem:[#allocation5 + $0x1e48] sm:$0xff]
    %v1196 = vld [vmem:[#allocation5 + $0x1e50] sm:$0xff]
    %v1197 = vld [vmem:[#allocation5 + $0x1e58] sm:$0xff]
    %v1198 = vld [vmem:[#allocation5 + $0x1e60] sm:$0xff]
    %v1199 = vld [vmem:[#allocation5 + $0x1e68] sm:$0xff]
    %v1200 = vld [vmem:[#allocation5 + $0x1e70] sm:$0xff]
    %v1201 = vld [vmem:[#allocation5 + $0x1e78] sm:$0xff]
    %v1202 = vld [vmem:[#allocation5 + $0x1e80] sm:$0xff]
    %v1203 = vld [vmem:[#allocation5 + $0x1e88] sm:$0xff]
    %v1204 = vld [vmem:[#allocation5 + $0x1e90] sm:$0xff]
    %v1205 = vld [vmem:[#allocation5 + $0x1e98] sm:$0xff]
    %v1206 = vld [vmem:[#allocation5 + $0x1ea0] sm:$0xff]
    %v1207 = vld [vmem:[#allocation5 + $0x1ea8] sm:$0xff]
    %v1208 = vld [vmem:[#allocation5 + $0x1eb0] sm:$0xff]
    %v1209 = vld [vmem:[#allocation5 + $0x1eb8] sm:$0xff]
    %v1210 = vld [vmem:[#allocation5 + $0x1ec0] sm:$0xff]
    %v1211 = vld [vmem:[#allocation5 + $0x1ec8] sm:$0xff]
    %v1212 = vld [vmem:[#allocation5 + $0x1ed0] sm:$0xff]
    %v1213 = vld [vmem:[#allocation5 + $0x1ed8] sm:$0xff]
    %v1214 = vld [vmem:[#allocation5 + $0x1ee0] sm:$0xff]
    %v1215 = vld [vmem:[#allocation5 + $0x1ee8] sm:$0xff]
    %v1216 = vld [vmem:[#allocation5 + $0x1ef0] sm:$0xff]
    %v1217 = vld [vmem:[#allocation5 + $0x1ef8] sm:$0xff]
    %v1218 = vld [vmem:[#allocation5 + $0x1f00] sm:$0xff]
    %v1219 = vld [vmem:[#allocation5 + $0x1f08] sm:$0xff]
    %v1220 = vld [vmem:[#allocation5 + $0x1f10] sm:$0xff]
    %v1221 = vld [vmem:[#allocation5 + $0x1f18] sm:$0xff]
    %v1222 = vld [vmem:[#allocation5 + $0x1f20] sm:$0xff]
    %v1223 = vld [vmem:[#allocation5 + $0x1f28] sm:$0xff]
    %v1224 = vld [vmem:[#allocation5 + $0x1f30] sm:$0xff]
    %v1225 = vld [vmem:[#allocation5 + $0x1f38] sm:$0xff]
    %v1226 = vld [vmem:[#allocation5 + $0x1f40] sm:$0xff]
    %v1227 = vld [vmem:[#allocation5 + $0x1f48] sm:$0xff]
    %v1228 = vld [vmem:[#allocation5 + $0x1f50] sm:$0xff]
    %v1229 = vld [vmem:[#allocation5 + $0x1f58] sm:$0xff]
    %v1230 = vld [vmem:[#allocation5 + $0x1f60] sm:$0xff]
    %v1231 = vld [vmem:[#allocation5 + $0x1f68] sm:$0xff]
    %v1232 = vld [vmem:[#allocation5 + $0x1f70] sm:$0xff]
    %v1233 = vld [vmem:[#allocation5 + $0x1f78] sm:$0xff]
    %v1234 = vld [vmem:[#allocation5 + $0x1f80] sm:$0xff]
    %v1235 = vld [vmem:[#allocation5 + $0x1f88] sm:$0xff]
    %v1236 = vld [vmem:[#allocation5 + $0x1f90] sm:$0xff]
    %v1237 = vld [vmem:[#allocation5 + $0x1f98] sm:$0xff]
    %v1238 = vld [vmem:[#allocation5 + $0x1fa0] sm:$0xff]
    %v1239 = vld [vmem:[#allocation5 + $0x1fa8] sm:$0xff]
    %v1240 = vld [vmem:[#allocation5 + $0x1fb0] sm:$0xff]
    %v1241 = vld [vmem:[#allocation5 + $0x1fb8] sm:$0xff]
    %v1242 = vld [vmem:[#allocation5 + $0x1fc0] sm:$0xff]
    %v1243 = vld [vmem:[#allocation5 + $0x1fc8] sm:$0xff]
    %v1244 = vld [vmem:[#allocation5 + $0x1fd0] sm:$0xff]
    %v1245 = vld [vmem:[#allocation5 + $0x1fd8] sm:$0xff]
    %v1246 = vld [vmem:[#allocation5 + $0x1fe0] sm:$0xff]
    %v1247 = vld [vmem:[#allocation5 + $0x1fe8] sm:$0xff]
    %v1248 = vld [vmem:[#allocation5 + $0x1ff0] sm:$0xff]
    %v1249 = vld [vmem:[#allocation5 + $0x1ff8] sm:$0xff]
    %v1250 = vld [vmem:[#allocation5 + $0x2000] sm:$0xff]
    %v1251 = vld [vmem:[#allocation5 + $0x2008] sm:$0xff]
    %v1252 = vld [vmem:[#allocation5 + $0x2010] sm:$0xff]
    %v1253 = vld [vmem:[#allocation5 + $0x2018] sm:$0xff]
    %v1254 = vld [vmem:[#allocation5 + $0x2020] sm:$0xff]
    %v1255 = vld [vmem:[#allocation5 + $0x2028] sm:$0xff]
    %v1256 = vld [vmem:[#allocation5 + $0x2030] sm:$0xff]
    %v1257 = vld [vmem:[#allocation5 + $0x2038] sm:$0xff]
    %v1258 = vld [vmem:[#allocation5 + $0x2040] sm:$0xff]
    %v1259 = vld [vmem:[#allocation5 + $0x2048] sm:$0xff]
    %v1260 = vld [vmem:[#allocation5 + $0x2050] sm:$0xff]
    %v1261 = vld [vmem:[#allocation5 + $0x2058] sm:$0xff]
    %v1262 = vld [vmem:[#allocation5 + $0x2060] sm:$0xff]
    %v1263 = vld [vmem:[#allocation5 + $0x2068] sm:$0xff]
    %v1264 = vld [vmem:[#allocation5 + $0x2070] sm:$0xff]
    %v1265 = vld [vmem:[#allocation5 + $0x2078] sm:$0xff]
    %v1266 = vld [vmem:[#allocation5 + $0x2080] sm:$0xff]
    %v1267 = vld [vmem:[#allocation5 + $0x2088] sm:$0xff]
    %v1268 = vld [vmem:[#allocation5 + $0x2090] sm:$0xff]
    %v1269 = vld [vmem:[#allocation5 + $0x2098] sm:$0xff]
    %v1270 = vld [vmem:[#allocation5 + $0x20a0] sm:$0xff]
    %v1271 = vld [vmem:[#allocation5 + $0x20a8] sm:$0xff]
    %v1272 = vld [vmem:[#allocation5 + $0x20b0] sm:$0xff]
    %v1273 = vld [vmem:[#allocation5 + $0x20b8] sm:$0xff]
    %v1274 = vld [vmem:[#allocation5 + $0x20c0] sm:$0xff]
    %v1275 = vld [vmem:[#allocation5 + $0x20c8] sm:$0xff]
    %v1276 = vld [vmem:[#allocation5 + $0x20d0] sm:$0xff]
    %v1277 = vld [vmem:[#allocation5 + $0x20d8] sm:$0xff]
    %v1278 = vld [vmem:[#allocation5 + $0x20e0] sm:$0xff]
    %v1279 = vld [vmem:[#allocation5 + $0x20e8] sm:$0xff]
    %v1280 = vld [vmem:[#allocation5 + $0x20f0] sm:$0xff]
    %v1281 = vld [vmem:[#allocation5 + $0x20f8] sm:$0xff]
    %v1282 = vld [vmem:[#allocation5 + $0x2100] sm:$0xff]
    %v1283 = vld [vmem:[#allocation5 + $0x2108] sm:$0xff]
    %v1284 = vld [vmem:[#allocation5 + $0x2110] sm:$0xff]
    %v1285 = vld [vmem:[#allocation5 + $0x2118] sm:$0xff]
    %v1286 = vld [vmem:[#allocation5 + $0x2120] sm:$0xff]
    %v1287 = vld [vmem:[#allocation5 + $0x2128] sm:$0xff]
    %v1288 = vld [vmem:[#allocation5 + $0x2130] sm:$0xff]
    %v1289 = vld [vmem:[#allocation5 + $0x2138] sm:$0xff]
    %v1290 = vld [vmem:[#allocation5 + $0x2140] sm:$0xff]
    %v1291 = vld [vmem:[#allocation5 + $0x2148] sm:$0xff]
    %v1292 = vld [vmem:[#allocation5 + $0x2150] sm:$0xff]
    %v1293 = vld [vmem:[#allocation5 + $0x2158] sm:$0xff]
    %v1294 = vld [vmem:[#allocation5 + $0x2160] sm:$0xff]
    %v1295 = vld [vmem:[#allocation5 + $0x2168] sm:$0xff]
    %v1296 = vld [vmem:[#allocation5 + $0x2170] sm:$0xff]
    %v1297 = vld [vmem:[#allocation5 + $0x2178] sm:$0xff]
    %v1298 = vld [vmem:[#allocation5 + $0x2180] sm:$0xff]
    %v1299 = vld [vmem:[#allocation5 + $0x2188] sm:$0xff]
    %v1300 = vld [vmem:[#allocation5 + $0x2190] sm:$0xff]
    %v1301 = vld [vmem:[#allocation5 + $0x2198] sm:$0xff]
    %v1302 = vld [vmem:[#allocation5 + $0x21a0] sm:$0xff]
    %v1303 = vld [vmem:[#allocation5 + $0x21a8] sm:$0xff]
    %v1304 = vld [vmem:[#allocation5 + $0x21b0] sm:$0xff]
    %v1305 = vld [vmem:[#allocation5 + $0x21b8] sm:$0xff]
    %v1306 = vld [vmem:[#allocation5 + $0x21c0] sm:$0xff]
    %v1307 = vld [vmem:[#allocation5 + $0x21c8] sm:$0xff]
    %v1308 = vld [vmem:[#allocation5 + $0x21d0] sm:$0xff]
    %v1309 = vld [vmem:[#allocation5 + $0x21d8] sm:$0xff]
    %v1310 = vld [vmem:[#allocation5 + $0x21e0] sm:$0xff]
    %v1311 = vld [vmem:[#allocation5 + $0x21e8] sm:$0xff]
    %v1312 = vld [vmem:[#allocation5 + $0x21f0] sm:$0xff]
    %v1313 = vld [vmem:[#allocation5 + $0x21f8] sm:$0xff]
    %v1314 = vld [vmem:[#allocation5 + $0x2200] sm:$0xff]
    %v1315 = vld [vmem:[#allocation5 + $0x2208] sm:$0xff]
    %v1316 = vld [vmem:[#allocation5 + $0x2210] sm:$0xff]
    %v1317 = vld [vmem:[#allocation5 + $0x2218] sm:$0xff]
    %v1318 = vld [vmem:[#allocation5 + $0x2220] sm:$0xff]
    %v1319 = vld [vmem:[#allocation5 + $0x2228] sm:$0xff]
    %v1320 = vld [vmem:[#allocation5 + $0x2230] sm:$0xff]
    %v1321 = vld [vmem:[#allocation5 + $0x2238] sm:$0xff]
    %v1322 = vld [vmem:[#allocation5 + $0x2240] sm:$0xff]
    %v1323 = vld [vmem:[#allocation5 + $0x2248] sm:$0xff]
    %v1324 = vld [vmem:[#allocation5 + $0x2250] sm:$0xff]
    %v1325 = vld [vmem:[#allocation5 + $0x2258] sm:$0xff]
    %v1326 = vld [vmem:[#allocation5 + $0x2260] sm:$0xff]
    %v1327 = vld [vmem:[#allocation5 + $0x2268] sm:$0xff]
    %v1328 = vld [vmem:[#allocation5 + $0x2270] sm:$0xff]
    %v1329 = vld [vmem:[#allocation5 + $0x2278] sm:$0xff]
    %v1330 = vld [vmem:[#allocation5 + $0x2280] sm:$0xff]
    %v1331 = vld [vmem:[#allocation5 + $0x2288] sm:$0xff]
    %v1332 = vld [vmem:[#allocation5 + $0x2290] sm:$0xff]
    %v1333 = vld [vmem:[#allocation5 + $0x2298] sm:$0xff]
    %v1334 = vld [vmem:[#allocation5 + $0x22a0] sm:$0xff]
    %v1335 = vld [vmem:[#allocation5 + $0x22a8] sm:$0xff]
    %v1336 = vld [vmem:[#allocation5 + $0x22b0] sm:$0xff]
    %v1337 = vld [vmem:[#allocation5 + $0x22b8] sm:$0xff]
    %v1338 = vld [vmem:[#allocation5 + $0x22c0] sm:$0xff]
    %v1339 = vld [vmem:[#allocation5 + $0x22c8] sm:$0xff]
    %v1340 = vld [vmem:[#allocation5 + $0x22d0] sm:$0xff]
    %v1341 = vld [vmem:[#allocation5 + $0x22d8] sm:$0xff]
    %v1342 = vld [vmem:[#allocation5 + $0x22e0] sm:$0xff]
    %v1343 = vld [vmem:[#allocation5 + $0x22e8] sm:$0xff]
    %v1344 = vld [vmem:[#allocation5 + $0x22f0] sm:$0xff]
    %v1345 = vld [vmem:[#allocation5 + $0x22f8] sm:$0xff]
    %v1346 = vld [vmem:[#allocation5 + $0x2300] sm:$0xff]
    %v1347 = vld [vmem:[#allocation5 + $0x2308] sm:$0xff]
    %v1348 = vld [vmem:[#allocation5 + $0x2310] sm:$0xff]
    %v1349 = vld [vmem:[#allocation5 + $0x2318] sm:$0xff]
    %v1350 = vld [vmem:[#allocation5 + $0x2320] sm:$0xff]
    %v1351 = vld [vmem:[#allocation5 + $0x2328] sm:$0xff]
    %v1352 = vld [vmem:[#allocation5 + $0x2330] sm:$0xff]
    %v1353 = vld [vmem:[#allocation5 + $0x2338] sm:$0xff]
    %v1354 = vld [vmem:[#allocation5 + $0x2340] sm:$0xff]
    %v1355 = vld [vmem:[#allocation5 + $0x2348] sm:$0xff]
    %v1356 = vld [vmem:[#allocation5 + $0x2350] sm:$0xff]
    %v1357 = vld [vmem:[#allocation5 + $0x2358] sm:$0xff]
    %v1358 = vld [vmem:[#allocation5 + $0x2360] sm:$0xff]
    %v1359 = vld [vmem:[#allocation5 + $0x2368] sm:$0xff]
    %v1360 = vld [vmem:[#allocation5 + $0x2370] sm:$0xff]
    %v1361 = vld [vmem:[#allocation5 + $0x2378] sm:$0xff]
    %v1362 = vld [vmem:[#allocation5 + $0x2380] sm:$0xff]
    %v1363 = vld [vmem:[#allocation5 + $0x2388] sm:$0xff]
    %v1364 = vld [vmem:[#allocation5 + $0x2390] sm:$0xff]
    %v1365 = vld [vmem:[#allocation5 + $0x2398] sm:$0xff]
    %v1366 = vld [vmem:[#allocation5 + $0x23a0] sm:$0xff]
    %v1367 = vld [vmem:[#allocation5 + $0x23a8] sm:$0xff]
    %v1368 = vld [vmem:[#allocation5 + $0x23b0] sm:$0xff]
    %v1369 = vld [vmem:[#allocation5 + $0x23b8] sm:$0xff]
    %v1370 = vld [vmem:[#allocation5 + $0x23c0] sm:$0xff]
    %v1371 = vld [vmem:[#allocation5 + $0x23c8] sm:$0xff]
    %v1372 = vld [vmem:[#allocation5 + $0x23d0] sm:$0xff]
    %v1373 = vld [vmem:[#allocation5 + $0x23d8] sm:$0xff]
    %v1374 = vld [vmem:[#allocation5 + $0x23e0] sm:$0xff]
    %v1375 = vld [vmem:[#allocation5 + $0x23e8] sm:$0xff]
    %v1376 = vld [vmem:[#allocation5 + $0x23f0] sm:$0xff]
    %v1377 = vld [vmem:[#allocation5 + $0x23f8] sm:$0xff]
    %v1378 = vld [vmem:[#allocation7] sm:$0xff]
    %v1379 = vld [vmem:[#allocation7 + $0x8] sm:$0xff]
    %v1380 = vld [vmem:[#allocation7 + $0x10] sm:$0xff]
    %v1384 = vlaneseq
    %v1385 = vshrl.u32 %v1384, 7
    %v1386 = vsub.s32 0, %v1385
    %v1387 = vrot.slane %v1378, %v1386
    %v1388 = vlaneseq
    %v1389 = vshrl.u32 %v1388, 7
    %v1390 = vsub.s32 1, %v1389
    %v1391 = vrot.slane %v1378, %v1390
    %v1392 = vlaneseq
    %v1393 = vshrl.u32 %v1392, 7
    %v1394 = vsub.s32 2, %v1393
    %v1395 = vrot.slane %v1378, %v1394
    %v1396 = vlaneseq
    %v1397 = vshrl.u32 %v1396, 7
    %v1398 = vsub.s32 3, %v1397
    %v1399 = vrot.slane %v1378, %v1398
    %v1400 = vlaneseq
    %v1401 = vshrl.u32 %v1400, 7
    %v1402 = vsub.s32 4, %v1401
    %v1403 = vrot.slane %v1378, %v1402
    %v1404 = vlaneseq
    %v1405 = vshrl.u32 %v1404, 7
    %v1406 = vsub.s32 5, %v1405
    %v1407 = vrot.slane %v1378, %v1406
    %v1408 = vlaneseq
    %v1409 = vshrl.u32 %v1408, 7
    %v1410 = vsub.s32 6, %v1409
    %v1411 = vrot.slane %v1378, %v1410
    %v1412 = vlaneseq
    %v1413 = vshrl.u32 %v1412, 7
    %v1414 = vsub.s32 7, %v1413
    %v1415 = vrot.slane %v1378, %v1414
    %v1416 = vlaneseq
    %v1417 = vshrl.u32 %v1416, 7
    %v1418 = vsub.s32 0, %v1417
    %v1419 = vrot.slane %v1379, %v1418
    %v1420 = vlaneseq
    %v1421 = vshrl.u32 %v1420, 7
    %v1422 = vsub.s32 1, %v1421
    %v1423 = vrot.slane %v1379, %v1422
    %v1424 = vlaneseq
    %v1425 = vshrl.u32 %v1424, 7
    %v1426 = vsub.s32 2, %v1425
    %v1427 = vrot.slane %v1379, %v1426
    %v1428 = vlaneseq
    %v1429 = vshrl.u32 %v1428, 7
    %v1430 = vsub.s32 3, %v1429
    %v1431 = vrot.slane %v1379, %v1430
    %v1432 = vlaneseq
    %v1433 = vshrl.u32 %v1432, 7
    %v1434 = vsub.s32 4, %v1433
    %v1435 = vrot.slane %v1379, %v1434
    %v1436 = vlaneseq
    %v1437 = vshrl.u32 %v1436, 7
    %v1438 = vsub.s32 5, %v1437
    %v1439 = vrot.slane %v1379, %v1438
    %v1440 = vlaneseq
    %v1441 = vshrl.u32 %v1440, 7
    %v1442 = vsub.s32 6, %v1441
    %v1443 = vrot.slane %v1379, %v1442
    %v1444 = vlaneseq
    %v1445 = vshrl.u32 %v1444, 7
    %v1446 = vsub.s32 7, %v1445
    %v1447 = vrot.slane %v1379, %v1446
    %v1448 = vlaneseq
    %v1449 = vshrl.u32 %v1448, 7
    %v1450 = vsub.s32 0, %v1449
    %v1451 = vrot.slane %v1380, %v1450
    %v1452 = vlaneseq
    %v1453 = vshrl.u32 %v1452, 7
    %v1454 = vsub.s32 1, %v1453
    %v1455 = vrot.slane %v1380, %v1454
    %v1456 = vlaneseq
    %v1457 = vshrl.u32 %v1456, 7
    %v1458 = vsub.s32 2, %v1457
    %v1459 = vrot.slane %v1380, %v1458
    %v1460 = vlaneseq
    %v1461 = vshrl.u32 %v1460, 7
    %v1462 = vsub.s32 3, %v1461
    %v1463 = vrot.slane %v1380, %v1462
    %v1464 = vlaneseq
    %v1465 = vshrl.u32 %v1464, 7
    %v1466 = vsub.s32 4, %v1465
    %v1467 = vrot.slane %v1380, %v1466
    %v1468 = vlaneseq
    %v1469 = vshrl.u32 %v1468, 7
    %v1470 = vsub.s32 5, %v1469
    %v1471 = vrot.slane %v1380, %v1470
    %v1472 = vlaneseq
    %v1473 = vshrl.u32 %v1472, 7
    %v1474 = vsub.s32 6, %v1473
    %v1475 = vrot.slane %v1380, %v1474
    %v1476 = vlaneseq
    %v1477 = vshrl.u32 %v1476, 7
    %v1478 = vsub.s32 7, %v1477
    %v1479 = vrot.slane %v1380, %v1478
    %v2656 = vunpack.c.l.b16 %v226
    %v2657 = vunpack.c.h.b16 %v226
    %v2658 = vunpack.c.l.b16 %v227
    %v2659 = vunpack.c.h.b16 %v227
    %v2660 = vunpack.c.l.b16 %v228
    %v2661 = vunpack.c.h.b16 %v228
    %v2662 = vunpack.c.l.b16 %v229
    %v2663 = vunpack.c.h.b16 %v229
    %v2664 = vunpack.c.l.b16 %v230
    %v2665 = vunpack.c.h.b16 %v230
    %v2666 = vunpack.c.l.b16 %v231
    %v2667 = vunpack.c.h.b16 %v231
    %v2668 = vunpack.c.l.b16 %v232
    %v2669 = vunpack.c.h.b16 %v232
    %v2670 = vunpack.c.l.b16 %v233
    %v2671 = vunpack.c.h.b16 %v233
    %v2672 = vunpack.c.l.b16 %v234
    %v2673 = vunpack.c.h.b16 %v234
    %v2674 = vunpack.c.l.b16 %v235
    %v2675 = vunpack.c.h.b16 %v235
    %v2676 = vunpack.c.l.b16 %v236
    %v2677 = vunpack.c.h.b16 %v236
    %v2678 = vunpack.c.l.b16 %v237
    %v2679 = vunpack.c.h.b16 %v237
    %v2680 = vunpack.c.l.b16 %v238
    %v2681 = vunpack.c.h.b16 %v238
    %v2682 = vunpack.c.l.b16 %v239
    %v2683 = vunpack.c.h.b16 %v239
    %v2684 = vunpack.c.l.b16 %v240
    %v2685 = vunpack.c.h.b16 %v240
    %v2686 = vunpack.c.l.b16 %v241
    %v2687 = vunpack.c.h.b16 %v241
    %v2688 = vunpack.c.l.b16 %v242
    %v2689 = vunpack.c.h.b16 %v242
    %v2690 = vunpack.c.l.b16 %v243
    %v2691 = vunpack.c.h.b16 %v243
    %v2692 = vunpack.c.l.b16 %v244
    %v2693 = vunpack.c.h.b16 %v244
    %v2694 = vunpack.c.l.b16 %v245
    %v2695 = vunpack.c.h.b16 %v245
    %v2696 = vunpack.c.l.b16 %v246
    %v2697 = vunpack.c.h.b16 %v246
    %v2698 = vunpack.c.l.b16 %v247
    %v2699 = vunpack.c.h.b16 %v247
    %v2700 = vunpack.c.l.b16 %v248
    %v2701 = vunpack.c.h.b16 %v248
    %v2702 = vunpack.c.l.b16 %v249
    %v2703 = vunpack.c.h.b16 %v249
    %v2704 = vunpack.c.l.b16 %v250
    %v2705 = vunpack.c.h.b16 %v250
    %v2706 = vunpack.c.l.b16 %v251
    %v2707 = vunpack.c.h.b16 %v251
    %v2708 = vunpack.c.l.b16 %v252
    %v2709 = vunpack.c.h.b16 %v252
    %v2710 = vunpack.c.l.b16 %v253
    %v2711 = vunpack.c.h.b16 %v253
    %v2712 = vunpack.c.l.b16 %v254
    %v2713 = vunpack.c.h.b16 %v254
    %v2714 = vunpack.c.l.b16 %v255
    %v2715 = vunpack.c.h.b16 %v255
    %v2716 = vunpack.c.l.b16 %v256
    %v2717 = vunpack.c.h.b16 %v256
    %v2718 = vunpack.c.l.b16 %v257
    %v2719 = vunpack.c.h.b16 %v257
    %v2720 = vunpack.c.l.b16 %v258
    %v2721 = vunpack.c.h.b16 %v258
    %v2722 = vunpack.c.l.b16 %v259
    %v2723 = vunpack.c.h.b16 %v259
    %v2724 = vunpack.c.l.b16 %v260
    %v2725 = vunpack.c.h.b16 %v260
    %v2726 = vunpack.c.l.b16 %v261
    %v2727 = vunpack.c.h.b16 %v261
    %v2728 = vunpack.c.l.b16 %v262
    %v2729 = vunpack.c.h.b16 %v262
    %v2730 = vunpack.c.l.b16 %v263
    %v2731 = vunpack.c.h.b16 %v263
    %v2732 = vunpack.c.l.b16 %v264
    %v2733 = vunpack.c.h.b16 %v264
    %v2734 = vunpack.c.l.b16 %v265
    %v2735 = vunpack.c.h.b16 %v265
    %v2736 = vunpack.c.l.b16 %v266
    %v2737 = vunpack.c.h.b16 %v266
    %v2738 = vunpack.c.l.b16 %v267
    %v2739 = vunpack.c.h.b16 %v267
    %v2740 = vunpack.c.l.b16 %v268
    %v2741 = vunpack.c.h.b16 %v268
    %v2742 = vunpack.c.l.b16 %v269
    %v2743 = vunpack.c.h.b16 %v269
    %v2744 = vunpack.c.l.b16 %v270
    %v2745 = vunpack.c.h.b16 %v270
    %v2746 = vunpack.c.l.b16 %v271
    %v2747 = vunpack.c.h.b16 %v271
    %v2748 = vunpack.c.l.b16 %v272
    %v2749 = vunpack.c.h.b16 %v272
    %v2750 = vunpack.c.l.b16 %v273
    %v2751 = vunpack.c.h.b16 %v273
    %v2752 = vunpack.c.l.b16 %v274
    %v2753 = vunpack.c.h.b16 %v274
    %v2754 = vunpack.c.l.b16 %v275
    %v2755 = vunpack.c.h.b16 %v275
    %v2756 = vunpack.c.l.b16 %v276
    %v2757 = vunpack.c.h.b16 %v276
    %v2758 = vunpack.c.l.b16 %v277
    %v2759 = vunpack.c.h.b16 %v277
    %v2760 = vunpack.c.l.b16 %v278
    %v2761 = vunpack.c.h.b16 %v278
    %v2762 = vunpack.c.l.b16 %v279
    %v2763 = vunpack.c.h.b16 %v279
    %v2764 = vunpack.c.l.b16 %v280
    %v2765 = vunpack.c.h.b16 %v280
    %v2766 = vunpack.c.l.b16 %v281
    %v2767 = vunpack.c.h.b16 %v281
    %v2768 = vunpack.c.l.b16 %v282
    %v2769 = vunpack.c.h.b16 %v282
    %v2770 = vunpack.c.l.b16 %v283
    %v2771 = vunpack.c.h.b16 %v283
    %v2772 = vunpack.c.l.b16 %v284
    %v2773 = vunpack.c.h.b16 %v284
    %v2774 = vunpack.c.l.b16 %v285
    %v2775 = vunpack.c.h.b16 %v285
    %v2776 = vunpack.c.l.b16 %v286
    %v2777 = vunpack.c.h.b16 %v286
    %v2778 = vunpack.c.l.b16 %v287
    %v2779 = vunpack.c.h.b16 %v287
    %v2780 = vunpack.c.l.b16 %v288
    %v2781 = vunpack.c.h.b16 %v288
    %v2782 = vunpack.c.l.b16 %v289
    %v2783 = vunpack.c.h.b16 %v289
    %v2784 = vunpack.c.l.b16 %v290
    %v2785 = vunpack.c.h.b16 %v290
    %v2786 = vunpack.c.l.b16 %v291
    %v2787 = vunpack.c.h.b16 %v291
    %v2788 = vunpack.c.l.b16 %v292
    %v2789 = vunpack.c.h.b16 %v292
    %v2790 = vunpack.c.l.b16 %v293
    %v2791 = vunpack.c.h.b16 %v293
    %v2792 = vunpack.c.l.b16 %v294
    %v2793 = vunpack.c.h.b16 %v294
    %v2794 = vunpack.c.l.b16 %v295
    %v2795 = vunpack.c.h.b16 %v295
    %v2796 = vunpack.c.l.b16 %v296
    %v2797 = vunpack.c.h.b16 %v296
    %v2798 = vunpack.c.l.b16 %v297
    %v2799 = vunpack.c.h.b16 %v297
    %v2800 = vunpack.c.l.b16 %v298
    %v2801 = vunpack.c.h.b16 %v298
    %v2802 = vunpack.c.l.b16 %v299
    %v2803 = vunpack.c.h.b16 %v299
    %v2804 = vunpack.c.l.b16 %v300
    %v2805 = vunpack.c.h.b16 %v300
    %v2806 = vunpack.c.l.b16 %v301
    %v2807 = vunpack.c.h.b16 %v301
    %v2808 = vunpack.c.l.b16 %v302
    %v2809 = vunpack.c.h.b16 %v302
    %v2810 = vunpack.c.l.b16 %v303
    %v2811 = vunpack.c.h.b16 %v303
    %v2812 = vunpack.c.l.b16 %v304
    %v2813 = vunpack.c.h.b16 %v304
    %v2814 = vunpack.c.l.b16 %v305
    %v2815 = vunpack.c.h.b16 %v305
    %v2816 = vunpack.c.l.b16 %v306
    %v2817 = vunpack.c.h.b16 %v306
    %v2818 = vunpack.c.l.b16 %v307
    %v2819 = vunpack.c.h.b16 %v307
    %v2820 = vunpack.c.l.b16 %v308
    %v2821 = vunpack.c.h.b16 %v308
    %v2822 = vunpack.c.l.b16 %v309
    %v2823 = vunpack.c.h.b16 %v309
    %v2824 = vunpack.c.l.b16 %v310
    %v2825 = vunpack.c.h.b16 %v310
    %v2826 = vunpack.c.l.b16 %v311
    %v2827 = vunpack.c.h.b16 %v311
    %v2828 = vunpack.c.l.b16 %v312
    %v2829 = vunpack.c.h.b16 %v312
    %v2830 = vunpack.c.l.b16 %v313
    %v2831 = vunpack.c.h.b16 %v313
    %v2832 = vunpack.c.l.b16 %v314
    %v2833 = vunpack.c.h.b16 %v314
    %v2834 = vunpack.c.l.b16 %v315
    %v2835 = vunpack.c.h.b16 %v315
    %v2836 = vunpack.c.l.b16 %v316
    %v2837 = vunpack.c.h.b16 %v316
    %v2838 = vunpack.c.l.b16 %v317
    %v2839 = vunpack.c.h.b16 %v317
    %v2840 = vunpack.c.l.b16 %v318
    %v2841 = vunpack.c.h.b16 %v318
    %v2842 = vunpack.c.l.b16 %v319
    %v2843 = vunpack.c.h.b16 %v319
    %v2844 = vunpack.c.l.b16 %v320
    %v2845 = vunpack.c.h.b16 %v320
    %v2846 = vunpack.c.l.b16 %v321
    %v2847 = vunpack.c.h.b16 %v321
    %v2848 = vunpack.c.l.b16 %v322
    %v2849 = vunpack.c.h.b16 %v322
    %v2850 = vunpack.c.l.b16 %v323
    %v2851 = vunpack.c.h.b16 %v323
    %v2852 = vunpack.c.l.b16 %v324
    %v2853 = vunpack.c.h.b16 %v324
    %v2854 = vunpack.c.l.b16 %v325
    %v2855 = vunpack.c.h.b16 %v325
    %v2856 = vunpack.c.l.b16 %v326
    %v2857 = vunpack.c.h.b16 %v326
    %v2858 = vunpack.c.l.b16 %v327
    %v2859 = vunpack.c.h.b16 %v327
    %v2860 = vunpack.c.l.b16 %v328
    %v2861 = vunpack.c.h.b16 %v328
    %v2862 = vunpack.c.l.b16 %v329
    %v2863 = vunpack.c.h.b16 %v329
    %v2864 = vunpack.c.l.b16 %v330
    %v2865 = vunpack.c.h.b16 %v330
    %v2866 = vunpack.c.l.b16 %v331
    %v2867 = vunpack.c.h.b16 %v331
    %v2868 = vunpack.c.l.b16 %v332
    %v2869 = vunpack.c.h.b16 %v332
    %v2870 = vunpack.c.l.b16 %v333
    %v2871 = vunpack.c.h.b16 %v333
    %v2872 = vunpack.c.l.b16 %v334
    %v2873 = vunpack.c.h.b16 %v334
    %v2874 = vunpack.c.l.b16 %v335
    %v2875 = vunpack.c.h.b16 %v335
    %v2876 = vunpack.c.l.b16 %v336
    %v2877 = vunpack.c.h.b16 %v336
    %v2878 = vunpack.c.l.b16 %v337
    %v2879 = vunpack.c.h.b16 %v337
    %v2880 = vunpack.c.l.b16 %v338
    %v2881 = vunpack.c.h.b16 %v338
    %v2882 = vunpack.c.l.b16 %v339
    %v2883 = vunpack.c.h.b16 %v339
    %v2884 = vunpack.c.l.b16 %v340
    %v2885 = vunpack.c.h.b16 %v340
    %v2886 = vunpack.c.l.b16 %v341
    %v2887 = vunpack.c.h.b16 %v341
    %v2888 = vunpack.c.l.b16 %v342
    %v2889 = vunpack.c.h.b16 %v342
    %v2890 = vunpack.c.l.b16 %v343
    %v2891 = vunpack.c.h.b16 %v343
    %v2892 = vunpack.c.l.b16 %v344
    %v2893 = vunpack.c.h.b16 %v344
    %v2894 = vunpack.c.l.b16 %v345
    %v2895 = vunpack.c.h.b16 %v345
    %v2896 = vunpack.c.l.b16 %v346
    %v2897 = vunpack.c.h.b16 %v346
    %v2898 = vunpack.c.l.b16 %v347
    %v2899 = vunpack.c.h.b16 %v347
    %v2900 = vunpack.c.l.b16 %v348
    %v2901 = vunpack.c.h.b16 %v348
    %v2902 = vunpack.c.l.b16 %v349
    %v2903 = vunpack.c.h.b16 %v349
    %v2904 = vunpack.c.l.b16 %v350
    %v2905 = vunpack.c.h.b16 %v350
    %v2906 = vunpack.c.l.b16 %v351
    %v2907 = vunpack.c.h.b16 %v351
    %v2908 = vunpack.c.l.b16 %v352
    %v2909 = vunpack.c.h.b16 %v352
    %v2910 = vunpack.c.l.b16 %v353
    %v2911 = vunpack.c.h.b16 %v353
    %v2912 = vunpack.c.l.b16 %v354
    %v2913 = vunpack.c.h.b16 %v354
    %v2914 = vunpack.c.l.b16 %v355
    %v2915 = vunpack.c.h.b16 %v355
    %v2916 = vunpack.c.l.b16 %v356
    %v2917 = vunpack.c.h.b16 %v356
    %v2918 = vunpack.c.l.b16 %v357
    %v2919 = vunpack.c.h.b16 %v357
    %v2920 = vunpack.c.l.b16 %v358
    %v2921 = vunpack.c.h.b16 %v358
    %v2922 = vunpack.c.l.b16 %v359
    %v2923 = vunpack.c.h.b16 %v359
    %v2924 = vunpack.c.l.b16 %v360
    %v2925 = vunpack.c.h.b16 %v360
    %v2926 = vunpack.c.l.b16 %v361
    %v2927 = vunpack.c.h.b16 %v361
    %v2928 = vunpack.c.l.b16 %v362
    %v2929 = vunpack.c.h.b16 %v362
    %v2930 = vunpack.c.l.b16 %v363
    %v2931 = vunpack.c.h.b16 %v363
    %v2932 = vunpack.c.l.b16 %v364
    %v2933 = vunpack.c.h.b16 %v364
    %v2934 = vunpack.c.l.b16 %v365
    %v2935 = vunpack.c.h.b16 %v365
    %v2936 = vunpack.c.l.b16 %v366
    %v2937 = vunpack.c.h.b16 %v366
    %v2938 = vunpack.c.l.b16 %v367
    %v2939 = vunpack.c.h.b16 %v367
    %v2940 = vunpack.c.l.b16 %v368
    %v2941 = vunpack.c.h.b16 %v368
    %v2942 = vunpack.c.l.b16 %v369
    %v2943 = vunpack.c.h.b16 %v369
    %v2944 = vunpack.c.l.b16 %v370
    %v2945 = vunpack.c.h.b16 %v370
    %v2946 = vunpack.c.l.b16 %v371
    %v2947 = vunpack.c.h.b16 %v371
    %v2948 = vunpack.c.l.b16 %v372
    %v2949 = vunpack.c.h.b16 %v372
    %v2950 = vunpack.c.l.b16 %v373
    %v2951 = vunpack.c.h.b16 %v373
    %v2952 = vunpack.c.l.b16 %v374
    %v2953 = vunpack.c.h.b16 %v374
    %v2954 = vunpack.c.l.b16 %v375
    %v2955 = vunpack.c.h.b16 %v375
    %v2956 = vunpack.c.l.b16 %v376
    %v2957 = vunpack.c.h.b16 %v376
    %v2958 = vunpack.c.l.b16 %v377
    %v2959 = vunpack.c.h.b16 %v377
    %v2960 = vunpack.c.l.b16 %v378
    %v2961 = vunpack.c.h.b16 %v378
    %v2962 = vunpack.c.l.b16 %v379
    %v2963 = vunpack.c.h.b16 %v379
    %v2964 = vunpack.c.l.b16 %v380
    %v2965 = vunpack.c.h.b16 %v380
    %v2966 = vunpack.c.l.b16 %v381
    %v2967 = vunpack.c.h.b16 %v381
    %v2968 = vunpack.c.l.b16 %v382
    %v2969 = vunpack.c.h.b16 %v382
    %v2970 = vunpack.c.l.b16 %v383
    %v2971 = vunpack.c.h.b16 %v383
    %v2972 = vunpack.c.l.b16 %v384
    %v2973 = vunpack.c.h.b16 %v384
    %v2974 = vunpack.c.l.b16 %v385
    %v2975 = vunpack.c.h.b16 %v385
    %v2976 = vunpack.c.l.b16 %v386
    %v2977 = vunpack.c.h.b16 %v386
    %v2978 = vunpack.c.l.b16 %v387
    %v2979 = vunpack.c.h.b16 %v387
    %v2980 = vunpack.c.l.b16 %v388
    %v2981 = vunpack.c.h.b16 %v388
    %v2982 = vunpack.c.l.b16 %v389
    %v2983 = vunpack.c.h.b16 %v389
    %v2984 = vunpack.c.l.b16 %v390
    %v2985 = vunpack.c.h.b16 %v390
    %v2986 = vunpack.c.l.b16 %v391
    %v2987 = vunpack.c.h.b16 %v391
    %v2988 = vunpack.c.l.b16 %v392
    %v2989 = vunpack.c.h.b16 %v392
    %v2990 = vunpack.c.l.b16 %v393
    %v2991 = vunpack.c.h.b16 %v393
    %v2992 = vunpack.c.l.b16 %v394
    %v2993 = vunpack.c.h.b16 %v394
    %v2994 = vunpack.c.l.b16 %v395
    %v2995 = vunpack.c.h.b16 %v395
    %v2996 = vunpack.c.l.b16 %v396
    %v2997 = vunpack.c.h.b16 %v396
    %v2998 = vunpack.c.l.b16 %v397
    %v2999 = vunpack.c.h.b16 %v397
    %v3000 = vunpack.c.l.b16 %v398
    %v3001 = vunpack.c.h.b16 %v398
    %v3002 = vunpack.c.l.b16 %v399
    %v3003 = vunpack.c.h.b16 %v399
    %v3004 = vunpack.c.l.b16 %v400
    %v3005 = vunpack.c.h.b16 %v400
    %v3006 = vunpack.c.l.b16 %v401
    %v3007 = vunpack.c.h.b16 %v401
    %v3008 = vunpack.c.l.b16 %v402
    %v3009 = vunpack.c.h.b16 %v402
    %v3010 = vunpack.c.l.b16 %v403
    %v3011 = vunpack.c.h.b16 %v403
    %v3012 = vunpack.c.l.b16 %v404
    %v3013 = vunpack.c.h.b16 %v404
    %v3014 = vunpack.c.l.b16 %v405
    %v3015 = vunpack.c.h.b16 %v405
    %v3016 = vunpack.c.l.b16 %v406
    %v3017 = vunpack.c.h.b16 %v406
    %v3018 = vunpack.c.l.b16 %v407
    %v3019 = vunpack.c.h.b16 %v407
    %v3020 = vunpack.c.l.b16 %v408
    %v3021 = vunpack.c.h.b16 %v408
    %v3022 = vunpack.c.l.b16 %v409
    %v3023 = vunpack.c.h.b16 %v409
    %v3024 = vunpack.c.l.b16 %v410
    %v3025 = vunpack.c.h.b16 %v410
    %v3026 = vunpack.c.l.b16 %v411
    %v3027 = vunpack.c.h.b16 %v411
    %v3028 = vunpack.c.l.b16 %v412
    %v3029 = vunpack.c.h.b16 %v412
    %v3030 = vunpack.c.l.b16 %v413
    %v3031 = vunpack.c.h.b16 %v413
    %v3032 = vunpack.c.l.b16 %v414
    %v3033 = vunpack.c.h.b16 %v414
    %v3034 = vunpack.c.l.b16 %v415
    %v3035 = vunpack.c.h.b16 %v415
    %v3036 = vunpack.c.l.b16 %v416
    %v3037 = vunpack.c.h.b16 %v416
    %v3038 = vunpack.c.l.b16 %v417
    %v3039 = vunpack.c.h.b16 %v417
    %v3040 = vunpack.c.l.b16 %v418
    %v3041 = vunpack.c.h.b16 %v418
    %v3042 = vunpack.c.l.b16 %v419
    %v3043 = vunpack.c.h.b16 %v419
    %v3044 = vunpack.c.l.b16 %v420
    %v3045 = vunpack.c.h.b16 %v420
    %v3046 = vunpack.c.l.b16 %v421
    %v3047 = vunpack.c.h.b16 %v421
    %v3048 = vunpack.c.l.b16 %v422
    %v3049 = vunpack.c.h.b16 %v422
    %v3050 = vunpack.c.l.b16 %v423
    %v3051 = vunpack.c.h.b16 %v423
    %v3052 = vunpack.c.l.b16 %v424
    %v3053 = vunpack.c.h.b16 %v424
    %v3054 = vunpack.c.l.b16 %v425
    %v3055 = vunpack.c.h.b16 %v425
    %v3056 = vunpack.c.l.b16 %v426
    %v3057 = vunpack.c.h.b16 %v426
    %v3058 = vunpack.c.l.b16 %v427
    %v3059 = vunpack.c.h.b16 %v427
    %v3060 = vunpack.c.l.b16 %v428
    %v3061 = vunpack.c.h.b16 %v428
    %v3062 = vunpack.c.l.b16 %v429
    %v3063 = vunpack.c.h.b16 %v429
    %v3064 = vunpack.c.l.b16 %v430
    %v3065 = vunpack.c.h.b16 %v430
    %v3066 = vunpack.c.l.b16 %v431
    %v3067 = vunpack.c.h.b16 %v431
    %v3068 = vunpack.c.l.b16 %v432
    %v3069 = vunpack.c.h.b16 %v432
    %v3070 = vunpack.c.l.b16 %v433
    %v3071 = vunpack.c.h.b16 %v433
    %v3072 = vunpack.c.l.b16 %v434
    %v3073 = vunpack.c.h.b16 %v434
    %v3074 = vunpack.c.l.b16 %v435
    %v3075 = vunpack.c.h.b16 %v435
    %v3076 = vunpack.c.l.b16 %v436
    %v3077 = vunpack.c.h.b16 %v436
    %v3078 = vunpack.c.l.b16 %v437
    %v3079 = vunpack.c.h.b16 %v437
    %v3080 = vunpack.c.l.b16 %v438
    %v3081 = vunpack.c.h.b16 %v438
    %v3082 = vunpack.c.l.b16 %v439
    %v3083 = vunpack.c.h.b16 %v439
    %v3084 = vunpack.c.l.b16 %v440
    %v3085 = vunpack.c.h.b16 %v440
    %v3086 = vunpack.c.l.b16 %v441
    %v3087 = vunpack.c.h.b16 %v441
    %v3088 = vunpack.c.l.b16 %v442
    %v3089 = vunpack.c.h.b16 %v442
    %v3090 = vunpack.c.l.b16 %v443
    %v3091 = vunpack.c.h.b16 %v443
    %v3092 = vunpack.c.l.b16 %v444
    %v3093 = vunpack.c.h.b16 %v444
    %v3094 = vunpack.c.l.b16 %v445
    %v3095 = vunpack.c.h.b16 %v445
    %v3096 = vunpack.c.l.b16 %v446
    %v3097 = vunpack.c.h.b16 %v446
    %v3098 = vunpack.c.l.b16 %v447
    %v3099 = vunpack.c.h.b16 %v447
    %v3100 = vunpack.c.l.b16 %v448
    %v3101 = vunpack.c.h.b16 %v448
    %v3102 = vunpack.c.l.b16 %v449
    %v3103 = vunpack.c.h.b16 %v449
    %v3104 = vunpack.c.l.b16 %v450
    %v3105 = vunpack.c.h.b16 %v450
    %v3106 = vunpack.c.l.b16 %v451
    %v3107 = vunpack.c.h.b16 %v451
    %v3108 = vunpack.c.l.b16 %v452
    %v3109 = vunpack.c.h.b16 %v452
    %v3110 = vunpack.c.l.b16 %v453
    %v3111 = vunpack.c.h.b16 %v453
    %v3112 = vunpack.c.l.b16 %v454
    %v3113 = vunpack.c.h.b16 %v454
    %v3114 = vunpack.c.l.b16 %v455
    %v3115 = vunpack.c.h.b16 %v455
    %v3116 = vunpack.c.l.b16 %v456
    %v3117 = vunpack.c.h.b16 %v456
    %v3118 = vunpack.c.l.b16 %v457
    %v3119 = vunpack.c.h.b16 %v457
    %v3120 = vunpack.c.l.b16 %v458
    %v3121 = vunpack.c.h.b16 %v458
    %v3122 = vunpack.c.l.b16 %v459
    %v3123 = vunpack.c.h.b16 %v459
    %v3124 = vunpack.c.l.b16 %v460
    %v3125 = vunpack.c.h.b16 %v460
    %v3126 = vunpack.c.l.b16 %v461
    %v3127 = vunpack.c.h.b16 %v461
    %v3128 = vunpack.c.l.b16 %v462
    %v3129 = vunpack.c.h.b16 %v462
    %v3130 = vunpack.c.l.b16 %v463
    %v3131 = vunpack.c.h.b16 %v463
    %v3132 = vunpack.c.l.b16 %v464
    %v3133 = vunpack.c.h.b16 %v464
    %v3134 = vunpack.c.l.b16 %v465
    %v3135 = vunpack.c.h.b16 %v465
    %v3136 = vunpack.c.l.b16 %v466
    %v3137 = vunpack.c.h.b16 %v466
    %v3138 = vunpack.c.l.b16 %v467
    %v3139 = vunpack.c.h.b16 %v467
    %v3140 = vunpack.c.l.b16 %v468
    %v3141 = vunpack.c.h.b16 %v468
    %v3142 = vunpack.c.l.b16 %v469
    %v3143 = vunpack.c.h.b16 %v469
    %v3144 = vunpack.c.l.b16 %v470
    %v3145 = vunpack.c.h.b16 %v470
    %v3146 = vunpack.c.l.b16 %v471
    %v3147 = vunpack.c.h.b16 %v471
    %v3148 = vunpack.c.l.b16 %v472
    %v3149 = vunpack.c.h.b16 %v472
    %v3150 = vunpack.c.l.b16 %v473
    %v3151 = vunpack.c.h.b16 %v473
    %v3152 = vunpack.c.l.b16 %v474
    %v3153 = vunpack.c.h.b16 %v474
    %v3154 = vunpack.c.l.b16 %v475
    %v3155 = vunpack.c.h.b16 %v475
    %v3156 = vunpack.c.l.b16 %v476
    %v3157 = vunpack.c.h.b16 %v476
    %v3158 = vunpack.c.l.b16 %v477
    %v3159 = vunpack.c.h.b16 %v477
    %v3160 = vunpack.c.l.b16 %v478
    %v3161 = vunpack.c.h.b16 %v478
    %v3162 = vunpack.c.l.b16 %v479
    %v3163 = vunpack.c.h.b16 %v479
    %v3164 = vunpack.c.l.b16 %v480
    %v3165 = vunpack.c.h.b16 %v480
    %v3166 = vunpack.c.l.b16 %v481
    %v3167 = vunpack.c.h.b16 %v481
    %v3168 = vunpack.c.l.b16 %v482
    %v3169 = vunpack.c.h.b16 %v482
    %v3170 = vunpack.c.l.b16 %v483
    %v3171 = vunpack.c.h.b16 %v483
    %v3172 = vunpack.c.l.b16 %v484
    %v3173 = vunpack.c.h.b16 %v484
    %v3174 = vunpack.c.l.b16 %v485
    %v3175 = vunpack.c.h.b16 %v485
    %v3176 = vunpack.c.l.b16 %v486
    %v3177 = vunpack.c.h.b16 %v486
    %v3178 = vunpack.c.l.b16 %v487
    %v3179 = vunpack.c.h.b16 %v487
    %v3180 = vunpack.c.l.b16 %v488
    %v3181 = vunpack.c.h.b16 %v488
    %v3182 = vunpack.c.l.b16 %v489
    %v3183 = vunpack.c.h.b16 %v489
    %v3184 = vunpack.c.l.b16 %v490
    %v3185 = vunpack.c.h.b16 %v490
    %v3186 = vunpack.c.l.b16 %v491
    %v3187 = vunpack.c.h.b16 %v491
    %v3188 = vunpack.c.l.b16 %v492
    %v3189 = vunpack.c.h.b16 %v492
    %v3190 = vunpack.c.l.b16 %v493
    %v3191 = vunpack.c.h.b16 %v493
    %v3192 = vunpack.c.l.b16 %v494
    %v3193 = vunpack.c.h.b16 %v494
    %v3194 = vunpack.c.l.b16 %v495
    %v3195 = vunpack.c.h.b16 %v495
    %v3196 = vunpack.c.l.b16 %v496
    %v3197 = vunpack.c.h.b16 %v496
    %v3198 = vunpack.c.l.b16 %v497
    %v3199 = vunpack.c.h.b16 %v497
    %v3200 = vunpack.c.l.b16 %v498
    %v3201 = vunpack.c.h.b16 %v498
    %v3202 = vunpack.c.l.b16 %v499
    %v3203 = vunpack.c.h.b16 %v499
    %v3204 = vunpack.c.l.b16 %v500
    %v3205 = vunpack.c.h.b16 %v500
    %v3206 = vunpack.c.l.b16 %v501
    %v3207 = vunpack.c.h.b16 %v501
    %v3208 = vunpack.c.l.b16 %v502
    %v3209 = vunpack.c.h.b16 %v502
    %v3210 = vunpack.c.l.b16 %v503
    %v3211 = vunpack.c.h.b16 %v503
    %v3212 = vunpack.c.l.b16 %v504
    %v3213 = vunpack.c.h.b16 %v504
    %v3214 = vunpack.c.l.b16 %v505
    %v3215 = vunpack.c.h.b16 %v505
    %v3216 = vunpack.c.l.b16 %v506
    %v3217 = vunpack.c.h.b16 %v506
    %v3218 = vunpack.c.l.b16 %v507
    %v3219 = vunpack.c.h.b16 %v507
    %v3220 = vunpack.c.l.b16 %v508
    %v3221 = vunpack.c.h.b16 %v508
    %v3222 = vunpack.c.l.b16 %v509
    %v3223 = vunpack.c.h.b16 %v509
    %v3224 = vunpack.c.l.b16 %v510
    %v3225 = vunpack.c.h.b16 %v510
    %v3226 = vunpack.c.l.b16 %v511
    %v3227 = vunpack.c.h.b16 %v511
    %v3228 = vunpack.c.l.b16 %v512
    %v3229 = vunpack.c.h.b16 %v512
    %v3230 = vunpack.c.l.b16 %v513
    %v3231 = vunpack.c.h.b16 %v513
    %v3232 = vunpack.c.l.b16 %v514
    %v3233 = vunpack.c.h.b16 %v514
    %v3234 = vunpack.c.l.b16 %v515
    %v3235 = vunpack.c.h.b16 %v515
    %v3236 = vunpack.c.l.b16 %v516
    %v3237 = vunpack.c.h.b16 %v516
    %v3238 = vunpack.c.l.b16 %v517
    %v3239 = vunpack.c.h.b16 %v517
    %v3240 = vunpack.c.l.b16 %v518
    %v3241 = vunpack.c.h.b16 %v518
    %v3242 = vunpack.c.l.b16 %v519
    %v3243 = vunpack.c.h.b16 %v519
    %v3244 = vunpack.c.l.b16 %v520
    %v3245 = vunpack.c.h.b16 %v520
    %v3246 = vunpack.c.l.b16 %v521
    %v3247 = vunpack.c.h.b16 %v521
    %v3248 = vunpack.c.l.b16 %v522
    %v3249 = vunpack.c.h.b16 %v522
    %v3250 = vunpack.c.l.b16 %v523
    %v3251 = vunpack.c.h.b16 %v523
    %v3252 = vunpack.c.l.b16 %v524
    %v3253 = vunpack.c.h.b16 %v524
    %v3254 = vunpack.c.l.b16 %v525
    %v3255 = vunpack.c.h.b16 %v525
    %v3256 = vunpack.c.l.b16 %v526
    %v3257 = vunpack.c.h.b16 %v526
    %v3258 = vunpack.c.l.b16 %v527
    %v3259 = vunpack.c.h.b16 %v527
    %v3260 = vunpack.c.l.b16 %v528
    %v3261 = vunpack.c.h.b16 %v528
    %v3262 = vunpack.c.l.b16 %v529
    %v3263 = vunpack.c.h.b16 %v529
    %v3264 = vunpack.c.l.b16 %v530
    %v3265 = vunpack.c.h.b16 %v530
    %v3266 = vunpack.c.l.b16 %v531
    %v3267 = vunpack.c.h.b16 %v531
    %v3268 = vunpack.c.l.b16 %v532
    %v3269 = vunpack.c.h.b16 %v532
    %v3270 = vunpack.c.l.b16 %v533
    %v3271 = vunpack.c.h.b16 %v533
    %v3272 = vunpack.c.l.b16 %v534
    %v3273 = vunpack.c.h.b16 %v534
    %v3274 = vunpack.c.l.b16 %v535
    %v3275 = vunpack.c.h.b16 %v535
    %v3276 = vunpack.c.l.b16 %v536
    %v3277 = vunpack.c.h.b16 %v536
    %v3278 = vunpack.c.l.b16 %v537
    %v3279 = vunpack.c.h.b16 %v537
    %v3280 = vunpack.c.l.b16 %v538
    %v3281 = vunpack.c.h.b16 %v538
    %v3282 = vunpack.c.l.b16 %v539
    %v3283 = vunpack.c.h.b16 %v539
    %v3284 = vunpack.c.l.b16 %v540
    %v3285 = vunpack.c.h.b16 %v540
    %v3286 = vunpack.c.l.b16 %v541
    %v3287 = vunpack.c.h.b16 %v541
    %v3288 = vunpack.c.l.b16 %v542
    %v3289 = vunpack.c.h.b16 %v542
    %v3290 = vunpack.c.l.b16 %v543
    %v3291 = vunpack.c.h.b16 %v543
    %v3292 = vunpack.c.l.b16 %v544
    %v3293 = vunpack.c.h.b16 %v544
    %v3294 = vunpack.c.l.b16 %v545
    %v3295 = vunpack.c.h.b16 %v545
    %v3296 = vunpack.c.l.b16 %v546
    %v3297 = vunpack.c.h.b16 %v546
    %v3298 = vunpack.c.l.b16 %v547
    %v3299 = vunpack.c.h.b16 %v547
    %v3300 = vunpack.c.l.b16 %v548
    %v3301 = vunpack.c.h.b16 %v548
    %v3302 = vunpack.c.l.b16 %v549
    %v3303 = vunpack.c.h.b16 %v549
    %v3304 = vunpack.c.l.b16 %v550
    %v3305 = vunpack.c.h.b16 %v550
    %v3306 = vunpack.c.l.b16 %v551
    %v3307 = vunpack.c.h.b16 %v551
    %v3308 = vunpack.c.l.b16 %v552
    %v3309 = vunpack.c.h.b16 %v552
    %v3310 = vunpack.c.l.b16 %v553
    %v3311 = vunpack.c.h.b16 %v553
    %v3312 = vunpack.c.l.b16 %v554
    %v3313 = vunpack.c.h.b16 %v554
    %v3314 = vunpack.c.l.b16 %v555
    %v3315 = vunpack.c.h.b16 %v555
    %v3316 = vunpack.c.l.b16 %v556
    %v3317 = vunpack.c.h.b16 %v556
    %v3318 = vunpack.c.l.b16 %v557
    %v3319 = vunpack.c.h.b16 %v557
    %v3320 = vunpack.c.l.b16 %v558
    %v3321 = vunpack.c.h.b16 %v558
    %v3322 = vunpack.c.l.b16 %v559
    %v3323 = vunpack.c.h.b16 %v559
    %v3324 = vunpack.c.l.b16 %v560
    %v3325 = vunpack.c.h.b16 %v560
    %v3326 = vunpack.c.l.b16 %v561
    %v3327 = vunpack.c.h.b16 %v561
    %v3328 = vunpack.c.l.b16 %v562
    %v3329 = vunpack.c.h.b16 %v562
    %v3330 = vunpack.c.l.b16 %v563
    %v3331 = vunpack.c.h.b16 %v563
    %v3332 = vunpack.c.l.b16 %v564
    %v3333 = vunpack.c.h.b16 %v564
    %v3334 = vunpack.c.l.b16 %v565
    %v3335 = vunpack.c.h.b16 %v565
    %v3336 = vunpack.c.l.b16 %v566
    %v3337 = vunpack.c.h.b16 %v566
    %v3338 = vunpack.c.l.b16 %v567
    %v3339 = vunpack.c.h.b16 %v567
    %v3340 = vunpack.c.l.b16 %v568
    %v3341 = vunpack.c.h.b16 %v568
    %v3342 = vunpack.c.l.b16 %v569
    %v3343 = vunpack.c.h.b16 %v569
    %v3344 = vunpack.c.l.b16 %v570
    %v3345 = vunpack.c.h.b16 %v570
    %v3346 = vunpack.c.l.b16 %v571
    %v3347 = vunpack.c.h.b16 %v571
    %v3348 = vunpack.c.l.b16 %v572
    %v3349 = vunpack.c.h.b16 %v572
    %v3350 = vunpack.c.l.b16 %v573
    %v3351 = vunpack.c.h.b16 %v573
    %v3352 = vunpack.c.l.b16 %v574
    %v3353 = vunpack.c.h.b16 %v574
    %v3354 = vunpack.c.l.b16 %v575
    %v3355 = vunpack.c.h.b16 %v575
    %v3356 = vunpack.c.l.b16 %v576
    %v3357 = vunpack.c.h.b16 %v576
    %v3358 = vunpack.c.l.b16 %v577
    %v3359 = vunpack.c.h.b16 %v577
    %v3360 = vunpack.c.l.b16 %v578
    %v3361 = vunpack.c.h.b16 %v578
    %v3362 = vunpack.c.l.b16 %v579
    %v3363 = vunpack.c.h.b16 %v579
    %v3364 = vunpack.c.l.b16 %v580
    %v3365 = vunpack.c.h.b16 %v580
    %v3366 = vunpack.c.l.b16 %v581
    %v3367 = vunpack.c.h.b16 %v581
    %v3368 = vunpack.c.l.b16 %v582
    %v3369 = vunpack.c.h.b16 %v582
    %v3370 = vunpack.c.l.b16 %v583
    %v3371 = vunpack.c.h.b16 %v583
    %v3372 = vunpack.c.l.b16 %v584
    %v3373 = vunpack.c.h.b16 %v584
    %v3374 = vunpack.c.l.b16 %v585
    %v3375 = vunpack.c.h.b16 %v585
    %v3376 = vunpack.c.l.b16 %v586
    %v3377 = vunpack.c.h.b16 %v586
    %v3378 = vunpack.c.l.b16 %v587
    %v3379 = vunpack.c.h.b16 %v587
    %v3380 = vunpack.c.l.b16 %v588
    %v3381 = vunpack.c.h.b16 %v588
    %v3382 = vunpack.c.l.b16 %v589
    %v3383 = vunpack.c.h.b16 %v589
    %v3384 = vunpack.c.l.b16 %v590
    %v3385 = vunpack.c.h.b16 %v590
    %v3386 = vunpack.c.l.b16 %v591
    %v3387 = vunpack.c.h.b16 %v591
    %v3388 = vunpack.c.l.b16 %v592
    %v3389 = vunpack.c.h.b16 %v592
    %v3390 = vunpack.c.l.b16 %v593
    %v3391 = vunpack.c.h.b16 %v593
    %v3392 = vunpack.c.l.b16 %v594
    %v3393 = vunpack.c.h.b16 %v594
    %v3394 = vunpack.c.l.b16 %v595
    %v3395 = vunpack.c.h.b16 %v595
    %v3396 = vunpack.c.l.b16 %v596
    %v3397 = vunpack.c.h.b16 %v596
    %v3398 = vunpack.c.l.b16 %v597
    %v3399 = vunpack.c.h.b16 %v597
    %v3400 = vunpack.c.l.b16 %v598
    %v3401 = vunpack.c.h.b16 %v598
    %v3402 = vunpack.c.l.b16 %v599
    %v3403 = vunpack.c.h.b16 %v599
    %v3404 = vunpack.c.l.b16 %v600
    %v3405 = vunpack.c.h.b16 %v600
    %v3406 = vunpack.c.l.b16 %v601
    %v3407 = vunpack.c.h.b16 %v601
    %v3408 = vunpack.c.l.b16 %v602
    %v3409 = vunpack.c.h.b16 %v602
    %v3410 = vunpack.c.l.b16 %v603
    %v3411 = vunpack.c.h.b16 %v603
    %v3412 = vunpack.c.l.b16 %v604
    %v3413 = vunpack.c.h.b16 %v604
    %v3414 = vunpack.c.l.b16 %v605
    %v3415 = vunpack.c.h.b16 %v605
    %v3416 = vunpack.c.l.b16 %v606
    %v3417 = vunpack.c.h.b16 %v606
    %v3418 = vunpack.c.l.b16 %v607
    %v3419 = vunpack.c.h.b16 %v607
    %v3420 = vunpack.c.l.b16 %v608
    %v3421 = vunpack.c.h.b16 %v608
    %v3422 = vunpack.c.l.b16 %v609
    %v3423 = vunpack.c.h.b16 %v609
    %v3424 = vunpack.c.l.b16 %v610
    %v3425 = vunpack.c.h.b16 %v610
    %v3426 = vunpack.c.l.b16 %v611
    %v3427 = vunpack.c.h.b16 %v611
    %v3428 = vunpack.c.l.b16 %v612
    %v3429 = vunpack.c.h.b16 %v612
    %v3430 = vunpack.c.l.b16 %v613
    %v3431 = vunpack.c.h.b16 %v613
    %v3432 = vunpack.c.l.b16 %v614
    %v3433 = vunpack.c.h.b16 %v614
    %v3434 = vunpack.c.l.b16 %v615
    %v3435 = vunpack.c.h.b16 %v615
    %v3436 = vunpack.c.l.b16 %v616
    %v3437 = vunpack.c.h.b16 %v616
    %v3438 = vunpack.c.l.b16 %v617
    %v3439 = vunpack.c.h.b16 %v617
    %v3440 = vunpack.c.l.b16 %v618
    %v3441 = vunpack.c.h.b16 %v618
    %v3442 = vunpack.c.l.b16 %v619
    %v3443 = vunpack.c.h.b16 %v619
    %v3444 = vunpack.c.l.b16 %v620
    %v3445 = vunpack.c.h.b16 %v620
    %v3446 = vunpack.c.l.b16 %v621
    %v3447 = vunpack.c.h.b16 %v621
    %v3448 = vunpack.c.l.b16 %v622
    %v3449 = vunpack.c.h.b16 %v622
    %v3450 = vunpack.c.l.b16 %v623
    %v3451 = vunpack.c.h.b16 %v623
    %v3452 = vunpack.c.l.b16 %v624
    %v3453 = vunpack.c.h.b16 %v624
    %v3454 = vunpack.c.l.b16 %v625
    %v3455 = vunpack.c.h.b16 %v625
    %v3456 = vunpack.c.l.b16 %v626
    %v3457 = vunpack.c.h.b16 %v626
    %v3458 = vunpack.c.l.b16 %v627
    %v3459 = vunpack.c.h.b16 %v627
    %v3460 = vunpack.c.l.b16 %v628
    %v3461 = vunpack.c.h.b16 %v628
    %v3462 = vunpack.c.l.b16 %v629
    %v3463 = vunpack.c.h.b16 %v629
    %v3464 = vunpack.c.l.b16 %v630
    %v3465 = vunpack.c.h.b16 %v630
    %v3466 = vunpack.c.l.b16 %v631
    %v3467 = vunpack.c.h.b16 %v631
    %v3468 = vunpack.c.l.b16 %v632
    %v3469 = vunpack.c.h.b16 %v632
    %v3470 = vunpack.c.l.b16 %v633
    %v3471 = vunpack.c.h.b16 %v633
    %v3472 = vunpack.c.l.b16 %v634
    %v3473 = vunpack.c.h.b16 %v634
    %v3474 = vunpack.c.l.b16 %v635
    %v3475 = vunpack.c.h.b16 %v635
    %v3476 = vunpack.c.l.b16 %v636
    %v3477 = vunpack.c.h.b16 %v636
    %v3478 = vunpack.c.l.b16 %v637
    %v3479 = vunpack.c.h.b16 %v637
    %v3480 = vunpack.c.l.b16 %v638
    %v3481 = vunpack.c.h.b16 %v638
    %v3482 = vunpack.c.l.b16 %v639
    %v3483 = vunpack.c.h.b16 %v639
    %v3484 = vunpack.c.l.b16 %v640
    %v3485 = vunpack.c.h.b16 %v640
    %v3486 = vunpack.c.l.b16 %v641
    %v3487 = vunpack.c.h.b16 %v641
    %v3488 = vunpack.c.l.b16 %v642
    %v3489 = vunpack.c.h.b16 %v642
    %v3490 = vunpack.c.l.b16 %v643
    %v3491 = vunpack.c.h.b16 %v643
    %v3492 = vunpack.c.l.b16 %v644
    %v3493 = vunpack.c.h.b16 %v644
    %v3494 = vunpack.c.l.b16 %v645
    %v3495 = vunpack.c.h.b16 %v645
    %v3496 = vunpack.c.l.b16 %v646
    %v3497 = vunpack.c.h.b16 %v646
    %v3498 = vunpack.c.l.b16 %v647
    %v3499 = vunpack.c.h.b16 %v647
    %v3500 = vunpack.c.l.b16 %v648
    %v3501 = vunpack.c.h.b16 %v648
    %v3502 = vunpack.c.l.b16 %v649
    %v3503 = vunpack.c.h.b16 %v649
    %v3504 = vunpack.c.l.b16 %v650
    %v3505 = vunpack.c.h.b16 %v650
    %v3506 = vunpack.c.l.b16 %v651
    %v3507 = vunpack.c.h.b16 %v651
    %v3508 = vunpack.c.l.b16 %v652
    %v3509 = vunpack.c.h.b16 %v652
    %v3510 = vunpack.c.l.b16 %v653
    %v3511 = vunpack.c.h.b16 %v653
    %v3512 = vunpack.c.l.b16 %v654
    %v3513 = vunpack.c.h.b16 %v654
    %v3514 = vunpack.c.l.b16 %v655
    %v3515 = vunpack.c.h.b16 %v655
    %v3516 = vunpack.c.l.b16 %v656
    %v3517 = vunpack.c.h.b16 %v656
    %v3518 = vunpack.c.l.b16 %v657
    %v3519 = vunpack.c.h.b16 %v657
    %v3520 = vunpack.c.l.b16 %v658
    %v3521 = vunpack.c.h.b16 %v658
    %v3522 = vunpack.c.l.b16 %v659
    %v3523 = vunpack.c.h.b16 %v659
    %v3524 = vunpack.c.l.b16 %v660
    %v3525 = vunpack.c.h.b16 %v660
    %v3526 = vunpack.c.l.b16 %v661
    %v3527 = vunpack.c.h.b16 %v661
    %v3528 = vunpack.c.l.b16 %v662
    %v3529 = vunpack.c.h.b16 %v662
    %v3530 = vunpack.c.l.b16 %v663
    %v3531 = vunpack.c.h.b16 %v663
    %v3532 = vunpack.c.l.b16 %v664
    %v3533 = vunpack.c.h.b16 %v664
    %v3534 = vunpack.c.l.b16 %v665
    %v3535 = vunpack.c.h.b16 %v665
    %v3536 = vunpack.c.l.b16 %v666
    %v3537 = vunpack.c.h.b16 %v666
    %v3538 = vunpack.c.l.b16 %v667
    %v3539 = vunpack.c.h.b16 %v667
    %v3540 = vunpack.c.l.b16 %v668
    %v3541 = vunpack.c.h.b16 %v668
    %v3542 = vunpack.c.l.b16 %v669
    %v3543 = vunpack.c.h.b16 %v669
    %v3544 = vunpack.c.l.b16 %v670
    %v3545 = vunpack.c.h.b16 %v670
    %v3546 = vunpack.c.l.b16 %v671
    %v3547 = vunpack.c.h.b16 %v671
    %v3548 = vunpack.c.l.b16 %v672
    %v3549 = vunpack.c.h.b16 %v672
    %v3550 = vunpack.c.l.b16 %v673
    %v3551 = vunpack.c.h.b16 %v673
    %v3552 = vunpack.c.l.b16 %v674
    %v3553 = vunpack.c.h.b16 %v674
    %v3554 = vunpack.c.l.b16 %v675
    %v3555 = vunpack.c.h.b16 %v675
    %v3556 = vunpack.c.l.b16 %v676
    %v3557 = vunpack.c.h.b16 %v676
    %v3558 = vunpack.c.l.b16 %v677
    %v3559 = vunpack.c.h.b16 %v677
    %v3560 = vunpack.c.l.b16 %v678
    %v3561 = vunpack.c.h.b16 %v678
    %v3562 = vunpack.c.l.b16 %v679
    %v3563 = vunpack.c.h.b16 %v679
    %v3564 = vunpack.c.l.b16 %v680
    %v3565 = vunpack.c.h.b16 %v680
    %v3566 = vunpack.c.l.b16 %v681
    %v3567 = vunpack.c.h.b16 %v681
    %v3568 = vunpack.c.l.b16 %v682
    %v3569 = vunpack.c.h.b16 %v682
    %v3570 = vunpack.c.l.b16 %v683
    %v3571 = vunpack.c.h.b16 %v683
    %v3572 = vunpack.c.l.b16 %v684
    %v3573 = vunpack.c.h.b16 %v684
    %v3574 = vunpack.c.l.b16 %v685
    %v3575 = vunpack.c.h.b16 %v685
    %v3576 = vunpack.c.l.b16 %v686
    %v3577 = vunpack.c.h.b16 %v686
    %v3578 = vunpack.c.l.b16 %v687
    %v3579 = vunpack.c.h.b16 %v687
    %v3580 = vunpack.c.l.b16 %v688
    %v3581 = vunpack.c.h.b16 %v688
    %v3582 = vunpack.c.l.b16 %v689
    %v3583 = vunpack.c.h.b16 %v689
    %v3584 = vunpack.c.l.b16 %v690
    %v3585 = vunpack.c.h.b16 %v690
    %v3586 = vunpack.c.l.b16 %v691
    %v3587 = vunpack.c.h.b16 %v691
    %v3588 = vunpack.c.l.b16 %v692
    %v3589 = vunpack.c.h.b16 %v692
    %v3590 = vunpack.c.l.b16 %v693
    %v3591 = vunpack.c.h.b16 %v693
    %v3592 = vunpack.c.l.b16 %v694
    %v3593 = vunpack.c.h.b16 %v694
    %v3594 = vunpack.c.l.b16 %v695
    %v3595 = vunpack.c.h.b16 %v695
    %v3596 = vunpack.c.l.b16 %v696
    %v3597 = vunpack.c.h.b16 %v696
    %v3598 = vunpack.c.l.b16 %v697
    %v3599 = vunpack.c.h.b16 %v697
    %v3600 = vunpack.c.l.b16 %v698
    %v3601 = vunpack.c.h.b16 %v698
    %v3602 = vunpack.c.l.b16 %v699
    %v3603 = vunpack.c.h.b16 %v699
    %v3604 = vunpack.c.l.b16 %v700
    %v3605 = vunpack.c.h.b16 %v700
    %v3606 = vunpack.c.l.b16 %v701
    %v3607 = vunpack.c.h.b16 %v701
    %v3608 = vunpack.c.l.b16 %v702
    %v3609 = vunpack.c.h.b16 %v702
    %v3610 = vunpack.c.l.b16 %v703
    %v3611 = vunpack.c.h.b16 %v703
    %v3612 = vunpack.c.l.b16 %v704
    %v3613 = vunpack.c.h.b16 %v704
    %v3614 = vunpack.c.l.b16 %v705
    %v3615 = vunpack.c.h.b16 %v705
    %v3616 = vunpack.c.l.b16 %v706
    %v3617 = vunpack.c.h.b16 %v706
    %v3618 = vunpack.c.l.b16 %v707
    %v3619 = vunpack.c.h.b16 %v707
    %v3620 = vunpack.c.l.b16 %v708
    %v3621 = vunpack.c.h.b16 %v708
    %v3622 = vunpack.c.l.b16 %v709
    %v3623 = vunpack.c.h.b16 %v709
    %v3624 = vunpack.c.l.b16 %v710
    %v3625 = vunpack.c.h.b16 %v710
    %v3626 = vunpack.c.l.b16 %v711
    %v3627 = vunpack.c.h.b16 %v711
    %v3628 = vunpack.c.l.b16 %v712
    %v3629 = vunpack.c.h.b16 %v712
    %v3630 = vunpack.c.l.b16 %v713
    %v3631 = vunpack.c.h.b16 %v713
    %v3632 = vunpack.c.l.b16 %v714
    %v3633 = vunpack.c.h.b16 %v714
    %v3634 = vunpack.c.l.b16 %v715
    %v3635 = vunpack.c.h.b16 %v715
    %v3636 = vunpack.c.l.b16 %v716
    %v3637 = vunpack.c.h.b16 %v716
    %v3638 = vunpack.c.l.b16 %v717
    %v3639 = vunpack.c.h.b16 %v717
    %v3640 = vunpack.c.l.b16 %v718
    %v3641 = vunpack.c.h.b16 %v718
    %v3642 = vunpack.c.l.b16 %v719
    %v3643 = vunpack.c.h.b16 %v719
    %v3644 = vunpack.c.l.b16 %v720
    %v3645 = vunpack.c.h.b16 %v720
    %v3646 = vunpack.c.l.b16 %v721
    %v3647 = vunpack.c.h.b16 %v721
    %v3648 = vunpack.c.l.b16 %v722
    %v3649 = vunpack.c.h.b16 %v722
    %v3650 = vunpack.c.l.b16 %v723
    %v3651 = vunpack.c.h.b16 %v723
    %v3652 = vunpack.c.l.b16 %v724
    %v3653 = vunpack.c.h.b16 %v724
    %v3654 = vunpack.c.l.b16 %v725
    %v3655 = vunpack.c.h.b16 %v725
    %v3656 = vunpack.c.l.b16 %v726
    %v3657 = vunpack.c.h.b16 %v726
    %v3658 = vunpack.c.l.b16 %v727
    %v3659 = vunpack.c.h.b16 %v727
    %v3660 = vunpack.c.l.b16 %v728
    %v3661 = vunpack.c.h.b16 %v728
    %v3662 = vunpack.c.l.b16 %v729
    %v3663 = vunpack.c.h.b16 %v729
    %v3664 = vunpack.c.l.b16 %v730
    %v3665 = vunpack.c.h.b16 %v730
    %v3666 = vunpack.c.l.b16 %v731
    %v3667 = vunpack.c.h.b16 %v731
    %v3668 = vunpack.c.l.b16 %v732
    %v3669 = vunpack.c.h.b16 %v732
    %v3670 = vunpack.c.l.b16 %v733
    %v3671 = vunpack.c.h.b16 %v733
    %v3672 = vunpack.c.l.b16 %v734
    %v3673 = vunpack.c.h.b16 %v734
    %v3674 = vunpack.c.l.b16 %v735
    %v3675 = vunpack.c.h.b16 %v735
    %v3676 = vunpack.c.l.b16 %v736
    %v3677 = vunpack.c.h.b16 %v736
    %v3678 = vunpack.c.l.b16 %v737
    %v3679 = vunpack.c.h.b16 %v737
    %v3680 = vunpack.c.l.b16 %v738
    %v3681 = vunpack.c.h.b16 %v738
    %v3682 = vunpack.c.l.b16 %v739
    %v3683 = vunpack.c.h.b16 %v739
    %v3684 = vunpack.c.l.b16 %v740
    %v3685 = vunpack.c.h.b16 %v740
    %v3686 = vunpack.c.l.b16 %v741
    %v3687 = vunpack.c.h.b16 %v741
    %v3688 = vunpack.c.l.b16 %v742
    %v3689 = vunpack.c.h.b16 %v742
    %v3690 = vunpack.c.l.b16 %v743
    %v3691 = vunpack.c.h.b16 %v743
    %v3692 = vunpack.c.l.b16 %v744
    %v3693 = vunpack.c.h.b16 %v744
    %v3694 = vunpack.c.l.b16 %v745
    %v3695 = vunpack.c.h.b16 %v745
    %v3696 = vunpack.c.l.b16 %v746
    %v3697 = vunpack.c.h.b16 %v746
    %v3698 = vunpack.c.l.b16 %v747
    %v3699 = vunpack.c.h.b16 %v747
    %v3700 = vunpack.c.l.b16 %v748
    %v3701 = vunpack.c.h.b16 %v748
    %v3702 = vunpack.c.l.b16 %v749
    %v3703 = vunpack.c.h.b16 %v749
    %v3704 = vunpack.c.l.b16 %v750
    %v3705 = vunpack.c.h.b16 %v750
    %v3706 = vunpack.c.l.b16 %v751
    %v3707 = vunpack.c.h.b16 %v751
    %v3708 = vunpack.c.l.b16 %v752
    %v3709 = vunpack.c.h.b16 %v752
    %v3710 = vunpack.c.l.b16 %v753
    %v3711 = vunpack.c.h.b16 %v753
    %v3712 = vunpack.c.l.b16 %v754
    %v3713 = vunpack.c.h.b16 %v754
    %v3714 = vunpack.c.l.b16 %v755
    %v3715 = vunpack.c.h.b16 %v755
    %v3716 = vunpack.c.l.b16 %v756
    %v3717 = vunpack.c.h.b16 %v756
    %v3718 = vunpack.c.l.b16 %v757
    %v3719 = vunpack.c.h.b16 %v757
    %v3720 = vunpack.c.l.b16 %v758
    %v3721 = vunpack.c.h.b16 %v758
    %v3722 = vunpack.c.l.b16 %v759
    %v3723 = vunpack.c.h.b16 %v759
    %v3724 = vunpack.c.l.b16 %v760
    %v3725 = vunpack.c.h.b16 %v760
    %v3726 = vunpack.c.l.b16 %v761
    %v3727 = vunpack.c.h.b16 %v761
    %v3728 = vunpack.c.l.b16 %v762
    %v3729 = vunpack.c.h.b16 %v762
    %v3730 = vunpack.c.l.b16 %v763
    %v3731 = vunpack.c.h.b16 %v763
    %v3732 = vunpack.c.l.b16 %v764
    %v3733 = vunpack.c.h.b16 %v764
    %v3734 = vunpack.c.l.b16 %v765
    %v3735 = vunpack.c.h.b16 %v765
    %v3736 = vunpack.c.l.b16 %v766
    %v3737 = vunpack.c.h.b16 %v766
    %v3738 = vunpack.c.l.b16 %v767
    %v3739 = vunpack.c.h.b16 %v767
    %v3740 = vunpack.c.l.b16 %v768
    %v3741 = vunpack.c.h.b16 %v768
    %v3742 = vunpack.c.l.b16 %v769
    %v3743 = vunpack.c.h.b16 %v769
    %v3744 = vunpack.c.l.b16 %v770
    %v3745 = vunpack.c.h.b16 %v770
    %v3746 = vunpack.c.l.b16 %v771
    %v3747 = vunpack.c.h.b16 %v771
    %v3748 = vunpack.c.l.b16 %v772
    %v3749 = vunpack.c.h.b16 %v772
    %v3750 = vunpack.c.l.b16 %v773
    %v3751 = vunpack.c.h.b16 %v773
    %v3752 = vunpack.c.l.b16 %v774
    %v3753 = vunpack.c.h.b16 %v774
    %v3754 = vunpack.c.l.b16 %v775
    %v3755 = vunpack.c.h.b16 %v775
    %v3756 = vunpack.c.l.b16 %v776
    %v3757 = vunpack.c.h.b16 %v776
    %v3758 = vunpack.c.l.b16 %v777
    %v3759 = vunpack.c.h.b16 %v777
    %v3760 = vunpack.c.l.b16 %v778
    %v3761 = vunpack.c.h.b16 %v778
    %v3762 = vunpack.c.l.b16 %v779
    %v3763 = vunpack.c.h.b16 %v779
    %v3764 = vunpack.c.l.b16 %v780
    %v3765 = vunpack.c.h.b16 %v780
    %v3766 = vunpack.c.l.b16 %v781
    %v3767 = vunpack.c.h.b16 %v781
    %v3768 = vunpack.c.l.b16 %v782
    %v3769 = vunpack.c.h.b16 %v782
    %v3770 = vunpack.c.l.b16 %v783
    %v3771 = vunpack.c.h.b16 %v783
    %v3772 = vunpack.c.l.b16 %v784
    %v3773 = vunpack.c.h.b16 %v784
    %v3774 = vunpack.c.l.b16 %v785
    %v3775 = vunpack.c.h.b16 %v785
    %v3776 = vunpack.c.l.b16 %v786
    %v3777 = vunpack.c.h.b16 %v786
    %v3778 = vunpack.c.l.b16 %v787
    %v3779 = vunpack.c.h.b16 %v787
    %v3780 = vunpack.c.l.b16 %v788
    %v3781 = vunpack.c.h.b16 %v788
    %v3782 = vunpack.c.l.b16 %v789
    %v3783 = vunpack.c.h.b16 %v789
    %v3784 = vunpack.c.l.b16 %v790
    %v3785 = vunpack.c.h.b16 %v790
    %v3786 = vunpack.c.l.b16 %v791
    %v3787 = vunpack.c.h.b16 %v791
    %v3788 = vunpack.c.l.b16 %v792
    %v3789 = vunpack.c.h.b16 %v792
    %v3790 = vunpack.c.l.b16 %v793
    %v3791 = vunpack.c.h.b16 %v793
    %v3792 = vunpack.c.l.b16 %v794
    %v3793 = vunpack.c.h.b16 %v794
    %v3794 = vunpack.c.l.b16 %v795
    %v3795 = vunpack.c.h.b16 %v795
    %v3796 = vunpack.c.l.b16 %v796
    %v3797 = vunpack.c.h.b16 %v796
    %v3798 = vunpack.c.l.b16 %v797
    %v3799 = vunpack.c.h.b16 %v797
    %v3800 = vunpack.c.l.b16 %v798
    %v3801 = vunpack.c.h.b16 %v798
    %v3802 = vunpack.c.l.b16 %v799
    %v3803 = vunpack.c.h.b16 %v799
    %v3804 = vunpack.c.l.b16 %v800
    %v3805 = vunpack.c.h.b16 %v800
    %v3806 = vunpack.c.l.b16 %v801
    %v3807 = vunpack.c.h.b16 %v801
    %v3808 = vunpack.c.l.b16 %v802
    %v3809 = vunpack.c.h.b16 %v802
    %v3810 = vunpack.c.l.b16 %v803
    %v3811 = vunpack.c.h.b16 %v803
    %v3812 = vunpack.c.l.b16 %v804
    %v3813 = vunpack.c.h.b16 %v804
    %v3814 = vunpack.c.l.b16 %v805
    %v3815 = vunpack.c.h.b16 %v805
    %v3816 = vunpack.c.l.b16 %v806
    %v3817 = vunpack.c.h.b16 %v806
    %v3818 = vunpack.c.l.b16 %v807
    %v3819 = vunpack.c.h.b16 %v807
    %v3820 = vunpack.c.l.b16 %v808
    %v3821 = vunpack.c.h.b16 %v808
    %v3822 = vunpack.c.l.b16 %v809
    %v3823 = vunpack.c.h.b16 %v809
    %v3824 = vunpack.c.l.b16 %v810
    %v3825 = vunpack.c.h.b16 %v810
    %v3826 = vunpack.c.l.b16 %v811
    %v3827 = vunpack.c.h.b16 %v811
    %v3828 = vunpack.c.l.b16 %v812
    %v3829 = vunpack.c.h.b16 %v812
    %v3830 = vunpack.c.l.b16 %v813
    %v3831 = vunpack.c.h.b16 %v813
    %v3832 = vunpack.c.l.b16 %v814
    %v3833 = vunpack.c.h.b16 %v814
    %v3834 = vunpack.c.l.b16 %v815
    %v3835 = vunpack.c.h.b16 %v815
    %v3836 = vunpack.c.l.b16 %v816
    %v3837 = vunpack.c.h.b16 %v816
    %v3838 = vunpack.c.l.b16 %v817
    %v3839 = vunpack.c.h.b16 %v817
    %v3840 = vunpack.c.l.b16 %v818
    %v3841 = vunpack.c.h.b16 %v818
    %v3842 = vunpack.c.l.b16 %v819
    %v3843 = vunpack.c.h.b16 %v819
    %v3844 = vunpack.c.l.b16 %v820
    %v3845 = vunpack.c.h.b16 %v820
    %v3846 = vunpack.c.l.b16 %v821
    %v3847 = vunpack.c.h.b16 %v821
    %v3848 = vunpack.c.l.b16 %v822
    %v3849 = vunpack.c.h.b16 %v822
    %v3850 = vunpack.c.l.b16 %v823
    %v3851 = vunpack.c.h.b16 %v823
    %v3852 = vunpack.c.l.b16 %v824
    %v3853 = vunpack.c.h.b16 %v824
    %v3854 = vunpack.c.l.b16 %v825
    %v3855 = vunpack.c.h.b16 %v825
    %v3856 = vunpack.c.l.b16 %v826
    %v3857 = vunpack.c.h.b16 %v826
    %v3858 = vunpack.c.l.b16 %v827
    %v3859 = vunpack.c.h.b16 %v827
    %v3860 = vunpack.c.l.b16 %v828
    %v3861 = vunpack.c.h.b16 %v828
    %v3862 = vunpack.c.l.b16 %v829
    %v3863 = vunpack.c.h.b16 %v829
    %v3864 = vunpack.c.l.b16 %v830
    %v3865 = vunpack.c.h.b16 %v830
    %v3866 = vunpack.c.l.b16 %v831
    %v3867 = vunpack.c.h.b16 %v831
    %v3868 = vunpack.c.l.b16 %v832
    %v3869 = vunpack.c.h.b16 %v832
    %v3870 = vunpack.c.l.b16 %v833
    %v3871 = vunpack.c.h.b16 %v833
    %v3872 = vunpack.c.l.b16 %v834
    %v3873 = vunpack.c.h.b16 %v834
    %v3874 = vunpack.c.l.b16 %v835
    %v3875 = vunpack.c.h.b16 %v835
    %v3876 = vunpack.c.l.b16 %v836
    %v3877 = vunpack.c.h.b16 %v836
    %v3878 = vunpack.c.l.b16 %v837
    %v3879 = vunpack.c.h.b16 %v837
    %v3880 = vunpack.c.l.b16 %v838
    %v3881 = vunpack.c.h.b16 %v838
    %v3882 = vunpack.c.l.b16 %v839
    %v3883 = vunpack.c.h.b16 %v839
    %v3884 = vunpack.c.l.b16 %v840
    %v3885 = vunpack.c.h.b16 %v840
    %v3886 = vunpack.c.l.b16 %v841
    %v3887 = vunpack.c.h.b16 %v841
    %v3888 = vunpack.c.l.b16 %v842
    %v3889 = vunpack.c.h.b16 %v842
    %v3890 = vunpack.c.l.b16 %v843
    %v3891 = vunpack.c.h.b16 %v843
    %v3892 = vunpack.c.l.b16 %v844
    %v3893 = vunpack.c.h.b16 %v844
    %v3894 = vunpack.c.l.b16 %v845
    %v3895 = vunpack.c.h.b16 %v845
    %v3896 = vunpack.c.l.b16 %v846
    %v3897 = vunpack.c.h.b16 %v846
    %v3898 = vunpack.c.l.b16 %v847
    %v3899 = vunpack.c.h.b16 %v847
    %v3900 = vunpack.c.l.b16 %v848
    %v3901 = vunpack.c.h.b16 %v848
    %v3902 = vunpack.c.l.b16 %v849
    %v3903 = vunpack.c.h.b16 %v849
    %v3904 = vunpack.c.l.b16 %v850
    %v3905 = vunpack.c.h.b16 %v850
    %v3906 = vunpack.c.l.b16 %v851
    %v3907 = vunpack.c.h.b16 %v851
    %v3908 = vunpack.c.l.b16 %v852
    %v3909 = vunpack.c.h.b16 %v852
    %v3910 = vunpack.c.l.b16 %v853
    %v3911 = vunpack.c.h.b16 %v853
    %v3912 = vunpack.c.l.b16 %v854
    %v3913 = vunpack.c.h.b16 %v854
    %v3914 = vunpack.c.l.b16 %v855
    %v3915 = vunpack.c.h.b16 %v855
    %v3916 = vunpack.c.l.b16 %v856
    %v3917 = vunpack.c.h.b16 %v856
    %v3918 = vunpack.c.l.b16 %v857
    %v3919 = vunpack.c.h.b16 %v857
    %v3920 = vunpack.c.l.b16 %v858
    %v3921 = vunpack.c.h.b16 %v858
    %v3922 = vunpack.c.l.b16 %v859
    %v3923 = vunpack.c.h.b16 %v859
    %v3924 = vunpack.c.l.b16 %v860
    %v3925 = vunpack.c.h.b16 %v860
    %v3926 = vunpack.c.l.b16 %v861
    %v3927 = vunpack.c.h.b16 %v861
    %v3928 = vunpack.c.l.b16 %v862
    %v3929 = vunpack.c.h.b16 %v862
    %v3930 = vunpack.c.l.b16 %v863
    %v3931 = vunpack.c.h.b16 %v863
    %v3932 = vunpack.c.l.b16 %v864
    %v3933 = vunpack.c.h.b16 %v864
    %v3934 = vunpack.c.l.b16 %v865
    %v3935 = vunpack.c.h.b16 %v865
    %v3936 = vunpack.c.l.b16 %v866
    %v3937 = vunpack.c.h.b16 %v866
    %v3938 = vunpack.c.l.b16 %v867
    %v3939 = vunpack.c.h.b16 %v867
    %v3940 = vunpack.c.l.b16 %v868
    %v3941 = vunpack.c.h.b16 %v868
    %v3942 = vunpack.c.l.b16 %v869
    %v3943 = vunpack.c.h.b16 %v869
    %v3944 = vunpack.c.l.b16 %v870
    %v3945 = vunpack.c.h.b16 %v870
    %v3946 = vunpack.c.l.b16 %v871
    %v3947 = vunpack.c.h.b16 %v871
    %v3948 = vunpack.c.l.b16 %v872
    %v3949 = vunpack.c.h.b16 %v872
    %v3950 = vunpack.c.l.b16 %v873
    %v3951 = vunpack.c.h.b16 %v873
    %v3952 = vunpack.c.l.b16 %v874
    %v3953 = vunpack.c.h.b16 %v874
    %v3954 = vunpack.c.l.b16 %v875
    %v3955 = vunpack.c.h.b16 %v875
    %v3956 = vunpack.c.l.b16 %v876
    %v3957 = vunpack.c.h.b16 %v876
    %v3958 = vunpack.c.l.b16 %v877
    %v3959 = vunpack.c.h.b16 %v877
    %v3960 = vunpack.c.l.b16 %v878
    %v3961 = vunpack.c.h.b16 %v878
    %v3962 = vunpack.c.l.b16 %v879
    %v3963 = vunpack.c.h.b16 %v879
    %v3964 = vunpack.c.l.b16 %v880
    %v3965 = vunpack.c.h.b16 %v880
    %v3966 = vunpack.c.l.b16 %v881
    %v3967 = vunpack.c.h.b16 %v881
    %v3968 = vunpack.c.l.b16 %v882
    %v3969 = vunpack.c.h.b16 %v882
    %v3970 = vunpack.c.l.b16 %v883
    %v3971 = vunpack.c.h.b16 %v883
    %v3972 = vunpack.c.l.b16 %v884
    %v3973 = vunpack.c.h.b16 %v884
    %v3974 = vunpack.c.l.b16 %v885
    %v3975 = vunpack.c.h.b16 %v885
    %v3976 = vunpack.c.l.b16 %v886
    %v3977 = vunpack.c.h.b16 %v886
    %v3978 = vunpack.c.l.b16 %v887
    %v3979 = vunpack.c.h.b16 %v887
    %v3980 = vunpack.c.l.b16 %v888
    %v3981 = vunpack.c.h.b16 %v888
    %v3982 = vunpack.c.l.b16 %v889
    %v3983 = vunpack.c.h.b16 %v889
    %v3984 = vunpack.c.l.b16 %v890
    %v3985 = vunpack.c.h.b16 %v890
    %v3986 = vunpack.c.l.b16 %v891
    %v3987 = vunpack.c.h.b16 %v891
    %v3988 = vunpack.c.l.b16 %v892
    %v3989 = vunpack.c.h.b16 %v892
    %v3990 = vunpack.c.l.b16 %v893
    %v3991 = vunpack.c.h.b16 %v893
    %v3992 = vunpack.c.l.b16 %v894
    %v3993 = vunpack.c.h.b16 %v894
    %v3994 = vunpack.c.l.b16 %v895
    %v3995 = vunpack.c.h.b16 %v895
    %v3996 = vunpack.c.l.b16 %v896
    %v3997 = vunpack.c.h.b16 %v896
    %v3998 = vunpack.c.l.b16 %v897
    %v3999 = vunpack.c.h.b16 %v897
    %v4000 = vunpack.c.l.b16 %v898
    %v4001 = vunpack.c.h.b16 %v898
    %v4002 = vunpack.c.l.b16 %v899
    %v4003 = vunpack.c.h.b16 %v899
    %v4004 = vunpack.c.l.b16 %v900
    %v4005 = vunpack.c.h.b16 %v900
    %v4006 = vunpack.c.l.b16 %v901
    %v4007 = vunpack.c.h.b16 %v901
    %v4008 = vunpack.c.l.b16 %v902
    %v4009 = vunpack.c.h.b16 %v902
    %v4010 = vunpack.c.l.b16 %v903
    %v4011 = vunpack.c.h.b16 %v903
    %v4012 = vunpack.c.l.b16 %v904
    %v4013 = vunpack.c.h.b16 %v904
    %v4014 = vunpack.c.l.b16 %v905
    %v4015 = vunpack.c.h.b16 %v905
    %v4016 = vunpack.c.l.b16 %v906
    %v4017 = vunpack.c.h.b16 %v906
    %v4018 = vunpack.c.l.b16 %v907
    %v4019 = vunpack.c.h.b16 %v907
    %v4020 = vunpack.c.l.b16 %v908
    %v4021 = vunpack.c.h.b16 %v908
    %v4022 = vunpack.c.l.b16 %v909
    %v4023 = vunpack.c.h.b16 %v909
    %v4024 = vunpack.c.l.b16 %v910
    %v4025 = vunpack.c.h.b16 %v910
    %v4026 = vunpack.c.l.b16 %v911
    %v4027 = vunpack.c.h.b16 %v911
    %v4028 = vunpack.c.l.b16 %v912
    %v4029 = vunpack.c.h.b16 %v912
    %v4030 = vunpack.c.l.b16 %v913
    %v4031 = vunpack.c.h.b16 %v913
    %v4032 = vunpack.c.l.b16 %v914
    %v4033 = vunpack.c.h.b16 %v914
    %v4034 = vunpack.c.l.b16 %v915
    %v4035 = vunpack.c.h.b16 %v915
    %v4036 = vunpack.c.l.b16 %v916
    %v4037 = vunpack.c.h.b16 %v916
    %v4038 = vunpack.c.l.b16 %v917
    %v4039 = vunpack.c.h.b16 %v917
    %v4040 = vunpack.c.l.b16 %v918
    %v4041 = vunpack.c.h.b16 %v918
    %v4042 = vunpack.c.l.b16 %v919
    %v4043 = vunpack.c.h.b16 %v919
    %v4044 = vunpack.c.l.b16 %v920
    %v4045 = vunpack.c.h.b16 %v920
    %v4046 = vunpack.c.l.b16 %v921
    %v4047 = vunpack.c.h.b16 %v921
    %v4048 = vunpack.c.l.b16 %v922
    %v4049 = vunpack.c.h.b16 %v922
    %v4050 = vunpack.c.l.b16 %v923
    %v4051 = vunpack.c.h.b16 %v923
    %v4052 = vunpack.c.l.b16 %v924
    %v4053 = vunpack.c.h.b16 %v924
    %v4054 = vunpack.c.l.b16 %v925
    %v4055 = vunpack.c.h.b16 %v925
    %v4056 = vunpack.c.l.b16 %v926
    %v4057 = vunpack.c.h.b16 %v926
    %v4058 = vunpack.c.l.b16 %v927
    %v4059 = vunpack.c.h.b16 %v927
    %v4060 = vunpack.c.l.b16 %v928
    %v4061 = vunpack.c.h.b16 %v928
    %v4062 = vunpack.c.l.b16 %v929
    %v4063 = vunpack.c.h.b16 %v929
    %v4064 = vunpack.c.l.b16 %v930
    %v4065 = vunpack.c.h.b16 %v930
    %v4066 = vunpack.c.l.b16 %v931
    %v4067 = vunpack.c.h.b16 %v931
    %v4068 = vunpack.c.l.b16 %v932
    %v4069 = vunpack.c.h.b16 %v932
    %v4070 = vunpack.c.l.b16 %v933
    %v4071 = vunpack.c.h.b16 %v933
    %v4072 = vunpack.c.l.b16 %v934
    %v4073 = vunpack.c.h.b16 %v934
    %v4074 = vunpack.c.l.b16 %v935
    %v4075 = vunpack.c.h.b16 %v935
    %v4076 = vunpack.c.l.b16 %v936
    %v4077 = vunpack.c.h.b16 %v936
    %v4078 = vunpack.c.l.b16 %v937
    %v4079 = vunpack.c.h.b16 %v937
    %v4080 = vunpack.c.l.b16 %v938
    %v4081 = vunpack.c.h.b16 %v938
    %v4082 = vunpack.c.l.b16 %v939
    %v4083 = vunpack.c.h.b16 %v939
    %v4084 = vunpack.c.l.b16 %v940
    %v4085 = vunpack.c.h.b16 %v940
    %v4086 = vunpack.c.l.b16 %v941
    %v4087 = vunpack.c.h.b16 %v941
    %v4088 = vunpack.c.l.b16 %v942
    %v4089 = vunpack.c.h.b16 %v942
    %v4090 = vunpack.c.l.b16 %v943
    %v4091 = vunpack.c.h.b16 %v943
    %v4092 = vunpack.c.l.b16 %v944
    %v4093 = vunpack.c.h.b16 %v944
    %v4094 = vunpack.c.l.b16 %v945
    %v4095 = vunpack.c.h.b16 %v945
    %v4096 = vunpack.c.l.b16 %v946
    %v4097 = vunpack.c.h.b16 %v946
    %v4098 = vunpack.c.l.b16 %v947
    %v4099 = vunpack.c.h.b16 %v947
    %v4100 = vunpack.c.l.b16 %v948
    %v4101 = vunpack.c.h.b16 %v948
    %v4102 = vunpack.c.l.b16 %v949
    %v4103 = vunpack.c.h.b16 %v949
    %v4104 = vunpack.c.l.b16 %v950
    %v4105 = vunpack.c.h.b16 %v950
    %v4106 = vunpack.c.l.b16 %v951
    %v4107 = vunpack.c.h.b16 %v951
    %v4108 = vunpack.c.l.b16 %v952
    %v4109 = vunpack.c.h.b16 %v952
    %v4110 = vunpack.c.l.b16 %v953
    %v4111 = vunpack.c.h.b16 %v953
    %v4112 = vunpack.c.l.b16 %v954
    %v4113 = vunpack.c.h.b16 %v954
    %v4114 = vunpack.c.l.b16 %v955
    %v4115 = vunpack.c.h.b16 %v955
    %v4116 = vunpack.c.l.b16 %v956
    %v4117 = vunpack.c.h.b16 %v956
    %v4118 = vunpack.c.l.b16 %v957
    %v4119 = vunpack.c.h.b16 %v957
    %v4120 = vunpack.c.l.b16 %v958
    %v4121 = vunpack.c.h.b16 %v958
    %v4122 = vunpack.c.l.b16 %v959
    %v4123 = vunpack.c.h.b16 %v959
    %v4124 = vunpack.c.l.b16 %v960
    %v4125 = vunpack.c.h.b16 %v960
    %v4126 = vunpack.c.l.b16 %v961
    %v4127 = vunpack.c.h.b16 %v961
    %v4128 = vunpack.c.l.b16 %v962
    %v4129 = vunpack.c.h.b16 %v962
    %v4130 = vunpack.c.l.b16 %v963
    %v4131 = vunpack.c.h.b16 %v963
    %v4132 = vunpack.c.l.b16 %v964
    %v4133 = vunpack.c.h.b16 %v964
    %v4134 = vunpack.c.l.b16 %v965
    %v4135 = vunpack.c.h.b16 %v965
    %v4136 = vunpack.c.l.b16 %v966
    %v4137 = vunpack.c.h.b16 %v966
    %v4138 = vunpack.c.l.b16 %v967
    %v4139 = vunpack.c.h.b16 %v967
    %v4140 = vunpack.c.l.b16 %v968
    %v4141 = vunpack.c.h.b16 %v968
    %v4142 = vunpack.c.l.b16 %v969
    %v4143 = vunpack.c.h.b16 %v969
    %v4144 = vunpack.c.l.b16 %v970
    %v4145 = vunpack.c.h.b16 %v970
    %v4146 = vunpack.c.l.b16 %v971
    %v4147 = vunpack.c.h.b16 %v971
    %v4148 = vunpack.c.l.b16 %v972
    %v4149 = vunpack.c.h.b16 %v972
    %v4150 = vunpack.c.l.b16 %v973
    %v4151 = vunpack.c.h.b16 %v973
    %v4152 = vunpack.c.l.b16 %v974
    %v4153 = vunpack.c.h.b16 %v974
    %v4154 = vunpack.c.l.b16 %v975
    %v4155 = vunpack.c.h.b16 %v975
    %v4156 = vunpack.c.l.b16 %v976
    %v4157 = vunpack.c.h.b16 %v976
    %v4158 = vunpack.c.l.b16 %v977
    %v4159 = vunpack.c.h.b16 %v977
    %v4160 = vunpack.c.l.b16 %v978
    %v4161 = vunpack.c.h.b16 %v978
    %v4162 = vunpack.c.l.b16 %v979
    %v4163 = vunpack.c.h.b16 %v979
    %v4164 = vunpack.c.l.b16 %v980
    %v4165 = vunpack.c.h.b16 %v980
    %v4166 = vunpack.c.l.b16 %v981
    %v4167 = vunpack.c.h.b16 %v981
    %v4168 = vunpack.c.l.b16 %v982
    %v4169 = vunpack.c.h.b16 %v982
    %v4170 = vunpack.c.l.b16 %v983
    %v4171 = vunpack.c.h.b16 %v983
    %v4172 = vunpack.c.l.b16 %v984
    %v4173 = vunpack.c.h.b16 %v984
    %v4174 = vunpack.c.l.b16 %v985
    %v4175 = vunpack.c.h.b16 %v985
    %v4176 = vunpack.c.l.b16 %v986
    %v4177 = vunpack.c.h.b16 %v986
    %v4178 = vunpack.c.l.b16 %v987
    %v4179 = vunpack.c.h.b16 %v987
    %v4180 = vunpack.c.l.b16 %v988
    %v4181 = vunpack.c.h.b16 %v988
    %v4182 = vunpack.c.l.b16 %v989
    %v4183 = vunpack.c.h.b16 %v989
    %v4184 = vunpack.c.l.b16 %v990
    %v4185 = vunpack.c.h.b16 %v990
    %v4186 = vunpack.c.l.b16 %v991
    %v4187 = vunpack.c.h.b16 %v991
    %v4188 = vunpack.c.l.b16 %v992
    %v4189 = vunpack.c.h.b16 %v992
    %v4190 = vunpack.c.l.b16 %v993
    %v4191 = vunpack.c.h.b16 %v993
    %v4192 = vunpack.c.l.b16 %v994
    %v4193 = vunpack.c.h.b16 %v994
    %v4194 = vunpack.c.l.b16 %v995
    %v4195 = vunpack.c.h.b16 %v995
    %v4196 = vunpack.c.l.b16 %v996
    %v4197 = vunpack.c.h.b16 %v996
    %v4198 = vunpack.c.l.b16 %v997
    %v4199 = vunpack.c.h.b16 %v997
    %v4200 = vunpack.c.l.b16 %v998
    %v4201 = vunpack.c.h.b16 %v998
    %v4202 = vunpack.c.l.b16 %v999
    %v4203 = vunpack.c.h.b16 %v999
    %v4204 = vunpack.c.l.b16 %v1000
    %v4205 = vunpack.c.h.b16 %v1000
    %v4206 = vunpack.c.l.b16 %v1001
    %v4207 = vunpack.c.h.b16 %v1001
    %v4208 = vunpack.c.l.b16 %v1002
    %v4209 = vunpack.c.h.b16 %v1002
    %v4210 = vunpack.c.l.b16 %v1003
    %v4211 = vunpack.c.h.b16 %v1003
    %v4212 = vunpack.c.l.b16 %v1004
    %v4213 = vunpack.c.h.b16 %v1004
    %v4214 = vunpack.c.l.b16 %v1005
    %v4215 = vunpack.c.h.b16 %v1005
    %v4216 = vunpack.c.l.b16 %v1006
    %v4217 = vunpack.c.h.b16 %v1006
    %v4218 = vunpack.c.l.b16 %v1007
    %v4219 = vunpack.c.h.b16 %v1007
    %v4220 = vunpack.c.l.b16 %v1008
    %v4221 = vunpack.c.h.b16 %v1008
    %v4222 = vunpack.c.l.b16 %v1009
    %v4223 = vunpack.c.h.b16 %v1009
    %v4224 = vunpack.c.l.b16 %v1010
    %v4225 = vunpack.c.h.b16 %v1010
    %v4226 = vunpack.c.l.b16 %v1011
    %v4227 = vunpack.c.h.b16 %v1011
    %v4228 = vunpack.c.l.b16 %v1012
    %v4229 = vunpack.c.h.b16 %v1012
    %v4230 = vunpack.c.l.b16 %v1013
    %v4231 = vunpack.c.h.b16 %v1013
    %v4232 = vunpack.c.l.b16 %v1014
    %v4233 = vunpack.c.h.b16 %v1014
    %v4234 = vunpack.c.l.b16 %v1015
    %v4235 = vunpack.c.h.b16 %v1015
    %v4236 = vunpack.c.l.b16 %v1016
    %v4237 = vunpack.c.h.b16 %v1016
    %v4238 = vunpack.c.l.b16 %v1017
    %v4239 = vunpack.c.h.b16 %v1017
    %v4240 = vunpack.c.l.b16 %v1018
    %v4241 = vunpack.c.h.b16 %v1018
    %v4242 = vunpack.c.l.b16 %v1019
    %v4243 = vunpack.c.h.b16 %v1019
    %v4244 = vunpack.c.l.b16 %v1020
    %v4245 = vunpack.c.h.b16 %v1020
    %v4246 = vunpack.c.l.b16 %v1021
    %v4247 = vunpack.c.h.b16 %v1021
    %v4248 = vunpack.c.l.b16 %v1022
    %v4249 = vunpack.c.h.b16 %v1022
    %v4250 = vunpack.c.l.b16 %v1023
    %v4251 = vunpack.c.h.b16 %v1023
    %v4252 = vunpack.c.l.b16 %v1024
    %v4253 = vunpack.c.h.b16 %v1024
    %v4254 = vunpack.c.l.b16 %v1025
    %v4255 = vunpack.c.h.b16 %v1025
    %v4256 = vunpack.c.l.b16 %v1026
    %v4257 = vunpack.c.h.b16 %v1026
    %v4258 = vunpack.c.l.b16 %v1027
    %v4259 = vunpack.c.h.b16 %v1027
    %v4260 = vunpack.c.l.b16 %v1028
    %v4261 = vunpack.c.h.b16 %v1028
    %v4262 = vunpack.c.l.b16 %v1029
    %v4263 = vunpack.c.h.b16 %v1029
    %v4264 = vunpack.c.l.b16 %v1030
    %v4265 = vunpack.c.h.b16 %v1030
    %v4266 = vunpack.c.l.b16 %v1031
    %v4267 = vunpack.c.h.b16 %v1031
    %v4268 = vunpack.c.l.b16 %v1032
    %v4269 = vunpack.c.h.b16 %v1032
    %v4270 = vunpack.c.l.b16 %v1033
    %v4271 = vunpack.c.h.b16 %v1033
    %v4272 = vunpack.c.l.b16 %v1034
    %v4273 = vunpack.c.h.b16 %v1034
    %v4274 = vunpack.c.l.b16 %v1035
    %v4275 = vunpack.c.h.b16 %v1035
    %v4276 = vunpack.c.l.b16 %v1036
    %v4277 = vunpack.c.h.b16 %v1036
    %v4278 = vunpack.c.l.b16 %v1037
    %v4279 = vunpack.c.h.b16 %v1037
    %v4280 = vunpack.c.l.b16 %v1038
    %v4281 = vunpack.c.h.b16 %v1038
    %v4282 = vunpack.c.l.b16 %v1039
    %v4283 = vunpack.c.h.b16 %v1039
    %v4284 = vunpack.c.l.b16 %v1040
    %v4285 = vunpack.c.h.b16 %v1040
    %v4286 = vunpack.c.l.b16 %v1041
    %v4287 = vunpack.c.h.b16 %v1041
    %v4288 = vunpack.c.l.b16 %v1042
    %v4289 = vunpack.c.h.b16 %v1042
    %v4290 = vunpack.c.l.b16 %v1043
    %v4291 = vunpack.c.h.b16 %v1043
    %v4292 = vunpack.c.l.b16 %v1044
    %v4293 = vunpack.c.h.b16 %v1044
    %v4294 = vunpack.c.l.b16 %v1045
    %v4295 = vunpack.c.h.b16 %v1045
    %v4296 = vunpack.c.l.b16 %v1046
    %v4297 = vunpack.c.h.b16 %v1046
    %v4298 = vunpack.c.l.b16 %v1047
    %v4299 = vunpack.c.h.b16 %v1047
    %v4300 = vunpack.c.l.b16 %v1048
    %v4301 = vunpack.c.h.b16 %v1048
    %v4302 = vunpack.c.l.b16 %v1049
    %v4303 = vunpack.c.h.b16 %v1049
    %v4304 = vunpack.c.l.b16 %v1050
    %v4305 = vunpack.c.h.b16 %v1050
    %v4306 = vunpack.c.l.b16 %v1051
    %v4307 = vunpack.c.h.b16 %v1051
    %v4308 = vunpack.c.l.b16 %v1052
    %v4309 = vunpack.c.h.b16 %v1052
    %v4310 = vunpack.c.l.b16 %v1053
    %v4311 = vunpack.c.h.b16 %v1053
    %v4312 = vunpack.c.l.b16 %v1054
    %v4313 = vunpack.c.h.b16 %v1054
    %v4314 = vunpack.c.l.b16 %v1055
    %v4315 = vunpack.c.h.b16 %v1055
    %v4316 = vunpack.c.l.b16 %v1056
    %v4317 = vunpack.c.h.b16 %v1056
    %v4318 = vunpack.c.l.b16 %v1057
    %v4319 = vunpack.c.h.b16 %v1057
    %v4320 = vunpack.c.l.b16 %v1058
    %v4321 = vunpack.c.h.b16 %v1058
    %v4322 = vunpack.c.l.b16 %v1059
    %v4323 = vunpack.c.h.b16 %v1059
    %v4324 = vunpack.c.l.b16 %v1060
    %v4325 = vunpack.c.h.b16 %v1060
    %v4326 = vunpack.c.l.b16 %v1061
    %v4327 = vunpack.c.h.b16 %v1061
    %v4328 = vunpack.c.l.b16 %v1062
    %v4329 = vunpack.c.h.b16 %v1062
    %v4330 = vunpack.c.l.b16 %v1063
    %v4331 = vunpack.c.h.b16 %v1063
    %v4332 = vunpack.c.l.b16 %v1064
    %v4333 = vunpack.c.h.b16 %v1064
    %v4334 = vunpack.c.l.b16 %v1065
    %v4335 = vunpack.c.h.b16 %v1065
    %v4336 = vunpack.c.l.b16 %v1066
    %v4337 = vunpack.c.h.b16 %v1066
    %v4338 = vunpack.c.l.b16 %v1067
    %v4339 = vunpack.c.h.b16 %v1067
    %v4340 = vunpack.c.l.b16 %v1068
    %v4341 = vunpack.c.h.b16 %v1068
    %v4342 = vunpack.c.l.b16 %v1069
    %v4343 = vunpack.c.h.b16 %v1069
    %v4344 = vunpack.c.l.b16 %v1070
    %v4345 = vunpack.c.h.b16 %v1070
    %v4346 = vunpack.c.l.b16 %v1071
    %v4347 = vunpack.c.h.b16 %v1071
    %v4348 = vunpack.c.l.b16 %v1072
    %v4349 = vunpack.c.h.b16 %v1072
    %v4350 = vunpack.c.l.b16 %v1073
    %v4351 = vunpack.c.h.b16 %v1073
    %v4352 = vunpack.c.l.b16 %v1074
    %v4353 = vunpack.c.h.b16 %v1074
    %v4354 = vunpack.c.l.b16 %v1075
    %v4355 = vunpack.c.h.b16 %v1075
    %v4356 = vunpack.c.l.b16 %v1076
    %v4357 = vunpack.c.h.b16 %v1076
    %v4358 = vunpack.c.l.b16 %v1077
    %v4359 = vunpack.c.h.b16 %v1077
    %v4360 = vunpack.c.l.b16 %v1078
    %v4361 = vunpack.c.h.b16 %v1078
    %v4362 = vunpack.c.l.b16 %v1079
    %v4363 = vunpack.c.h.b16 %v1079
    %v4364 = vunpack.c.l.b16 %v1080
    %v4365 = vunpack.c.h.b16 %v1080
    %v4366 = vunpack.c.l.b16 %v1081
    %v4367 = vunpack.c.h.b16 %v1081
    %v4368 = vunpack.c.l.b16 %v1082
    %v4369 = vunpack.c.h.b16 %v1082
    %v4370 = vunpack.c.l.b16 %v1083
    %v4371 = vunpack.c.h.b16 %v1083
    %v4372 = vunpack.c.l.b16 %v1084
    %v4373 = vunpack.c.h.b16 %v1084
    %v4374 = vunpack.c.l.b16 %v1085
    %v4375 = vunpack.c.h.b16 %v1085
    %v4376 = vunpack.c.l.b16 %v1086
    %v4377 = vunpack.c.h.b16 %v1086
    %v4378 = vunpack.c.l.b16 %v1087
    %v4379 = vunpack.c.h.b16 %v1087
    %v4380 = vunpack.c.l.b16 %v1088
    %v4381 = vunpack.c.h.b16 %v1088
    %v4382 = vunpack.c.l.b16 %v1089
    %v4383 = vunpack.c.h.b16 %v1089
    %v4384 = vunpack.c.l.b16 %v1090
    %v4385 = vunpack.c.h.b16 %v1090
    %v4386 = vunpack.c.l.b16 %v1091
    %v4387 = vunpack.c.h.b16 %v1091
    %v4388 = vunpack.c.l.b16 %v1092
    %v4389 = vunpack.c.h.b16 %v1092
    %v4390 = vunpack.c.l.b16 %v1093
    %v4391 = vunpack.c.h.b16 %v1093
    %v4392 = vunpack.c.l.b16 %v1094
    %v4393 = vunpack.c.h.b16 %v1094
    %v4394 = vunpack.c.l.b16 %v1095
    %v4395 = vunpack.c.h.b16 %v1095
    %v4396 = vunpack.c.l.b16 %v1096
    %v4397 = vunpack.c.h.b16 %v1096
    %v4398 = vunpack.c.l.b16 %v1097
    %v4399 = vunpack.c.h.b16 %v1097
    %v4400 = vunpack.c.l.b16 %v1098
    %v4401 = vunpack.c.h.b16 %v1098
    %v4402 = vunpack.c.l.b16 %v1099
    %v4403 = vunpack.c.h.b16 %v1099
    %v4404 = vunpack.c.l.b16 %v1100
    %v4405 = vunpack.c.h.b16 %v1100
    %v4406 = vunpack.c.l.b16 %v1101
    %v4407 = vunpack.c.h.b16 %v1101
    %v4408 = vunpack.c.l.b16 %v1102
    %v4409 = vunpack.c.h.b16 %v1102
    %v4410 = vunpack.c.l.b16 %v1103
    %v4411 = vunpack.c.h.b16 %v1103
    %v4412 = vunpack.c.l.b16 %v1104
    %v4413 = vunpack.c.h.b16 %v1104
    %v4414 = vunpack.c.l.b16 %v1105
    %v4415 = vunpack.c.h.b16 %v1105
    %v4416 = vunpack.c.l.b16 %v1106
    %v4417 = vunpack.c.h.b16 %v1106
    %v4418 = vunpack.c.l.b16 %v1107
    %v4419 = vunpack.c.h.b16 %v1107
    %v4420 = vunpack.c.l.b16 %v1108
    %v4421 = vunpack.c.h.b16 %v1108
    %v4422 = vunpack.c.l.b16 %v1109
    %v4423 = vunpack.c.h.b16 %v1109
    %v4424 = vunpack.c.l.b16 %v1110
    %v4425 = vunpack.c.h.b16 %v1110
    %v4426 = vunpack.c.l.b16 %v1111
    %v4427 = vunpack.c.h.b16 %v1111
    %v4428 = vunpack.c.l.b16 %v1112
    %v4429 = vunpack.c.h.b16 %v1112
    %v4430 = vunpack.c.l.b16 %v1113
    %v4431 = vunpack.c.h.b16 %v1113
    %v4432 = vunpack.c.l.b16 %v1114
    %v4433 = vunpack.c.h.b16 %v1114
    %v4434 = vunpack.c.l.b16 %v1115
    %v4435 = vunpack.c.h.b16 %v1115
    %v4436 = vunpack.c.l.b16 %v1116
    %v4437 = vunpack.c.h.b16 %v1116
    %v4438 = vunpack.c.l.b16 %v1117
    %v4439 = vunpack.c.h.b16 %v1117
    %v4440 = vunpack.c.l.b16 %v1118
    %v4441 = vunpack.c.h.b16 %v1118
    %v4442 = vunpack.c.l.b16 %v1119
    %v4443 = vunpack.c.h.b16 %v1119
    %v4444 = vunpack.c.l.b16 %v1120
    %v4445 = vunpack.c.h.b16 %v1120
    %v4446 = vunpack.c.l.b16 %v1121
    %v4447 = vunpack.c.h.b16 %v1121
    %v4448 = vunpack.c.l.b16 %v1122
    %v4449 = vunpack.c.h.b16 %v1122
    %v4450 = vunpack.c.l.b16 %v1123
    %v4451 = vunpack.c.h.b16 %v1123
    %v4452 = vunpack.c.l.b16 %v1124
    %v4453 = vunpack.c.h.b16 %v1124
    %v4454 = vunpack.c.l.b16 %v1125
    %v4455 = vunpack.c.h.b16 %v1125
    %v4456 = vunpack.c.l.b16 %v1126
    %v4457 = vunpack.c.h.b16 %v1126
    %v4458 = vunpack.c.l.b16 %v1127
    %v4459 = vunpack.c.h.b16 %v1127
    %v4460 = vunpack.c.l.b16 %v1128
    %v4461 = vunpack.c.h.b16 %v1128
    %v4462 = vunpack.c.l.b16 %v1129
    %v4463 = vunpack.c.h.b16 %v1129
    %v4464 = vunpack.c.l.b16 %v1130
    %v4465 = vunpack.c.h.b16 %v1130
    %v4466 = vunpack.c.l.b16 %v1131
    %v4467 = vunpack.c.h.b16 %v1131
    %v4468 = vunpack.c.l.b16 %v1132
    %v4469 = vunpack.c.h.b16 %v1132
    %v4470 = vunpack.c.l.b16 %v1133
    %v4471 = vunpack.c.h.b16 %v1133
    %v4472 = vunpack.c.l.b16 %v1134
    %v4473 = vunpack.c.h.b16 %v1134
    %v4474 = vunpack.c.l.b16 %v1135
    %v4475 = vunpack.c.h.b16 %v1135
    %v4476 = vunpack.c.l.b16 %v1136
    %v4477 = vunpack.c.h.b16 %v1136
    %v4478 = vunpack.c.l.b16 %v1137
    %v4479 = vunpack.c.h.b16 %v1137
    %v4480 = vunpack.c.l.b16 %v1138
    %v4481 = vunpack.c.h.b16 %v1138
    %v4482 = vunpack.c.l.b16 %v1139
    %v4483 = vunpack.c.h.b16 %v1139
    %v4484 = vunpack.c.l.b16 %v1140
    %v4485 = vunpack.c.h.b16 %v1140
    %v4486 = vunpack.c.l.b16 %v1141
    %v4487 = vunpack.c.h.b16 %v1141
    %v4488 = vunpack.c.l.b16 %v1142
    %v4489 = vunpack.c.h.b16 %v1142
    %v4490 = vunpack.c.l.b16 %v1143
    %v4491 = vunpack.c.h.b16 %v1143
    %v4492 = vunpack.c.l.b16 %v1144
    %v4493 = vunpack.c.h.b16 %v1144
    %v4494 = vunpack.c.l.b16 %v1145
    %v4495 = vunpack.c.h.b16 %v1145
    %v4496 = vunpack.c.l.b16 %v1146
    %v4497 = vunpack.c.h.b16 %v1146
    %v4498 = vunpack.c.l.b16 %v1147
    %v4499 = vunpack.c.h.b16 %v1147
    %v4500 = vunpack.c.l.b16 %v1148
    %v4501 = vunpack.c.h.b16 %v1148
    %v4502 = vunpack.c.l.b16 %v1149
    %v4503 = vunpack.c.h.b16 %v1149
    %v4504 = vunpack.c.l.b16 %v1150
    %v4505 = vunpack.c.h.b16 %v1150
    %v4506 = vunpack.c.l.b16 %v1151
    %v4507 = vunpack.c.h.b16 %v1151
    %v4508 = vunpack.c.l.b16 %v1152
    %v4509 = vunpack.c.h.b16 %v1152
    %v4510 = vunpack.c.l.b16 %v1153
    %v4511 = vunpack.c.h.b16 %v1153
    %v4512 = vunpack.c.l.b16 %v1154
    %v4513 = vunpack.c.h.b16 %v1154
    %v4514 = vunpack.c.l.b16 %v1155
    %v4515 = vunpack.c.h.b16 %v1155
    %v4516 = vunpack.c.l.b16 %v1156
    %v4517 = vunpack.c.h.b16 %v1156
    %v4518 = vunpack.c.l.b16 %v1157
    %v4519 = vunpack.c.h.b16 %v1157
    %v4520 = vunpack.c.l.b16 %v1158
    %v4521 = vunpack.c.h.b16 %v1158
    %v4522 = vunpack.c.l.b16 %v1159
    %v4523 = vunpack.c.h.b16 %v1159
    %v4524 = vunpack.c.l.b16 %v1160
    %v4525 = vunpack.c.h.b16 %v1160
    %v4526 = vunpack.c.l.b16 %v1161
    %v4527 = vunpack.c.h.b16 %v1161
    %v4528 = vunpack.c.l.b16 %v1162
    %v4529 = vunpack.c.h.b16 %v1162
    %v4530 = vunpack.c.l.b16 %v1163
    %v4531 = vunpack.c.h.b16 %v1163
    %v4532 = vunpack.c.l.b16 %v1164
    %v4533 = vunpack.c.h.b16 %v1164
    %v4534 = vunpack.c.l.b16 %v1165
    %v4535 = vunpack.c.h.b16 %v1165
    %v4536 = vunpack.c.l.b16 %v1166
    %v4537 = vunpack.c.h.b16 %v1166
    %v4538 = vunpack.c.l.b16 %v1167
    %v4539 = vunpack.c.h.b16 %v1167
    %v4540 = vunpack.c.l.b16 %v1168
    %v4541 = vunpack.c.h.b16 %v1168
    %v4542 = vunpack.c.l.b16 %v1169
    %v4543 = vunpack.c.h.b16 %v1169
    %v4544 = vunpack.c.l.b16 %v1170
    %v4545 = vunpack.c.h.b16 %v1170
    %v4546 = vunpack.c.l.b16 %v1171
    %v4547 = vunpack.c.h.b16 %v1171
    %v4548 = vunpack.c.l.b16 %v1172
    %v4549 = vunpack.c.h.b16 %v1172
    %v4550 = vunpack.c.l.b16 %v1173
    %v4551 = vunpack.c.h.b16 %v1173
    %v4552 = vunpack.c.l.b16 %v1174
    %v4553 = vunpack.c.h.b16 %v1174
    %v4554 = vunpack.c.l.b16 %v1175
    %v4555 = vunpack.c.h.b16 %v1175
    %v4556 = vunpack.c.l.b16 %v1176
    %v4557 = vunpack.c.h.b16 %v1176
    %v4558 = vunpack.c.l.b16 %v1177
    %v4559 = vunpack.c.h.b16 %v1177
    %v4560 = vunpack.c.l.b16 %v1178
    %v4561 = vunpack.c.h.b16 %v1178
    %v4562 = vunpack.c.l.b16 %v1179
    %v4563 = vunpack.c.h.b16 %v1179
    %v4564 = vunpack.c.l.b16 %v1180
    %v4565 = vunpack.c.h.b16 %v1180
    %v4566 = vunpack.c.l.b16 %v1181
    %v4567 = vunpack.c.h.b16 %v1181
    %v4568 = vunpack.c.l.b16 %v1182
    %v4569 = vunpack.c.h.b16 %v1182
    %v4570 = vunpack.c.l.b16 %v1183
    %v4571 = vunpack.c.h.b16 %v1183
    %v4572 = vunpack.c.l.b16 %v1184
    %v4573 = vunpack.c.h.b16 %v1184
    %v4574 = vunpack.c.l.b16 %v1185
    %v4575 = vunpack.c.h.b16 %v1185
    %v4576 = vunpack.c.l.b16 %v1186
    %v4577 = vunpack.c.h.b16 %v1186
    %v4578 = vunpack.c.l.b16 %v1187
    %v4579 = vunpack.c.h.b16 %v1187
    %v4580 = vunpack.c.l.b16 %v1188
    %v4581 = vunpack.c.h.b16 %v1188
    %v4582 = vunpack.c.l.b16 %v1189
    %v4583 = vunpack.c.h.b16 %v1189
    %v4584 = vunpack.c.l.b16 %v1190
    %v4585 = vunpack.c.h.b16 %v1190
    %v4586 = vunpack.c.l.b16 %v1191
    %v4587 = vunpack.c.h.b16 %v1191
    %v4588 = vunpack.c.l.b16 %v1192
    %v4589 = vunpack.c.h.b16 %v1192
    %v4590 = vunpack.c.l.b16 %v1193
    %v4591 = vunpack.c.h.b16 %v1193
    %v4592 = vunpack.c.l.b16 %v1194
    %v4593 = vunpack.c.h.b16 %v1194
    %v4594 = vunpack.c.l.b16 %v1195
    %v4595 = vunpack.c.h.b16 %v1195
    %v4596 = vunpack.c.l.b16 %v1196
    %v4597 = vunpack.c.h.b16 %v1196
    %v4598 = vunpack.c.l.b16 %v1197
    %v4599 = vunpack.c.h.b16 %v1197
    %v4600 = vunpack.c.l.b16 %v1198
    %v4601 = vunpack.c.h.b16 %v1198
    %v4602 = vunpack.c.l.b16 %v1199
    %v4603 = vunpack.c.h.b16 %v1199
    %v4604 = vunpack.c.l.b16 %v1200
    %v4605 = vunpack.c.h.b16 %v1200
    %v4606 = vunpack.c.l.b16 %v1201
    %v4607 = vunpack.c.h.b16 %v1201
    %v4608 = vunpack.c.l.b16 %v1202
    %v4609 = vunpack.c.h.b16 %v1202
    %v4610 = vunpack.c.l.b16 %v1203
    %v4611 = vunpack.c.h.b16 %v1203
    %v4612 = vunpack.c.l.b16 %v1204
    %v4613 = vunpack.c.h.b16 %v1204
    %v4614 = vunpack.c.l.b16 %v1205
    %v4615 = vunpack.c.h.b16 %v1205
    %v4616 = vunpack.c.l.b16 %v1206
    %v4617 = vunpack.c.h.b16 %v1206
    %v4618 = vunpack.c.l.b16 %v1207
    %v4619 = vunpack.c.h.b16 %v1207
    %v4620 = vunpack.c.l.b16 %v1208
    %v4621 = vunpack.c.h.b16 %v1208
    %v4622 = vunpack.c.l.b16 %v1209
    %v4623 = vunpack.c.h.b16 %v1209
    %v4624 = vunpack.c.l.b16 %v1210
    %v4625 = vunpack.c.h.b16 %v1210
    %v4626 = vunpack.c.l.b16 %v1211
    %v4627 = vunpack.c.h.b16 %v1211
    %v4628 = vunpack.c.l.b16 %v1212
    %v4629 = vunpack.c.h.b16 %v1212
    %v4630 = vunpack.c.l.b16 %v1213
    %v4631 = vunpack.c.h.b16 %v1213
    %v4632 = vunpack.c.l.b16 %v1214
    %v4633 = vunpack.c.h.b16 %v1214
    %v4634 = vunpack.c.l.b16 %v1215
    %v4635 = vunpack.c.h.b16 %v1215
    %v4636 = vunpack.c.l.b16 %v1216
    %v4637 = vunpack.c.h.b16 %v1216
    %v4638 = vunpack.c.l.b16 %v1217
    %v4639 = vunpack.c.h.b16 %v1217
    %v4640 = vunpack.c.l.b16 %v1218
    %v4641 = vunpack.c.h.b16 %v1218
    %v4642 = vunpack.c.l.b16 %v1219
    %v4643 = vunpack.c.h.b16 %v1219
    %v4644 = vunpack.c.l.b16 %v1220
    %v4645 = vunpack.c.h.b16 %v1220
    %v4646 = vunpack.c.l.b16 %v1221
    %v4647 = vunpack.c.h.b16 %v1221
    %v4648 = vunpack.c.l.b16 %v1222
    %v4649 = vunpack.c.h.b16 %v1222
    %v4650 = vunpack.c.l.b16 %v1223
    %v4651 = vunpack.c.h.b16 %v1223
    %v4652 = vunpack.c.l.b16 %v1224
    %v4653 = vunpack.c.h.b16 %v1224
    %v4654 = vunpack.c.l.b16 %v1225
    %v4655 = vunpack.c.h.b16 %v1225
    %v4656 = vunpack.c.l.b16 %v1226
    %v4657 = vunpack.c.h.b16 %v1226
    %v4658 = vunpack.c.l.b16 %v1227
    %v4659 = vunpack.c.h.b16 %v1227
    %v4660 = vunpack.c.l.b16 %v1228
    %v4661 = vunpack.c.h.b16 %v1228
    %v4662 = vunpack.c.l.b16 %v1229
    %v4663 = vunpack.c.h.b16 %v1229
    %v4664 = vunpack.c.l.b16 %v1230
    %v4665 = vunpack.c.h.b16 %v1230
    %v4666 = vunpack.c.l.b16 %v1231
    %v4667 = vunpack.c.h.b16 %v1231
    %v4668 = vunpack.c.l.b16 %v1232
    %v4669 = vunpack.c.h.b16 %v1232
    %v4670 = vunpack.c.l.b16 %v1233
    %v4671 = vunpack.c.h.b16 %v1233
    %v4672 = vunpack.c.l.b16 %v1234
    %v4673 = vunpack.c.h.b16 %v1234
    %v4674 = vunpack.c.l.b16 %v1235
    %v4675 = vunpack.c.h.b16 %v1235
    %v4676 = vunpack.c.l.b16 %v1236
    %v4677 = vunpack.c.h.b16 %v1236
    %v4678 = vunpack.c.l.b16 %v1237
    %v4679 = vunpack.c.h.b16 %v1237
    %v4680 = vunpack.c.l.b16 %v1238
    %v4681 = vunpack.c.h.b16 %v1238
    %v4682 = vunpack.c.l.b16 %v1239
    %v4683 = vunpack.c.h.b16 %v1239
    %v4684 = vunpack.c.l.b16 %v1240
    %v4685 = vunpack.c.h.b16 %v1240
    %v4686 = vunpack.c.l.b16 %v1241
    %v4687 = vunpack.c.h.b16 %v1241
    %v4688 = vunpack.c.l.b16 %v1242
    %v4689 = vunpack.c.h.b16 %v1242
    %v4690 = vunpack.c.l.b16 %v1243
    %v4691 = vunpack.c.h.b16 %v1243
    %v4692 = vunpack.c.l.b16 %v1244
    %v4693 = vunpack.c.h.b16 %v1244
    %v4694 = vunpack.c.l.b16 %v1245
    %v4695 = vunpack.c.h.b16 %v1245
    %v4696 = vunpack.c.l.b16 %v1246
    %v4697 = vunpack.c.h.b16 %v1246
    %v4698 = vunpack.c.l.b16 %v1247
    %v4699 = vunpack.c.h.b16 %v1247
    %v4700 = vunpack.c.l.b16 %v1248
    %v4701 = vunpack.c.h.b16 %v1248
    %v4702 = vunpack.c.l.b16 %v1249
    %v4703 = vunpack.c.h.b16 %v1249
    %v4704 = vunpack.c.l.b16 %v1250
    %v4705 = vunpack.c.h.b16 %v1250
    %v4706 = vunpack.c.l.b16 %v1251
    %v4707 = vunpack.c.h.b16 %v1251
    %v4708 = vunpack.c.l.b16 %v1252
    %v4709 = vunpack.c.h.b16 %v1252
    %v4710 = vunpack.c.l.b16 %v1253
    %v4711 = vunpack.c.h.b16 %v1253
    %v4712 = vunpack.c.l.b16 %v1254
    %v4713 = vunpack.c.h.b16 %v1254
    %v4714 = vunpack.c.l.b16 %v1255
    %v4715 = vunpack.c.h.b16 %v1255
    %v4716 = vunpack.c.l.b16 %v1256
    %v4717 = vunpack.c.h.b16 %v1256
    %v4718 = vunpack.c.l.b16 %v1257
    %v4719 = vunpack.c.h.b16 %v1257
    %v4720 = vunpack.c.l.b16 %v1258
    %v4721 = vunpack.c.h.b16 %v1258
    %v4722 = vunpack.c.l.b16 %v1259
    %v4723 = vunpack.c.h.b16 %v1259
    %v4724 = vunpack.c.l.b16 %v1260
    %v4725 = vunpack.c.h.b16 %v1260
    %v4726 = vunpack.c.l.b16 %v1261
    %v4727 = vunpack.c.h.b16 %v1261
    %v4728 = vunpack.c.l.b16 %v1262
    %v4729 = vunpack.c.h.b16 %v1262
    %v4730 = vunpack.c.l.b16 %v1263
    %v4731 = vunpack.c.h.b16 %v1263
    %v4732 = vunpack.c.l.b16 %v1264
    %v4733 = vunpack.c.h.b16 %v1264
    %v4734 = vunpack.c.l.b16 %v1265
    %v4735 = vunpack.c.h.b16 %v1265
    %v4736 = vunpack.c.l.b16 %v1266
    %v4737 = vunpack.c.h.b16 %v1266
    %v4738 = vunpack.c.l.b16 %v1267
    %v4739 = vunpack.c.h.b16 %v1267
    %v4740 = vunpack.c.l.b16 %v1268
    %v4741 = vunpack.c.h.b16 %v1268
    %v4742 = vunpack.c.l.b16 %v1269
    %v4743 = vunpack.c.h.b16 %v1269
    %v4744 = vunpack.c.l.b16 %v1270
    %v4745 = vunpack.c.h.b16 %v1270
    %v4746 = vunpack.c.l.b16 %v1271
    %v4747 = vunpack.c.h.b16 %v1271
    %v4748 = vunpack.c.l.b16 %v1272
    %v4749 = vunpack.c.h.b16 %v1272
    %v4750 = vunpack.c.l.b16 %v1273
    %v4751 = vunpack.c.h.b16 %v1273
    %v4752 = vunpack.c.l.b16 %v1274
    %v4753 = vunpack.c.h.b16 %v1274
    %v4754 = vunpack.c.l.b16 %v1275
    %v4755 = vunpack.c.h.b16 %v1275
    %v4756 = vunpack.c.l.b16 %v1276
    %v4757 = vunpack.c.h.b16 %v1276
    %v4758 = vunpack.c.l.b16 %v1277
    %v4759 = vunpack.c.h.b16 %v1277
    %v4760 = vunpack.c.l.b16 %v1278
    %v4761 = vunpack.c.h.b16 %v1278
    %v4762 = vunpack.c.l.b16 %v1279
    %v4763 = vunpack.c.h.b16 %v1279
    %v4764 = vunpack.c.l.b16 %v1280
    %v4765 = vunpack.c.h.b16 %v1280
    %v4766 = vunpack.c.l.b16 %v1281
    %v4767 = vunpack.c.h.b16 %v1281
    %v4768 = vunpack.c.l.b16 %v1282
    %v4769 = vunpack.c.h.b16 %v1282
    %v4770 = vunpack.c.l.b16 %v1283
    %v4771 = vunpack.c.h.b16 %v1283
    %v4772 = vunpack.c.l.b16 %v1284
    %v4773 = vunpack.c.h.b16 %v1284
    %v4774 = vunpack.c.l.b16 %v1285
    %v4775 = vunpack.c.h.b16 %v1285
    %v4776 = vunpack.c.l.b16 %v1286
    %v4777 = vunpack.c.h.b16 %v1286
    %v4778 = vunpack.c.l.b16 %v1287
    %v4779 = vunpack.c.h.b16 %v1287
    %v4780 = vunpack.c.l.b16 %v1288
    %v4781 = vunpack.c.h.b16 %v1288
    %v4782 = vunpack.c.l.b16 %v1289
    %v4783 = vunpack.c.h.b16 %v1289
    %v4784 = vunpack.c.l.b16 %v1290
    %v4785 = vunpack.c.h.b16 %v1290
    %v4786 = vunpack.c.l.b16 %v1291
    %v4787 = vunpack.c.h.b16 %v1291
    %v4788 = vunpack.c.l.b16 %v1292
    %v4789 = vunpack.c.h.b16 %v1292
    %v4790 = vunpack.c.l.b16 %v1293
    %v4791 = vunpack.c.h.b16 %v1293
    %v4792 = vunpack.c.l.b16 %v1294
    %v4793 = vunpack.c.h.b16 %v1294
    %v4794 = vunpack.c.l.b16 %v1295
    %v4795 = vunpack.c.h.b16 %v1295
    %v4796 = vunpack.c.l.b16 %v1296
    %v4797 = vunpack.c.h.b16 %v1296
    %v4798 = vunpack.c.l.b16 %v1297
    %v4799 = vunpack.c.h.b16 %v1297
    %v4800 = vunpack.c.l.b16 %v1298
    %v4801 = vunpack.c.h.b16 %v1298
    %v4802 = vunpack.c.l.b16 %v1299
    %v4803 = vunpack.c.h.b16 %v1299
    %v4804 = vunpack.c.l.b16 %v1300
    %v4805 = vunpack.c.h.b16 %v1300
    %v4806 = vunpack.c.l.b16 %v1301
    %v4807 = vunpack.c.h.b16 %v1301
    %v4808 = vunpack.c.l.b16 %v1302
    %v4809 = vunpack.c.h.b16 %v1302
    %v4810 = vunpack.c.l.b16 %v1303
    %v4811 = vunpack.c.h.b16 %v1303
    %v4812 = vunpack.c.l.b16 %v1304
    %v4813 = vunpack.c.h.b16 %v1304
    %v4814 = vunpack.c.l.b16 %v1305
    %v4815 = vunpack.c.h.b16 %v1305
    %v4816 = vunpack.c.l.b16 %v1306
    %v4817 = vunpack.c.h.b16 %v1306
    %v4818 = vunpack.c.l.b16 %v1307
    %v4819 = vunpack.c.h.b16 %v1307
    %v4820 = vunpack.c.l.b16 %v1308
    %v4821 = vunpack.c.h.b16 %v1308
    %v4822 = vunpack.c.l.b16 %v1309
    %v4823 = vunpack.c.h.b16 %v1309
    %v4824 = vunpack.c.l.b16 %v1310
    %v4825 = vunpack.c.h.b16 %v1310
    %v4826 = vunpack.c.l.b16 %v1311
    %v4827 = vunpack.c.h.b16 %v1311
    %v4828 = vunpack.c.l.b16 %v1312
    %v4829 = vunpack.c.h.b16 %v1312
    %v4830 = vunpack.c.l.b16 %v1313
    %v4831 = vunpack.c.h.b16 %v1313
    %v4832 = vunpack.c.l.b16 %v1314
    %v4833 = vunpack.c.h.b16 %v1314
    %v4834 = vunpack.c.l.b16 %v1315
    %v4835 = vunpack.c.h.b16 %v1315
    %v4836 = vunpack.c.l.b16 %v1316
    %v4837 = vunpack.c.h.b16 %v1316
    %v4838 = vunpack.c.l.b16 %v1317
    %v4839 = vunpack.c.h.b16 %v1317
    %v4840 = vunpack.c.l.b16 %v1318
    %v4841 = vunpack.c.h.b16 %v1318
    %v4842 = vunpack.c.l.b16 %v1319
    %v4843 = vunpack.c.h.b16 %v1319
    %v4844 = vunpack.c.l.b16 %v1320
    %v4845 = vunpack.c.h.b16 %v1320
    %v4846 = vunpack.c.l.b16 %v1321
    %v4847 = vunpack.c.h.b16 %v1321
    %v4848 = vunpack.c.l.b16 %v1322
    %v4849 = vunpack.c.h.b16 %v1322
    %v4850 = vunpack.c.l.b16 %v1323
    %v4851 = vunpack.c.h.b16 %v1323
    %v4852 = vunpack.c.l.b16 %v1324
    %v4853 = vunpack.c.h.b16 %v1324
    %v4854 = vunpack.c.l.b16 %v1325
    %v4855 = vunpack.c.h.b16 %v1325
    %v4856 = vunpack.c.l.b16 %v1326
    %v4857 = vunpack.c.h.b16 %v1326
    %v4858 = vunpack.c.l.b16 %v1327
    %v4859 = vunpack.c.h.b16 %v1327
    %v4860 = vunpack.c.l.b16 %v1328
    %v4861 = vunpack.c.h.b16 %v1328
    %v4862 = vunpack.c.l.b16 %v1329
    %v4863 = vunpack.c.h.b16 %v1329
    %v4864 = vunpack.c.l.b16 %v1330
    %v4865 = vunpack.c.h.b16 %v1330
    %v4866 = vunpack.c.l.b16 %v1331
    %v4867 = vunpack.c.h.b16 %v1331
    %v4868 = vunpack.c.l.b16 %v1332
    %v4869 = vunpack.c.h.b16 %v1332
    %v4870 = vunpack.c.l.b16 %v1333
    %v4871 = vunpack.c.h.b16 %v1333
    %v4872 = vunpack.c.l.b16 %v1334
    %v4873 = vunpack.c.h.b16 %v1334
    %v4874 = vunpack.c.l.b16 %v1335
    %v4875 = vunpack.c.h.b16 %v1335
    %v4876 = vunpack.c.l.b16 %v1336
    %v4877 = vunpack.c.h.b16 %v1336
    %v4878 = vunpack.c.l.b16 %v1337
    %v4879 = vunpack.c.h.b16 %v1337
    %v4880 = vunpack.c.l.b16 %v1338
    %v4881 = vunpack.c.h.b16 %v1338
    %v4882 = vunpack.c.l.b16 %v1339
    %v4883 = vunpack.c.h.b16 %v1339
    %v4884 = vunpack.c.l.b16 %v1340
    %v4885 = vunpack.c.h.b16 %v1340
    %v4886 = vunpack.c.l.b16 %v1341
    %v4887 = vunpack.c.h.b16 %v1341
    %v4888 = vunpack.c.l.b16 %v1342
    %v4889 = vunpack.c.h.b16 %v1342
    %v4890 = vunpack.c.l.b16 %v1343
    %v4891 = vunpack.c.h.b16 %v1343
    %v4892 = vunpack.c.l.b16 %v1344
    %v4893 = vunpack.c.h.b16 %v1344
    %v4894 = vunpack.c.l.b16 %v1345
    %v4895 = vunpack.c.h.b16 %v1345
    %v4896 = vunpack.c.l.b16 %v1346
    %v4897 = vunpack.c.h.b16 %v1346
    %v4898 = vunpack.c.l.b16 %v1347
    %v4899 = vunpack.c.h.b16 %v1347
    %v4900 = vunpack.c.l.b16 %v1348
    %v4901 = vunpack.c.h.b16 %v1348
    %v4902 = vunpack.c.l.b16 %v1349
    %v4903 = vunpack.c.h.b16 %v1349
    %v4904 = vunpack.c.l.b16 %v1350
    %v4905 = vunpack.c.h.b16 %v1350
    %v4906 = vunpack.c.l.b16 %v1351
    %v4907 = vunpack.c.h.b16 %v1351
    %v4908 = vunpack.c.l.b16 %v1352
    %v4909 = vunpack.c.h.b16 %v1352
    %v4910 = vunpack.c.l.b16 %v1353
    %v4911 = vunpack.c.h.b16 %v1353
    %v4912 = vunpack.c.l.b16 %v1354
    %v4913 = vunpack.c.h.b16 %v1354
    %v4914 = vunpack.c.l.b16 %v1355
    %v4915 = vunpack.c.h.b16 %v1355
    %v4916 = vunpack.c.l.b16 %v1356
    %v4917 = vunpack.c.h.b16 %v1356
    %v4918 = vunpack.c.l.b16 %v1357
    %v4919 = vunpack.c.h.b16 %v1357
    %v4920 = vunpack.c.l.b16 %v1358
    %v4921 = vunpack.c.h.b16 %v1358
    %v4922 = vunpack.c.l.b16 %v1359
    %v4923 = vunpack.c.h.b16 %v1359
    %v4924 = vunpack.c.l.b16 %v1360
    %v4925 = vunpack.c.h.b16 %v1360
    %v4926 = vunpack.c.l.b16 %v1361
    %v4927 = vunpack.c.h.b16 %v1361
    %v4928 = vunpack.c.l.b16 %v1362
    %v4929 = vunpack.c.h.b16 %v1362
    %v4930 = vunpack.c.l.b16 %v1363
    %v4931 = vunpack.c.h.b16 %v1363
    %v4932 = vunpack.c.l.b16 %v1364
    %v4933 = vunpack.c.h.b16 %v1364
    %v4934 = vunpack.c.l.b16 %v1365
    %v4935 = vunpack.c.h.b16 %v1365
    %v4936 = vunpack.c.l.b16 %v1366
    %v4937 = vunpack.c.h.b16 %v1366
    %v4938 = vunpack.c.l.b16 %v1367
    %v4939 = vunpack.c.h.b16 %v1367
    %v4940 = vunpack.c.l.b16 %v1368
    %v4941 = vunpack.c.h.b16 %v1368
    %v4942 = vunpack.c.l.b16 %v1369
    %v4943 = vunpack.c.h.b16 %v1369
    %v4944 = vunpack.c.l.b16 %v1370
    %v4945 = vunpack.c.h.b16 %v1370
    %v4946 = vunpack.c.l.b16 %v1371
    %v4947 = vunpack.c.h.b16 %v1371
    %v4948 = vunpack.c.l.b16 %v1372
    %v4949 = vunpack.c.h.b16 %v1372
    %v4950 = vunpack.c.l.b16 %v1373
    %v4951 = vunpack.c.h.b16 %v1373
    %v4952 = vunpack.c.l.b16 %v1374
    %v4953 = vunpack.c.h.b16 %v1374
    %v4954 = vunpack.c.l.b16 %v1375
    %v4955 = vunpack.c.h.b16 %v1375
    %v4956 = vunpack.c.l.b16 %v1376
    %v4957 = vunpack.c.h.b16 %v1376
    %v4958 = vunpack.c.l.b16 %v1377
    %v4959 = vunpack.c.h.b16 %v1377
    %v4960 = vpack.c.b16 %v2680, %v2656
    %v4961 = vpack.c.b16 %v2681, %v2657
    %v4962 = vpack.c.b16 %v2682, %v2658
    %v4963 = vpack.c.b16 %v2683, %v2659
    %v4964 = vpack.c.b16 %v2684, %v2660
    %v4965 = vpack.c.b16 %v2685, %v2661
    %v4966 = vpack.c.b16 %v2686, %v2662
    %v4967 = vpack.c.b16 %v2687, %v2663
    %v4968 = vpack.c.b16 %v2688, %v2664
    %v4969 = vpack.c.b16 %v2689, %v2665
    %v4970 = vpack.c.b16 %v2690, %v2666
    %v4971 = vpack.c.b16 %v2691, %v2667
    %v4972 = vpack.c.b16 %v2692, %v2668
    %v4973 = vpack.c.b16 %v2693, %v2669
    %v4974 = vpack.c.b16 %v2694, %v2670
    %v4975 = vpack.c.b16 %v2695, %v2671
    %v4976 = vpack.c.b16 %v2696, %v2672
    %v4977 = vpack.c.b16 %v2697, %v2673
    %v4978 = vpack.c.b16 %v2698, %v2674
    %v4979 = vpack.c.b16 %v2699, %v2675
    %v4980 = vpack.c.b16 %v2700, %v2676
    %v4981 = vpack.c.b16 %v2701, %v2677
    %v4982 = vpack.c.b16 %v2702, %v2678
    %v4983 = vpack.c.b16 %v2703, %v2679
    %v4984 = vpack.c.b16 %v2728, %v2704
    %v4985 = vpack.c.b16 %v2729, %v2705
    %v4986 = vpack.c.b16 %v2730, %v2706
    %v4987 = vpack.c.b16 %v2731, %v2707
    %v4988 = vpack.c.b16 %v2732, %v2708
    %v4989 = vpack.c.b16 %v2733, %v2709
    %v4990 = vpack.c.b16 %v2734, %v2710
    %v4991 = vpack.c.b16 %v2735, %v2711
    %v4992 = vpack.c.b16 %v2736, %v2712
    %v4993 = vpack.c.b16 %v2737, %v2713
    %v4994 = vpack.c.b16 %v2738, %v2714
    %v4995 = vpack.c.b16 %v2739, %v2715
    %v4996 = vpack.c.b16 %v2740, %v2716
    %v4997 = vpack.c.b16 %v2741, %v2717
    %v4998 = vpack.c.b16 %v2742, %v2718
    %v4999 = vpack.c.b16 %v2743, %v2719
    %v5000 = vpack.c.b16 %v2744, %v2720
    %v5001 = vpack.c.b16 %v2745, %v2721
    %v5002 = vpack.c.b16 %v2746, %v2722
    %v5003 = vpack.c.b16 %v2747, %v2723
    %v5004 = vpack.c.b16 %v2748, %v2724
    %v5005 = vpack.c.b16 %v2749, %v2725
    %v5006 = vpack.c.b16 %v2750, %v2726
    %v5007 = vpack.c.b16 %v2751, %v2727
    %v5008 = vpack.c.b16 %v2776, %v2752
    %v5009 = vpack.c.b16 %v2777, %v2753
    %v5010 = vpack.c.b16 %v2778, %v2754
    %v5011 = vpack.c.b16 %v2779, %v2755
    %v5012 = vpack.c.b16 %v2780, %v2756
    %v5013 = vpack.c.b16 %v2781, %v2757
    %v5014 = vpack.c.b16 %v2782, %v2758
    %v5015 = vpack.c.b16 %v2783, %v2759
    %v5016 = vpack.c.b16 %v2784, %v2760
    %v5017 = vpack.c.b16 %v2785, %v2761
    %v5018 = vpack.c.b16 %v2786, %v2762
    %v5019 = vpack.c.b16 %v2787, %v2763
    %v5020 = vpack.c.b16 %v2788, %v2764
    %v5021 = vpack.c.b16 %v2789, %v2765
    %v5022 = vpack.c.b16 %v2790, %v2766
    %v5023 = vpack.c.b16 %v2791, %v2767
    %v5024 = vpack.c.b16 %v2792, %v2768
    %v5025 = vpack.c.b16 %v2793, %v2769
    %v5026 = vpack.c.b16 %v2794, %v2770
    %v5027 = vpack.c.b16 %v2795, %v2771
    %v5028 = vpack.c.b16 %v2796, %v2772
    %v5029 = vpack.c.b16 %v2797, %v2773
    %v5030 = vpack.c.b16 %v2798, %v2774
    %v5031 = vpack.c.b16 %v2799, %v2775
    %v5032 = vpack.c.b16 %v2824, %v2800
    %v5033 = vpack.c.b16 %v2825, %v2801
    %v5034 = vpack.c.b16 %v2826, %v2802
    %v5035 = vpack.c.b16 %v2827, %v2803
    %v5036 = vpack.c.b16 %v2828, %v2804
    %v5037 = vpack.c.b16 %v2829, %v2805
    %v5038 = vpack.c.b16 %v2830, %v2806
    %v5039 = vpack.c.b16 %v2831, %v2807
    %v5040 = vpack.c.b16 %v2832, %v2808
    %v5041 = vpack.c.b16 %v2833, %v2809
    %v5042 = vpack.c.b16 %v2834, %v2810
    %v5043 = vpack.c.b16 %v2835, %v2811
    %v5044 = vpack.c.b16 %v2836, %v2812
    %v5045 = vpack.c.b16 %v2837, %v2813
    %v5046 = vpack.c.b16 %v2838, %v2814
    %v5047 = vpack.c.b16 %v2839, %v2815
    %v5048 = vpack.c.b16 %v2840, %v2816
    %v5049 = vpack.c.b16 %v2841, %v2817
    %v5050 = vpack.c.b16 %v2842, %v2818
    %v5051 = vpack.c.b16 %v2843, %v2819
    %v5052 = vpack.c.b16 %v2844, %v2820
    %v5053 = vpack.c.b16 %v2845, %v2821
    %v5054 = vpack.c.b16 %v2846, %v2822
    %v5055 = vpack.c.b16 %v2847, %v2823
    %v5056 = vpack.c.b16 %v2872, %v2848
    %v5057 = vpack.c.b16 %v2873, %v2849
    %v5058 = vpack.c.b16 %v2874, %v2850
    %v5059 = vpack.c.b16 %v2875, %v2851
    %v5060 = vpack.c.b16 %v2876, %v2852
    %v5061 = vpack.c.b16 %v2877, %v2853
    %v5062 = vpack.c.b16 %v2878, %v2854
    %v5063 = vpack.c.b16 %v2879, %v2855
    %v5064 = vpack.c.b16 %v2880, %v2856
    %v5065 = vpack.c.b16 %v2881, %v2857
    %v5066 = vpack.c.b16 %v2882, %v2858
    %v5067 = vpack.c.b16 %v2883, %v2859
    %v5068 = vpack.c.b16 %v2884, %v2860
    %v5069 = vpack.c.b16 %v2885, %v2861
    %v5070 = vpack.c.b16 %v2886, %v2862
    %v5071 = vpack.c.b16 %v2887, %v2863
    %v5072 = vpack.c.b16 %v2888, %v2864
    %v5073 = vpack.c.b16 %v2889, %v2865
    %v5074 = vpack.c.b16 %v2890, %v2866
    %v5075 = vpack.c.b16 %v2891, %v2867
    %v5076 = vpack.c.b16 %v2892, %v2868
    %v5077 = vpack.c.b16 %v2893, %v2869
    %v5078 = vpack.c.b16 %v2894, %v2870
    %v5079 = vpack.c.b16 %v2895, %v2871
    %v5080 = vpack.c.b16 %v2920, %v2896
    %v5081 = vpack.c.b16 %v2921, %v2897
    %v5082 = vpack.c.b16 %v2922, %v2898
    %v5083 = vpack.c.b16 %v2923, %v2899
    %v5084 = vpack.c.b16 %v2924, %v2900
    %v5085 = vpack.c.b16 %v2925, %v2901
    %v5086 = vpack.c.b16 %v2926, %v2902
    %v5087 = vpack.c.b16 %v2927, %v2903
    %v5088 = vpack.c.b16 %v2928, %v2904
    %v5089 = vpack.c.b16 %v2929, %v2905
    %v5090 = vpack.c.b16 %v2930, %v2906
    %v5091 = vpack.c.b16 %v2931, %v2907
    %v5092 = vpack.c.b16 %v2932, %v2908
    %v5093 = vpack.c.b16 %v2933, %v2909
    %v5094 = vpack.c.b16 %v2934, %v2910
    %v5095 = vpack.c.b16 %v2935, %v2911
    %v5096 = vpack.c.b16 %v2936, %v2912
    %v5097 = vpack.c.b16 %v2937, %v2913
    %v5098 = vpack.c.b16 %v2938, %v2914
    %v5099 = vpack.c.b16 %v2939, %v2915
    %v5100 = vpack.c.b16 %v2940, %v2916
    %v5101 = vpack.c.b16 %v2941, %v2917
    %v5102 = vpack.c.b16 %v2942, %v2918
    %v5103 = vpack.c.b16 %v2943, %v2919
    %v5104 = vpack.c.b16 %v2968, %v2944
    %v5105 = vpack.c.b16 %v2969, %v2945
    %v5106 = vpack.c.b16 %v2970, %v2946
    %v5107 = vpack.c.b16 %v2971, %v2947
    %v5108 = vpack.c.b16 %v2972, %v2948
    %v5109 = vpack.c.b16 %v2973, %v2949
    %v5110 = vpack.c.b16 %v2974, %v2950
    %v5111 = vpack.c.b16 %v2975, %v2951
    %v5112 = vpack.c.b16 %v2976, %v2952
    %v5113 = vpack.c.b16 %v2977, %v2953
    %v5114 = vpack.c.b16 %v2978, %v2954
    %v5115 = vpack.c.b16 %v2979, %v2955
    %v5116 = vpack.c.b16 %v2980, %v2956
    %v5117 = vpack.c.b16 %v2981, %v2957
    %v5118 = vpack.c.b16 %v2982, %v2958
    %v5119 = vpack.c.b16 %v2983, %v2959
    %v5120 = vpack.c.b16 %v2984, %v2960
    %v5121 = vpack.c.b16 %v2985, %v2961
    %v5122 = vpack.c.b16 %v2986, %v2962
    %v5123 = vpack.c.b16 %v2987, %v2963
    %v5124 = vpack.c.b16 %v2988, %v2964
    %v5125 = vpack.c.b16 %v2989, %v2965
    %v5126 = vpack.c.b16 %v2990, %v2966
    %v5127 = vpack.c.b16 %v2991, %v2967
    %v5128 = vpack.c.b16 %v3016, %v2992
    %v5129 = vpack.c.b16 %v3017, %v2993
    %v5130 = vpack.c.b16 %v3018, %v2994
    %v5131 = vpack.c.b16 %v3019, %v2995
    %v5132 = vpack.c.b16 %v3020, %v2996
    %v5133 = vpack.c.b16 %v3021, %v2997
    %v5134 = vpack.c.b16 %v3022, %v2998
    %v5135 = vpack.c.b16 %v3023, %v2999
    %v5136 = vpack.c.b16 %v3024, %v3000
    %v5137 = vpack.c.b16 %v3025, %v3001
    %v5138 = vpack.c.b16 %v3026, %v3002
    %v5139 = vpack.c.b16 %v3027, %v3003
    %v5140 = vpack.c.b16 %v3028, %v3004
    %v5141 = vpack.c.b16 %v3029, %v3005
    %v5142 = vpack.c.b16 %v3030, %v3006
    %v5143 = vpack.c.b16 %v3031, %v3007
    %v5144 = vpack.c.b16 %v3032, %v3008
    %v5145 = vpack.c.b16 %v3033, %v3009
    %v5146 = vpack.c.b16 %v3034, %v3010
    %v5147 = vpack.c.b16 %v3035, %v3011
    %v5148 = vpack.c.b16 %v3036, %v3012
    %v5149 = vpack.c.b16 %v3037, %v3013
    %v5150 = vpack.c.b16 %v3038, %v3014
    %v5151 = vpack.c.b16 %v3039, %v3015
    %v5152 = vpack.c.b16 %v3064, %v3040
    %v5153 = vpack.c.b16 %v3065, %v3041
    %v5154 = vpack.c.b16 %v3066, %v3042
    %v5155 = vpack.c.b16 %v3067, %v3043
    %v5156 = vpack.c.b16 %v3068, %v3044
    %v5157 = vpack.c.b16 %v3069, %v3045
    %v5158 = vpack.c.b16 %v3070, %v3046
    %v5159 = vpack.c.b16 %v3071, %v3047
    %v5160 = vpack.c.b16 %v3072, %v3048
    %v5161 = vpack.c.b16 %v3073, %v3049
    %v5162 = vpack.c.b16 %v3074, %v3050
    %v5163 = vpack.c.b16 %v3075, %v3051
    %v5164 = vpack.c.b16 %v3076, %v3052
    %v5165 = vpack.c.b16 %v3077, %v3053
    %v5166 = vpack.c.b16 %v3078, %v3054
    %v5167 = vpack.c.b16 %v3079, %v3055
    %v5168 = vpack.c.b16 %v3080, %v3056
    %v5169 = vpack.c.b16 %v3081, %v3057
    %v5170 = vpack.c.b16 %v3082, %v3058
    %v5171 = vpack.c.b16 %v3083, %v3059
    %v5172 = vpack.c.b16 %v3084, %v3060
    %v5173 = vpack.c.b16 %v3085, %v3061
    %v5174 = vpack.c.b16 %v3086, %v3062
    %v5175 = vpack.c.b16 %v3087, %v3063
    %v5176 = vpack.c.b16 %v3112, %v3088
    %v5177 = vpack.c.b16 %v3113, %v3089
    %v5178 = vpack.c.b16 %v3114, %v3090
    %v5179 = vpack.c.b16 %v3115, %v3091
    %v5180 = vpack.c.b16 %v3116, %v3092
    %v5181 = vpack.c.b16 %v3117, %v3093
    %v5182 = vpack.c.b16 %v3118, %v3094
    %v5183 = vpack.c.b16 %v3119, %v3095
    %v5184 = vpack.c.b16 %v3120, %v3096
    %v5185 = vpack.c.b16 %v3121, %v3097
    %v5186 = vpack.c.b16 %v3122, %v3098
    %v5187 = vpack.c.b16 %v3123, %v3099
    %v5188 = vpack.c.b16 %v3124, %v3100
    %v5189 = vpack.c.b16 %v3125, %v3101
    %v5190 = vpack.c.b16 %v3126, %v3102
    %v5191 = vpack.c.b16 %v3127, %v3103
    %v5192 = vpack.c.b16 %v3128, %v3104
    %v5193 = vpack.c.b16 %v3129, %v3105
    %v5194 = vpack.c.b16 %v3130, %v3106
    %v5195 = vpack.c.b16 %v3131, %v3107
    %v5196 = vpack.c.b16 %v3132, %v3108
    %v5197 = vpack.c.b16 %v3133, %v3109
    %v5198 = vpack.c.b16 %v3134, %v3110
    %v5199 = vpack.c.b16 %v3135, %v3111
    %v5200 = vpack.c.b16 %v3160, %v3136
    %v5201 = vpack.c.b16 %v3161, %v3137
    %v5202 = vpack.c.b16 %v3162, %v3138
    %v5203 = vpack.c.b16 %v3163, %v3139
    %v5204 = vpack.c.b16 %v3164, %v3140
    %v5205 = vpack.c.b16 %v3165, %v3141
    %v5206 = vpack.c.b16 %v3166, %v3142
    %v5207 = vpack.c.b16 %v3167, %v3143
    %v5208 = vpack.c.b16 %v3168, %v3144
    %v5209 = vpack.c.b16 %v3169, %v3145
    %v5210 = vpack.c.b16 %v3170, %v3146
    %v5211 = vpack.c.b16 %v3171, %v3147
    %v5212 = vpack.c.b16 %v3172, %v3148
    %v5213 = vpack.c.b16 %v3173, %v3149
    %v5214 = vpack.c.b16 %v3174, %v3150
    %v5215 = vpack.c.b16 %v3175, %v3151
    %v5216 = vpack.c.b16 %v3176, %v3152
    %v5217 = vpack.c.b16 %v3177, %v3153
    %v5218 = vpack.c.b16 %v3178, %v3154
    %v5219 = vpack.c.b16 %v3179, %v3155
    %v5220 = vpack.c.b16 %v3180, %v3156
    %v5221 = vpack.c.b16 %v3181, %v3157
    %v5222 = vpack.c.b16 %v3182, %v3158
    %v5223 = vpack.c.b16 %v3183, %v3159
    %v5224 = vpack.c.b16 %v3208, %v3184
    %v5225 = vpack.c.b16 %v3209, %v3185
    %v5226 = vpack.c.b16 %v3210, %v3186
    %v5227 = vpack.c.b16 %v3211, %v3187
    %v5228 = vpack.c.b16 %v3212, %v3188
    %v5229 = vpack.c.b16 %v3213, %v3189
    %v5230 = vpack.c.b16 %v3214, %v3190
    %v5231 = vpack.c.b16 %v3215, %v3191
    %v5232 = vpack.c.b16 %v3216, %v3192
    %v5233 = vpack.c.b16 %v3217, %v3193
    %v5234 = vpack.c.b16 %v3218, %v3194
    %v5235 = vpack.c.b16 %v3219, %v3195
    %v5236 = vpack.c.b16 %v3220, %v3196
    %v5237 = vpack.c.b16 %v3221, %v3197
    %v5238 = vpack.c.b16 %v3222, %v3198
    %v5239 = vpack.c.b16 %v3223, %v3199
    %v5240 = vpack.c.b16 %v3224, %v3200
    %v5241 = vpack.c.b16 %v3225, %v3201
    %v5242 = vpack.c.b16 %v3226, %v3202
    %v5243 = vpack.c.b16 %v3227, %v3203
    %v5244 = vpack.c.b16 %v3228, %v3204
    %v5245 = vpack.c.b16 %v3229, %v3205
    %v5246 = vpack.c.b16 %v3230, %v3206
    %v5247 = vpack.c.b16 %v3231, %v3207
    %v5248 = vpack.c.b16 %v3256, %v3232
    %v5249 = vpack.c.b16 %v3257, %v3233
    %v5250 = vpack.c.b16 %v3258, %v3234
    %v5251 = vpack.c.b16 %v3259, %v3235
    %v5252 = vpack.c.b16 %v3260, %v3236
    %v5253 = vpack.c.b16 %v3261, %v3237
    %v5254 = vpack.c.b16 %v3262, %v3238
    %v5255 = vpack.c.b16 %v3263, %v3239
    %v5256 = vpack.c.b16 %v3264, %v3240
    %v5257 = vpack.c.b16 %v3265, %v3241
    %v5258 = vpack.c.b16 %v3266, %v3242
    %v5259 = vpack.c.b16 %v3267, %v3243
    %v5260 = vpack.c.b16 %v3268, %v3244
    %v5261 = vpack.c.b16 %v3269, %v3245
    %v5262 = vpack.c.b16 %v3270, %v3246
    %v5263 = vpack.c.b16 %v3271, %v3247
    %v5264 = vpack.c.b16 %v3272, %v3248
    %v5265 = vpack.c.b16 %v3273, %v3249
    %v5266 = vpack.c.b16 %v3274, %v3250
    %v5267 = vpack.c.b16 %v3275, %v3251
    %v5268 = vpack.c.b16 %v3276, %v3252
    %v5269 = vpack.c.b16 %v3277, %v3253
    %v5270 = vpack.c.b16 %v3278, %v3254
    %v5271 = vpack.c.b16 %v3279, %v3255
    %v5272 = vpack.c.b16 %v3304, %v3280
    %v5273 = vpack.c.b16 %v3305, %v3281
    %v5274 = vpack.c.b16 %v3306, %v3282
    %v5275 = vpack.c.b16 %v3307, %v3283
    %v5276 = vpack.c.b16 %v3308, %v3284
    %v5277 = vpack.c.b16 %v3309, %v3285
    %v5278 = vpack.c.b16 %v3310, %v3286
    %v5279 = vpack.c.b16 %v3311, %v3287
    %v5280 = vpack.c.b16 %v3312, %v3288
    %v5281 = vpack.c.b16 %v3313, %v3289
    %v5282 = vpack.c.b16 %v3314, %v3290
    %v5283 = vpack.c.b16 %v3315, %v3291
    %v5284 = vpack.c.b16 %v3316, %v3292
    %v5285 = vpack.c.b16 %v3317, %v3293
    %v5286 = vpack.c.b16 %v3318, %v3294
    %v5287 = vpack.c.b16 %v3319, %v3295
    %v5288 = vpack.c.b16 %v3320, %v3296
    %v5289 = vpack.c.b16 %v3321, %v3297
    %v5290 = vpack.c.b16 %v3322, %v3298
    %v5291 = vpack.c.b16 %v3323, %v3299
    %v5292 = vpack.c.b16 %v3324, %v3300
    %v5293 = vpack.c.b16 %v3325, %v3301
    %v5294 = vpack.c.b16 %v3326, %v3302
    %v5295 = vpack.c.b16 %v3327, %v3303
    %v5296 = vpack.c.b16 %v3352, %v3328
    %v5297 = vpack.c.b16 %v3353, %v3329
    %v5298 = vpack.c.b16 %v3354, %v3330
    %v5299 = vpack.c.b16 %v3355, %v3331
    %v5300 = vpack.c.b16 %v3356, %v3332
    %v5301 = vpack.c.b16 %v3357, %v3333
    %v5302 = vpack.c.b16 %v3358, %v3334
    %v5303 = vpack.c.b16 %v3359, %v3335
    %v5304 = vpack.c.b16 %v3360, %v3336
    %v5305 = vpack.c.b16 %v3361, %v3337
    %v5306 = vpack.c.b16 %v3362, %v3338
    %v5307 = vpack.c.b16 %v3363, %v3339
    %v5308 = vpack.c.b16 %v3364, %v3340
    %v5309 = vpack.c.b16 %v3365, %v3341
    %v5310 = vpack.c.b16 %v3366, %v3342
    %v5311 = vpack.c.b16 %v3367, %v3343
    %v5312 = vpack.c.b16 %v3368, %v3344
    %v5313 = vpack.c.b16 %v3369, %v3345
    %v5314 = vpack.c.b16 %v3370, %v3346
    %v5315 = vpack.c.b16 %v3371, %v3347
    %v5316 = vpack.c.b16 %v3372, %v3348
    %v5317 = vpack.c.b16 %v3373, %v3349
    %v5318 = vpack.c.b16 %v3374, %v3350
    %v5319 = vpack.c.b16 %v3375, %v3351
    %v5320 = vpack.c.b16 %v3400, %v3376
    %v5321 = vpack.c.b16 %v3401, %v3377
    %v5322 = vpack.c.b16 %v3402, %v3378
    %v5323 = vpack.c.b16 %v3403, %v3379
    %v5324 = vpack.c.b16 %v3404, %v3380
    %v5325 = vpack.c.b16 %v3405, %v3381
    %v5326 = vpack.c.b16 %v3406, %v3382
    %v5327 = vpack.c.b16 %v3407, %v3383
    %v5328 = vpack.c.b16 %v3408, %v3384
    %v5329 = vpack.c.b16 %v3409, %v3385
    %v5330 = vpack.c.b16 %v3410, %v3386
    %v5331 = vpack.c.b16 %v3411, %v3387
    %v5332 = vpack.c.b16 %v3412, %v3388
    %v5333 = vpack.c.b16 %v3413, %v3389
    %v5334 = vpack.c.b16 %v3414, %v3390
    %v5335 = vpack.c.b16 %v3415, %v3391
    %v5336 = vpack.c.b16 %v3416, %v3392
    %v5337 = vpack.c.b16 %v3417, %v3393
    %v5338 = vpack.c.b16 %v3418, %v3394
    %v5339 = vpack.c.b16 %v3419, %v3395
    %v5340 = vpack.c.b16 %v3420, %v3396
    %v5341 = vpack.c.b16 %v3421, %v3397
    %v5342 = vpack.c.b16 %v3422, %v3398
    %v5343 = vpack.c.b16 %v3423, %v3399
    %v5344 = vpack.c.b16 %v3448, %v3424
    %v5345 = vpack.c.b16 %v3449, %v3425
    %v5346 = vpack.c.b16 %v3450, %v3426
    %v5347 = vpack.c.b16 %v3451, %v3427
    %v5348 = vpack.c.b16 %v3452, %v3428
    %v5349 = vpack.c.b16 %v3453, %v3429
    %v5350 = vpack.c.b16 %v3454, %v3430
    %v5351 = vpack.c.b16 %v3455, %v3431
    %v5352 = vpack.c.b16 %v3456, %v3432
    %v5353 = vpack.c.b16 %v3457, %v3433
    %v5354 = vpack.c.b16 %v3458, %v3434
    %v5355 = vpack.c.b16 %v3459, %v3435
    %v5356 = vpack.c.b16 %v3460, %v3436
    %v5357 = vpack.c.b16 %v3461, %v3437
    %v5358 = vpack.c.b16 %v3462, %v3438
    %v5359 = vpack.c.b16 %v3463, %v3439
    %v5360 = vpack.c.b16 %v3464, %v3440
    %v5361 = vpack.c.b16 %v3465, %v3441
    %v5362 = vpack.c.b16 %v3466, %v3442
    %v5363 = vpack.c.b16 %v3467, %v3443
    %v5364 = vpack.c.b16 %v3468, %v3444
    %v5365 = vpack.c.b16 %v3469, %v3445
    %v5366 = vpack.c.b16 %v3470, %v3446
    %v5367 = vpack.c.b16 %v3471, %v3447
    %v5368 = vpack.c.b16 %v3496, %v3472
    %v5369 = vpack.c.b16 %v3497, %v3473
    %v5370 = vpack.c.b16 %v3498, %v3474
    %v5371 = vpack.c.b16 %v3499, %v3475
    %v5372 = vpack.c.b16 %v3500, %v3476
    %v5373 = vpack.c.b16 %v3501, %v3477
    %v5374 = vpack.c.b16 %v3502, %v3478
    %v5375 = vpack.c.b16 %v3503, %v3479
    %v5376 = vpack.c.b16 %v3504, %v3480
    %v5377 = vpack.c.b16 %v3505, %v3481
    %v5378 = vpack.c.b16 %v3506, %v3482
    %v5379 = vpack.c.b16 %v3507, %v3483
    %v5380 = vpack.c.b16 %v3508, %v3484
    %v5381 = vpack.c.b16 %v3509, %v3485
    %v5382 = vpack.c.b16 %v3510, %v3486
    %v5383 = vpack.c.b16 %v3511, %v3487
    %v5384 = vpack.c.b16 %v3512, %v3488
    %v5385 = vpack.c.b16 %v3513, %v3489
    %v5386 = vpack.c.b16 %v3514, %v3490
    %v5387 = vpack.c.b16 %v3515, %v3491
    %v5388 = vpack.c.b16 %v3516, %v3492
    %v5389 = vpack.c.b16 %v3517, %v3493
    %v5390 = vpack.c.b16 %v3518, %v3494
    %v5391 = vpack.c.b16 %v3519, %v3495
    %v5392 = vpack.c.b16 %v3544, %v3520
    %v5393 = vpack.c.b16 %v3545, %v3521
    %v5394 = vpack.c.b16 %v3546, %v3522
    %v5395 = vpack.c.b16 %v3547, %v3523
    %v5396 = vpack.c.b16 %v3548, %v3524
    %v5397 = vpack.c.b16 %v3549, %v3525
    %v5398 = vpack.c.b16 %v3550, %v3526
    %v5399 = vpack.c.b16 %v3551, %v3527
    %v5400 = vpack.c.b16 %v3552, %v3528
    %v5401 = vpack.c.b16 %v3553, %v3529
    %v5402 = vpack.c.b16 %v3554, %v3530
    %v5403 = vpack.c.b16 %v3555, %v3531
    %v5404 = vpack.c.b16 %v3556, %v3532
    %v5405 = vpack.c.b16 %v3557, %v3533
    %v5406 = vpack.c.b16 %v3558, %v3534
    %v5407 = vpack.c.b16 %v3559, %v3535
    %v5408 = vpack.c.b16 %v3560, %v3536
    %v5409 = vpack.c.b16 %v3561, %v3537
    %v5410 = vpack.c.b16 %v3562, %v3538
    %v5411 = vpack.c.b16 %v3563, %v3539
    %v5412 = vpack.c.b16 %v3564, %v3540
    %v5413 = vpack.c.b16 %v3565, %v3541
    %v5414 = vpack.c.b16 %v3566, %v3542
    %v5415 = vpack.c.b16 %v3567, %v3543
    %v5416 = vpack.c.b16 %v3592, %v3568
    %v5417 = vpack.c.b16 %v3593, %v3569
    %v5418 = vpack.c.b16 %v3594, %v3570
    %v5419 = vpack.c.b16 %v3595, %v3571
    %v5420 = vpack.c.b16 %v3596, %v3572
    %v5421 = vpack.c.b16 %v3597, %v3573
    %v5422 = vpack.c.b16 %v3598, %v3574
    %v5423 = vpack.c.b16 %v3599, %v3575
    %v5424 = vpack.c.b16 %v3600, %v3576
    %v5425 = vpack.c.b16 %v3601, %v3577
    %v5426 = vpack.c.b16 %v3602, %v3578
    %v5427 = vpack.c.b16 %v3603, %v3579
    %v5428 = vpack.c.b16 %v3604, %v3580
    %v5429 = vpack.c.b16 %v3605, %v3581
    %v5430 = vpack.c.b16 %v3606, %v3582
    %v5431 = vpack.c.b16 %v3607, %v3583
    %v5432 = vpack.c.b16 %v3608, %v3584
    %v5433 = vpack.c.b16 %v3609, %v3585
    %v5434 = vpack.c.b16 %v3610, %v3586
    %v5435 = vpack.c.b16 %v3611, %v3587
    %v5436 = vpack.c.b16 %v3612, %v3588
    %v5437 = vpack.c.b16 %v3613, %v3589
    %v5438 = vpack.c.b16 %v3614, %v3590
    %v5439 = vpack.c.b16 %v3615, %v3591
    %v5440 = vpack.c.b16 %v3640, %v3616
    %v5441 = vpack.c.b16 %v3641, %v3617
    %v5442 = vpack.c.b16 %v3642, %v3618
    %v5443 = vpack.c.b16 %v3643, %v3619
    %v5444 = vpack.c.b16 %v3644, %v3620
    %v5445 = vpack.c.b16 %v3645, %v3621
    %v5446 = vpack.c.b16 %v3646, %v3622
    %v5447 = vpack.c.b16 %v3647, %v3623
    %v5448 = vpack.c.b16 %v3648, %v3624
    %v5449 = vpack.c.b16 %v3649, %v3625
    %v5450 = vpack.c.b16 %v3650, %v3626
    %v5451 = vpack.c.b16 %v3651, %v3627
    %v5452 = vpack.c.b16 %v3652, %v3628
    %v5453 = vpack.c.b16 %v3653, %v3629
    %v5454 = vpack.c.b16 %v3654, %v3630
    %v5455 = vpack.c.b16 %v3655, %v3631
    %v5456 = vpack.c.b16 %v3656, %v3632
    %v5457 = vpack.c.b16 %v3657, %v3633
    %v5458 = vpack.c.b16 %v3658, %v3634
    %v5459 = vpack.c.b16 %v3659, %v3635
    %v5460 = vpack.c.b16 %v3660, %v3636
    %v5461 = vpack.c.b16 %v3661, %v3637
    %v5462 = vpack.c.b16 %v3662, %v3638
    %v5463 = vpack.c.b16 %v3663, %v3639
    %v5464 = vpack.c.b16 %v3688, %v3664
    %v5465 = vpack.c.b16 %v3689, %v3665
    %v5466 = vpack.c.b16 %v3690, %v3666
    %v5467 = vpack.c.b16 %v3691, %v3667
    %v5468 = vpack.c.b16 %v3692, %v3668
    %v5469 = vpack.c.b16 %v3693, %v3669
    %v5470 = vpack.c.b16 %v3694, %v3670
    %v5471 = vpack.c.b16 %v3695, %v3671
    %v5472 = vpack.c.b16 %v3696, %v3672
    %v5473 = vpack.c.b16 %v3697, %v3673
    %v5474 = vpack.c.b16 %v3698, %v3674
    %v5475 = vpack.c.b16 %v3699, %v3675
    %v5476 = vpack.c.b16 %v3700, %v3676
    %v5477 = vpack.c.b16 %v3701, %v3677
    %v5478 = vpack.c.b16 %v3702, %v3678
    %v5479 = vpack.c.b16 %v3703, %v3679
    %v5480 = vpack.c.b16 %v3704, %v3680
    %v5481 = vpack.c.b16 %v3705, %v3681
    %v5482 = vpack.c.b16 %v3706, %v3682
    %v5483 = vpack.c.b16 %v3707, %v3683
    %v5484 = vpack.c.b16 %v3708, %v3684
    %v5485 = vpack.c.b16 %v3709, %v3685
    %v5486 = vpack.c.b16 %v3710, %v3686
    %v5487 = vpack.c.b16 %v3711, %v3687
    %v5488 = vpack.c.b16 %v3736, %v3712
    %v5489 = vpack.c.b16 %v3737, %v3713
    %v5490 = vpack.c.b16 %v3738, %v3714
    %v5491 = vpack.c.b16 %v3739, %v3715
    %v5492 = vpack.c.b16 %v3740, %v3716
    %v5493 = vpack.c.b16 %v3741, %v3717
    %v5494 = vpack.c.b16 %v3742, %v3718
    %v5495 = vpack.c.b16 %v3743, %v3719
    %v5496 = vpack.c.b16 %v3744, %v3720
    %v5497 = vpack.c.b16 %v3745, %v3721
    %v5498 = vpack.c.b16 %v3746, %v3722
    %v5499 = vpack.c.b16 %v3747, %v3723
    %v5500 = vpack.c.b16 %v3748, %v3724
    %v5501 = vpack.c.b16 %v3749, %v3725
    %v5502 = vpack.c.b16 %v3750, %v3726
    %v5503 = vpack.c.b16 %v3751, %v3727
    %v5504 = vpack.c.b16 %v3752, %v3728
    %v5505 = vpack.c.b16 %v3753, %v3729
    %v5506 = vpack.c.b16 %v3754, %v3730
    %v5507 = vpack.c.b16 %v3755, %v3731
    %v5508 = vpack.c.b16 %v3756, %v3732
    %v5509 = vpack.c.b16 %v3757, %v3733
    %v5510 = vpack.c.b16 %v3758, %v3734
    %v5511 = vpack.c.b16 %v3759, %v3735
    %v5512 = vpack.c.b16 %v3784, %v3760
    %v5513 = vpack.c.b16 %v3785, %v3761
    %v5514 = vpack.c.b16 %v3786, %v3762
    %v5515 = vpack.c.b16 %v3787, %v3763
    %v5516 = vpack.c.b16 %v3788, %v3764
    %v5517 = vpack.c.b16 %v3789, %v3765
    %v5518 = vpack.c.b16 %v3790, %v3766
    %v5519 = vpack.c.b16 %v3791, %v3767
    %v5520 = vpack.c.b16 %v3792, %v3768
    %v5521 = vpack.c.b16 %v3793, %v3769
    %v5522 = vpack.c.b16 %v3794, %v3770
    %v5523 = vpack.c.b16 %v3795, %v3771
    %v5524 = vpack.c.b16 %v3796, %v3772
    %v5525 = vpack.c.b16 %v3797, %v3773
    %v5526 = vpack.c.b16 %v3798, %v3774
    %v5527 = vpack.c.b16 %v3799, %v3775
    %v5528 = vpack.c.b16 %v3800, %v3776
    %v5529 = vpack.c.b16 %v3801, %v3777
    %v5530 = vpack.c.b16 %v3802, %v3778
    %v5531 = vpack.c.b16 %v3803, %v3779
    %v5532 = vpack.c.b16 %v3804, %v3780
    %v5533 = vpack.c.b16 %v3805, %v3781
    %v5534 = vpack.c.b16 %v3806, %v3782
    %v5535 = vpack.c.b16 %v3807, %v3783
    %v5536 = vpack.c.b16 %v3832, %v3808
    %v5537 = vpack.c.b16 %v3833, %v3809
    %v5538 = vpack.c.b16 %v3834, %v3810
    %v5539 = vpack.c.b16 %v3835, %v3811
    %v5540 = vpack.c.b16 %v3836, %v3812
    %v5541 = vpack.c.b16 %v3837, %v3813
    %v5542 = vpack.c.b16 %v3838, %v3814
    %v5543 = vpack.c.b16 %v3839, %v3815
    %v5544 = vpack.c.b16 %v3840, %v3816
    %v5545 = vpack.c.b16 %v3841, %v3817
    %v5546 = vpack.c.b16 %v3842, %v3818
    %v5547 = vpack.c.b16 %v3843, %v3819
    %v5548 = vpack.c.b16 %v3844, %v3820
    %v5549 = vpack.c.b16 %v3845, %v3821
    %v5550 = vpack.c.b16 %v3846, %v3822
    %v5551 = vpack.c.b16 %v3847, %v3823
    %v5552 = vpack.c.b16 %v3848, %v3824
    %v5553 = vpack.c.b16 %v3849, %v3825
    %v5554 = vpack.c.b16 %v3850, %v3826
    %v5555 = vpack.c.b16 %v3851, %v3827
    %v5556 = vpack.c.b16 %v3852, %v3828
    %v5557 = vpack.c.b16 %v3853, %v3829
    %v5558 = vpack.c.b16 %v3854, %v3830
    %v5559 = vpack.c.b16 %v3855, %v3831
    %v5560 = vpack.c.b16 %v3880, %v3856
    %v5561 = vpack.c.b16 %v3881, %v3857
    %v5562 = vpack.c.b16 %v3882, %v3858
    %v5563 = vpack.c.b16 %v3883, %v3859
    %v5564 = vpack.c.b16 %v3884, %v3860
    %v5565 = vpack.c.b16 %v3885, %v3861
    %v5566 = vpack.c.b16 %v3886, %v3862
    %v5567 = vpack.c.b16 %v3887, %v3863
    %v5568 = vpack.c.b16 %v3888, %v3864
    %v5569 = vpack.c.b16 %v3889, %v3865
    %v5570 = vpack.c.b16 %v3890, %v3866
    %v5571 = vpack.c.b16 %v3891, %v3867
    %v5572 = vpack.c.b16 %v3892, %v3868
    %v5573 = vpack.c.b16 %v3893, %v3869
    %v5574 = vpack.c.b16 %v3894, %v3870
    %v5575 = vpack.c.b16 %v3895, %v3871
    %v5576 = vpack.c.b16 %v3896, %v3872
    %v5577 = vpack.c.b16 %v3897, %v3873
    %v5578 = vpack.c.b16 %v3898, %v3874
    %v5579 = vpack.c.b16 %v3899, %v3875
    %v5580 = vpack.c.b16 %v3900, %v3876
    %v5581 = vpack.c.b16 %v3901, %v3877
    %v5582 = vpack.c.b16 %v3902, %v3878
    %v5583 = vpack.c.b16 %v3903, %v3879
    %v5584 = vpack.c.b16 %v3928, %v3904
    %v5585 = vpack.c.b16 %v3929, %v3905
    %v5586 = vpack.c.b16 %v3930, %v3906
    %v5587 = vpack.c.b16 %v3931, %v3907
    %v5588 = vpack.c.b16 %v3932, %v3908
    %v5589 = vpack.c.b16 %v3933, %v3909
    %v5590 = vpack.c.b16 %v3934, %v3910
    %v5591 = vpack.c.b16 %v3935, %v3911
    %v5592 = vpack.c.b16 %v3936, %v3912
    %v5593 = vpack.c.b16 %v3937, %v3913
    %v5594 = vpack.c.b16 %v3938, %v3914
    %v5595 = vpack.c.b16 %v3939, %v3915
    %v5596 = vpack.c.b16 %v3940, %v3916
    %v5597 = vpack.c.b16 %v3941, %v3917
    %v5598 = vpack.c.b16 %v3942, %v3918
    %v5599 = vpack.c.b16 %v3943, %v3919
    %v5600 = vpack.c.b16 %v3944, %v3920
    %v5601 = vpack.c.b16 %v3945, %v3921
    %v5602 = vpack.c.b16 %v3946, %v3922
    %v5603 = vpack.c.b16 %v3947, %v3923
    %v5604 = vpack.c.b16 %v3948, %v3924
    %v5605 = vpack.c.b16 %v3949, %v3925
    %v5606 = vpack.c.b16 %v3950, %v3926
    %v5607 = vpack.c.b16 %v3951, %v3927
    %v5608 = vpack.c.b16 %v3976, %v3952
    %v5609 = vpack.c.b16 %v3977, %v3953
    %v5610 = vpack.c.b16 %v3978, %v3954
    %v5611 = vpack.c.b16 %v3979, %v3955
    %v5612 = vpack.c.b16 %v3980, %v3956
    %v5613 = vpack.c.b16 %v3981, %v3957
    %v5614 = vpack.c.b16 %v3982, %v3958
    %v5615 = vpack.c.b16 %v3983, %v3959
    %v5616 = vpack.c.b16 %v3984, %v3960
    %v5617 = vpack.c.b16 %v3985, %v3961
    %v5618 = vpack.c.b16 %v3986, %v3962
    %v5619 = vpack.c.b16 %v3987, %v3963
    %v5620 = vpack.c.b16 %v3988, %v3964
    %v5621 = vpack.c.b16 %v3989, %v3965
    %v5622 = vpack.c.b16 %v3990, %v3966
    %v5623 = vpack.c.b16 %v3991, %v3967
    %v5624 = vpack.c.b16 %v3992, %v3968
    %v5625 = vpack.c.b16 %v3993, %v3969
    %v5626 = vpack.c.b16 %v3994, %v3970
    %v5627 = vpack.c.b16 %v3995, %v3971
    %v5628 = vpack.c.b16 %v3996, %v3972
    %v5629 = vpack.c.b16 %v3997, %v3973
    %v5630 = vpack.c.b16 %v3998, %v3974
    %v5631 = vpack.c.b16 %v3999, %v3975
    %v5632 = vpack.c.b16 %v4024, %v4000
    %v5633 = vpack.c.b16 %v4025, %v4001
    %v5634 = vpack.c.b16 %v4026, %v4002
    %v5635 = vpack.c.b16 %v4027, %v4003
    %v5636 = vpack.c.b16 %v4028, %v4004
    %v5637 = vpack.c.b16 %v4029, %v4005
    %v5638 = vpack.c.b16 %v4030, %v4006
    %v5639 = vpack.c.b16 %v4031, %v4007
    %v5640 = vpack.c.b16 %v4032, %v4008
    %v5641 = vpack.c.b16 %v4033, %v4009
    %v5642 = vpack.c.b16 %v4034, %v4010
    %v5643 = vpack.c.b16 %v4035, %v4011
    %v5644 = vpack.c.b16 %v4036, %v4012
    %v5645 = vpack.c.b16 %v4037, %v4013
    %v5646 = vpack.c.b16 %v4038, %v4014
    %v5647 = vpack.c.b16 %v4039, %v4015
    %v5648 = vpack.c.b16 %v4040, %v4016
    %v5649 = vpack.c.b16 %v4041, %v4017
    %v5650 = vpack.c.b16 %v4042, %v4018
    %v5651 = vpack.c.b16 %v4043, %v4019
    %v5652 = vpack.c.b16 %v4044, %v4020
    %v5653 = vpack.c.b16 %v4045, %v4021
    %v5654 = vpack.c.b16 %v4046, %v4022
    %v5655 = vpack.c.b16 %v4047, %v4023
    %v5656 = vpack.c.b16 %v4072, %v4048
    %v5657 = vpack.c.b16 %v4073, %v4049
    %v5658 = vpack.c.b16 %v4074, %v4050
    %v5659 = vpack.c.b16 %v4075, %v4051
    %v5660 = vpack.c.b16 %v4076, %v4052
    %v5661 = vpack.c.b16 %v4077, %v4053
    %v5662 = vpack.c.b16 %v4078, %v4054
    %v5663 = vpack.c.b16 %v4079, %v4055
    %v5664 = vpack.c.b16 %v4080, %v4056
    %v5665 = vpack.c.b16 %v4081, %v4057
    %v5666 = vpack.c.b16 %v4082, %v4058
    %v5667 = vpack.c.b16 %v4083, %v4059
    %v5668 = vpack.c.b16 %v4084, %v4060
    %v5669 = vpack.c.b16 %v4085, %v4061
    %v5670 = vpack.c.b16 %v4086, %v4062
    %v5671 = vpack.c.b16 %v4087, %v4063
    %v5672 = vpack.c.b16 %v4088, %v4064
    %v5673 = vpack.c.b16 %v4089, %v4065
    %v5674 = vpack.c.b16 %v4090, %v4066
    %v5675 = vpack.c.b16 %v4091, %v4067
    %v5676 = vpack.c.b16 %v4092, %v4068
    %v5677 = vpack.c.b16 %v4093, %v4069
    %v5678 = vpack.c.b16 %v4094, %v4070
    %v5679 = vpack.c.b16 %v4095, %v4071
    %v5680 = vpack.c.b16 %v4120, %v4096
    %v5681 = vpack.c.b16 %v4121, %v4097
    %v5682 = vpack.c.b16 %v4122, %v4098
    %v5683 = vpack.c.b16 %v4123, %v4099
    %v5684 = vpack.c.b16 %v4124, %v4100
    %v5685 = vpack.c.b16 %v4125, %v4101
    %v5686 = vpack.c.b16 %v4126, %v4102
    %v5687 = vpack.c.b16 %v4127, %v4103
    %v5688 = vpack.c.b16 %v4128, %v4104
    %v5689 = vpack.c.b16 %v4129, %v4105
    %v5690 = vpack.c.b16 %v4130, %v4106
    %v5691 = vpack.c.b16 %v4131, %v4107
    %v5692 = vpack.c.b16 %v4132, %v4108
    %v5693 = vpack.c.b16 %v4133, %v4109
    %v5694 = vpack.c.b16 %v4134, %v4110
    %v5695 = vpack.c.b16 %v4135, %v4111
    %v5696 = vpack.c.b16 %v4136, %v4112
    %v5697 = vpack.c.b16 %v4137, %v4113
    %v5698 = vpack.c.b16 %v4138, %v4114
    %v5699 = vpack.c.b16 %v4139, %v4115
    %v5700 = vpack.c.b16 %v4140, %v4116
    %v5701 = vpack.c.b16 %v4141, %v4117
    %v5702 = vpack.c.b16 %v4142, %v4118
    %v5703 = vpack.c.b16 %v4143, %v4119
    %v5704 = vpack.c.b16 %v4168, %v4144
    %v5705 = vpack.c.b16 %v4169, %v4145
    %v5706 = vpack.c.b16 %v4170, %v4146
    %v5707 = vpack.c.b16 %v4171, %v4147
    %v5708 = vpack.c.b16 %v4172, %v4148
    %v5709 = vpack.c.b16 %v4173, %v4149
    %v5710 = vpack.c.b16 %v4174, %v4150
    %v5711 = vpack.c.b16 %v4175, %v4151
    %v5712 = vpack.c.b16 %v4176, %v4152
    %v5713 = vpack.c.b16 %v4177, %v4153
    %v5714 = vpack.c.b16 %v4178, %v4154
    %v5715 = vpack.c.b16 %v4179, %v4155
    %v5716 = vpack.c.b16 %v4180, %v4156
    %v5717 = vpack.c.b16 %v4181, %v4157
    %v5718 = vpack.c.b16 %v4182, %v4158
    %v5719 = vpack.c.b16 %v4183, %v4159
    %v5720 = vpack.c.b16 %v4184, %v4160
    %v5721 = vpack.c.b16 %v4185, %v4161
    %v5722 = vpack.c.b16 %v4186, %v4162
    %v5723 = vpack.c.b16 %v4187, %v4163
    %v5724 = vpack.c.b16 %v4188, %v4164
    %v5725 = vpack.c.b16 %v4189, %v4165
    %v5726 = vpack.c.b16 %v4190, %v4166
    %v5727 = vpack.c.b16 %v4191, %v4167
    %v5728 = vpack.c.b16 %v4216, %v4192
    %v5729 = vpack.c.b16 %v4217, %v4193
    %v5730 = vpack.c.b16 %v4218, %v4194
    %v5731 = vpack.c.b16 %v4219, %v4195
    %v5732 = vpack.c.b16 %v4220, %v4196
    %v5733 = vpack.c.b16 %v4221, %v4197
    %v5734 = vpack.c.b16 %v4222, %v4198
    %v5735 = vpack.c.b16 %v4223, %v4199
    %v5736 = vpack.c.b16 %v4224, %v4200
    %v5737 = vpack.c.b16 %v4225, %v4201
    %v5738 = vpack.c.b16 %v4226, %v4202
    %v5739 = vpack.c.b16 %v4227, %v4203
    %v5740 = vpack.c.b16 %v4228, %v4204
    %v5741 = vpack.c.b16 %v4229, %v4205
    %v5742 = vpack.c.b16 %v4230, %v4206
    %v5743 = vpack.c.b16 %v4231, %v4207
    %v5744 = vpack.c.b16 %v4232, %v4208
    %v5745 = vpack.c.b16 %v4233, %v4209
    %v5746 = vpack.c.b16 %v4234, %v4210
    %v5747 = vpack.c.b16 %v4235, %v4211
    %v5748 = vpack.c.b16 %v4236, %v4212
    %v5749 = vpack.c.b16 %v4237, %v4213
    %v5750 = vpack.c.b16 %v4238, %v4214
    %v5751 = vpack.c.b16 %v4239, %v4215
    %v5752 = vpack.c.b16 %v4264, %v4240
    %v5753 = vpack.c.b16 %v4265, %v4241
    %v5754 = vpack.c.b16 %v4266, %v4242
    %v5755 = vpack.c.b16 %v4267, %v4243
    %v5756 = vpack.c.b16 %v4268, %v4244
    %v5757 = vpack.c.b16 %v4269, %v4245
    %v5758 = vpack.c.b16 %v4270, %v4246
    %v5759 = vpack.c.b16 %v4271, %v4247
    %v5760 = vpack.c.b16 %v4272, %v4248
    %v5761 = vpack.c.b16 %v4273, %v4249
    %v5762 = vpack.c.b16 %v4274, %v4250
    %v5763 = vpack.c.b16 %v4275, %v4251
    %v5764 = vpack.c.b16 %v4276, %v4252
    %v5765 = vpack.c.b16 %v4277, %v4253
    %v5766 = vpack.c.b16 %v4278, %v4254
    %v5767 = vpack.c.b16 %v4279, %v4255
    %v5768 = vpack.c.b16 %v4280, %v4256
    %v5769 = vpack.c.b16 %v4281, %v4257
    %v5770 = vpack.c.b16 %v4282, %v4258
    %v5771 = vpack.c.b16 %v4283, %v4259
    %v5772 = vpack.c.b16 %v4284, %v4260
    %v5773 = vpack.c.b16 %v4285, %v4261
    %v5774 = vpack.c.b16 %v4286, %v4262
    %v5775 = vpack.c.b16 %v4287, %v4263
    %v5776 = vpack.c.b16 %v4312, %v4288
    %v5777 = vpack.c.b16 %v4313, %v4289
    %v5778 = vpack.c.b16 %v4314, %v4290
    %v5779 = vpack.c.b16 %v4315, %v4291
    %v5780 = vpack.c.b16 %v4316, %v4292
    %v5781 = vpack.c.b16 %v4317, %v4293
    %v5782 = vpack.c.b16 %v4318, %v4294
    %v5783 = vpack.c.b16 %v4319, %v4295
    %v5784 = vpack.c.b16 %v4320, %v4296
    %v5785 = vpack.c.b16 %v4321, %v4297
    %v5786 = vpack.c.b16 %v4322, %v4298
    %v5787 = vpack.c.b16 %v4323, %v4299
    %v5788 = vpack.c.b16 %v4324, %v4300
    %v5789 = vpack.c.b16 %v4325, %v4301
    %v5790 = vpack.c.b16 %v4326, %v4302
    %v5791 = vpack.c.b16 %v4327, %v4303
    %v5792 = vpack.c.b16 %v4328, %v4304
    %v5793 = vpack.c.b16 %v4329, %v4305
    %v5794 = vpack.c.b16 %v4330, %v4306
    %v5795 = vpack.c.b16 %v4331, %v4307
    %v5796 = vpack.c.b16 %v4332, %v4308
    %v5797 = vpack.c.b16 %v4333, %v4309
    %v5798 = vpack.c.b16 %v4334, %v4310
    %v5799 = vpack.c.b16 %v4335, %v4311
    %v5800 = vpack.c.b16 %v4360, %v4336
    %v5801 = vpack.c.b16 %v4361, %v4337
    %v5802 = vpack.c.b16 %v4362, %v4338
    %v5803 = vpack.c.b16 %v4363, %v4339
    %v5804 = vpack.c.b16 %v4364, %v4340
    %v5805 = vpack.c.b16 %v4365, %v4341
    %v5806 = vpack.c.b16 %v4366, %v4342
    %v5807 = vpack.c.b16 %v4367, %v4343
    %v5808 = vpack.c.b16 %v4368, %v4344
    %v5809 = vpack.c.b16 %v4369, %v4345
    %v5810 = vpack.c.b16 %v4370, %v4346
    %v5811 = vpack.c.b16 %v4371, %v4347
    %v5812 = vpack.c.b16 %v4372, %v4348
    %v5813 = vpack.c.b16 %v4373, %v4349
    %v5814 = vpack.c.b16 %v4374, %v4350
    %v5815 = vpack.c.b16 %v4375, %v4351
    %v5816 = vpack.c.b16 %v4376, %v4352
    %v5817 = vpack.c.b16 %v4377, %v4353
    %v5818 = vpack.c.b16 %v4378, %v4354
    %v5819 = vpack.c.b16 %v4379, %v4355
    %v5820 = vpack.c.b16 %v4380, %v4356
    %v5821 = vpack.c.b16 %v4381, %v4357
    %v5822 = vpack.c.b16 %v4382, %v4358
    %v5823 = vpack.c.b16 %v4383, %v4359
    %v5824 = vpack.c.b16 %v4408, %v4384
    %v5825 = vpack.c.b16 %v4409, %v4385
    %v5826 = vpack.c.b16 %v4410, %v4386
    %v5827 = vpack.c.b16 %v4411, %v4387
    %v5828 = vpack.c.b16 %v4412, %v4388
    %v5829 = vpack.c.b16 %v4413, %v4389
    %v5830 = vpack.c.b16 %v4414, %v4390
    %v5831 = vpack.c.b16 %v4415, %v4391
    %v5832 = vpack.c.b16 %v4416, %v4392
    %v5833 = vpack.c.b16 %v4417, %v4393
    %v5834 = vpack.c.b16 %v4418, %v4394
    %v5835 = vpack.c.b16 %v4419, %v4395
    %v5836 = vpack.c.b16 %v4420, %v4396
    %v5837 = vpack.c.b16 %v4421, %v4397
    %v5838 = vpack.c.b16 %v4422, %v4398
    %v5839 = vpack.c.b16 %v4423, %v4399
    %v5840 = vpack.c.b16 %v4424, %v4400
    %v5841 = vpack.c.b16 %v4425, %v4401
    %v5842 = vpack.c.b16 %v4426, %v4402
    %v5843 = vpack.c.b16 %v4427, %v4403
    %v5844 = vpack.c.b16 %v4428, %v4404
    %v5845 = vpack.c.b16 %v4429, %v4405
    %v5846 = vpack.c.b16 %v4430, %v4406
    %v5847 = vpack.c.b16 %v4431, %v4407
    %v5848 = vpack.c.b16 %v4456, %v4432
    %v5849 = vpack.c.b16 %v4457, %v4433
    %v5850 = vpack.c.b16 %v4458, %v4434
    %v5851 = vpack.c.b16 %v4459, %v4435
    %v5852 = vpack.c.b16 %v4460, %v4436
    %v5853 = vpack.c.b16 %v4461, %v4437
    %v5854 = vpack.c.b16 %v4462, %v4438
    %v5855 = vpack.c.b16 %v4463, %v4439
    %v5856 = vpack.c.b16 %v4464, %v4440
    %v5857 = vpack.c.b16 %v4465, %v4441
    %v5858 = vpack.c.b16 %v4466, %v4442
    %v5859 = vpack.c.b16 %v4467, %v4443
    %v5860 = vpack.c.b16 %v4468, %v4444
    %v5861 = vpack.c.b16 %v4469, %v4445
    %v5862 = vpack.c.b16 %v4470, %v4446
    %v5863 = vpack.c.b16 %v4471, %v4447
    %v5864 = vpack.c.b16 %v4472, %v4448
    %v5865 = vpack.c.b16 %v4473, %v4449
    %v5866 = vpack.c.b16 %v4474, %v4450
    %v5867 = vpack.c.b16 %v4475, %v4451
    %v5868 = vpack.c.b16 %v4476, %v4452
    %v5869 = vpack.c.b16 %v4477, %v4453
    %v5870 = vpack.c.b16 %v4478, %v4454
    %v5871 = vpack.c.b16 %v4479, %v4455
    %v5872 = vpack.c.b16 %v4504, %v4480
    %v5873 = vpack.c.b16 %v4505, %v4481
    %v5874 = vpack.c.b16 %v4506, %v4482
    %v5875 = vpack.c.b16 %v4507, %v4483
    %v5876 = vpack.c.b16 %v4508, %v4484
    %v5877 = vpack.c.b16 %v4509, %v4485
    %v5878 = vpack.c.b16 %v4510, %v4486
    %v5879 = vpack.c.b16 %v4511, %v4487
    %v5880 = vpack.c.b16 %v4512, %v4488
    %v5881 = vpack.c.b16 %v4513, %v4489
    %v5882 = vpack.c.b16 %v4514, %v4490
    %v5883 = vpack.c.b16 %v4515, %v4491
    %v5884 = vpack.c.b16 %v4516, %v4492
    %v5885 = vpack.c.b16 %v4517, %v4493
    %v5886 = vpack.c.b16 %v4518, %v4494
    %v5887 = vpack.c.b16 %v4519, %v4495
    %v5888 = vpack.c.b16 %v4520, %v4496
    %v5889 = vpack.c.b16 %v4521, %v4497
    %v5890 = vpack.c.b16 %v4522, %v4498
    %v5891 = vpack.c.b16 %v4523, %v4499
    %v5892 = vpack.c.b16 %v4524, %v4500
    %v5893 = vpack.c.b16 %v4525, %v4501
    %v5894 = vpack.c.b16 %v4526, %v4502
    %v5895 = vpack.c.b16 %v4527, %v4503
    %v5896 = vpack.c.b16 %v4552, %v4528
    %v5897 = vpack.c.b16 %v4553, %v4529
    %v5898 = vpack.c.b16 %v4554, %v4530
    %v5899 = vpack.c.b16 %v4555, %v4531
    %v5900 = vpack.c.b16 %v4556, %v4532
    %v5901 = vpack.c.b16 %v4557, %v4533
    %v5902 = vpack.c.b16 %v4558, %v4534
    %v5903 = vpack.c.b16 %v4559, %v4535
    %v5904 = vpack.c.b16 %v4560, %v4536
    %v5905 = vpack.c.b16 %v4561, %v4537
    %v5906 = vpack.c.b16 %v4562, %v4538
    %v5907 = vpack.c.b16 %v4563, %v4539
    %v5908 = vpack.c.b16 %v4564, %v4540
    %v5909 = vpack.c.b16 %v4565, %v4541
    %v5910 = vpack.c.b16 %v4566, %v4542
    %v5911 = vpack.c.b16 %v4567, %v4543
    %v5912 = vpack.c.b16 %v4568, %v4544
    %v5913 = vpack.c.b16 %v4569, %v4545
    %v5914 = vpack.c.b16 %v4570, %v4546
    %v5915 = vpack.c.b16 %v4571, %v4547
    %v5916 = vpack.c.b16 %v4572, %v4548
    %v5917 = vpack.c.b16 %v4573, %v4549
    %v5918 = vpack.c.b16 %v4574, %v4550
    %v5919 = vpack.c.b16 %v4575, %v4551
    %v5920 = vpack.c.b16 %v4600, %v4576
    %v5921 = vpack.c.b16 %v4601, %v4577
    %v5922 = vpack.c.b16 %v4602, %v4578
    %v5923 = vpack.c.b16 %v4603, %v4579
    %v5924 = vpack.c.b16 %v4604, %v4580
    %v5925 = vpack.c.b16 %v4605, %v4581
    %v5926 = vpack.c.b16 %v4606, %v4582
    %v5927 = vpack.c.b16 %v4607, %v4583
    %v5928 = vpack.c.b16 %v4608, %v4584
    %v5929 = vpack.c.b16 %v4609, %v4585
    %v5930 = vpack.c.b16 %v4610, %v4586
    %v5931 = vpack.c.b16 %v4611, %v4587
    %v5932 = vpack.c.b16 %v4612, %v4588
    %v5933 = vpack.c.b16 %v4613, %v4589
    %v5934 = vpack.c.b16 %v4614, %v4590
    %v5935 = vpack.c.b16 %v4615, %v4591
    %v5936 = vpack.c.b16 %v4616, %v4592
    %v5937 = vpack.c.b16 %v4617, %v4593
    %v5938 = vpack.c.b16 %v4618, %v4594
    %v5939 = vpack.c.b16 %v4619, %v4595
    %v5940 = vpack.c.b16 %v4620, %v4596
    %v5941 = vpack.c.b16 %v4621, %v4597
    %v5942 = vpack.c.b16 %v4622, %v4598
    %v5943 = vpack.c.b16 %v4623, %v4599
    %v5944 = vpack.c.b16 %v4648, %v4624
    %v5945 = vpack.c.b16 %v4649, %v4625
    %v5946 = vpack.c.b16 %v4650, %v4626
    %v5947 = vpack.c.b16 %v4651, %v4627
    %v5948 = vpack.c.b16 %v4652, %v4628
    %v5949 = vpack.c.b16 %v4653, %v4629
    %v5950 = vpack.c.b16 %v4654, %v4630
    %v5951 = vpack.c.b16 %v4655, %v4631
    %v5952 = vpack.c.b16 %v4656, %v4632
    %v5953 = vpack.c.b16 %v4657, %v4633
    %v5954 = vpack.c.b16 %v4658, %v4634
    %v5955 = vpack.c.b16 %v4659, %v4635
    %v5956 = vpack.c.b16 %v4660, %v4636
    %v5957 = vpack.c.b16 %v4661, %v4637
    %v5958 = vpack.c.b16 %v4662, %v4638
    %v5959 = vpack.c.b16 %v4663, %v4639
    %v5960 = vpack.c.b16 %v4664, %v4640
    %v5961 = vpack.c.b16 %v4665, %v4641
    %v5962 = vpack.c.b16 %v4666, %v4642
    %v5963 = vpack.c.b16 %v4667, %v4643
    %v5964 = vpack.c.b16 %v4668, %v4644
    %v5965 = vpack.c.b16 %v4669, %v4645
    %v5966 = vpack.c.b16 %v4670, %v4646
    %v5967 = vpack.c.b16 %v4671, %v4647
    %v5968 = vpack.c.b16 %v4696, %v4672
    %v5969 = vpack.c.b16 %v4697, %v4673
    %v5970 = vpack.c.b16 %v4698, %v4674
    %v5971 = vpack.c.b16 %v4699, %v4675
    %v5972 = vpack.c.b16 %v4700, %v4676
    %v5973 = vpack.c.b16 %v4701, %v4677
    %v5974 = vpack.c.b16 %v4702, %v4678
    %v5975 = vpack.c.b16 %v4703, %v4679
    %v5976 = vpack.c.b16 %v4704, %v4680
    %v5977 = vpack.c.b16 %v4705, %v4681
    %v5978 = vpack.c.b16 %v4706, %v4682
    %v5979 = vpack.c.b16 %v4707, %v4683
    %v5980 = vpack.c.b16 %v4708, %v4684
    %v5981 = vpack.c.b16 %v4709, %v4685
    %v5982 = vpack.c.b16 %v4710, %v4686
    %v5983 = vpack.c.b16 %v4711, %v4687
    %v5984 = vpack.c.b16 %v4712, %v4688
    %v5985 = vpack.c.b16 %v4713, %v4689
    %v5986 = vpack.c.b16 %v4714, %v4690
    %v5987 = vpack.c.b16 %v4715, %v4691
    %v5988 = vpack.c.b16 %v4716, %v4692
    %v5989 = vpack.c.b16 %v4717, %v4693
    %v5990 = vpack.c.b16 %v4718, %v4694
    %v5991 = vpack.c.b16 %v4719, %v4695
    %v5992 = vpack.c.b16 %v4744, %v4720
    %v5993 = vpack.c.b16 %v4745, %v4721
    %v5994 = vpack.c.b16 %v4746, %v4722
    %v5995 = vpack.c.b16 %v4747, %v4723
    %v5996 = vpack.c.b16 %v4748, %v4724
    %v5997 = vpack.c.b16 %v4749, %v4725
    %v5998 = vpack.c.b16 %v4750, %v4726
    %v5999 = vpack.c.b16 %v4751, %v4727
    %v6000 = vpack.c.b16 %v4752, %v4728
    %v6001 = vpack.c.b16 %v4753, %v4729
    %v6002 = vpack.c.b16 %v4754, %v4730
    %v6003 = vpack.c.b16 %v4755, %v4731
    %v6004 = vpack.c.b16 %v4756, %v4732
    %v6005 = vpack.c.b16 %v4757, %v4733
    %v6006 = vpack.c.b16 %v4758, %v4734
    %v6007 = vpack.c.b16 %v4759, %v4735
    %v6008 = vpack.c.b16 %v4760, %v4736
    %v6009 = vpack.c.b16 %v4761, %v4737
    %v6010 = vpack.c.b16 %v4762, %v4738
    %v6011 = vpack.c.b16 %v4763, %v4739
    %v6012 = vpack.c.b16 %v4764, %v4740
    %v6013 = vpack.c.b16 %v4765, %v4741
    %v6014 = vpack.c.b16 %v4766, %v4742
    %v6015 = vpack.c.b16 %v4767, %v4743
    %v6016 = vpack.c.b16 %v4792, %v4768
    %v6017 = vpack.c.b16 %v4793, %v4769
    %v6018 = vpack.c.b16 %v4794, %v4770
    %v6019 = vpack.c.b16 %v4795, %v4771
    %v6020 = vpack.c.b16 %v4796, %v4772
    %v6021 = vpack.c.b16 %v4797, %v4773
    %v6022 = vpack.c.b16 %v4798, %v4774
    %v6023 = vpack.c.b16 %v4799, %v4775
    %v6024 = vpack.c.b16 %v4800, %v4776
    %v6025 = vpack.c.b16 %v4801, %v4777
    %v6026 = vpack.c.b16 %v4802, %v4778
    %v6027 = vpack.c.b16 %v4803, %v4779
    %v6028 = vpack.c.b16 %v4804, %v4780
    %v6029 = vpack.c.b16 %v4805, %v4781
    %v6030 = vpack.c.b16 %v4806, %v4782
    %v6031 = vpack.c.b16 %v4807, %v4783
    %v6032 = vpack.c.b16 %v4808, %v4784
    %v6033 = vpack.c.b16 %v4809, %v4785
    %v6034 = vpack.c.b16 %v4810, %v4786
    %v6035 = vpack.c.b16 %v4811, %v4787
    %v6036 = vpack.c.b16 %v4812, %v4788
    %v6037 = vpack.c.b16 %v4813, %v4789
    %v6038 = vpack.c.b16 %v4814, %v4790
    %v6039 = vpack.c.b16 %v4815, %v4791
    %v6040 = vpack.c.b16 %v4840, %v4816
    %v6041 = vpack.c.b16 %v4841, %v4817
    %v6042 = vpack.c.b16 %v4842, %v4818
    %v6043 = vpack.c.b16 %v4843, %v4819
    %v6044 = vpack.c.b16 %v4844, %v4820
    %v6045 = vpack.c.b16 %v4845, %v4821
    %v6046 = vpack.c.b16 %v4846, %v4822
    %v6047 = vpack.c.b16 %v4847, %v4823
    %v6048 = vpack.c.b16 %v4848, %v4824
    %v6049 = vpack.c.b16 %v4849, %v4825
    %v6050 = vpack.c.b16 %v4850, %v4826
    %v6051 = vpack.c.b16 %v4851, %v4827
    %v6052 = vpack.c.b16 %v4852, %v4828
    %v6053 = vpack.c.b16 %v4853, %v4829
    %v6054 = vpack.c.b16 %v4854, %v4830
    %v6055 = vpack.c.b16 %v4855, %v4831
    %v6056 = vpack.c.b16 %v4856, %v4832
    %v6057 = vpack.c.b16 %v4857, %v4833
    %v6058 = vpack.c.b16 %v4858, %v4834
    %v6059 = vpack.c.b16 %v4859, %v4835
    %v6060 = vpack.c.b16 %v4860, %v4836
    %v6061 = vpack.c.b16 %v4861, %v4837
    %v6062 = vpack.c.b16 %v4862, %v4838
    %v6063 = vpack.c.b16 %v4863, %v4839
    %v6064 = vpack.c.b16 %v4888, %v4864
    %v6065 = vpack.c.b16 %v4889, %v4865
    %v6066 = vpack.c.b16 %v4890, %v4866
    %v6067 = vpack.c.b16 %v4891, %v4867
    %v6068 = vpack.c.b16 %v4892, %v4868
    %v6069 = vpack.c.b16 %v4893, %v4869
    %v6070 = vpack.c.b16 %v4894, %v4870
    %v6071 = vpack.c.b16 %v4895, %v4871
    %v6072 = vpack.c.b16 %v4896, %v4872
    %v6073 = vpack.c.b16 %v4897, %v4873
    %v6074 = vpack.c.b16 %v4898, %v4874
    %v6075 = vpack.c.b16 %v4899, %v4875
    %v6076 = vpack.c.b16 %v4900, %v4876
    %v6077 = vpack.c.b16 %v4901, %v4877
    %v6078 = vpack.c.b16 %v4902, %v4878
    %v6079 = vpack.c.b16 %v4903, %v4879
    %v6080 = vpack.c.b16 %v4904, %v4880
    %v6081 = vpack.c.b16 %v4905, %v4881
    %v6082 = vpack.c.b16 %v4906, %v4882
    %v6083 = vpack.c.b16 %v4907, %v4883
    %v6084 = vpack.c.b16 %v4908, %v4884
    %v6085 = vpack.c.b16 %v4909, %v4885
    %v6086 = vpack.c.b16 %v4910, %v4886
    %v6087 = vpack.c.b16 %v4911, %v4887
    %v6088 = vpack.c.b16 %v4936, %v4912
    %v6089 = vpack.c.b16 %v4937, %v4913
    %v6090 = vpack.c.b16 %v4938, %v4914
    %v6091 = vpack.c.b16 %v4939, %v4915
    %v6092 = vpack.c.b16 %v4940, %v4916
    %v6093 = vpack.c.b16 %v4941, %v4917
    %v6094 = vpack.c.b16 %v4942, %v4918
    %v6095 = vpack.c.b16 %v4943, %v4919
    %v6096 = vpack.c.b16 %v4944, %v4920
    %v6097 = vpack.c.b16 %v4945, %v4921
    %v6098 = vpack.c.b16 %v4946, %v4922
    %v6099 = vpack.c.b16 %v4947, %v4923
    %v6100 = vpack.c.b16 %v4948, %v4924
    %v6101 = vpack.c.b16 %v4949, %v4925
    %v6102 = vpack.c.b16 %v4950, %v4926
    %v6103 = vpack.c.b16 %v4951, %v4927
    %v6104 = vpack.c.b16 %v4952, %v4928
    %v6105 = vpack.c.b16 %v4953, %v4929
    %v6106 = vpack.c.b16 %v4954, %v4930
    %v6107 = vpack.c.b16 %v4955, %v4931
    %v6108 = vpack.c.b16 %v4956, %v4932
    %v6109 = vpack.c.b16 %v4957, %v4933
    %v6110 = vpack.c.b16 %v4958, %v4934
    %v6111 = vpack.c.b16 %v4959, %v4935
    %7264 = vmatprep.subr.bf16.mxu0 %v4961
    %7265 = vmatpush1.bf16.msra.mxu0 %v4960
    %7266 = vmatprep.subr.bf16.mxu0 %v4985
    %7267 = vmatpush1.bf16.msra.mxu0 %v4984
    %7268 = vmatprep.subr.bf16.mxu0 %v5009
    %7269 = vmatpush1.bf16.msra.mxu0 %v5008
    %7270 = vmatprep.subr.bf16.mxu0 %v5033
    %7271 = vmatpush1.bf16.msra.mxu0 %v5032
    %7272 = vmatprep.subr.bf16.mxu0 %v5057
    %7273 = vmatpush1.bf16.msra.mxu0 %v5056
    %7274 = vmatprep.subr.bf16.mxu0 %v5081
    %7275 = vmatpush1.bf16.msra.mxu0 %v5080
    %7276 = vmatprep.subr.bf16.mxu0 %v5105
    %7277 = vmatpush1.bf16.msra.mxu0 %v5104
    %7278 = vmatprep.subr.bf16.mxu0 %v5129
    %7279 = vmatpush1.bf16.msra.mxu0 %v5128
    %7280 = vmatprep.subr.bf16.mxu0 %v5153
    %7281 = vmatpush1.bf16.msra.mxu0 %v5152
    %7282 = vmatprep.subr.bf16.mxu0 %v5177
    %7283 = vmatpush1.bf16.msra.mxu0 %v5176
    %7284 = vmatprep.subr.bf16.mxu0 %v5201
    %7285 = vmatpush1.bf16.msra.mxu0 %v5200
    %7286 = vmatprep.subr.bf16.mxu0 %v5225
    %7287 = vmatpush1.bf16.msra.mxu0 %v5224
    %7288 = vmatprep.subr.bf16.mxu0 %v5249
    %7289 = vmatpush1.bf16.msra.mxu0 %v5248
    %7290 = vmatprep.subr.bf16.mxu0 %v5273
    %7291 = vmatpush1.bf16.msra.mxu0 %v5272
    %7292 = vmatprep.subr.bf16.mxu0 %v5297
    %7293 = vmatpush1.bf16.msra.mxu0 %v5296
    %7294 = vmatprep.subr.bf16.mxu0 %v5321
    %7295 = vmatpush1.bf16.msra.mxu0 %v5320
    %7296 = vmatprep.mubr.bf16.mxu0 %v178
    %7297 = vmatmul.mubr.bf16.gmra.mrb[0].mxu0 %v177
    %v7298 = vpop.f32.mrb[0].mxu0
    %v7299 = vadd.f32 %v1387, %v7298
    %v7300 = vpop.f32.mrb[0].mxu0
    %v7301 = vadd.f32 %v1391, %v7300
    %v7302 = vpop.f32.mrb[0].mxu0
    %v7303 = vadd.f32 %v1387, %v7302
    %v7304 = vpop.f32.mrb[0].mxu0
    %v7305 = vadd.f32 %v1391, %v7304
    %7306 = vdwg.mxu0
    %7307 = vmatprep.subr.bf16.mxu0 %v5345
    %7308 = vmatpush1.bf16.msra.mxu0 %v5344
    %7309 = vmatprep.subr.bf16.mxu0 %v5369
    %7310 = vmatpush1.bf16.msra.mxu0 %v5368
    %7311 = vmatprep.subr.bf16.mxu0 %v5393
    %7312 = vmatpush1.bf16.msra.mxu0 %v5392
    %7313 = vmatprep.subr.bf16.mxu0 %v5417
    %7314 = vmatpush1.bf16.msra.mxu0 %v5416
    %7315 = vmatprep.subr.bf16.mxu0 %v5441
    %7316 = vmatpush1.bf16.msra.mxu0 %v5440
    %7317 = vmatprep.subr.bf16.mxu0 %v5465
    %7318 = vmatpush1.bf16.msra.mxu0 %v5464
    %7319 = vmatprep.subr.bf16.mxu0 %v5489
    %7320 = vmatpush1.bf16.msra.mxu0 %v5488
    %7321 = vmatprep.subr.bf16.mxu0 %v5513
    %7322 = vmatpush1.bf16.msra.mxu0 %v5512
    %7323 = vmatprep.subr.bf16.mxu0 %v5537
    %7324 = vmatpush1.bf16.msra.mxu0 %v5536
    %7325 = vmatprep.subr.bf16.mxu0 %v5561
    %7326 = vmatpush1.bf16.msra.mxu0 %v5560
    %7327 = vmatprep.subr.bf16.mxu0 %v5585
    %7328 = vmatpush1.bf16.msra.mxu0 %v5584
    %7329 = vmatprep.subr.bf16.mxu0 %v5609
    %7330 = vmatpush1.bf16.msra.mxu0 %v5608
    %7331 = vmatprep.subr.bf16.mxu0 %v5633
    %7332 = vmatpush1.bf16.msra.mxu0 %v5632
    %7333 = vmatprep.subr.bf16.mxu0 %v5657
    %7334 = vmatpush1.bf16.msra.mxu0 %v5656
    %7335 = vmatprep.subr.bf16.mxu0 %v5681
    %7336 = vmatpush1.bf16.msra.mxu0 %v5680
    %7337 = vmatprep.subr.bf16.mxu0 %v5705
    %7338 = vmatpush1.bf16.msra.mxu0 %v5704
    %7339 = vmatprep.mubr.bf16.mxu0 %v180
    %7340 = vmatmul.mubr.bf16.gmra.mrb[0].mxu0 %v179
    %v7341 = vpop.f32.mrb[0].mxu0
    %v7342 = vadd.f32 %v7299, %v7341
    %v7343 = vpop.f32.mrb[0].mxu0
    %v7344 = vadd.f32 %v7301, %v7343
    %v7345 = vpop.f32.mrb[0].mxu0
    %v7346 = vadd.f32 %v7303, %v7345
    %v7347 = vpop.f32.mrb[0].mxu0
    %v7348 = vadd.f32 %v7305, %v7347
    %7349 = vdwg.mxu0
    %7350 = vmatprep.subr.bf16.mxu0 %v5729
    %7351 = vmatpush1.bf16.msra.mxu0 %v5728
    %7352 = vmatprep.subr.bf16.mxu0 %v5753
    %7353 = vmatpush1.bf16.msra.mxu0 %v5752
    %7354 = vmatprep.subr.bf16.mxu0 %v5777
    %7355 = vmatpush1.bf16.msra.mxu0 %v5776
    %7356 = vmatprep.subr.bf16.mxu0 %v5801
    %7357 = vmatpush1.bf16.msra.mxu0 %v5800
    %7358 = vmatprep.subr.bf16.mxu0 %v5825
    %7359 = vmatpush1.bf16.msra.mxu0 %v5824
    %7360 = vmatprep.subr.bf16.mxu0 %v5849
    %7361 = vmatpush1.bf16.msra.mxu0 %v5848
    %7362 = vmatprep.subr.bf16.mxu0 %v5873
    %7363 = vmatpush1.bf16.msra.mxu0 %v5872
    %7364 = vmatprep.subr.bf16.mxu0 %v5897
    %7365 = vmatpush1.bf16.msra.mxu0 %v5896
    %7366 = vmatprep.subr.bf16.mxu0 %v5921
    %7367 = vmatpush1.bf16.msra.mxu0 %v5920
    %7368 = vmatprep.subr.bf16.mxu0 %v5945
    %7369 = vmatpush1.bf16.msra.mxu0 %v5944
    %7370 = vmatprep.subr.bf16.mxu0 %v5969
    %7371 = vmatpush1.bf16.msra.mxu0 %v5968
    %7372 = vmatprep.subr.bf16.mxu0 %v5993
    %7373 = vmatpush1.bf16.msra.mxu0 %v5992
    %7374 = vmatprep.subr.bf16.mxu0 %v6017
    %7375 = vmatpush1.bf16.msra.mxu0 %v6016
    %7376 = vmatprep.subr.bf16.mxu0 %v6041
    %7377 = vmatpush1.bf16.msra.mxu0 %v6040
    %7378 = vmatprep.subr.bf16.mxu0 %v6065
    %7379 = vmatpush1.bf16.msra.mxu0 %v6064
    %7380 = vmatprep.subr.bf16.mxu0 %v6089
    %7381 = vmatpush1.bf16.msra.mxu0 %v6088
    %7382 = vmatprep.mubr.bf16.mxu0 %v182
    %7383 = vmatmul.mubr.bf16.gmra.mrb[0].mxu0 %v181
    %v7384 = vpop.f32.mrb[0].mxu0
    %v7385 = vadd.f32 %v7342, %v7384
    %v7386 = vpop.f32.mrb[0].mxu0
    %v7387 = vadd.f32 %v7344, %v7386
    %v7388 = vpop.f32.mrb[0].mxu0
    %v7389 = vadd.f32 %v7346, %v7388
    %v7390 = vpop.f32.mrb[0].mxu0
    %v7391 = vadd.f32 %v7348, %v7390
    %7392 = vdwg.mxu0
    %7393 = vmatprep.subr.bf16.mxu0 %v4963
    %7394 = vmatpush1.bf16.msra.mxu0 %v4962
    %7395 = vmatprep.subr.bf16.mxu0 %v4987
    %7396 = vmatpush1.bf16.msra.mxu0 %v4986
    %7397 = vmatprep.subr.bf16.mxu0 %v5011
    %7398 = vmatpush1.bf16.msra.mxu0 %v5010
    %7399 = vmatprep.subr.bf16.mxu0 %v5035
    %7400 = vmatpush1.bf16.msra.mxu0 %v5034
    %7401 = vmatprep.subr.bf16.mxu0 %v5059
    %7402 = vmatpush1.bf16.msra.mxu0 %v5058
    %7403 = vmatprep.subr.bf16.mxu0 %v5083
    %7404 = vmatpush1.bf16.msra.mxu0 %v5082
    %7405 = vmatprep.subr.bf16.mxu0 %v5107
    %7406 = vmatpush1.bf16.msra.mxu0 %v5106
    %7407 = vmatprep.subr.bf16.mxu0 %v5131
    %7408 = vmatpush1.bf16.msra.mxu0 %v5130
    %7409 = vmatprep.subr.bf16.mxu0 %v5155
    %7410 = vmatpush1.bf16.msra.mxu0 %v5154
    %7411 = vmatprep.subr.bf16.mxu0 %v5179
    %7412 = vmatpush1.bf16.msra.mxu0 %v5178
    %7413 = vmatprep.subr.bf16.mxu0 %v5203
    %7414 = vmatpush1.bf16.msra.mxu0 %v5202
    %7415 = vmatprep.subr.bf16.mxu0 %v5227
    %7416 = vmatpush1.bf16.msra.mxu0 %v5226
    %7417 = vmatprep.subr.bf16.mxu0 %v5251
    %7418 = vmatpush1.bf16.msra.mxu0 %v5250
    %7419 = vmatprep.subr.bf16.mxu0 %v5275
    %7420 = vmatpush1.bf16.msra.mxu0 %v5274
    %7421 = vmatprep.subr.bf16.mxu0 %v5299
    %7422 = vmatpush1.bf16.msra.mxu0 %v5298
    %7423 = vmatprep.subr.bf16.mxu0 %v5323
    %7424 = vmatpush1.bf16.msra.mxu0 %v5322
    %7425 = vmatprep.mubr.bf16.mxu0 %v178
    %7426 = vmatmul.mubr.bf16.gmra.mrb[0].mxu0 %v177
    %v7427 = vpop.f32.mrb[0].mxu0
    %v7428 = vadd.f32 %v1395, %v7427
    %v7429 = vpop.f32.mrb[0].mxu0
    %v7430 = vadd.f32 %v1399, %v7429
    %v7431 = vpop.f32.mrb[0].mxu0
    %v7432 = vadd.f32 %v1395, %v7431
    %v7433 = vpop.f32.mrb[0].mxu0
    %v7434 = vadd.f32 %v1399, %v7433
    %7435 = vdwg.mxu0
    %7436 = vmatprep.subr.bf16.mxu0 %v5347
    %7437 = vmatpush1.bf16.msra.mxu0 %v5346
    %7438 = vmatprep.subr.bf16.mxu0 %v5371
    %7439 = vmatpush1.bf16.msra.mxu0 %v5370
    %7440 = vmatprep.subr.bf16.mxu0 %v5395
    %7441 = vmatpush1.bf16.msra.mxu0 %v5394
    %7442 = vmatprep.subr.bf16.mxu0 %v5419
    %7443 = vmatpush1.bf16.msra.mxu0 %v5418
    %7444 = vmatprep.subr.bf16.mxu0 %v5443
    %7445 = vmatpush1.bf16.msra.mxu0 %v5442
    %7446 = vmatprep.subr.bf16.mxu0 %v5467
    %7447 = vmatpush1.bf16.msra.mxu0 %v5466
    %7448 = vmatprep.subr.bf16.mxu0 %v5491
    %7449 = vmatpush1.bf16.msra.mxu0 %v5490
    %7450 = vmatprep.subr.bf16.mxu0 %v5515
    %7451 = vmatpush1.bf16.msra.mxu0 %v5514
    %7452 = vmatprep.subr.bf16.mxu0 %v5539
    %7453 = vmatpush1.bf16.msra.mxu0 %v5538
    %7454 = vmatprep.subr.bf16.mxu0 %v5563
    %7455 = vmatpush1.bf16.msra.mxu0 %v5562
    %7456 = vmatprep.subr.bf16.mxu0 %v5587
    %7457 = vmatpush1.bf16.msra.mxu0 %v5586
    %7458 = vmatprep.subr.bf16.mxu0 %v5611
    %7459 = vmatpush1.bf16.msra.mxu0 %v5610
    %7460 = vmatprep.subr.bf16.mxu0 %v5635
    %7461 = vmatpush1.bf16.msra.mxu0 %v5634
    %7462 = vmatprep.subr.bf16.mxu0 %v5659
    %7463 = vmatpush1.bf16.msra.mxu0 %v5658
    %7464 = vmatprep.subr.bf16.mxu0 %v5683
    %7465 = vmatpush1.bf16.msra.mxu0 %v5682
    %7466 = vmatprep.subr.bf16.mxu0 %v5707
    %7467 = vmatpush1.bf16.msra.mxu0 %v5706
    %7468 = vmatprep.mubr.bf16.mxu0 %v180
    %7469 = vmatmul.mubr.bf16.gmra.mrb[0].mxu0 %v179
    %v7470 = vpop.f32.mrb[0].mxu0
    %v7471 = vadd.f32 %v7428, %v7470
    %v7472 = vpop.f32.mrb[0].mxu0
    %v7473 = vadd.f32 %v7430, %v7472
    %v7474 = vpop.f32.mrb[0].mxu0
    %v7475 = vadd.f32 %v7432, %v7474
    %v7476 = vpop.f32.mrb[0].mxu0
    %v7477 = vadd.f32 %v7434, %v7476
    %7478 = vdwg.mxu0
    %7479 = vmatprep.subr.bf16.mxu0 %v5731
    %7480 = vmatpush1.bf16.msra.mxu0 %v5730
    %7481 = vmatprep.subr.bf16.mxu0 %v5755
    %7482 = vmatpush1.bf16.msra.mxu0 %v5754
    %7483 = vmatprep.subr.bf16.mxu0 %v5779
    %7484 = vmatpush1.bf16.msra.mxu0 %v5778
    %7485 = vmatprep.subr.bf16.mxu0 %v5803
    %7486 = vmatpush1.bf16.msra.mxu0 %v5802
    %7487 = vmatprep.subr.bf16.mxu0 %v5827
    %7488 = vmatpush1.bf16.msra.mxu0 %v5826
    %7489 = vmatprep.subr.bf16.mxu0 %v5851
    %7490 = vmatpush1.bf16.msra.mxu0 %v5850
    %7491 = vmatprep.subr.bf16.mxu0 %v5875
    %7492 = vmatpush1.bf16.msra.mxu0 %v5874
    %7493 = vmatprep.subr.bf16.mxu0 %v5899
    %7494 = vmatpush1.bf16.msra.mxu0 %v5898
    %7495 = vmatprep.subr.bf16.mxu0 %v5923
    %7496 = vmatpush1.bf16.msra.mxu0 %v5922
    %7497 = vmatprep.subr.bf16.mxu0 %v5947
    %7498 = vmatpush1.bf16.msra.mxu0 %v5946
    %7499 = vmatprep.subr.bf16.mxu0 %v5971
    %7500 = vmatpush1.bf16.msra.mxu0 %v5970
    %7501 = vmatprep.subr.bf16.mxu0 %v5995
    %7502 = vmatpush1.bf16.msra.mxu0 %v5994
    %7503 = vmatprep.subr.bf16.mxu0 %v6019
    %7504 = vmatpush1.bf16.msra.mxu0 %v6018
    %7505 = vmatprep.subr.bf16.mxu0 %v6043
    %7506 = vmatpush1.bf16.msra.mxu0 %v6042
    %7507 = vmatprep.subr.bf16.mxu0 %v6067
    %7508 = vmatpush1.bf16.msra.mxu0 %v6066
    %7509 = vmatprep.subr.bf16.mxu0 %v6091
    %7510 = vmatpush1.bf16.msra.mxu0 %v6090
    %7511 = vmatprep.mubr.bf16.mxu0 %v182
    %7512 = vmatmul.mubr.bf16.gmra.mrb[0].mxu0 %v181
    %v7513 = vpop.f32.mrb[0].mxu0
    %v7514 = vadd.f32 %v7471, %v7513
    %v7515 = vpop.f32.mrb[0].mxu0
    %v7516 = vadd.f32 %v7473, %v7515
    %v7517 = vpop.f32.mrb[0].mxu0
    %v7518 = vadd.f32 %v7475, %v7517
    %v7519 = vpop.f32.mrb[0].mxu0
    %v7520 = vadd.f32 %v7477, %v7519
    %7521 = vdwg.mxu0
    %7522 = vmatprep.subr.bf16.mxu0 %v4965
    %7523 = vmatpush1.bf16.msra.mxu0 %v4964
    %7524 = vmatprep.subr.bf16.mxu0 %v4989
    %7525 = vmatpush1.bf16.msra.mxu0 %v4988
    %7526 = vmatprep.subr.bf16.mxu0 %v5013
    %7527 = vmatpush1.bf16.msra.mxu0 %v5012
    %7528 = vmatprep.subr.bf16.mxu0 %v5037
    %7529 = vmatpush1.bf16.msra.mxu0 %v5036
    %7530 = vmatprep.subr.bf16.mxu0 %v5061
    %7531 = vmatpush1.bf16.msra.mxu0 %v5060
    %7532 = vmatprep.subr.bf16.mxu0 %v5085
    %7533 = vmatpush1.bf16.msra.mxu0 %v5084
    %7534 = vmatprep.subr.bf16.mxu0 %v5109
    %7535 = vmatpush1.bf16.msra.mxu0 %v5108
    %7536 = vmatprep.subr.bf16.mxu0 %v5133
    %7537 = vmatpush1.bf16.msra.mxu0 %v5132
    %7538 = vmatprep.subr.bf16.mxu0 %v5157
    %7539 = vmatpush1.bf16.msra.mxu0 %v5156
    %7540 = vmatprep.subr.bf16.mxu0 %v5181
    %7541 = vmatpush1.bf16.msra.mxu0 %v5180
    %7542 = vmatprep.subr.bf16.mxu0 %v5205
    %7543 = vmatpush1.bf16.msra.mxu0 %v5204
    %7544 = vmatprep.subr.bf16.mxu0 %v5229
    %7545 = vmatpush1.bf16.msra.mxu0 %v5228
    %7546 = vmatprep.subr.bf16.mxu0 %v5253
    %7547 = vmatpush1.bf16.msra.mxu0 %v5252
    %7548 = vmatprep.subr.bf16.mxu0 %v5277
    %7549 = vmatpush1.bf16.msra.mxu0 %v5276
    %7550 = vmatprep.subr.bf16.mxu0 %v5301
    %7551 = vmatpush1.bf16.msra.mxu0 %v5300
    %7552 = vmatprep.subr.bf16.mxu0 %v5325
    %7553 = vmatpush1.bf16.msra.mxu0 %v5324
    %7554 = vmatprep.mubr.bf16.mxu0 %v178
    %7555 = vmatmul.mubr.bf16.gmra.mrb[0].mxu0 %v177
    %v7556 = vpop.f32.mrb[0].mxu0
    %v7557 = vadd.f32 %v1403, %v7556
    %v7558 = vpop.f32.mrb[0].mxu0
    %v7559 = vadd.f32 %v1407, %v7558
    %v7560 = vpop.f32.mrb[0].mxu0
    %v7561 = vadd.f32 %v1403, %v7560
    %v7562 = vpop.f32.mrb[0].mxu0
    %v7563 = vadd.f32 %v1407, %v7562
    %7564 = vdwg.mxu0
    %7565 = vmatprep.subr.bf16.mxu0 %v5349
    %7566 = vmatpush1.bf16.msra.mxu0 %v5348
    %7567 = vmatprep.subr.bf16.mxu0 %v5373
    %7568 = vmatpush1.bf16.msra.mxu0 %v5372
    %7569 = vmatprep.subr.bf16.mxu0 %v5397
    %7570 = vmatpush1.bf16.msra.mxu0 %v5396
    %7571 = vmatprep.subr.bf16.mxu0 %v5421
    %7572 = vmatpush1.bf16.msra.mxu0 %v5420
    %7573 = vmatprep.subr.bf16.mxu0 %v5445
    %7574 = vmatpush1.bf16.msra.mxu0 %v5444
    %7575 = vmatprep.subr.bf16.mxu0 %v5469
    %7576 = vmatpush1.bf16.msra.mxu0 %v5468
    %7577 = vmatprep.subr.bf16.mxu0 %v5493
    %7578 = vmatpush1.bf16.msra.mxu0 %v5492
    %7579 = vmatprep.subr.bf16.mxu0 %v5517
    %7580 = vmatpush1.bf16.msra.mxu0 %v5516
    %7581 = vmatprep.subr.bf16.mxu0 %v5541
    %7582 = vmatpush1.bf16.msra.mxu0 %v5540
    %7583 = vmatprep.subr.bf16.mxu0 %v5565
    %7584 = vmatpush1.bf16.msra.mxu0 %v5564
    %7585 = vmatprep.subr.bf16.mxu0 %v5589
    %7586 = vmatpush1.bf16.msra.mxu0 %v5588
    %7587 = vmatprep.subr.bf16.mxu0 %v5613
    %7588 = vmatpush1.bf16.msra.mxu0 %v5612
    %7589 = vmatprep.subr.bf16.mxu0 %v5637
    %7590 = vmatpush1.bf16.msra.mxu0 %v5636
    %7591 = vmatprep.subr.bf16.mxu0 %v5661
    %7592 = vmatpush1.bf16.msra.mxu0 %v5660
    %7593 = vmatprep.subr.bf16.mxu0 %v5685
    %7594 = vmatpush1.bf16.msra.mxu0 %v5684
    %7595 = vmatprep.subr.bf16.mxu0 %v5709
    %7596 = vmatpush1.bf16.msra.mxu0 %v5708
    %7597 = vmatprep.mubr.bf16.mxu0 %v180
    %7598 = vmatmul.mubr.bf16.gmra.mrb[0].mxu0 %v179
    %v7599 = vpop.f32.mrb[0].mxu0
    %v7600 = vadd.f32 %v7557, %v7599
    %v7601 = vpop.f32.mrb[0].mxu0
    %v7602 = vadd.f32 %v7559, %v7601
    %v7603 = vpop.f32.mrb[0].mxu0
    %v7604 = vadd.f32 %v7561, %v7603
    %v7605 = vpop.f32.mrb[0].mxu0
    %v7606 = vadd.f32 %v7563, %v7605
    %7607 = vdwg.mxu0
    %7608 = vmatprep.subr.bf16.mxu0 %v5733
    %7609 = vmatpush1.bf16.msra.mxu0 %v5732
    %7610 = vmatprep.subr.bf16.mxu0 %v5757
    %7611 = vmatpush1.bf16.msra.mxu0 %v5756
    %7612 = vmatprep.subr.bf16.mxu0 %v5781
    %7613 = vmatpush1.bf16.msra.mxu0 %v5780
    %7614 = vmatprep.subr.bf16.mxu0 %v5805
    %7615 = vmatpush1.bf16.msra.mxu0 %v5804
    %7616 = vmatprep.subr.bf16.mxu0 %v5829
    %7617 = vmatpush1.bf16.msra.mxu0 %v5828
    %7618 = vmatprep.subr.bf16.mxu0 %v5853
    %7619 = vmatpush1.bf16.msra.mxu0 %v5852
    %7620 = vmatprep.subr.bf16.mxu0 %v5877
    %7621 = vmatpush1.bf16.msra.mxu0 %v5876
    %7622 = vmatprep.subr.bf16.mxu0 %v5901
    %7623 = vmatpush1.bf16.msra.mxu0 %v5900
    %7624 = vmatprep.subr.bf16.mxu0 %v5925
    %7625 = vmatpush1.bf16.msra.mxu0 %v5924
    %7626 = vmatprep.subr.bf16.mxu0 %v5949
    %7627 = vmatpush1.bf16.msra.mxu0 %v5948
    %7628 = vmatprep.subr.bf16.mxu0 %v5973
    %7629 = vmatpush1.bf16.msra.mxu0 %v5972
    %7630 = vmatprep.subr.bf16.mxu0 %v5997
    %7631 = vmatpush1.bf16.msra.mxu0 %v5996
    %7632 = vmatprep.subr.bf16.mxu0 %v6021
    %7633 = vmatpush1.bf16.msra.mxu0 %v6020
    %7634 = vmatprep.subr.bf16.mxu0 %v6045
    %7635 = vmatpush1.bf16.msra.mxu0 %v6044
    %7636 = vmatprep.subr.bf16.mxu0 %v6069
    %7637 = vmatpush1.bf16.msra.mxu0 %v6068
    %7638 = vmatprep.subr.bf16.mxu0 %v6093
    %7639 = vmatpush1.bf16.msra.mxu0 %v6092
    %7640 = vmatprep.mubr.bf16.mxu0 %v182
    %7641 = vmatmul.mubr.bf16.gmra.mrb[0].mxu0 %v181
    %v7642 = vpop.f32.mrb[0].mxu0
    %v7643 = vadd.f32 %v7600, %v7642
    %v7644 = vpop.f32.mrb[0].mxu0
    %v7645 = vadd.f32 %v7602, %v7644
    %v7646 = vpop.f32.mrb[0].mxu0
    %v7647 = vadd.f32 %v7604, %v7646
    %v7648 = vpop.f32.mrb[0].mxu0
    %v7649 = vadd.f32 %v7606, %v7648
    %7650 = vdwg.mxu0
    %7651 = vmatprep.subr.bf16.mxu0 %v4967
    %7652 = vmatpush1.bf16.msra.mxu0 %v4966
    %7653 = vmatprep.subr.bf16.mxu0 %v4991
    %7654 = vmatpush1.bf16.msra.mxu0 %v4990
    %7655 = vmatprep.subr.bf16.mxu0 %v5015
    %7656 = vmatpush1.bf16.msra.mxu0 %v5014
    %7657 = vmatprep.subr.bf16.mxu0 %v5039
    %7658 = vmatpush1.bf16.msra.mxu0 %v5038
    %7659 = vmatprep.subr.bf16.mxu0 %v5063
    %7660 = vmatpush1.bf16.msra.mxu0 %v5062
    %7661 = vmatprep.subr.bf16.mxu0 %v5087
    %7662 = vmatpush1.bf16.msra.mxu0 %v5086
    %7663 = vmatprep.subr.bf16.mxu0 %v5111
    %7664 = vmatpush1.bf16.msra.mxu0 %v5110
    %7665 = vmatprep.subr.bf16.mxu0 %v5135
    %7666 = vmatpush1.bf16.msra.mxu0 %v5134
    %7667 = vmatprep.subr.bf16.mxu0 %v5159
    %7668 = vmatpush1.bf16.msra.mxu0 %v5158
    %7669 = vmatprep.subr.bf16.mxu0 %v5183
    %7670 = vmatpush1.bf16.msra.mxu0 %v5182
    %7671 = vmatprep.subr.bf16.mxu0 %v5207
    %7672 = vmatpush1.bf16.msra.mxu0 %v5206
    %7673 = vmatprep.subr.bf16.mxu0 %v5231
    %7674 = vmatpush1.bf16.msra.mxu0 %v5230
    %7675 = vmatprep.subr.bf16.mxu0 %v5255
    %7676 = vmatpush1.bf16.msra.mxu0 %v5254
    %7677 = vmatprep.subr.bf16.mxu0 %v5279
    %7678 = vmatpush1.bf16.msra.mxu0 %v5278
    %7679 = vmatprep.subr.bf16.mxu0 %v5303
    %7680 = vmatpush1.bf16.msra.mxu0 %v5302
    %7681 = vmatprep.subr.bf16.mxu0 %v5327
    %7682 = vmatpush1.bf16.msra.mxu0 %v5326
    %7683 = vmatprep.mubr.bf16.mxu0 %v178
    %7684 = vmatmul.mubr.bf16.gmra.mrb[0].mxu0 %v177
    %v7685 = vpop.f32.mrb[0].mxu0
    %v7686 = vadd.f32 %v1411, %v7685
    %v7687 = vpop.f32.mrb[0].mxu0
    %v7688 = vadd.f32 %v1415, %v7687
    %v7689 = vpop.f32.mrb[0].mxu0
    %v7690 = vadd.f32 %v1411, %v7689
    %v7691 = vpop.f32.mrb[0].mxu0
    %v7692 = vadd.f32 %v1415, %v7691
    %7693 = vdwg.mxu0
    %7694 = vmatprep.subr.bf16.mxu0 %v5351
    %7695 = vmatpush1.bf16.msra.mxu0 %v5350
    %7696 = vmatprep.subr.bf16.mxu0 %v5375
    %7697 = vmatpush1.bf16.msra.mxu0 %v5374
    %7698 = vmatprep.subr.bf16.mxu0 %v5399
    %7699 = vmatpush1.bf16.msra.mxu0 %v5398
    %7700 = vmatprep.subr.bf16.mxu0 %v5423
    %7701 = vmatpush1.bf16.msra.mxu0 %v5422
    %7702 = vmatprep.subr.bf16.mxu0 %v5447
    %7703 = vmatpush1.bf16.msra.mxu0 %v5446
    %7704 = vmatprep.subr.bf16.mxu0 %v5471
    %7705 = vmatpush1.bf16.msra.mxu0 %v5470
    %7706 = vmatprep.subr.bf16.mxu0 %v5495
    %7707 = vmatpush1.bf16.msra.mxu0 %v5494
    %7708 = vmatprep.subr.bf16.mxu0 %v5519
    %7709 = vmatpush1.bf16.msra.mxu0 %v5518
    %7710 = vmatprep.subr.bf16.mxu0 %v5543
    %7711 = vmatpush1.bf16.msra.mxu0 %v5542
    %7712 = vmatprep.subr.bf16.mxu0 %v5567
    %7713 = vmatpush1.bf16.msra.mxu0 %v5566
    %7714 = vmatprep.subr.bf16.mxu0 %v5591
    %7715 = vmatpush1.bf16.msra.mxu0 %v5590
    %7716 = vmatprep.subr.bf16.mxu0 %v5615
    %7717 = vmatpush1.bf16.msra.mxu0 %v5614
    %7718 = vmatprep.subr.bf16.mxu0 %v5639
    %7719 = vmatpush1.bf16.msra.mxu0 %v5638
    %7720 = vmatprep.subr.bf16.mxu0 %v5663
    %7721 = vmatpush1.bf16.msra.mxu0 %v5662
    %7722 = vmatprep.subr.bf16.mxu0 %v5687
    %7723 = vmatpush1.bf16.msra.mxu0 %v5686
    %7724 = vmatprep.subr.bf16.mxu0 %v5711
    %7725 = vmatpush1.bf16.msra.mxu0 %v5710
    %7726 = vmatprep.mubr.bf16.mxu0 %v180
    %7727 = vmatmul.mubr.bf16.gmra.mrb[0].mxu0 %v179
    %v7728 = vpop.f32.mrb[0].mxu0
    %v7729 = vadd.f32 %v7686, %v7728
    %v7730 = vpop.f32.mrb[0].mxu0
    %v7731 = vadd.f32 %v7688, %v7730
    %v7732 = vpop.f32.mrb[0].mxu0
    %v7733 = vadd.f32 %v7690, %v7732
    %v7734 = vpop.f32.mrb[0].mxu0
    %v7735 = vadd.f32 %v7692, %v7734
    %7736 = vdwg.mxu0
    %7737 = vmatprep.subr.bf16.mxu0 %v5735
    %7738 = vmatpush1.bf16.msra.mxu0 %v5734
    %7739 = vmatprep.subr.bf16.mxu0 %v5759
    %7740 = vmatpush1.bf16.msra.mxu0 %v5758
    %7741 = vmatprep.subr.bf16.mxu0 %v5783
    %7742 = vmatpush1.bf16.msra.mxu0 %v5782
    %7743 = vmatprep.subr.bf16.mxu0 %v5807
    %7744 = vmatpush1.bf16.msra.mxu0 %v5806
    %7745 = vmatprep.subr.bf16.mxu0 %v5831
    %7746 = vmatpush1.bf16.msra.mxu0 %v5830
    %7747 = vmatprep.subr.bf16.mxu0 %v5855
    %7748 = vmatpush1.bf16.msra.mxu0 %v5854
    %7749 = vmatprep.subr.bf16.mxu0 %v5879
    %7750 = vmatpush1.bf16.msra.mxu0 %v5878
    %7751 = vmatprep.subr.bf16.mxu0 %v5903
    %7752 = vmatpush1.bf16.msra.mxu0 %v5902
    %7753 = vmatprep.subr.bf16.mxu0 %v5927
    %7754 = vmatpush1.bf16.msra.mxu0 %v5926
    %7755 = vmatprep.subr.bf16.mxu0 %v5951
    %7756 = vmatpush1.bf16.msra.mxu0 %v5950
    %7757 = vmatprep.subr.bf16.mxu0 %v5975
    %7758 = vmatpush1.bf16.msra.mxu0 %v5974
    %7759 = vmatprep.subr.bf16.mxu0 %v5999
    %7760 = vmatpush1.bf16.msra.mxu0 %v5998
    %7761 = vmatprep.subr.bf16.mxu0 %v6023
    %7762 = vmatpush1.bf16.msra.mxu0 %v6022
    %7763 = vmatprep.subr.bf16.mxu0 %v6047
    %7764 = vmatpush1.bf16.msra.mxu0 %v6046
    %7765 = vmatprep.subr.bf16.mxu0 %v6071
    %7766 = vmatpush1.bf16.msra.mxu0 %v6070
    %7767 = vmatprep.subr.bf16.mxu0 %v6095
    %7768 = vmatpush1.bf16.msra.mxu0 %v6094
    %7769 = vmatprep.mubr.bf16.mxu0 %v182
    %7770 = vmatmul.mubr.bf16.gmra.mrb[0].mxu0 %v181
    %v7771 = vpop.f32.mrb[0].mxu0
    %v7772 = vadd.f32 %v7729, %v7771
    %v7773 = vpop.f32.mrb[0].mxu0
    %v7774 = vadd.f32 %v7731, %v7773
    %v7775 = vpop.f32.mrb[0].mxu0
    %v7776 = vadd.f32 %v7733, %v7775
    %v7777 = vpop.f32.mrb[0].mxu0
    %v7778 = vadd.f32 %v7735, %v7777
    %7779 = vdwg.mxu0
    %7780 = vmatprep.subr.bf16.mxu0 %v4969
    %7781 = vmatpush1.bf16.msra.mxu0 %v4968
    %7782 = vmatprep.subr.bf16.mxu0 %v4993
    %7783 = vmatpush1.bf16.msra.mxu0 %v4992
    %7784 = vmatprep.subr.bf16.mxu0 %v5017
    %7785 = vmatpush1.bf16.msra.mxu0 %v5016
    %7786 = vmatprep.subr.bf16.mxu0 %v5041
    %7787 = vmatpush1.bf16.msra.mxu0 %v5040
    %7788 = vmatprep.subr.bf16.mxu0 %v5065
    %7789 = vmatpush1.bf16.msra.mxu0 %v5064
    %7790 = vmatprep.subr.bf16.mxu0 %v5089
    %7791 = vmatpush1.bf16.msra.mxu0 %v5088
    %7792 = vmatprep.subr.bf16.mxu0 %v5113
    %7793 = vmatpush1.bf16.msra.mxu0 %v5112
    %7794 = vmatprep.subr.bf16.mxu0 %v5137
    %7795 = vmatpush1.bf16.msra.mxu0 %v5136
    %7796 = vmatprep.subr.bf16.mxu0 %v5161
    %7797 = vmatpush1.bf16.msra.mxu0 %v5160
    %7798 = vmatprep.subr.bf16.mxu0 %v5185
    %7799 = vmatpush1.bf16.msra.mxu0 %v5184
    %7800 = vmatprep.subr.bf16.mxu0 %v5209
    %7801 = vmatpush1.bf16.msra.mxu0 %v5208
    %7802 = vmatprep.subr.bf16.mxu0 %v5233
    %7803 = vmatpush1.bf16.msra.mxu0 %v5232
    %7804 = vmatprep.subr.bf16.mxu0 %v5257
    %7805 = vmatpush1.bf16.msra.mxu0 %v5256
    %7806 = vmatprep.subr.bf16.mxu0 %v5281
    %7807 = vmatpush1.bf16.msra.mxu0 %v5280
    %7808 = vmatprep.subr.bf16.mxu0 %v5305
    %7809 = vmatpush1.bf16.msra.mxu0 %v5304
    %7810 = vmatprep.subr.bf16.mxu0 %v5329
    %7811 = vmatpush1.bf16.msra.mxu0 %v5328
    %7812 = vmatprep.mubr.bf16.mxu0 %v178
    %7813 = vmatmul.mubr.bf16.gmra.mrb[0].mxu0 %v177
    %v7814 = vpop.f32.mrb[0].mxu0
    %v7815 = vadd.f32 %v1419, %v7814
    %v7816 = vpop.f32.mrb[0].mxu0
    %v7817 = vadd.f32 %v1423, %v7816
    %v7818 = vpop.f32.mrb[0].mxu0
    %v7819 = vadd.f32 %v1419, %v7818
    %v7820 = vpop.f32.mrb[0].mxu0
    %v7821 = vadd.f32 %v1423, %v7820
    %7822 = vdwg.mxu0
    %7823 = vmatprep.subr.bf16.mxu0 %v5353
    %7824 = vmatpush1.bf16.msra.mxu0 %v5352
    %7825 = vmatprep.subr.bf16.mxu0 %v5377
    %7826 = vmatpush1.bf16.msra.mxu0 %v5376
    %7827 = vmatprep.subr.bf16.mxu0 %v5401
    %7828 = vmatpush1.bf16.msra.mxu0 %v5400
    %7829 = vmatprep.subr.bf16.mxu0 %v5425
    %7830 = vmatpush1.bf16.msra.mxu0 %v5424
    %7831 = vmatprep.subr.bf16.mxu0 %v5449
    %7832 = vmatpush1.bf16.msra.mxu0 %v5448
    %7833 = vmatprep.subr.bf16.mxu0 %v5473
    %7834 = vmatpush1.bf16.msra.mxu0 %v5472
    %7835 = vmatprep.subr.bf16.mxu0 %v5497
    %7836 = vmatpush1.bf16.msra.mxu0 %v5496
    %7837 = vmatprep.subr.bf16.mxu0 %v5521
    %7838 = vmatpush1.bf16.msra.mxu0 %v5520
    %7839 = vmatprep.subr.bf16.mxu0 %v5545
    %7840 = vmatpush1.bf16.msra.mxu0 %v5544
    %7841 = vmatprep.subr.bf16.mxu0 %v5569
    %7842 = vmatpush1.bf16.msra.mxu0 %v5568
    %7843 = vmatprep.subr.bf16.mxu0 %v5593
    %7844 = vmatpush1.bf16.msra.mxu0 %v5592
    %7845 = vmatprep.subr.bf16.mxu0 %v5617
    %7846 = vmatpush1.bf16.msra.mxu0 %v5616
    %7847 = vmatprep.subr.bf16.mxu0 %v5641
    %7848 = vmatpush1.bf16.msra.mxu0 %v5640
    %7849 = vmatprep.subr.bf16.mxu0 %v5665
    %7850 = vmatpush1.bf16.msra.mxu0 %v5664
    %7851 = vmatprep.subr.bf16.mxu0 %v5689
    %7852 = vmatpush1.bf16.msra.mxu0 %v5688
    %7853 = vmatprep.subr.bf16.mxu0 %v5713
    %7854 = vmatpush1.bf16.msra.mxu0 %v5712
    %7855 = vmatprep.mubr.bf16.mxu0 %v180
    %7856 = vmatmul.mubr.bf16.gmra.mrb[0].mxu0 %v179
    %v7857 = vpop.f32.mrb[0].mxu0
    %v7858 = vadd.f32 %v7815, %v7857
    %v7859 = vpop.f32.mrb[0].mxu0
    %v7860 = vadd.f32 %v7817, %v7859
    %v7861 = vpop.f32.mrb[0].mxu0
    %v7862 = vadd.f32 %v7819, %v7861
    %v7863 = vpop.f32.mrb[0].mxu0
    %v7864 = vadd.f32 %v7821, %v7863
    %7865 = vdwg.mxu0
    %7866 = vmatprep.subr.bf16.mxu0 %v5737
    %7867 = vmatpush1.bf16.msra.mxu0 %v5736
    %7868 = vmatprep.subr.bf16.mxu0 %v5761
    %7869 = vmatpush1.bf16.msra.mxu0 %v5760
    %7870 = vmatprep.subr.bf16.mxu0 %v5785
    %7871 = vmatpush1.bf16.msra.mxu0 %v5784
    %7872 = vmatprep.subr.bf16.mxu0 %v5809
    %7873 = vmatpush1.bf16.msra.mxu0 %v5808
    %7874 = vmatprep.subr.bf16.mxu0 %v5833
    %7875 = vmatpush1.bf16.msra.mxu0 %v5832
    %7876 = vmatprep.subr.bf16.mxu0 %v5857
    %7877 = vmatpush1.bf16.msra.mxu0 %v5856
    %7878 = vmatprep.subr.bf16.mxu0 %v5881
    %7879 = vmatpush1.bf16.msra.mxu0 %v5880
    %7880 = vmatprep.subr.bf16.mxu0 %v5905
    %7881 = vmatpush1.bf16.msra.mxu0 %v5904
    %7882 = vmatprep.subr.bf16.mxu0 %v5929
    %7883 = vmatpush1.bf16.msra.mxu0 %v5928
    %7884 = vmatprep.subr.bf16.mxu0 %v5953
    %7885 = vmatpush1.bf16.msra.mxu0 %v5952
    %7886 = vmatprep.subr.bf16.mxu0 %v5977
    %7887 = vmatpush1.bf16.msra.mxu0 %v5976
    %7888 = vmatprep.subr.bf16.mxu0 %v6001
    %7889 = vmatpush1.bf16.msra.mxu0 %v6000
    %7890 = vmatprep.subr.bf16.mxu0 %v6025
    %7891 = vmatpush1.bf16.msra.mxu0 %v6024
    %7892 = vmatprep.subr.bf16.mxu0 %v6049
    %7893 = vmatpush1.bf16.msra.mxu0 %v6048
    %7894 = vmatprep.subr.bf16.mxu0 %v6073
    %7895 = vmatpush1.bf16.msra.mxu0 %v6072
    %7896 = vmatprep.subr.bf16.mxu0 %v6097
    %7897 = vmatpush1.bf16.msra.mxu0 %v6096
    %7898 = vmatprep.mubr.bf16.mxu0 %v182
    %7899 = vmatmul.mubr.bf16.gmra.mrb[0].mxu0 %v181
    %v7900 = vpop.f32.mrb[0].mxu0
    %v7901 = vadd.f32 %v7858, %v7900
    %v7902 = vpop.f32.mrb[0].mxu0
    %v7903 = vadd.f32 %v7860, %v7902
    %v7904 = vpop.f32.mrb[0].mxu0
    %v7905 = vadd.f32 %v7862, %v7904
    %v7906 = vpop.f32.mrb[0].mxu0
    %v7907 = vadd.f32 %v7864, %v7906
    %7908 = vdwg.mxu0
    %7909 = vmatprep.subr.bf16.mxu0 %v4971
    %7910 = vmatpush1.bf16.msra.mxu0 %v4970
    %7911 = vmatprep.subr.bf16.mxu0 %v4995
    %7912 = vmatpush1.bf16.msra.mxu0 %v4994
    %7913 = vmatprep.subr.bf16.mxu0 %v5019
    %7914 = vmatpush1.bf16.msra.mxu0 %v5018
    %7915 = vmatprep.subr.bf16.mxu0 %v5043
    %7916 = vmatpush1.bf16.msra.mxu0 %v5042
    %7917 = vmatprep.subr.bf16.mxu0 %v5067
    %7918 = vmatpush1.bf16.msra.mxu0 %v5066
    %7919 = vmatprep.subr.bf16.mxu0 %v5091
    %7920 = vmatpush1.bf16.msra.mxu0 %v5090
    %7921 = vmatprep.subr.bf16.mxu0 %v5115
    %7922 = vmatpush1.bf16.msra.mxu0 %v5114
    %7923 = vmatprep.subr.bf16.mxu0 %v5139
    %7924 = vmatpush1.bf16.msra.mxu0 %v5138
    %7925 = vmatprep.subr.bf16.mxu0 %v5163
    %7926 = vmatpush1.bf16.msra.mxu0 %v5162
    %7927 = vmatprep.subr.bf16.mxu0 %v5187
    %7928 = vmatpush1.bf16.msra.mxu0 %v5186
    %7929 = vmatprep.subr.bf16.mxu0 %v5211
    %7930 = vmatpush1.bf16.msra.mxu0 %v5210
    %7931 = vmatprep.subr.bf16.mxu0 %v5235
    %7932 = vmatpush1.bf16.msra.mxu0 %v5234
    %7933 = vmatprep.subr.bf16.mxu0 %v5259
    %7934 = vmatpush1.bf16.msra.mxu0 %v5258
    %7935 = vmatprep.subr.bf16.mxu0 %v5283
    %7936 = vmatpush1.bf16.msra.mxu0 %v5282
    %7937 = vmatprep.subr.bf16.mxu0 %v5307
    %7938 = vmatpush1.bf16.msra.mxu0 %v5306
    %7939 = vmatprep.subr.bf16.mxu0 %v5331
    %7940 = vmatpush1.bf16.msra.mxu0 %v5330
    %7941 = vmatprep.mubr.bf16.mxu0 %v178
    %7942 = vmatmul.mubr.bf16.gmra.mrb[0].mxu0 %v177
    %v7943 = vpop.f32.mrb[0].mxu0
    %v7944 = vadd.f32 %v1427, %v7943
    %v7945 = vpop.f32.mrb[0].mxu0
    %v7946 = vadd.f32 %v1431, %v7945
    %v7947 = vpop.f32.mrb[0].mxu0
    %v7948 = vadd.f32 %v1427, %v7947
    %v7949 = vpop.f32.mrb[0].mxu0
    %v7950 = vadd.f32 %v1431, %v7949
    %7951 = vdwg.mxu0
    %7952 = vmatprep.subr.bf16.mxu0 %v5355
    %7953 = vmatpush1.bf16.msra.mxu0 %v5354
    %7954 = vmatprep.subr.bf16.mxu0 %v5379
    %7955 = vmatpush1.bf16.msra.mxu0 %v5378
    %7956 = vmatprep.subr.bf16.mxu0 %v5403
    %7957 = vmatpush1.bf16.msra.mxu0 %v5402
    %7958 = vmatprep.subr.bf16.mxu0 %v5427
    %7959 = vmatpush1.bf16.msra.mxu0 %v5426
    %7960 = vmatprep.subr.bf16.mxu0 %v5451
    %7961 = vmatpush1.bf16.msra.mxu0 %v5450
    %7962 = vmatprep.subr.bf16.mxu0 %v5475
    %7963 = vmatpush1.bf16.msra.mxu0 %v5474
    %7964 = vmatprep.subr.bf16.mxu0 %v5499
    %7965 = vmatpush1.bf16.msra.mxu0 %v5498
    %7966 = vmatprep.subr.bf16.mxu0 %v5523
    %7967 = vmatpush1.bf16.msra.mxu0 %v5522
    %7968 = vmatprep.subr.bf16.mxu0 %v5547
    %7969 = vmatpush1.bf16.msra.mxu0 %v5546
    %7970 = vmatprep.subr.bf16.mxu0 %v5571
    %7971 = vmatpush1.bf16.msra.mxu0 %v5570
    %7972 = vmatprep.subr.bf16.mxu0 %v5595
    %7973 = vmatpush1.bf16.msra.mxu0 %v5594
    %7974 = vmatprep.subr.bf16.mxu0 %v5619
    %7975 = vmatpush1.bf16.msra.mxu0 %v5618
    %7976 = vmatprep.subr.bf16.mxu0 %v5643
    %7977 = vmatpush1.bf16.msra.mxu0 %v5642
    %7978 = vmatprep.subr.bf16.mxu0 %v5667
    %7979 = vmatpush1.bf16.msra.mxu0 %v5666
    %7980 = vmatprep.subr.bf16.mxu0 %v5691
    %7981 = vmatpush1.bf16.msra.mxu0 %v5690
    %7982 = vmatprep.subr.bf16.mxu0 %v5715
    %7983 = vmatpush1.bf16.msra.mxu0 %v5714
    %7984 = vmatprep.mubr.bf16.mxu0 %v180
    %7985 = vmatmul.mubr.bf16.gmra.mrb[0].mxu0 %v179
    %v7986 = vpop.f32.mrb[0].mxu0
    %v7987 = vadd.f32 %v7944, %v7986
    %v7988 = vpop.f32.mrb[0].mxu0
    %v7989 = vadd.f32 %v7946, %v7988
    %v7990 = vpop.f32.mrb[0].mxu0
    %v7991 = vadd.f32 %v7948, %v7990
    %v7992 = vpop.f32.mrb[0].mxu0
    %v7993 = vadd.f32 %v7950, %v7992
    %7994 = vdwg.mxu0
    %7995 = vmatprep.subr.bf16.mxu0 %v5739
    %7996 = vmatpush1.bf16.msra.mxu0 %v5738
    %7997 = vmatprep.subr.bf16.mxu0 %v5763
    %7998 = vmatpush1.bf16.msra.mxu0 %v5762
    %7999 = vmatprep.subr.bf16.mxu0 %v5787
    %8000 = vmatpush1.bf16.msra.mxu0 %v5786
    %8001 = vmatprep.subr.bf16.mxu0 %v5811
    %8002 = vmatpush1.bf16.msra.mxu0 %v5810
    %8003 = vmatprep.subr.bf16.mxu0 %v5835
    %8004 = vmatpush1.bf16.msra.mxu0 %v5834
    %8005 = vmatprep.subr.bf16.mxu0 %v5859
    %8006 = vmatpush1.bf16.msra.mxu0 %v5858
    %8007 = vmatprep.subr.bf16.mxu0 %v5883
    %8008 = vmatpush1.bf16.msra.mxu0 %v5882
    %8009 = vmatprep.subr.bf16.mxu0 %v5907
    %8010 = vmatpush1.bf16.msra.mxu0 %v5906
    %8011 = vmatprep.subr.bf16.mxu0 %v5931
    %8012 = vmatpush1.bf16.msra.mxu0 %v5930
    %8013 = vmatprep.subr.bf16.mxu0 %v5955
    %8014 = vmatpush1.bf16.msra.mxu0 %v5954
    %8015 = vmatprep.subr.bf16.mxu0 %v5979
    %8016 = vmatpush1.bf16.msra.mxu0 %v5978
    %8017 = vmatprep.subr.bf16.mxu0 %v6003
    %8018 = vmatpush1.bf16.msra.mxu0 %v6002
    %8019 = vmatprep.subr.bf16.mxu0 %v6027
    %8020 = vmatpush1.bf16.msra.mxu0 %v6026
    %8021 = vmatprep.subr.bf16.mxu0 %v6051
    %8022 = vmatpush1.bf16.msra.mxu0 %v6050
    %8023 = vmatprep.subr.bf16.mxu0 %v6075
    %8024 = vmatpush1.bf16.msra.mxu0 %v6074
    %8025 = vmatprep.subr.bf16.mxu0 %v6099
    %8026 = vmatpush1.bf16.msra.mxu0 %v6098
    %8027 = vmatprep.mubr.bf16.mxu0 %v182
    %8028 = vmatmul.mubr.bf16.gmra.mrb[0].mxu0 %v181
    %v8029 = vpop.f32.mrb[0].mxu0
    %v8030 = vadd.f32 %v7987, %v8029
    %v8031 = vpop.f32.mrb[0].mxu0
    %v8032 = vadd.f32 %v7989, %v8031
    %v8033 = vpop.f32.mrb[0].mxu0
    %v8034 = vadd.f32 %v7991, %v8033
    %v8035 = vpop.f32.mrb[0].mxu0
    %v8036 = vadd.f32 %v7993, %v8035
    %8037 = vdwg.mxu0
    %8038 = vmatprep.subr.bf16.mxu0 %v4973
    %8039 = vmatpush1.bf16.msra.mxu0 %v4972
    %8040 = vmatprep.subr.bf16.mxu0 %v4997
    %8041 = vmatpush1.bf16.msra.mxu0 %v4996
    %8042 = vmatprep.subr.bf16.mxu0 %v5021
    %8043 = vmatpush1.bf16.msra.mxu0 %v5020
    %8044 = vmatprep.subr.bf16.mxu0 %v5045
    %8045 = vmatpush1.bf16.msra.mxu0 %v5044
    %8046 = vmatprep.subr.bf16.mxu0 %v5069
    %8047 = vmatpush1.bf16.msra.mxu0 %v5068
    %8048 = vmatprep.subr.bf16.mxu0 %v5093
    %8049 = vmatpush1.bf16.msra.mxu0 %v5092
    %8050 = vmatprep.subr.bf16.mxu0 %v5117
    %8051 = vmatpush1.bf16.msra.mxu0 %v5116
    %8052 = vmatprep.subr.bf16.mxu0 %v5141
    %8053 = vmatpush1.bf16.msra.mxu0 %v5140
    %8054 = vmatprep.subr.bf16.mxu0 %v5165
    %8055 = vmatpush1.bf16.msra.mxu0 %v5164
    %8056 = vmatprep.subr.bf16.mxu0 %v5189
    %8057 = vmatpush1.bf16.msra.mxu0 %v5188
    %8058 = vmatprep.subr.bf16.mxu0 %v5213
    %8059 = vmatpush1.bf16.msra.mxu0 %v5212
    %8060 = vmatprep.subr.bf16.mxu0 %v5237
    %8061 = vmatpush1.bf16.msra.mxu0 %v5236
    %8062 = vmatprep.subr.bf16.mxu0 %v5261
    %8063 = vmatpush1.bf16.msra.mxu0 %v5260
    %8064 = vmatprep.subr.bf16.mxu0 %v5285
    %8065 = vmatpush1.bf16.msra.mxu0 %v5284
    %8066 = vmatprep.subr.bf16.mxu0 %v5309
    %8067 = vmatpush1.bf16.msra.mxu0 %v5308
    %8068 = vmatprep.subr.bf16.mxu0 %v5333
    %8069 = vmatpush1.bf16.msra.mxu0 %v5332
    %8070 = vmatprep.mubr.bf16.mxu0 %v178
    %8071 = vmatmul.mubr.bf16.gmra.mrb[0].mxu0 %v177
    %v8072 = vpop.f32.mrb[0].mxu0
    %v8073 = vadd.f32 %v1435, %v8072
    %v8074 = vpop.f32.mrb[0].mxu0
    %v8075 = vadd.f32 %v1439, %v8074
    %v8076 = vpop.f32.mrb[0].mxu0
    %v8077 = vadd.f32 %v1435, %v8076
    %v8078 = vpop.f32.mrb[0].mxu0
    %v8079 = vadd.f32 %v1439, %v8078
    %8080 = vdwg.mxu0
    %8081 = vmatprep.subr.bf16.mxu0 %v5357
    %8082 = vmatpush1.bf16.msra.mxu0 %v5356
    %8083 = vmatprep.subr.bf16.mxu0 %v5381
    %8084 = vmatpush1.bf16.msra.mxu0 %v5380
    %8085 = vmatprep.subr.bf16.mxu0 %v5405
    %8086 = vmatpush1.bf16.msra.mxu0 %v5404
    %8087 = vmatprep.subr.bf16.mxu0 %v5429
    %8088 = vmatpush1.bf16.msra.mxu0 %v5428
    %8089 = vmatprep.subr.bf16.mxu0 %v5453
    %8090 = vmatpush1.bf16.msra.mxu0 %v5452
    %8091 = vmatprep.subr.bf16.mxu0 %v5477
    %8092 = vmatpush1.bf16.msra.mxu0 %v5476
    %8093 = vmatprep.subr.bf16.mxu0 %v5501
    %8094 = vmatpush1.bf16.msra.mxu0 %v5500
    %8095 = vmatprep.subr.bf16.mxu0 %v5525
    %8096 = vmatpush1.bf16.msra.mxu0 %v5524
    %8097 = vmatprep.subr.bf16.mxu0 %v5549
    %8098 = vmatpush1.bf16.msra.mxu0 %v5548
    %8099 = vmatprep.subr.bf16.mxu0 %v5573
    %8100 = vmatpush1.bf16.msra.mxu0 %v5572
    %8101 = vmatprep.subr.bf16.mxu0 %v5597
    %8102 = vmatpush1.bf16.msra.mxu0 %v5596
    %8103 = vmatprep.subr.bf16.mxu0 %v5621
    %8104 = vmatpush1.bf16.msra.mxu0 %v5620
    %8105 = vmatprep.subr.bf16.mxu0 %v5645
    %8106 = vmatpush1.bf16.msra.mxu0 %v5644
    %8107 = vmatprep.subr.bf16.mxu0 %v5669
    %8108 = vmatpush1.bf16.msra.mxu0 %v5668
    %8109 = vmatprep.subr.bf16.mxu0 %v5693
    %8110 = vmatpush1.bf16.msra.mxu0 %v5692
    %8111 = vmatprep.subr.bf16.mxu0 %v5717
    %8112 = vmatpush1.bf16.msra.mxu0 %v5716
    %8113 = vmatprep.mubr.bf16.mxu0 %v180
    %8114 = vmatmul.mubr.bf16.gmra.mrb[0].mxu0 %v179
    %v8115 = vpop.f32.mrb[0].mxu0
    %v8116 = vadd.f32 %v8073, %v8115
    %v8117 = vpop.f32.mrb[0].mxu0
    %v8118 = vadd.f32 %v8075, %v8117
    %v8119 = vpop.f32.mrb[0].mxu0
    %v8120 = vadd.f32 %v8077, %v8119
    %v8121 = vpop.f32.mrb[0].mxu0
    %v8122 = vadd.f32 %v8079, %v8121
    %8123 = vdwg.mxu0
    %8124 = vmatprep.subr.bf16.mxu0 %v5741
    %8125 = vmatpush1.bf16.msra.mxu0 %v5740
    %8126 = vmatprep.subr.bf16.mxu0 %v5765
    %8127 = vmatpush1.bf16.msra.mxu0 %v5764
    %8128 = vmatprep.subr.bf16.mxu0 %v5789
    %8129 = vmatpush1.bf16.msra.mxu0 %v5788
    %8130 = vmatprep.subr.bf16.mxu0 %v5813
    %8131 = vmatpush1.bf16.msra.mxu0 %v5812
    %8132 = vmatprep.subr.bf16.mxu0 %v5837
    %8133 = vmatpush1.bf16.msra.mxu0 %v5836
    %8134 = vmatprep.subr.bf16.mxu0 %v5861
    %8135 = vmatpush1.bf16.msra.mxu0 %v5860
    %8136 = vmatprep.subr.bf16.mxu0 %v5885
    %8137 = vmatpush1.bf16.msra.mxu0 %v5884
    %8138 = vmatprep.subr.bf16.mxu0 %v5909
    %8139 = vmatpush1.bf16.msra.mxu0 %v5908
    %8140 = vmatprep.subr.bf16.mxu0 %v5933
    %8141 = vmatpush1.bf16.msra.mxu0 %v5932
    %8142 = vmatprep.subr.bf16.mxu0 %v5957
    %8143 = vmatpush1.bf16.msra.mxu0 %v5956
    %8144 = vmatprep.subr.bf16.mxu0 %v5981
    %8145 = vmatpush1.bf16.msra.mxu0 %v5980
    %8146 = vmatprep.subr.bf16.mxu0 %v6005
    %8147 = vmatpush1.bf16.msra.mxu0 %v6004
    %8148 = vmatprep.subr.bf16.mxu0 %v6029
    %8149 = vmatpush1.bf16.msra.mxu0 %v6028
    %8150 = vmatprep.subr.bf16.mxu0 %v6053
    %8151 = vmatpush1.bf16.msra.mxu0 %v6052
    %8152 = vmatprep.subr.bf16.mxu0 %v6077
    %8153 = vmatpush1.bf16.msra.mxu0 %v6076
    %8154 = vmatprep.subr.bf16.mxu0 %v6101
    %8155 = vmatpush1.bf16.msra.mxu0 %v6100
    %8156 = vmatprep.mubr.bf16.mxu0 %v182
    %8157 = vmatmul.mubr.bf16.gmra.mrb[0].mxu0 %v181
    %v8158 = vpop.f32.mrb[0].mxu0
    %v8159 = vadd.f32 %v8116, %v8158
    %v8160 = vpop.f32.mrb[0].mxu0
    %v8161 = vadd.f32 %v8118, %v8160
    %v8162 = vpop.f32.mrb[0].mxu0
    %v8163 = vadd.f32 %v8120, %v8162
    %v8164 = vpop.f32.mrb[0].mxu0
    %v8165 = vadd.f32 %v8122, %v8164
    %8166 = vdwg.mxu0
    %8167 = vmatprep.subr.bf16.mxu0 %v4975
    %8168 = vmatpush1.bf16.msra.mxu0 %v4974
    %8169 = vmatprep.subr.bf16.mxu0 %v4999
    %8170 = vmatpush1.bf16.msra.mxu0 %v4998
    %8171 = vmatprep.subr.bf16.mxu0 %v5023
    %8172 = vmatpush1.bf16.msra.mxu0 %v5022
    %8173 = vmatprep.subr.bf16.mxu0 %v5047
    %8174 = vmatpush1.bf16.msra.mxu0 %v5046
    %8175 = vmatprep.subr.bf16.mxu0 %v5071
    %8176 = vmatpush1.bf16.msra.mxu0 %v5070
    %8177 = vmatprep.subr.bf16.mxu0 %v5095
    %8178 = vmatpush1.bf16.msra.mxu0 %v5094
    %8179 = vmatprep.subr.bf16.mxu0 %v5119
    %8180 = vmatpush1.bf16.msra.mxu0 %v5118
    %8181 = vmatprep.subr.bf16.mxu0 %v5143
    %8182 = vmatpush1.bf16.msra.mxu0 %v5142
    %8183 = vmatprep.subr.bf16.mxu0 %v5167
    %8184 = vmatpush1.bf16.msra.mxu0 %v5166
    %8185 = vmatprep.subr.bf16.mxu0 %v5191
    %8186 = vmatpush1.bf16.msra.mxu0 %v5190
    %8187 = vmatprep.subr.bf16.mxu0 %v5215
    %8188 = vmatpush1.bf16.msra.mxu0 %v5214
    %8189 = vmatprep.subr.bf16.mxu0 %v5239
    %8190 = vmatpush1.bf16.msra.mxu0 %v5238
    %8191 = vmatprep.subr.bf16.mxu0 %v5263
    %8192 = vmatpush1.bf16.msra.mxu0 %v5262
    %8193 = vmatprep.subr.bf16.mxu0 %v5287
    %8194 = vmatpush1.bf16.msra.mxu0 %v5286
    %8195 = vmatprep.subr.bf16.mxu0 %v5311
    %8196 = vmatpush1.bf16.msra.mxu0 %v5310
    %8197 = vmatprep.subr.bf16.mxu0 %v5335
    %8198 = vmatpush1.bf16.msra.mxu0 %v5334
    %8199 = vmatprep.mubr.bf16.mxu0 %v178
    %8200 = vmatmul.mubr.bf16.gmra.mrb[0].mxu0 %v177
    %v8201 = vpop.f32.mrb[0].mxu0
    %v8202 = vadd.f32 %v1443, %v8201
    %v8203 = vpop.f32.mrb[0].mxu0
    %v8204 = vadd.f32 %v1447, %v8203
    %v8205 = vpop.f32.mrb[0].mxu0
    %v8206 = vadd.f32 %v1443, %v8205
    %v8207 = vpop.f32.mrb[0].mxu0
    %v8208 = vadd.f32 %v1447, %v8207
    %8209 = vdwg.mxu0
    %8210 = vmatprep.subr.bf16.mxu0 %v5359
    %8211 = vmatpush1.bf16.msra.mxu0 %v5358
    %8212 = vmatprep.subr.bf16.mxu0 %v5383
    %8213 = vmatpush1.bf16.msra.mxu0 %v5382
    %8214 = vmatprep.subr.bf16.mxu0 %v5407
    %8215 = vmatpush1.bf16.msra.mxu0 %v5406
    %8216 = vmatprep.subr.bf16.mxu0 %v5431
    %8217 = vmatpush1.bf16.msra.mxu0 %v5430
    %8218 = vmatprep.subr.bf16.mxu0 %v5455
    %8219 = vmatpush1.bf16.msra.mxu0 %v5454
    %8220 = vmatprep.subr.bf16.mxu0 %v5479
    %8221 = vmatpush1.bf16.msra.mxu0 %v5478
    %8222 = vmatprep.subr.bf16.mxu0 %v5503
    %8223 = vmatpush1.bf16.msra.mxu0 %v5502
    %8224 = vmatprep.subr.bf16.mxu0 %v5527
    %8225 = vmatpush1.bf16.msra.mxu0 %v5526
    %8226 = vmatprep.subr.bf16.mxu0 %v5551
    %8227 = vmatpush1.bf16.msra.mxu0 %v5550
    %8228 = vmatprep.subr.bf16.mxu0 %v5575
    %8229 = vmatpush1.bf16.msra.mxu0 %v5574
    %8230 = vmatprep.subr.bf16.mxu0 %v5599
    %8231 = vmatpush1.bf16.msra.mxu0 %v5598
    %8232 = vmatprep.subr.bf16.mxu0 %v5623
    %8233 = vmatpush1.bf16.msra.mxu0 %v5622
    %8234 = vmatprep.subr.bf16.mxu0 %v5647
    %8235 = vmatpush1.bf16.msra.mxu0 %v5646
    %8236 = vmatprep.subr.bf16.mxu0 %v5671
    %8237 = vmatpush1.bf16.msra.mxu0 %v5670
    %8238 = vmatprep.subr.bf16.mxu0 %v5695
    %8239 = vmatpush1.bf16.msra.mxu0 %v5694
    %8240 = vmatprep.subr.bf16.mxu0 %v5719
    %8241 = vmatpush1.bf16.msra.mxu0 %v5718
    %8242 = vmatprep.mubr.bf16.mxu0 %v180
    %8243 = vmatmul.mubr.bf16.gmra.mrb[0].mxu0 %v179
    %v8244 = vpop.f32.mrb[0].mxu0
    %v8245 = vadd.f32 %v8202, %v8244
    %v8246 = vpop.f32.mrb[0].mxu0
    %v8247 = vadd.f32 %v8204, %v8246
    %v8248 = vpop.f32.mrb[0].mxu0
    %v8249 = vadd.f32 %v8206, %v8248
    %v8250 = vpop.f32.mrb[0].mxu0
    %v8251 = vadd.f32 %v8208, %v8250
    %8252 = vdwg.mxu0
    %8253 = vmatprep.subr.bf16.mxu0 %v5743
    %8254 = vmatpush1.bf16.msra.mxu0 %v5742
    %8255 = vmatprep.subr.bf16.mxu0 %v5767
    %8256 = vmatpush1.bf16.msra.mxu0 %v5766
    %8257 = vmatprep.subr.bf16.mxu0 %v5791
    %8258 = vmatpush1.bf16.msra.mxu0 %v5790
    %8259 = vmatprep.subr.bf16.mxu0 %v5815
    %8260 = vmatpush1.bf16.msra.mxu0 %v5814
    %8261 = vmatprep.subr.bf16.mxu0 %v5839
    %8262 = vmatpush1.bf16.msra.mxu0 %v5838
    %8263 = vmatprep.subr.bf16.mxu0 %v5863
    %8264 = vmatpush1.bf16.msra.mxu0 %v5862
    %8265 = vmatprep.subr.bf16.mxu0 %v5887
    %8266 = vmatpush1.bf16.msra.mxu0 %v5886
    %8267 = vmatprep.subr.bf16.mxu0 %v5911
    %8268 = vmatpush1.bf16.msra.mxu0 %v5910
    %8269 = vmatprep.subr.bf16.mxu0 %v5935
    %8270 = vmatpush1.bf16.msra.mxu0 %v5934
    %8271 = vmatprep.subr.bf16.mxu0 %v5959
    %8272 = vmatpush1.bf16.msra.mxu0 %v5958
    %8273 = vmatprep.subr.bf16.mxu0 %v5983
    %8274 = vmatpush1.bf16.msra.mxu0 %v5982
    %8275 = vmatprep.subr.bf16.mxu0 %v6007
    %8276 = vmatpush1.bf16.msra.mxu0 %v6006
    %8277 = vmatprep.subr.bf16.mxu0 %v6031
    %8278 = vmatpush1.bf16.msra.mxu0 %v6030
    %8279 = vmatprep.subr.bf16.mxu0 %v6055
    %8280 = vmatpush1.bf16.msra.mxu0 %v6054
    %8281 = vmatprep.subr.bf16.mxu0 %v6079
    %8282 = vmatpush1.bf16.msra.mxu0 %v6078
    %8283 = vmatprep.subr.bf16.mxu0 %v6103
    %8284 = vmatpush1.bf16.msra.mxu0 %v6102
    %8285 = vmatprep.mubr.bf16.mxu0 %v182
    %8286 = vmatmul.mubr.bf16.gmra.mrb[0].mxu0 %v181
    %v8287 = vpop.f32.mrb[0].mxu0
    %v8288 = vadd.f32 %v8245, %v8287
    %v8289 = vpop.f32.mrb[0].mxu0
    %v8290 = vadd.f32 %v8247, %v8289
    %v8291 = vpop.f32.mrb[0].mxu0
    %v8292 = vadd.f32 %v8249, %v8291
    %v8293 = vpop.f32.mrb[0].mxu0
    %v8294 = vadd.f32 %v8251, %v8293
    %8295 = vdwg.mxu0
    %8296 = vmatprep.subr.bf16.mxu0 %v4977
    %8297 = vmatpush1.bf16.msra.mxu0 %v4976
    %8298 = vmatprep.subr.bf16.mxu0 %v5001
    %8299 = vmatpush1.bf16.msra.mxu0 %v5000
    %8300 = vmatprep.subr.bf16.mxu0 %v5025
    %8301 = vmatpush1.bf16.msra.mxu0 %v5024
    %8302 = vmatprep.subr.bf16.mxu0 %v5049
    %8303 = vmatpush1.bf16.msra.mxu0 %v5048
    %8304 = vmatprep.subr.bf16.mxu0 %v5073
    %8305 = vmatpush1.bf16.msra.mxu0 %v5072
    %8306 = vmatprep.subr.bf16.mxu0 %v5097
    %8307 = vmatpush1.bf16.msra.mxu0 %v5096
    %8308 = vmatprep.subr.bf16.mxu0 %v5121
    %8309 = vmatpush1.bf16.msra.mxu0 %v5120
    %8310 = vmatprep.subr.bf16.mxu0 %v5145
    %8311 = vmatpush1.bf16.msra.mxu0 %v5144
    %8312 = vmatprep.subr.bf16.mxu0 %v5169
    %8313 = vmatpush1.bf16.msra.mxu0 %v5168
    %8314 = vmatprep.subr.bf16.mxu0 %v5193
    %8315 = vmatpush1.bf16.msra.mxu0 %v5192
    %8316 = vmatprep.subr.bf16.mxu0 %v5217
    %8317 = vmatpush1.bf16.msra.mxu0 %v5216
    %8318 = vmatprep.subr.bf16.mxu0 %v5241
    %8319 = vmatpush1.bf16.msra.mxu0 %v5240
    %8320 = vmatprep.subr.bf16.mxu0 %v5265
    %8321 = vmatpush1.bf16.msra.mxu0 %v5264
    %8322 = vmatprep.subr.bf16.mxu0 %v5289
    %8323 = vmatpush1.bf16.msra.mxu0 %v5288
    %8324 = vmatprep.subr.bf16.mxu0 %v5313
    %8325 = vmatpush1.bf16.msra.mxu0 %v5312
    %8326 = vmatprep.subr.bf16.mxu0 %v5337
    %8327 = vmatpush1.bf16.msra.mxu0 %v5336
    %8328 = vmatprep.mubr.bf16.mxu0 %v178
    %8329 = vmatmul.mubr.bf16.gmra.mrb[0].mxu0 %v177
    %v8330 = vpop.f32.mrb[0].mxu0
    %v8331 = vadd.f32 %v1451, %v8330
    %v8332 = vpop.f32.mrb[0].mxu0
    %v8333 = vadd.f32 %v1455, %v8332
    %v8334 = vpop.f32.mrb[0].mxu0
    %v8335 = vadd.f32 %v1451, %v8334
    %v8336 = vpop.f32.mrb[0].mxu0
    %v8337 = vadd.f32 %v1455, %v8336
    %8338 = vdwg.mxu0
    %8339 = vmatprep.subr.bf16.mxu0 %v5361
    %8340 = vmatpush1.bf16.msra.mxu0 %v5360
    %8341 = vmatprep.subr.bf16.mxu0 %v5385
    %8342 = vmatpush1.bf16.msra.mxu0 %v5384
    %8343 = vmatprep.subr.bf16.mxu0 %v5409
    %8344 = vmatpush1.bf16.msra.mxu0 %v5408
    %8345 = vmatprep.subr.bf16.mxu0 %v5433
    %8346 = vmatpush1.bf16.msra.mxu0 %v5432
    %8347 = vmatprep.subr.bf16.mxu0 %v5457
    %8348 = vmatpush1.bf16.msra.mxu0 %v5456
    %8349 = vmatprep.subr.bf16.mxu0 %v5481
    %8350 = vmatpush1.bf16.msra.mxu0 %v5480
    %8351 = vmatprep.subr.bf16.mxu0 %v5505
    %8352 = vmatpush1.bf16.msra.mxu0 %v5504
    %8353 = vmatprep.subr.bf16.mxu0 %v5529
    %8354 = vmatpush1.bf16.msra.mxu0 %v5528
    %8355 = vmatprep.subr.bf16.mxu0 %v5553
    %8356 = vmatpush1.bf16.msra.mxu0 %v5552
    %8357 = vmatprep.subr.bf16.mxu0 %v5577
    %8358 = vmatpush1.bf16.msra.mxu0 %v5576
    %8359 = vmatprep.subr.bf16.mxu0 %v5601
    %8360 = vmatpush1.bf16.msra.mxu0 %v5600
    %8361 = vmatprep.subr.bf16.mxu0 %v5625
    %8362 = vmatpush1.bf16.msra.mxu0 %v5624
    %8363 = vmatprep.subr.bf16.mxu0 %v5649
    %8364 = vmatpush1.bf16.msra.mxu0 %v5648
    %8365 = vmatprep.subr.bf16.mxu0 %v5673
    %8366 = vmatpush1.bf16.msra.mxu0 %v5672
    %8367 = vmatprep.subr.bf16.mxu0 %v5697
    %8368 = vmatpush1.bf16.msra.mxu0 %v5696
    %8369 = vmatprep.subr.bf16.mxu0 %v5721
    %8370 = vmatpush1.bf16.msra.mxu0 %v5720
    %8371 = vmatprep.mubr.bf16.mxu0 %v180
    %8372 = vmatmul.mubr.bf16.gmra.mrb[0].mxu0 %v179
    %v8373 = vpop.f32.mrb[0].mxu0
    %v8374 = vadd.f32 %v8331, %v8373
    %v8375 = vpop.f32.mrb[0].mxu0
    %v8376 = vadd.f32 %v8333, %v8375
    %v8377 = vpop.f32.mrb[0].mxu0
    %v8378 = vadd.f32 %v8335, %v8377
    %v8379 = vpop.f32.mrb[0].mxu0
    %v8380 = vadd.f32 %v8337, %v8379
    %8381 = vdwg.mxu0
    %8382 = vmatprep.subr.bf16.mxu0 %v5745
    %8383 = vmatpush1.bf16.msra.mxu0 %v5744
    %8384 = vmatprep.subr.bf16.mxu0 %v5769
    %8385 = vmatpush1.bf16.msra.mxu0 %v5768
    %8386 = vmatprep.subr.bf16.mxu0 %v5793
    %8387 = vmatpush1.bf16.msra.mxu0 %v5792
    %8388 = vmatprep.subr.bf16.mxu0 %v5817
    %8389 = vmatpush1.bf16.msra.mxu0 %v5816
    %8390 = vmatprep.subr.bf16.mxu0 %v5841
    %8391 = vmatpush1.bf16.msra.mxu0 %v5840
    %8392 = vmatprep.subr.bf16.mxu0 %v5865
    %8393 = vmatpush1.bf16.msra.mxu0 %v5864
    %8394 = vmatprep.subr.bf16.mxu0 %v5889
    %8395 = vmatpush1.bf16.msra.mxu0 %v5888
    %8396 = vmatprep.subr.bf16.mxu0 %v5913
    %8397 = vmatpush1.bf16.msra.mxu0 %v5912
    %8398 = vmatprep.subr.bf16.mxu0 %v5937
    %8399 = vmatpush1.bf16.msra.mxu0 %v5936
    %8400 = vmatprep.subr.bf16.mxu0 %v5961
    %8401 = vmatpush1.bf16.msra.mxu0 %v5960
    %8402 = vmatprep.subr.bf16.mxu0 %v5985
    %8403 = vmatpush1.bf16.msra.mxu0 %v5984
    %8404 = vmatprep.subr.bf16.mxu0 %v6009
    %8405 = vmatpush1.bf16.msra.mxu0 %v6008
    %8406 = vmatprep.subr.bf16.mxu0 %v6033
    %8407 = vmatpush1.bf16.msra.mxu0 %v6032
    %8408 = vmatprep.subr.bf16.mxu0 %v6057
    %8409 = vmatpush1.bf16.msra.mxu0 %v6056
    %8410 = vmatprep.subr.bf16.mxu0 %v6081
    %8411 = vmatpush1.bf16.msra.mxu0 %v6080
    %8412 = vmatprep.subr.bf16.mxu0 %v6105
    %8413 = vmatpush1.bf16.msra.mxu0 %v6104
    %8414 = vmatprep.mubr.bf16.mxu0 %v182
    %8415 = vmatmul.mubr.bf16.gmra.mrb[0].mxu0 %v181
    %v8416 = vpop.f32.mrb[0].mxu0
    %v8417 = vadd.f32 %v8374, %v8416
    %v8418 = vpop.f32.mrb[0].mxu0
    %v8419 = vadd.f32 %v8376, %v8418
    %v8420 = vpop.f32.mrb[0].mxu0
    %v8421 = vadd.f32 %v8378, %v8420
    %v8422 = vpop.f32.mrb[0].mxu0
    %v8423 = vadd.f32 %v8380, %v8422
    %8424 = vdwg.mxu0
    %8425 = vmatprep.subr.bf16.mxu0 %v4979
    %8426 = vmatpush1.bf16.msra.mxu0 %v4978
    %8427 = vmatprep.subr.bf16.mxu0 %v5003
    %8428 = vmatpush1.bf16.msra.mxu0 %v5002
    %8429 = vmatprep.subr.bf16.mxu0 %v5027
    %8430 = vmatpush1.bf16.msra.mxu0 %v5026
    %8431 = vmatprep.subr.bf16.mxu0 %v5051
    %8432 = vmatpush1.bf16.msra.mxu0 %v5050
    %8433 = vmatprep.subr.bf16.mxu0 %v5075
    %8434 = vmatpush1.bf16.msra.mxu0 %v5074
    %8435 = vmatprep.subr.bf16.mxu0 %v5099
    %8436 = vmatpush1.bf16.msra.mxu0 %v5098
    %8437 = vmatprep.subr.bf16.mxu0 %v5123
    %8438 = vmatpush1.bf16.msra.mxu0 %v5122
    %8439 = vmatprep.subr.bf16.mxu0 %v5147
    %8440 = vmatpush1.bf16.msra.mxu0 %v5146
    %8441 = vmatprep.subr.bf16.mxu0 %v5171
    %8442 = vmatpush1.bf16.msra.mxu0 %v5170
    %8443 = vmatprep.subr.bf16.mxu0 %v5195
    %8444 = vmatpush1.bf16.msra.mxu0 %v5194
    %8445 = vmatprep.subr.bf16.mxu0 %v5219
    %8446 = vmatpush1.bf16.msra.mxu0 %v5218
    %8447 = vmatprep.subr.bf16.mxu0 %v5243
    %8448 = vmatpush1.bf16.msra.mxu0 %v5242
    %8449 = vmatprep.subr.bf16.mxu0 %v5267
    %8450 = vmatpush1.bf16.msra.mxu0 %v5266
    %8451 = vmatprep.subr.bf16.mxu0 %v5291
    %8452 = vmatpush1.bf16.msra.mxu0 %v5290
    %8453 = vmatprep.subr.bf16.mxu0 %v5315
    %8454 = vmatpush1.bf16.msra.mxu0 %v5314
    %8455 = vmatprep.subr.bf16.mxu0 %v5339
    %8456 = vmatpush1.bf16.msra.mxu0 %v5338
    %8457 = vmatprep.mubr.bf16.mxu0 %v178
    %8458 = vmatmul.mubr.bf16.gmra.mrb[0].mxu0 %v177
    %v8459 = vpop.f32.mrb[0].mxu0
    %v8460 = vadd.f32 %v1459, %v8459
    %v8461 = vpop.f32.mrb[0].mxu0
    %v8462 = vadd.f32 %v1463, %v8461
    %v8463 = vpop.f32.mrb[0].mxu0
    %v8464 = vadd.f32 %v1459, %v8463
    %v8465 = vpop.f32.mrb[0].mxu0
    %v8466 = vadd.f32 %v1463, %v8465
    %8467 = vdwg.mxu0
    %8468 = vmatprep.subr.bf16.mxu0 %v5363
    %8469 = vmatpush1.bf16.msra.mxu0 %v5362
    %8470 = vmatprep.subr.bf16.mxu0 %v5387
    %8471 = vmatpush1.bf16.msra.mxu0 %v5386
    %8472 = vmatprep.subr.bf16.mxu0 %v5411
    %8473 = vmatpush1.bf16.msra.mxu0 %v5410
    %8474 = vmatprep.subr.bf16.mxu0 %v5435
    %8475 = vmatpush1.bf16.msra.mxu0 %v5434
    %8476 = vmatprep.subr.bf16.mxu0 %v5459
    %8477 = vmatpush1.bf16.msra.mxu0 %v5458
    %8478 = vmatprep.subr.bf16.mxu0 %v5483
    %8479 = vmatpush1.bf16.msra.mxu0 %v5482
    %8480 = vmatprep.subr.bf16.mxu0 %v5507
    %8481 = vmatpush1.bf16.msra.mxu0 %v5506
    %8482 = vmatprep.subr.bf16.mxu0 %v5531
    %8483 = vmatpush1.bf16.msra.mxu0 %v5530
    %8484 = vmatprep.subr.bf16.mxu0 %v5555
    %8485 = vmatpush1.bf16.msra.mxu0 %v5554
    %8486 = vmatprep.subr.bf16.mxu0 %v5579
    %8487 = vmatpush1.bf16.msra.mxu0 %v5578
    %8488 = vmatprep.subr.bf16.mxu0 %v5603
    %8489 = vmatpush1.bf16.msra.mxu0 %v5602
    %8490 = vmatprep.subr.bf16.mxu0 %v5627
    %8491 = vmatpush1.bf16.msra.mxu0 %v5626
    %8492 = vmatprep.subr.bf16.mxu0 %v5651
    %8493 = vmatpush1.bf16.msra.mxu0 %v5650
    %8494 = vmatprep.subr.bf16.mxu0 %v5675
    %8495 = vmatpush1.bf16.msra.mxu0 %v5674
    %8496 = vmatprep.subr.bf16.mxu0 %v5699
    %8497 = vmatpush1.bf16.msra.mxu0 %v5698
    %8498 = vmatprep.subr.bf16.mxu0 %v5723
    %8499 = vmatpush1.bf16.msra.mxu0 %v5722
    %8500 = vmatprep.mubr.bf16.mxu0 %v180
    %8501 = vmatmul.mubr.bf16.gmra.mrb[0].mxu0 %v179
    %v8502 = vpop.f32.mrb[0].mxu0
    %v8503 = vadd.f32 %v8460, %v8502
    %v8504 = vpop.f32.mrb[0].mxu0
    %v8505 = vadd.f32 %v8462, %v8504
    %v8506 = vpop.f32.mrb[0].mxu0
    %v8507 = vadd.f32 %v8464, %v8506
    %v8508 = vpop.f32.mrb[0].mxu0
    %v8509 = vadd.f32 %v8466, %v8508
    %8510 = vdwg.mxu0
    %8511 = vmatprep.subr.bf16.mxu0 %v5747
    %8512 = vmatpush1.bf16.msra.mxu0 %v5746
    %8513 = vmatprep.subr.bf16.mxu0 %v5771
    %8514 = vmatpush1.bf16.msra.mxu0 %v5770
    %8515 = vmatprep.subr.bf16.mxu0 %v5795
    %8516 = vmatpush1.bf16.msra.mxu0 %v5794
    %8517 = vmatprep.subr.bf16.mxu0 %v5819
    %8518 = vmatpush1.bf16.msra.mxu0 %v5818
    %8519 = vmatprep.subr.bf16.mxu0 %v5843
    %8520 = vmatpush1.bf16.msra.mxu0 %v5842
    %8521 = vmatprep.subr.bf16.mxu0 %v5867
    %8522 = vmatpush1.bf16.msra.mxu0 %v5866
    %8523 = vmatprep.subr.bf16.mxu0 %v5891
    %8524 = vmatpush1.bf16.msra.mxu0 %v5890
    %8525 = vmatprep.subr.bf16.mxu0 %v5915
    %8526 = vmatpush1.bf16.msra.mxu0 %v5914
    %8527 = vmatprep.subr.bf16.mxu0 %v5939
    %8528 = vmatpush1.bf16.msra.mxu0 %v5938
    %8529 = vmatprep.subr.bf16.mxu0 %v5963
    %8530 = vmatpush1.bf16.msra.mxu0 %v5962
    %8531 = vmatprep.subr.bf16.mxu0 %v5987
    %8532 = vmatpush1.bf16.msra.mxu0 %v5986
    %8533 = vmatprep.subr.bf16.mxu0 %v6011
    %8534 = vmatpush1.bf16.msra.mxu0 %v6010
    %8535 = vmatprep.subr.bf16.mxu0 %v6035
    %8536 = vmatpush1.bf16.msra.mxu0 %v6034
    %8537 = vmatprep.subr.bf16.mxu0 %v6059
    %8538 = vmatpush1.bf16.msra.mxu0 %v6058
    %8539 = vmatprep.subr.bf16.mxu0 %v6083
    %8540 = vmatpush1.bf16.msra.mxu0 %v6082
    %8541 = vmatprep.subr.bf16.mxu0 %v6107
    %8542 = vmatpush1.bf16.msra.mxu0 %v6106
    %8543 = vmatprep.mubr.bf16.mxu0 %v182
    %8544 = vmatmul.mubr.bf16.gmra.mrb[0].mxu0 %v181
    %v8545 = vpop.f32.mrb[0].mxu0
    %v8546 = vadd.f32 %v8503, %v8545
    %v8547 = vpop.f32.mrb[0].mxu0
    %v8548 = vadd.f32 %v8505, %v8547
    %v8549 = vpop.f32.mrb[0].mxu0
    %v8550 = vadd.f32 %v8507, %v8549
    %v8551 = vpop.f32.mrb[0].mxu0
    %v8552 = vadd.f32 %v8509, %v8551
    %8553 = vdwg.mxu0
    %8554 = vmatprep.subr.bf16.mxu0 %v4981
    %8555 = vmatpush1.bf16.msra.mxu0 %v4980
    %8556 = vmatprep.subr.bf16.mxu0 %v5005
    %8557 = vmatpush1.bf16.msra.mxu0 %v5004
    %8558 = vmatprep.subr.bf16.mxu0 %v5029
    %8559 = vmatpush1.bf16.msra.mxu0 %v5028
    %8560 = vmatprep.subr.bf16.mxu0 %v5053
    %8561 = vmatpush1.bf16.msra.mxu0 %v5052
    %8562 = vmatprep.subr.bf16.mxu0 %v5077
    %8563 = vmatpush1.bf16.msra.mxu0 %v5076
    %8564 = vmatprep.subr.bf16.mxu0 %v5101
    %8565 = vmatpush1.bf16.msra.mxu0 %v5100
    %8566 = vmatprep.subr.bf16.mxu0 %v5125
    %8567 = vmatpush1.bf16.msra.mxu0 %v5124
    %8568 = vmatprep.subr.bf16.mxu0 %v5149
    %8569 = vmatpush1.bf16.msra.mxu0 %v5148
    %8570 = vmatprep.subr.bf16.mxu0 %v5173
    %8571 = vmatpush1.bf16.msra.mxu0 %v5172
    %8572 = vmatprep.subr.bf16.mxu0 %v5197
    %8573 = vmatpush1.bf16.msra.mxu0 %v5196
    %8574 = vmatprep.subr.bf16.mxu0 %v5221
    %8575 = vmatpush1.bf16.msra.mxu0 %v5220
    %8576 = vmatprep.subr.bf16.mxu0 %v5245
    %8577 = vmatpush1.bf16.msra.mxu0 %v5244
    %8578 = vmatprep.subr.bf16.mxu0 %v5269
    %8579 = vmatpush1.bf16.msra.mxu0 %v5268
    %8580 = vmatprep.subr.bf16.mxu0 %v5293
    %8581 = vmatpush1.bf16.msra.mxu0 %v5292
    %8582 = vmatprep.subr.bf16.mxu0 %v5317
    %8583 = vmatpush1.bf16.msra.mxu0 %v5316
    %8584 = vmatprep.subr.bf16.mxu0 %v5341
    %8585 = vmatpush1.bf16.msra.mxu0 %v5340
    %8586 = vmatprep.mubr.bf16.mxu0 %v178
    %8587 = vmatmul.mubr.bf16.gmra.mrb[0].mxu0 %v177
    %v8588 = vpop.f32.mrb[0].mxu0
    %v8589 = vadd.f32 %v1467, %v8588
    %v8590 = vpop.f32.mrb[0].mxu0
    %v8591 = vadd.f32 %v1471, %v8590
    %v8592 = vpop.f32.mrb[0].mxu0
    %v8593 = vadd.f32 %v1467, %v8592
    %v8594 = vpop.f32.mrb[0].mxu0
    %v8595 = vadd.f32 %v1471, %v8594
    %8596 = vdwg.mxu0
    %8597 = vmatprep.subr.bf16.mxu0 %v5365
    %8598 = vmatpush1.bf16.msra.mxu0 %v5364
    %8599 = vmatprep.subr.bf16.mxu0 %v5389
    %8600 = vmatpush1.bf16.msra.mxu0 %v5388
    %8601 = vmatprep.subr.bf16.mxu0 %v5413
    %8602 = vmatpush1.bf16.msra.mxu0 %v5412
    %8603 = vmatprep.subr.bf16.mxu0 %v5437
    %8604 = vmatpush1.bf16.msra.mxu0 %v5436
    %8605 = vmatprep.subr.bf16.mxu0 %v5461
    %8606 = vmatpush1.bf16.msra.mxu0 %v5460
    %8607 = vmatprep.subr.bf16.mxu0 %v5485
    %8608 = vmatpush1.bf16.msra.mxu0 %v5484
    %8609 = vmatprep.subr.bf16.mxu0 %v5509
    %8610 = vmatpush1.bf16.msra.mxu0 %v5508
    %8611 = vmatprep.subr.bf16.mxu0 %v5533
    %8612 = vmatpush1.bf16.msra.mxu0 %v5532
    %8613 = vmatprep.subr.bf16.mxu0 %v5557
    %8614 = vmatpush1.bf16.msra.mxu0 %v5556
    %8615 = vmatprep.subr.bf16.mxu0 %v5581
    %8616 = vmatpush1.bf16.msra.mxu0 %v5580
    %8617 = vmatprep.subr.bf16.mxu0 %v5605
    %8618 = vmatpush1.bf16.msra.mxu0 %v5604
    %8619 = vmatprep.subr.bf16.mxu0 %v5629
    %8620 = vmatpush1.bf16.msra.mxu0 %v5628
    %8621 = vmatprep.subr.bf16.mxu0 %v5653
    %8622 = vmatpush1.bf16.msra.mxu0 %v5652
    %8623 = vmatprep.subr.bf16.mxu0 %v5677
    %8624 = vmatpush1.bf16.msra.mxu0 %v5676
    %8625 = vmatprep.subr.bf16.mxu0 %v5701
    %8626 = vmatpush1.bf16.msra.mxu0 %v5700
    %8627 = vmatprep.subr.bf16.mxu0 %v5725
    %8628 = vmatpush1.bf16.msra.mxu0 %v5724
    %8629 = vmatprep.mubr.bf16.mxu0 %v180
    %8630 = vmatmul.mubr.bf16.gmra.mrb[0].mxu0 %v179
    %v8631 = vpop.f32.mrb[0].mxu0
    %v8632 = vadd.f32 %v8589, %v8631
    %v8633 = vpop.f32.mrb[0].mxu0
    %v8634 = vadd.f32 %v8591, %v8633
    %v8635 = vpop.f32.mrb[0].mxu0
    %v8636 = vadd.f32 %v8593, %v8635
    %v8637 = vpop.f32.mrb[0].mxu0
    %v8638 = vadd.f32 %v8595, %v8637
    %8639 = vdwg.mxu0
    %8640 = vmatprep.subr.bf16.mxu0 %v5749
    %8641 = vmatpush1.bf16.msra.mxu0 %v5748
    %8642 = vmatprep.subr.bf16.mxu0 %v5773
    %8643 = vmatpush1.bf16.msra.mxu0 %v5772
    %8644 = vmatprep.subr.bf16.mxu0 %v5797
    %8645 = vmatpush1.bf16.msra.mxu0 %v5796
    %8646 = vmatprep.subr.bf16.mxu0 %v5821
    %8647 = vmatpush1.bf16.msra.mxu0 %v5820
    %8648 = vmatprep.subr.bf16.mxu0 %v5845
    %8649 = vmatpush1.bf16.msra.mxu0 %v5844
    %8650 = vmatprep.subr.bf16.mxu0 %v5869
    %8651 = vmatpush1.bf16.msra.mxu0 %v5868
    %8652 = vmatprep.subr.bf16.mxu0 %v5893
    %8653 = vmatpush1.bf16.msra.mxu0 %v5892
    %8654 = vmatprep.subr.bf16.mxu0 %v5917
    %8655 = vmatpush1.bf16.msra.mxu0 %v5916
    %8656 = vmatprep.subr.bf16.mxu0 %v5941
    %8657 = vmatpush1.bf16.msra.mxu0 %v5940
    %8658 = vmatprep.subr.bf16.mxu0 %v5965
    %8659 = vmatpush1.bf16.msra.mxu0 %v5964
    %8660 = vmatprep.subr.bf16.mxu0 %v5989
    %8661 = vmatpush1.bf16.msra.mxu0 %v5988
    %8662 = vmatprep.subr.bf16.mxu0 %v6013
    %8663 = vmatpush1.bf16.msra.mxu0 %v6012
    %8664 = vmatprep.subr.bf16.mxu0 %v6037
    %8665 = vmatpush1.bf16.msra.mxu0 %v6036
    %8666 = vmatprep.subr.bf16.mxu0 %v6061
    %8667 = vmatpush1.bf16.msra.mxu0 %v6060
    %8668 = vmatprep.subr.bf16.mxu0 %v6085
    %8669 = vmatpush1.bf16.msra.mxu0 %v6084
    %8670 = vmatprep.subr.bf16.mxu0 %v6109
    %8671 = vmatpush1.bf16.msra.mxu0 %v6108
    %8672 = vmatprep.mubr.bf16.mxu0 %v182
    %8673 = vmatmul.mubr.bf16.gmra.mrb[0].mxu0 %v181
    %v8674 = vpop.f32.mrb[0].mxu0
    %v8675 = vadd.f32 %v8632, %v8674
    %v8676 = vpop.f32.mrb[0].mxu0
    %v8677 = vadd.f32 %v8634, %v8676
    %v8678 = vpop.f32.mrb[0].mxu0
    %v8679 = vadd.f32 %v8636, %v8678
    %v8680 = vpop.f32.mrb[0].mxu0
    %v8681 = vadd.f32 %v8638, %v8680
    %8682 = vdwg.mxu0
    %8683 = vmatprep.subr.bf16.mxu0 %v4983
    %8684 = vmatpush1.bf16.msra.mxu0 %v4982
    %8685 = vmatprep.subr.bf16.mxu0 %v5007
    %8686 = vmatpush1.bf16.msra.mxu0 %v5006
    %8687 = vmatprep.subr.bf16.mxu0 %v5031
    %8688 = vmatpush1.bf16.msra.mxu0 %v5030
    %8689 = vmatprep.subr.bf16.mxu0 %v5055
    %8690 = vmatpush1.bf16.msra.mxu0 %v5054
    %8691 = vmatprep.subr.bf16.mxu0 %v5079
    %8692 = vmatpush1.bf16.msra.mxu0 %v5078
    %8693 = vmatprep.subr.bf16.mxu0 %v5103
    %8694 = vmatpush1.bf16.msra.mxu0 %v5102
    %8695 = vmatprep.subr.bf16.mxu0 %v5127
    %8696 = vmatpush1.bf16.msra.mxu0 %v5126
    %8697 = vmatprep.subr.bf16.mxu0 %v5151
    %8698 = vmatpush1.bf16.msra.mxu0 %v5150
    %8699 = vmatprep.subr.bf16.mxu0 %v5175
    %8700 = vmatpush1.bf16.msra.mxu0 %v5174
    %8701 = vmatprep.subr.bf16.mxu0 %v5199
    %8702 = vmatpush1.bf16.msra.mxu0 %v5198
    %8703 = vmatprep.subr.bf16.mxu0 %v5223
    %8704 = vmatpush1.bf16.msra.mxu0 %v5222
    %8705 = vmatprep.subr.bf16.mxu0 %v5247
    %8706 = vmatpush1.bf16.msra.mxu0 %v5246
    %8707 = vmatprep.subr.bf16.mxu0 %v5271
    %8708 = vmatpush1.bf16.msra.mxu0 %v5270
    %8709 = vmatprep.subr.bf16.mxu0 %v5295
    %8710 = vmatpush1.bf16.msra.mxu0 %v5294
    %8711 = vmatprep.subr.bf16.mxu0 %v5319
    %8712 = vmatpush1.bf16.msra.mxu0 %v5318
    %8713 = vmatprep.subr.bf16.mxu0 %v5343
    %8714 = vmatpush1.bf16.msra.mxu0 %v5342
    %8715 = vmatprep.mubr.bf16.mxu0 %v178
    %8716 = vmatmul.mubr.bf16.gmra.mrb[0].mxu0 %v177
    %v8717 = vpop.f32.mrb[0].mxu0
    %v8718 = vadd.f32 %v1475, %v8717
    %v8719 = vpop.f32.mrb[0].mxu0
    %v8720 = vadd.f32 %v1479, %v8719
    %v8721 = vpop.f32.mrb[0].mxu0
    %v8722 = vadd.f32 %v1475, %v8721
    %v8723 = vpop.f32.mrb[0].mxu0
    %v8724 = vadd.f32 %v1479, %v8723
    %8725 = vdwg.mxu0
    %8726 = vmatprep.subr.bf16.mxu0 %v5367
    %8727 = vmatpush1.bf16.msra.mxu0 %v5366
    %8728 = vmatprep.subr.bf16.mxu0 %v5391
    %8729 = vmatpush1.bf16.msra.mxu0 %v5390
    %8730 = vmatprep.subr.bf16.mxu0 %v5415
    %8731 = vmatpush1.bf16.msra.mxu0 %v5414
    %8732 = vmatprep.subr.bf16.mxu0 %v5439
    %8733 = vmatpush1.bf16.msra.mxu0 %v5438
    %8734 = vmatprep.subr.bf16.mxu0 %v5463
    %8735 = vmatpush1.bf16.msra.mxu0 %v5462
    %8736 = vmatprep.subr.bf16.mxu0 %v5487
    %8737 = vmatpush1.bf16.msra.mxu0 %v5486
    %8738 = vmatprep.subr.bf16.mxu0 %v5511
    %8739 = vmatpush1.bf16.msra.mxu0 %v5510
    %8740 = vmatprep.subr.bf16.mxu0 %v5535
    %8741 = vmatpush1.bf16.msra.mxu0 %v5534
    %8742 = vmatprep.subr.bf16.mxu0 %v5559
    %8743 = vmatpush1.bf16.msra.mxu0 %v5558
    %8744 = vmatprep.subr.bf16.mxu0 %v5583
    %8745 = vmatpush1.bf16.msra.mxu0 %v5582
    %8746 = vmatprep.subr.bf16.mxu0 %v5607
    %8747 = vmatpush1.bf16.msra.mxu0 %v5606
    %8748 = vmatprep.subr.bf16.mxu0 %v5631
    %8749 = vmatpush1.bf16.msra.mxu0 %v5630
    %8750 = vmatprep.subr.bf16.mxu0 %v5655
    %8751 = vmatpush1.bf16.msra.mxu0 %v5654
    %8752 = vmatprep.subr.bf16.mxu0 %v5679
    %8753 = vmatpush1.bf16.msra.mxu0 %v5678
    %8754 = vmatprep.subr.bf16.mxu0 %v5703
    %8755 = vmatpush1.bf16.msra.mxu0 %v5702
    %8756 = vmatprep.subr.bf16.mxu0 %v5727
    %8757 = vmatpush1.bf16.msra.mxu0 %v5726
    %8758 = vmatprep.mubr.bf16.mxu0 %v180
    %8759 = vmatmul.mubr.bf16.gmra.mrb[0].mxu0 %v179
    %v8760 = vpop.f32.mrb[0].mxu0
    %v8761 = vadd.f32 %v8718, %v8760
    %v8762 = vpop.f32.mrb[0].mxu0
    %v8763 = vadd.f32 %v8720, %v8762
    %v8764 = vpop.f32.mrb[0].mxu0
    %v8765 = vadd.f32 %v8722, %v8764
    %v8766 = vpop.f32.mrb[0].mxu0
    %v8767 = vadd.f32 %v8724, %v8766
    %8768 = vdwg.mxu0
    %8769 = vmatprep.subr.bf16.mxu0 %v5751
    %8770 = vmatpush1.bf16.msra.mxu0 %v5750
    %8771 = vmatprep.subr.bf16.mxu0 %v5775
    %8772 = vmatpush1.bf16.msra.mxu0 %v5774
    %8773 = vmatprep.subr.bf16.mxu0 %v5799
    %8774 = vmatpush1.bf16.msra.mxu0 %v5798
    %8775 = vmatprep.subr.bf16.mxu0 %v5823
    %8776 = vmatpush1.bf16.msra.mxu0 %v5822
    %8777 = vmatprep.subr.bf16.mxu0 %v5847
    %8778 = vmatpush1.bf16.msra.mxu0 %v5846
    %8779 = vmatprep.subr.bf16.mxu0 %v5871
    %8780 = vmatpush1.bf16.msra.mxu0 %v5870
    %8781 = vmatprep.subr.bf16.mxu0 %v5895
    %8782 = vmatpush1.bf16.msra.mxu0 %v5894
    %8783 = vmatprep.subr.bf16.mxu0 %v5919
    %8784 = vmatpush1.bf16.msra.mxu0 %v5918
    %8785 = vmatprep.subr.bf16.mxu0 %v5943
    %8786 = vmatpush1.bf16.msra.mxu0 %v5942
    %8787 = vmatprep.subr.bf16.mxu0 %v5967
    %8788 = vmatpush1.bf16.msra.mxu0 %v5966
    %8789 = vmatprep.subr.bf16.mxu0 %v5991
    %8790 = vmatpush1.bf16.msra.mxu0 %v5990
    %8791 = vmatprep.subr.bf16.mxu0 %v6015
    %8792 = vmatpush1.bf16.msra.mxu0 %v6014
    %8793 = vmatprep.subr.bf16.mxu0 %v6039
    %8794 = vmatpush1.bf16.msra.mxu0 %v6038
    %8795 = vmatprep.subr.bf16.mxu0 %v6063
    %8796 = vmatpush1.bf16.msra.mxu0 %v6062
    %8797 = vmatprep.subr.bf16.mxu0 %v6087
    %8798 = vmatpush1.bf16.msra.mxu0 %v6086
    %8799 = vmatprep.subr.bf16.mxu0 %v6111
    %8800 = vmatpush1.bf16.msra.mxu0 %v6110
    %8801 = vmatprep.mubr.bf16.mxu0 %v182
    %8802 = vmatmul.mubr.bf16.gmra.mrb[0].mxu0 %v181
    %v8803 = vpop.f32.mrb[0].mxu0
    %v8804 = vadd.f32 %v8761, %v8803
    %v8805 = vpop.f32.mrb[0].mxu0
    %v8806 = vadd.f32 %v8763, %v8805
    %v8807 = vpop.f32.mrb[0].mxu0
    %v8808 = vadd.f32 %v8765, %v8807
    %v8809 = vpop.f32.mrb[0].mxu0
    %v8810 = vadd.f32 %v8767, %v8809
    %8811 = vdwg.mxu0
    %8812 = vmatprep.subr.mxu0 %v7903
    %8813 = vmatpush1.xpose.msra.mxu0 %v7901
    %8814 = vmatprep.subr.mxu0 0.0
    %8815 = vmatpush1.xpose.msra.mxu0 0.0
    %8816 = vmatprep.subr.mxu0 0.0
    %8817 = vmatpush1.xpose.msra.mxu0 0.0
    %8818 = vmatprep.subr.mxu0 0.0
    %8819 = vmatpush1.xpose.msra.mxu0 0.0
    %8820 = vmatprep.subr.mxu0 0.0
    %8821 = vmatpush1.xpose.msra.mxu0 0.0
    %8822 = vmatprep.subr.mxu0 0.0
    %8823 = vmatpush1.xpose.msra.mxu0 0.0
    %8824 = vmatprep.subr.mxu0 0.0
    %8825 = vmatpush1.xpose.msra.mxu0 0.0
    %8826 = vmatprep.subr.mxu0 0.0
    %8827 = vmatpush1.xpose.msra.mxu0 0.0
    %8828 = vmatprep.subr.mxu0 0.0
    %8829 = vmatpush1.xpose.msra.mxu0 0.0
    %8830 = vmatprep.subr.mxu0 0.0
    %8831 = vmatpush1.xpose.msra.mxu0 0.0
    %8832 = vmatprep.subr.mxu0 0.0
    %8833 = vmatpush1.xpose.msra.mxu0 0.0
    %8834 = vmatprep.subr.mxu0 0.0
    %8835 = vmatpush1.xpose.msra.mxu0 0.0
    %8836 = vmatprep.subr.mxu0 0.0
    %8837 = vmatpush1.xpose.msra.mxu0 0.0
    %8838 = vmatprep.subr.mxu0 0.0
    %8839 = vmatpush1.xpose.msra.mxu0 0.0
    %8840 = vmatprep.subr.mxu0 0.0
    %8841 = vmatpush1.xpose.msra.mxu0 0.0
    %8842 = vmatprep.subr.mxu0 0.0
    %8843 = vmatpush1.xpose.msra.mxu0 0.0
    %8844 = vmatprep.subr.mxu0 0.0
    %8845 = vmatpush1.xpose.msra.mxu0 0.0
    %8846 = vmatprep.subr.mxu0 0.0
    %8847 = vmatpush1.xpose.msra.mxu0 0.0
    %8848 = vmatprep.subr.mxu0 0.0
    %8849 = vmatpush1.xpose.msra.mxu0 0.0
    %8850 = vmatprep.subr.mxu0 0.0
    %8851 = vmatpush1.xpose.msra.mxu0 0.0
    %8852 = vmatprep.subr.mxu0 0.0
    %8853 = vmatpush1.xpose.msra.mxu0 0.0
    %8854 = vmatprep.subr.mxu0 0.0
    %8855 = vmatpush1.xpose.msra.mxu0 0.0
    %8856 = vmatprep.subr.mxu0 0.0
    %8857 = vmatpush1.xpose.msra.mxu0 0.0
    %8858 = vmatprep.subr.mxu0 0.0
    %8859 = vmatpush1.xpose.msra.mxu0 0.0
    %8860 = vmatprep.subr.mxu0 0.0
    %8861 = vmatpush1.xpose.msra.mxu0 0.0
    %8862 = vmatprep.subr.mxu0 0.0
    %8863 = vmatpush1.xpose.msra.mxu0 0.0
    %8864 = vmatprep.subr.mxu0 0.0
    %8865 = vmatpush1.xpose.msra.mxu0 0.0
    %8866 = vmatprep.subr.mxu0 0.0
    %8867 = vmatpush1.xpose.msra.mxu0 0.0
    %8868 = vmatprep.subr.mxu0 0.0
    %8869 = vmatpush1.xpose.msra.mxu0 0.0
    %8870 = vmatprep.subr.mxu0 0.0
    %8871 = vmatpush1.xpose.msra.mxu0 0.0
    %8872 = vmatprep.subr.mxu0 0.0
    %8873 = vmatpush1.xpose.msra.mxu0 0.0
    %8874 = vmatprep.subr.mxu0 0.0
    %8875 = vmatpush1.xpose.msra.mxu0 0.0
    %8876 = vmatprep.mubr.f32.mxu0 %v7387
    %8877 = vmatmul.mubr.f32.gmra.mrb[0].mxu0 %v7385
    %v8878 = vpop.f32.mrb[0].mxu0
    %v8879 = vadd.f32 %v224, %v8878
    %v8880 = vpop.f32.mrb[0].mxu0
    %8881 = vdwg.mxu0
    %8882 = vmatprep.subr.mxu0 %v7907
    %8883 = vmatpush1.xpose.msra.mxu0 %v7905
    %8884 = vmatprep.subr.mxu0 0.0
    %8885 = vmatpush1.xpose.msra.mxu0 0.0
    %8886 = vmatprep.subr.mxu0 0.0
    %8887 = vmatpush1.xpose.msra.mxu0 0.0
    %8888 = vmatprep.subr.mxu0 0.0
    %8889 = vmatpush1.xpose.msra.mxu0 0.0
    %8890 = vmatprep.subr.mxu0 0.0
    %8891 = vmatpush1.xpose.msra.mxu0 0.0
    %8892 = vmatprep.subr.mxu0 0.0
    %8893 = vmatpush1.xpose.msra.mxu0 0.0
    %8894 = vmatprep.subr.mxu0 0.0
    %8895 = vmatpush1.xpose.msra.mxu0 0.0
    %8896 = vmatprep.subr.mxu0 0.0
    %8897 = vmatpush1.xpose.msra.mxu0 0.0
    %8898 = vmatprep.subr.mxu0 0.0
    %8899 = vmatpush1.xpose.msra.mxu0 0.0
    %8900 = vmatprep.subr.mxu0 0.0
    %8901 = vmatpush1.xpose.msra.mxu0 0.0
    %8902 = vmatprep.subr.mxu0 0.0
    %8903 = vmatpush1.xpose.msra.mxu0 0.0
    %8904 = vmatprep.subr.mxu0 0.0
    %8905 = vmatpush1.xpose.msra.mxu0 0.0
    %8906 = vmatprep.subr.mxu0 0.0
    %8907 = vmatpush1.xpose.msra.mxu0 0.0
    %8908 = vmatprep.subr.mxu0 0.0
    %8909 = vmatpush1.xpose.msra.mxu0 0.0
    %8910 = vmatprep.subr.mxu0 0.0
    %8911 = vmatpush1.xpose.msra.mxu0 0.0
    %8912 = vmatprep.subr.mxu0 0.0
    %8913 = vmatpush1.xpose.msra.mxu0 0.0
    %8914 = vmatprep.subr.mxu0 0.0
    %8915 = vmatpush1.xpose.msra.mxu0 0.0
    %8916 = vmatprep.subr.mxu0 0.0
    %8917 = vmatpush1.xpose.msra.mxu0 0.0
    %8918 = vmatprep.subr.mxu0 0.0
    %8919 = vmatpush1.xpose.msra.mxu0 0.0
    %8920 = vmatprep.subr.mxu0 0.0
    %8921 = vmatpush1.xpose.msra.mxu0 0.0
    %8922 = vmatprep.subr.mxu0 0.0
    %8923 = vmatpush1.xpose.msra.mxu0 0.0
    %8924 = vmatprep.subr.mxu0 0.0
    %8925 = vmatpush1.xpose.msra.mxu0 0.0
    %8926 = vmatprep.subr.mxu0 0.0
    %8927 = vmatpush1.xpose.msra.mxu0 0.0
    %8928 = vmatprep.subr.mxu0 0.0
    %8929 = vmatpush1.xpose.msra.mxu0 0.0
    %8930 = vmatprep.subr.mxu0 0.0
    %8931 = vmatpush1.xpose.msra.mxu0 0.0
    %8932 = vmatprep.subr.mxu0 0.0
    %8933 = vmatpush1.xpose.msra.mxu0 0.0
    %8934 = vmatprep.subr.mxu0 0.0
    %8935 = vmatpush1.xpose.msra.mxu0 0.0
    %8936 = vmatprep.subr.mxu0 0.0
    %8937 = vmatpush1.xpose.msra.mxu0 0.0
    %8938 = vmatprep.subr.mxu0 0.0
    %8939 = vmatpush1.xpose.msra.mxu0 0.0
    %8940 = vmatprep.subr.mxu0 0.0
    %8941 = vmatpush1.xpose.msra.mxu0 0.0
    %8942 = vmatprep.subr.mxu0 0.0
    %8943 = vmatpush1.xpose.msra.mxu0 0.0
    %8944 = vmatprep.subr.mxu0 0.0
    %8945 = vmatpush1.xpose.msra.mxu0 0.0
    %8946 = vmatprep.mubr.f32.mxu0 %v7391
    %8947 = vmatmul.mubr.f32.gmra.mrb[0].mxu0 %v7389
    %v8948 = vpop.f32.mrb[0].mxu0
    %v8949 = vadd.f32 %v225, %v8948
    %v8950 = vpop.f32.mrb[0].mxu0
    %8951 = vdwg.mxu0
    %vm8952 = vcmask 64512
    %v8953 = vsel %vm8952, %v8879, -inf
    %8954 = vmax.xlane.f32.xlu0 %v8953
    %v8955 = vpop.xlane.xlu0 %8954
    %v8956 = vsel %vm8952, %v8949, -inf
    %8957 = vmax.xlane.f32.xlu0 %v8956
    %v8958 = vpop.xlane.xlu0 %8957
    %v8959 = vsub.f32 %v8879, %v8955
    %v8960 = vsub.f32 %v8949, %v8958
    %v8961 = vmul.f32 %v8959, 1.442695
    %v8962 = vpow.pop %v8961
    %v8963 = vmul.f32 %v8960, 1.442695
    %v8964 = vpow.pop %v8963
    %v8965 = vsel %vm8952, %v8962, 0.0
    %8966 = vadd.xlane.f32.xlu0 %v8965
    %v8967 = vpop.xlane.xlu0 %8966
    %v8968 = vsel %vm8952, %v8964, 0.0
    %8969 = vadd.xlane.f32.xlu0 %v8968
    %v8970 = vpop.xlane.xlu0 %8969
    %v8971 = vrcp.pop %v8967
    %v8972 = vrcp.pop %v8970
    %v8973 = vmul.f32 %v8962, %v8971
    %v8974 = vmul.f32 %v8964, %v8972
    %v8976 = vsel %vm8952, %v8973, 0
    %8978 = vmatprep.subr.mxu0 %v8419
    %8979 = vmatpush1.msra.mxu0 %v8417
    %8980 = vmatprep.subr.mxu0 0.0
    %8981 = vmatpush1.msra.mxu0 0.0
    %8982 = vmatprep.subr.mxu0 0.0
    %8983 = vmatpush1.msra.mxu0 0.0
    %8984 = vmatprep.subr.mxu0 0.0
    %8985 = vmatpush1.msra.mxu0 0.0
    %8986 = vmatprep.subr.mxu0 0.0
    %8987 = vmatpush1.msra.mxu0 0.0
    %8988 = vmatprep.subr.mxu0 0.0
    %8989 = vmatpush1.msra.mxu0 0.0
    %8990 = vmatprep.subr.mxu0 0.0
    %8991 = vmatpush1.msra.mxu0 0.0
    %8992 = vmatprep.subr.mxu0 0.0
    %8993 = vmatpush1.msra.mxu0 0.0
    %8994 = vmatprep.subr.mxu0 0.0
    %8995 = vmatpush1.msra.mxu0 0.0
    %8996 = vmatprep.subr.mxu0 0.0
    %8997 = vmatpush1.msra.mxu0 0.0
    %8998 = vmatprep.subr.mxu0 0.0
    %8999 = vmatpush1.msra.mxu0 0.0
    %9000 = vmatprep.subr.mxu0 0.0
    %9001 = vmatpush1.msra.mxu0 0.0
    %9002 = vmatprep.subr.mxu0 0.0
    %9003 = vmatpush1.msra.mxu0 0.0
    %9004 = vmatprep.subr.mxu0 0.0
    %9005 = vmatpush1.msra.mxu0 0.0
    %9006 = vmatprep.subr.mxu0 0.0
    %9007 = vmatpush1.msra.mxu0 0.0
    %9008 = vmatprep.subr.mxu0 0.0
    %9009 = vmatpush1.msra.mxu0 0.0
    %9010 = vmatprep.subr.mxu0 0.0
    %9011 = vmatpush1.msra.mxu0 0.0
    %9012 = vmatprep.subr.mxu0 0.0
    %9013 = vmatpush1.msra.mxu0 0.0
    %9014 = vmatprep.subr.mxu0 0.0
    %9015 = vmatpush1.msra.mxu0 0.0
    %9016 = vmatprep.subr.mxu0 0.0
    %9017 = vmatpush1.msra.mxu0 0.0
    %9018 = vmatprep.subr.mxu0 0.0
    %9019 = vmatpush1.msra.mxu0 0.0
    %9020 = vmatprep.subr.mxu0 0.0
    %9021 = vmatpush1.msra.mxu0 0.0
    %9022 = vmatprep.subr.mxu0 0.0
    %9023 = vmatpush1.msra.mxu0 0.0
    %9024 = vmatprep.subr.mxu0 0.0
    %9025 = vmatpush1.msra.mxu0 0.0
    %9026 = vmatprep.subr.mxu0 0.0
    %9027 = vmatpush1.msra.mxu0 0.0
    %9028 = vmatprep.subr.mxu0 0.0
    %9029 = vmatpush1.msra.mxu0 0.0
    %9030 = vmatprep.subr.mxu0 0.0
    %9031 = vmatpush1.msra.mxu0 0.0
    %9032 = vmatprep.subr.mxu0 0.0
    %9033 = vmatpush1.msra.mxu0 0.0
    %9034 = vmatprep.subr.mxu0 0.0
    %9035 = vmatpush1.msra.mxu0 0.0
    %9036 = vmatprep.subr.mxu0 0.0
    %9037 = vmatpush1.msra.mxu0 0.0
    %9038 = vmatprep.subr.mxu0 0.0
    %9039 = vmatpush1.msra.mxu0 0.0
    %9040 = vmatprep.subr.mxu0 0.0
    %9041 = vmatpush1.msra.mxu0 0.0
    %9042 = vmatprep.mubr.f32.mxu0 0.0
    %9043 = vmatmul.mubr.f32.gmra.mrb[0].mxu0 %v8976
    %v9044 = vpop.f32.mrb[0].mxu0
    %v9045 = vadd.f32 0.0, %v9044
    %v9046 = vpop.f32.mrb[0].mxu0
    %v9047 = vadd.f32 0.0, %v9046
    %9048 = vdwg.mxu0
    %v9050 = vsel %vm8952, %v8974, 0
    %9052 = vmatprep.subr.mxu0 %v8423
    %9053 = vmatpush1.msra.mxu0 %v8421
    %9054 = vmatprep.subr.mxu0 0.0
    %9055 = vmatpush1.msra.mxu0 0.0
    %9056 = vmatprep.subr.mxu0 0.0
    %9057 = vmatpush1.msra.mxu0 0.0
    %9058 = vmatprep.subr.mxu0 0.0
    %9059 = vmatpush1.msra.mxu0 0.0
    %9060 = vmatprep.subr.mxu0 0.0
    %9061 = vmatpush1.msra.mxu0 0.0
    %9062 = vmatprep.subr.mxu0 0.0
    %9063 = vmatpush1.msra.mxu0 0.0
    %9064 = vmatprep.subr.mxu0 0.0
    %9065 = vmatpush1.msra.mxu0 0.0
    %9066 = vmatprep.subr.mxu0 0.0
    %9067 = vmatpush1.msra.mxu0 0.0
    %9068 = vmatprep.subr.mxu0 0.0
    %9069 = vmatpush1.msra.mxu0 0.0
    %9070 = vmatprep.subr.mxu0 0.0
    %9071 = vmatpush1.msra.mxu0 0.0
    %9072 = vmatprep.subr.mxu0 0.0
    %9073 = vmatpush1.msra.mxu0 0.0
    %9074 = vmatprep.subr.mxu0 0.0
    %9075 = vmatpush1.msra.mxu0 0.0
    %9076 = vmatprep.subr.mxu0 0.0
    %9077 = vmatpush1.msra.mxu0 0.0
    %9078 = vmatprep.subr.mxu0 0.0
    %9079 = vmatpush1.msra.mxu0 0.0
    %9080 = vmatprep.subr.mxu0 0.0
    %9081 = vmatpush1.msra.mxu0 0.0
    %9082 = vmatprep.subr.mxu0 0.0
    %9083 = vmatpush1.msra.mxu0 0.0
    %9084 = vmatprep.subr.mxu0 0.0
    %9085 = vmatpush1.msra.mxu0 0.0
    %9086 = vmatprep.subr.mxu0 0.0
    %9087 = vmatpush1.msra.mxu0 0.0
    %9088 = vmatprep.subr.mxu0 0.0
    %9089 = vmatpush1.msra.mxu0 0.0
    %9090 = vmatprep.subr.mxu0 0.0
    %9091 = vmatpush1.msra.mxu0 0.0
    %9092 = vmatprep.subr.mxu0 0.0
    %9093 = vmatpush1.msra.mxu0 0.0
    %9094 = vmatprep.subr.mxu0 0.0
    %9095 = vmatpush1.msra.mxu0 0.0
    %9096 = vmatprep.subr.mxu0 0.0
    %9097 = vmatpush1.msra.mxu0 0.0
    %9098 = vmatprep.subr.mxu0 0.0
    %9099 = vmatpush1.msra.mxu0 0.0
    %9100 = vmatprep.subr.mxu0 0.0
    %9101 = vmatpush1.msra.mxu0 0.0
    %9102 = vmatprep.subr.mxu0 0.0
    %9103 = vmatpush1.msra.mxu0 0.0
    %9104 = vmatprep.subr.mxu0 0.0
    %9105 = vmatpush1.msra.mxu0 0.0
    %9106 = vmatprep.subr.mxu0 0.0
    %9107 = vmatpush1.msra.mxu0 0.0
    %9108 = vmatprep.subr.mxu0 0.0
    %9109 = vmatpush1.msra.mxu0 0.0
    %9110 = vmatprep.subr.mxu0 0.0
    %9111 = vmatpush1.msra.mxu0 0.0
    %9112 = vmatprep.subr.mxu0 0.0
    %9113 = vmatpush1.msra.mxu0 0.0
    %9114 = vmatprep.subr.mxu0 0.0
    %9115 = vmatpush1.msra.mxu0 0.0
    %9116 = vmatprep.mubr.f32.mxu0 0.0
    %9117 = vmatmul.mubr.f32.gmra.mrb[0].mxu0 %v9050
    %v9118 = vpop.f32.mrb[0].mxu0
    %v9119 = vadd.f32 0.0, %v9118
    %v9120 = vpop.f32.mrb[0].mxu0
    %v9121 = vadd.f32 0.0, %v9120
    %9122 = vdwg.mxu0
    %9123 = vmatprep.subr.mxu0 %v8032
    %9124 = vmatpush1.xpose.msra.mxu0 %v8030
    %9125 = vmatprep.subr.mxu0 0.0
    %9126 = vmatpush1.xpose.msra.mxu0 0.0
    %9127 = vmatprep.subr.mxu0 0.0
    %9128 = vmatpush1.xpose.msra.mxu0 0.0
    %9129 = vmatprep.subr.mxu0 0.0
    %9130 = vmatpush1.xpose.msra.mxu0 0.0
    %9131 = vmatprep.subr.mxu0 0.0
    %9132 = vmatpush1.xpose.msra.mxu0 0.0
    %9133 = vmatprep.subr.mxu0 0.0
    %9134 = vmatpush1.xpose.msra.mxu0 0.0
    %9135 = vmatprep.subr.mxu0 0.0
    %9136 = vmatpush1.xpose.msra.mxu0 0.0
    %9137 = vmatprep.subr.mxu0 0.0
    %9138 = vmatpush1.xpose.msra.mxu0 0.0
    %9139 = vmatprep.subr.mxu0 0.0
    %9140 = vmatpush1.xpose.msra.mxu0 0.0
    %9141 = vmatprep.subr.mxu0 0.0
    %9142 = vmatpush1.xpose.msra.mxu0 0.0
    %9143 = vmatprep.subr.mxu0 0.0
    %9144 = vmatpush1.xpose.msra.mxu0 0.0
    %9145 = vmatprep.subr.mxu0 0.0
    %9146 = vmatpush1.xpose.msra.mxu0 0.0
    %9147 = vmatprep.subr.mxu0 0.0
    %9148 = vmatpush1.xpose.msra.mxu0 0.0
    %9149 = vmatprep.subr.mxu0 0.0
    %9150 = vmatpush1.xpose.msra.mxu0 0.0
    %9151 = vmatprep.subr.mxu0 0.0
    %9152 = vmatpush1.xpose.msra.mxu0 0.0
    %9153 = vmatprep.subr.mxu0 0.0
    %9154 = vmatpush1.xpose.msra.mxu0 0.0
    %9155 = vmatprep.subr.mxu0 0.0
    %9156 = vmatpush1.xpose.msra.mxu0 0.0
    %9157 = vmatprep.subr.mxu0 0.0
    %9158 = vmatpush1.xpose.msra.mxu0 0.0
    %9159 = vmatprep.subr.mxu0 0.0
    %9160 = vmatpush1.xpose.msra.mxu0 0.0
    %9161 = vmatprep.subr.mxu0 0.0
    %9162 = vmatpush1.xpose.msra.mxu0 0.0
    %9163 = vmatprep.subr.mxu0 0.0
    %9164 = vmatpush1.xpose.msra.mxu0 0.0
    %9165 = vmatprep.subr.mxu0 0.0
    %9166 = vmatpush1.xpose.msra.mxu0 0.0
    %9167 = vmatprep.subr.mxu0 0.0
    %9168 = vmatpush1.xpose.msra.mxu0 0.0
    %9169 = vmatprep.subr.mxu0 0.0
    %9170 = vmatpush1.xpose.msra.mxu0 0.0
    %9171 = vmatprep.subr.mxu0 0.0
    %9172 = vmatpush1.xpose.msra.mxu0 0.0
    %9173 = vmatprep.subr.mxu0 0.0
    %9174 = vmatpush1.xpose.msra.mxu0 0.0
    %9175 = vmatprep.subr.mxu0 0.0
    %9176 = vmatpush1.xpose.msra.mxu0 0.0
    %9177 = vmatprep.subr.mxu0 0.0
    %9178 = vmatpush1.xpose.msra.mxu0 0.0
    %9179 = vmatprep.subr.mxu0 0.0
    %9180 = vmatpush1.xpose.msra.mxu0 0.0
    %9181 = vmatprep.subr.mxu0 0.0
    %9182 = vmatpush1.xpose.msra.mxu0 0.0
    %9183 = vmatprep.subr.mxu0 0.0
    %9184 = vmatpush1.xpose.msra.mxu0 0.0
    %9185 = vmatprep.subr.mxu0 0.0
    %9186 = vmatpush1.xpose.msra.mxu0 0.0
    %9187 = vmatprep.mubr.f32.mxu0 %v7516
    %9188 = vmatmul.mubr.f32.gmra.mrb[0].mxu0 %v7514
    %v9189 = vpop.f32.mrb[0].mxu0
    %v9190 = vadd.f32 %v224, %v9189
    %v9191 = vpop.f32.mrb[0].mxu0
    %9192 = vdwg.mxu0
    %9193 = vmatprep.subr.mxu0 %v8036
    %9194 = vmatpush1.xpose.msra.mxu0 %v8034
    %9195 = vmatprep.subr.mxu0 0.0
    %9196 = vmatpush1.xpose.msra.mxu0 0.0
    %9197 = vmatprep.subr.mxu0 0.0
    %9198 = vmatpush1.xpose.msra.mxu0 0.0
    %9199 = vmatprep.subr.mxu0 0.0
    %9200 = vmatpush1.xpose.msra.mxu0 0.0
    %9201 = vmatprep.subr.mxu0 0.0
    %9202 = vmatpush1.xpose.msra.mxu0 0.0
    %9203 = vmatprep.subr.mxu0 0.0
    %9204 = vmatpush1.xpose.msra.mxu0 0.0
    %9205 = vmatprep.subr.mxu0 0.0
    %9206 = vmatpush1.xpose.msra.mxu0 0.0
    %9207 = vmatprep.subr.mxu0 0.0
    %9208 = vmatpush1.xpose.msra.mxu0 0.0
    %9209 = vmatprep.subr.mxu0 0.0
    %9210 = vmatpush1.xpose.msra.mxu0 0.0
    %9211 = vmatprep.subr.mxu0 0.0
    %9212 = vmatpush1.xpose.msra.mxu0 0.0
    %9213 = vmatprep.subr.mxu0 0.0
    %9214 = vmatpush1.xpose.msra.mxu0 0.0
    %9215 = vmatprep.subr.mxu0 0.0
    %9216 = vmatpush1.xpose.msra.mxu0 0.0
    %9217 = vmatprep.subr.mxu0 0.0
    %9218 = vmatpush1.xpose.msra.mxu0 0.0
    %9219 = vmatprep.subr.mxu0 0.0
    %9220 = vmatpush1.xpose.msra.mxu0 0.0
    %9221 = vmatprep.subr.mxu0 0.0
    %9222 = vmatpush1.xpose.msra.mxu0 0.0
    %9223 = vmatprep.subr.mxu0 0.0
    %9224 = vmatpush1.xpose.msra.mxu0 0.0
    %9225 = vmatprep.subr.mxu0 0.0
    %9226 = vmatpush1.xpose.msra.mxu0 0.0
    %9227 = vmatprep.subr.mxu0 0.0
    %9228 = vmatpush1.xpose.msra.mxu0 0.0
    %9229 = vmatprep.subr.mxu0 0.0
    %9230 = vmatpush1.xpose.msra.mxu0 0.0
    %9231 = vmatprep.subr.mxu0 0.0
    %9232 = vmatpush1.xpose.msra.mxu0 0.0
    %9233 = vmatprep.subr.mxu0 0.0
    %9234 = vmatpush1.xpose.msra.mxu0 0.0
    %9235 = vmatprep.subr.mxu0 0.0
    %9236 = vmatpush1.xpose.msra.mxu0 0.0
    %9237 = vmatprep.subr.mxu0 0.0
    %9238 = vmatpush1.xpose.msra.mxu0 0.0
    %9239 = vmatprep.subr.mxu0 0.0
    %9240 = vmatpush1.xpose.msra.mxu0 0.0
    %9241 = vmatprep.subr.mxu0 0.0
    %9242 = vmatpush1.xpose.msra.mxu0 0.0
    %9243 = vmatprep.subr.mxu0 0.0
    %9244 = vmatpush1.xpose.msra.mxu0 0.0
    %9245 = vmatprep.subr.mxu0 0.0
    %9246 = vmatpush1.xpose.msra.mxu0 0.0
    %9247 = vmatprep.subr.mxu0 0.0
    %9248 = vmatpush1.xpose.msra.mxu0 0.0
    %9249 = vmatprep.subr.mxu0 0.0
    %9250 = vmatpush1.xpose.msra.mxu0 0.0
    %9251 = vmatprep.subr.mxu0 0.0
    %9252 = vmatpush1.xpose.msra.mxu0 0.0
    %9253 = vmatprep.subr.mxu0 0.0
    %9254 = vmatpush1.xpose.msra.mxu0 0.0
    %9255 = vmatprep.subr.mxu0 0.0
    %9256 = vmatpush1.xpose.msra.mxu0 0.0
    %9257 = vmatprep.mubr.f32.mxu0 %v7520
    %9258 = vmatmul.mubr.f32.gmra.mrb[0].mxu0 %v7518
    %v9259 = vpop.f32.mrb[0].mxu0
    %v9260 = vadd.f32 %v225, %v9259
    %v9261 = vpop.f32.mrb[0].mxu0
    %9262 = vdwg.mxu0
    %v9263 = vsel %vm8952, %v9190, -inf
    %9264 = vmax.xlane.f32.xlu0 %v9263
    %v9265 = vpop.xlane.xlu0 %9264
    %v9266 = vsel %vm8952, %v9260, -inf
    %9267 = vmax.xlane.f32.xlu0 %v9266
    %v9268 = vpop.xlane.xlu0 %9267
    %v9269 = vsub.f32 %v9190, %v9265
    %v9270 = vsub.f32 %v9260, %v9268
    %v9271 = vmul.f32 %v9269, 1.442695
    %v9272 = vpow.pop %v9271
    %v9273 = vmul.f32 %v9270, 1.442695
    %v9274 = vpow.pop %v9273
    %v9275 = vsel %vm8952, %v9272, 0.0
    %9276 = vadd.xlane.f32.xlu0 %v9275
    %v9277 = vpop.xlane.xlu0 %9276
    %v9278 = vsel %vm8952, %v9274, 0.0
    %9279 = vadd.xlane.f32.xlu0 %v9278
    %v9280 = vpop.xlane.xlu0 %9279
    %v9281 = vrcp.pop %v9277
    %v9282 = vrcp.pop %v9280
    %v9283 = vmul.f32 %v9272, %v9281
    %v9284 = vmul.f32 %v9274, %v9282
    %v9286 = vsel %vm8952, %v9283, 0
    %9288 = vmatprep.subr.mxu0 %v8548
    %9289 = vmatpush1.msra.mxu0 %v8546
    %9290 = vmatprep.subr.mxu0 0.0
    %9291 = vmatpush1.msra.mxu0 0.0
    %9292 = vmatprep.subr.mxu0 0.0
    %9293 = vmatpush1.msra.mxu0 0.0
    %9294 = vmatprep.subr.mxu0 0.0
    %9295 = vmatpush1.msra.mxu0 0.0
    %9296 = vmatprep.subr.mxu0 0.0
    %9297 = vmatpush1.msra.mxu0 0.0
    %9298 = vmatprep.subr.mxu0 0.0
    %9299 = vmatpush1.msra.mxu0 0.0
    %9300 = vmatprep.subr.mxu0 0.0
    %9301 = vmatpush1.msra.mxu0 0.0
    %9302 = vmatprep.subr.mxu0 0.0
    %9303 = vmatpush1.msra.mxu0 0.0
    %9304 = vmatprep.subr.mxu0 0.0
    %9305 = vmatpush1.msra.mxu0 0.0
    %9306 = vmatprep.subr.mxu0 0.0
    %9307 = vmatpush1.msra.mxu0 0.0
    %9308 = vmatprep.subr.mxu0 0.0
    %9309 = vmatpush1.msra.mxu0 0.0
    %9310 = vmatprep.subr.mxu0 0.0
    %9311 = vmatpush1.msra.mxu0 0.0
    %9312 = vmatprep.subr.mxu0 0.0
    %9313 = vmatpush1.msra.mxu0 0.0
    %9314 = vmatprep.subr.mxu0 0.0
    %9315 = vmatpush1.msra.mxu0 0.0
    %9316 = vmatprep.subr.mxu0 0.0
    %9317 = vmatpush1.msra.mxu0 0.0
    %9318 = vmatprep.subr.mxu0 0.0
    %9319 = vmatpush1.msra.mxu0 0.0
    %9320 = vmatprep.subr.mxu0 0.0
    %9321 = vmatpush1.msra.mxu0 0.0
    %9322 = vmatprep.subr.mxu0 0.0
    %9323 = vmatpush1.msra.mxu0 0.0
    %9324 = vmatprep.subr.mxu0 0.0
    %9325 = vmatpush1.msra.mxu0 0.0
    %9326 = vmatprep.subr.mxu0 0.0
    %9327 = vmatpush1.msra.mxu0 0.0
    %9328 = vmatprep.subr.mxu0 0.0
    %9329 = vmatpush1.msra.mxu0 0.0
    %9330 = vmatprep.subr.mxu0 0.0
    %9331 = vmatpush1.msra.mxu0 0.0
    %9332 = vmatprep.subr.mxu0 0.0
    %9333 = vmatpush1.msra.mxu0 0.0
    %9334 = vmatprep.subr.mxu0 0.0
    %9335 = vmatpush1.msra.mxu0 0.0
    %9336 = vmatprep.subr.mxu0 0.0
    %9337 = vmatpush1.msra.mxu0 0.0
    %9338 = vmatprep.subr.mxu0 0.0
    %9339 = vmatpush1.msra.mxu0 0.0
    %9340 = vmatprep.subr.mxu0 0.0
    %9341 = vmatpush1.msra.mxu0 0.0
    %9342 = vmatprep.subr.mxu0 0.0
    %9343 = vmatpush1.msra.mxu0 0.0
    %9344 = vmatprep.subr.mxu0 0.0
    %9345 = vmatpush1.msra.mxu0 0.0
    %9346 = vmatprep.subr.mxu0 0.0
    %9347 = vmatpush1.msra.mxu0 0.0
    %9348 = vmatprep.subr.mxu0 0.0
    %9349 = vmatpush1.msra.mxu0 0.0
    %9350 = vmatprep.subr.mxu0 0.0
    %9351 = vmatpush1.msra.mxu0 0.0
    %9352 = vmatprep.mubr.f32.mxu0 0.0
    %9353 = vmatmul.mubr.f32.gmra.mrb[0].mxu0 %v9286
    %v9354 = vpop.f32.mrb[0].mxu0
    %v9355 = vadd.f32 0.0, %v9354
    %v9356 = vpop.f32.mrb[0].mxu0
    %v9357 = vadd.f32 0.0, %v9356
    %9358 = vdwg.mxu0
    %v9360 = vsel %vm8952, %v9284, 0
    %9362 = vmatprep.subr.mxu0 %v8552
    %9363 = vmatpush1.msra.mxu0 %v8550
    %9364 = vmatprep.subr.mxu0 0.0
    %9365 = vmatpush1.msra.mxu0 0.0
    %9366 = vmatprep.subr.mxu0 0.0
    %9367 = vmatpush1.msra.mxu0 0.0
    %9368 = vmatprep.subr.mxu0 0.0
    %9369 = vmatpush1.msra.mxu0 0.0
    %9370 = vmatprep.subr.mxu0 0.0
    %9371 = vmatpush1.msra.mxu0 0.0
    %9372 = vmatprep.subr.mxu0 0.0
    %9373 = vmatpush1.msra.mxu0 0.0
    %9374 = vmatprep.subr.mxu0 0.0
    %9375 = vmatpush1.msra.mxu0 0.0
    %9376 = vmatprep.subr.mxu0 0.0
    %9377 = vmatpush1.msra.mxu0 0.0
    %9378 = vmatprep.subr.mxu0 0.0
    %9379 = vmatpush1.msra.mxu0 0.0
    %9380 = vmatprep.subr.mxu0 0.0
    %9381 = vmatpush1.msra.mxu0 0.0
    %9382 = vmatprep.subr.mxu0 0.0
    %9383 = vmatpush1.msra.mxu0 0.0
    %9384 = vmatprep.subr.mxu0 0.0
    %9385 = vmatpush1.msra.mxu0 0.0
    %9386 = vmatprep.subr.mxu0 0.0
    %9387 = vmatpush1.msra.mxu0 0.0
    %9388 = vmatprep.subr.mxu0 0.0
    %9389 = vmatpush1.msra.mxu0 0.0
    %9390 = vmatprep.subr.mxu0 0.0
    %9391 = vmatpush1.msra.mxu0 0.0
    %9392 = vmatprep.subr.mxu0 0.0
    %9393 = vmatpush1.msra.mxu0 0.0
    %9394 = vmatprep.subr.mxu0 0.0
    %9395 = vmatpush1.msra.mxu0 0.0
    %9396 = vmatprep.subr.mxu0 0.0
    %9397 = vmatpush1.msra.mxu0 0.0
    %9398 = vmatprep.subr.mxu0 0.0
    %9399 = vmatpush1.msra.mxu0 0.0
    %9400 = vmatprep.subr.mxu0 0.0
    %9401 = vmatpush1.msra.mxu0 0.0
    %9402 = vmatprep.subr.mxu0 0.0
    %9403 = vmatpush1.msra.mxu0 0.0
    %9404 = vmatprep.subr.mxu0 0.0
    %9405 = vmatpush1.msra.mxu0 0.0
    %9406 = vmatprep.subr.mxu0 0.0
    %9407 = vmatpush1.msra.mxu0 0.0
    %9408 = vmatprep.subr.mxu0 0.0
    %9409 = vmatpush1.msra.mxu0 0.0
    %9410 = vmatprep.subr.mxu0 0.0
    %9411 = vmatpush1.msra.mxu0 0.0
    %9412 = vmatprep.subr.mxu0 0.0
    %9413 = vmatpush1.msra.mxu0 0.0
    %9414 = vmatprep.subr.mxu0 0.0
    %9415 = vmatpush1.msra.mxu0 0.0
    %9416 = vmatprep.subr.mxu0 0.0
    %9417 = vmatpush1.msra.mxu0 0.0
    %9418 = vmatprep.subr.mxu0 0.0
    %9419 = vmatpush1.msra.mxu0 0.0
    %9420 = vmatprep.subr.mxu0 0.0
    %9421 = vmatpush1.msra.mxu0 0.0
    %9422 = vmatprep.subr.mxu0 0.0
    %9423 = vmatpush1.msra.mxu0 0.0
    %9424 = vmatprep.subr.mxu0 0.0
    %9425 = vmatpush1.msra.mxu0 0.0
    %9426 = vmatprep.mubr.f32.mxu0 0.0
    %9427 = vmatmul.mubr.f32.gmra.mrb[0].mxu0 %v9360
    %v9428 = vpop.f32.mrb[0].mxu0
    %v9429 = vadd.f32 0.0, %v9428
    %v9430 = vpop.f32.mrb[0].mxu0
    %v9431 = vadd.f32 0.0, %v9430
    %9432 = vdwg.mxu0
    %9433 = vmatprep.subr.mxu0 %v8161
    %9434 = vmatpush1.xpose.msra.mxu0 %v8159
    %9435 = vmatprep.subr.mxu0 0.0
    %9436 = vmatpush1.xpose.msra.mxu0 0.0
    %9437 = vmatprep.subr.mxu0 0.0
    %9438 = vmatpush1.xpose.msra.mxu0 0.0
    %9439 = vmatprep.subr.mxu0 0.0
    %9440 = vmatpush1.xpose.msra.mxu0 0.0
    %9441 = vmatprep.subr.mxu0 0.0
    %9442 = vmatpush1.xpose.msra.mxu0 0.0
    %9443 = vmatprep.subr.mxu0 0.0
    %9444 = vmatpush1.xpose.msra.mxu0 0.0
    %9445 = vmatprep.subr.mxu0 0.0
    %9446 = vmatpush1.xpose.msra.mxu0 0.0
    %9447 = vmatprep.subr.mxu0 0.0
    %9448 = vmatpush1.xpose.msra.mxu0 0.0
    %9449 = vmatprep.subr.mxu0 0.0
    %9450 = vmatpush1.xpose.msra.mxu0 0.0
    %9451 = vmatprep.subr.mxu0 0.0
    %9452 = vmatpush1.xpose.msra.mxu0 0.0
    %9453 = vmatprep.subr.mxu0 0.0
    %9454 = vmatpush1.xpose.msra.mxu0 0.0
    %9455 = vmatprep.subr.mxu0 0.0
    %9456 = vmatpush1.xpose.msra.mxu0 0.0
    %9457 = vmatprep.subr.mxu0 0.0
    %9458 = vmatpush1.xpose.msra.mxu0 0.0
    %9459 = vmatprep.subr.mxu0 0.0
    %9460 = vmatpush1.xpose.msra.mxu0 0.0
    %9461 = vmatprep.subr.mxu0 0.0
    %9462 = vmatpush1.xpose.msra.mxu0 0.0
    %9463 = vmatprep.subr.mxu0 0.0
    %9464 = vmatpush1.xpose.msra.mxu0 0.0
    %9465 = vmatprep.subr.mxu0 0.0
    %9466 = vmatpush1.xpose.msra.mxu0 0.0
    %9467 = vmatprep.subr.mxu0 0.0
    %9468 = vmatpush1.xpose.msra.mxu0 0.0
    %9469 = vmatprep.subr.mxu0 0.0
    %9470 = vmatpush1.xpose.msra.mxu0 0.0
    %9471 = vmatprep.subr.mxu0 0.0
    %9472 = vmatpush1.xpose.msra.mxu0 0.0
    %9473 = vmatprep.subr.mxu0 0.0
    %9474 = vmatpush1.xpose.msra.mxu0 0.0
    %9475 = vmatprep.subr.mxu0 0.0
    %9476 = vmatpush1.xpose.msra.mxu0 0.0
    %9477 = vmatprep.subr.mxu0 0.0
    %9478 = vmatpush1.xpose.msra.mxu0 0.0
    %9479 = vmatprep.subr.mxu0 0.0
    %9480 = vmatpush1.xpose.msra.mxu0 0.0
    %9481 = vmatprep.subr.mxu0 0.0
    %9482 = vmatpush1.xpose.msra.mxu0 0.0
    %9483 = vmatprep.subr.mxu0 0.0
    %9484 = vmatpush1.xpose.msra.mxu0 0.0
    %9485 = vmatprep.subr.mxu0 0.0
    %9486 = vmatpush1.xpose.msra.mxu0 0.0
    %9487 = vmatprep.subr.mxu0 0.0
    %9488 = vmatpush1.xpose.msra.mxu0 0.0
    %9489 = vmatprep.subr.mxu0 0.0
    %9490 = vmatpush1.xpose.msra.mxu0 0.0
    %9491 = vmatprep.subr.mxu0 0.0
    %9492 = vmatpush1.xpose.msra.mxu0 0.0
    %9493 = vmatprep.subr.mxu0 0.0
    %9494 = vmatpush1.xpose.msra.mxu0 0.0
    %9495 = vmatprep.subr.mxu0 0.0
    %9496 = vmatpush1.xpose.msra.mxu0 0.0
    %9497 = vmatprep.mubr.f32.mxu0 %v7645
    %9498 = vmatmul.mubr.f32.gmra.mrb[0].mxu0 %v7643
    %v9499 = vpop.f32.mrb[0].mxu0
    %v9500 = vadd.f32 %v224, %v9499
    %v9501 = vpop.f32.mrb[0].mxu0
    %9502 = vdwg.mxu0
    %9503 = vmatprep.subr.mxu0 %v8165
    %9504 = vmatpush1.xpose.msra.mxu0 %v8163
    %9505 = vmatprep.subr.mxu0 0.0
    %9506 = vmatpush1.xpose.msra.mxu0 0.0
    %9507 = vmatprep.subr.mxu0 0.0
    %9508 = vmatpush1.xpose.msra.mxu0 0.0
    %9509 = vmatprep.subr.mxu0 0.0
    %9510 = vmatpush1.xpose.msra.mxu0 0.0
    %9511 = vmatprep.subr.mxu0 0.0
    %9512 = vmatpush1.xpose.msra.mxu0 0.0
    %9513 = vmatprep.subr.mxu0 0.0
    %9514 = vmatpush1.xpose.msra.mxu0 0.0
    %9515 = vmatprep.subr.mxu0 0.0
    %9516 = vmatpush1.xpose.msra.mxu0 0.0
    %9517 = vmatprep.subr.mxu0 0.0
    %9518 = vmatpush1.xpose.msra.mxu0 0.0
    %9519 = vmatprep.subr.mxu0 0.0
    %9520 = vmatpush1.xpose.msra.mxu0 0.0
    %9521 = vmatprep.subr.mxu0 0.0
    %9522 = vmatpush1.xpose.msra.mxu0 0.0
    %9523 = vmatprep.subr.mxu0 0.0
    %9524 = vmatpush1.xpose.msra.mxu0 0.0
    %9525 = vmatprep.subr.mxu0 0.0
    %9526 = vmatpush1.xpose.msra.mxu0 0.0
    %9527 = vmatprep.subr.mxu0 0.0
    %9528 = vmatpush1.xpose.msra.mxu0 0.0
    %9529 = vmatprep.subr.mxu0 0.0
    %9530 = vmatpush1.xpose.msra.mxu0 0.0
    %9531 = vmatprep.subr.mxu0 0.0
    %9532 = vmatpush1.xpose.msra.mxu0 0.0
    %9533 = vmatprep.subr.mxu0 0.0
    %9534 = vmatpush1.xpose.msra.mxu0 0.0
    %9535 = vmatprep.subr.mxu0 0.0
    %9536 = vmatpush1.xpose.msra.mxu0 0.0
    %9537 = vmatprep.subr.mxu0 0.0
    %9538 = vmatpush1.xpose.msra.mxu0 0.0
    %9539 = vmatprep.subr.mxu0 0.0
    %9540 = vmatpush1.xpose.msra.mxu0 0.0
    %9541 = vmatprep.subr.mxu0 0.0
    %9542 = vmatpush1.xpose.msra.mxu0 0.0
    %9543 = vmatprep.subr.mxu0 0.0
    %9544 = vmatpush1.xpose.msra.mxu0 0.0
    %9545 = vmatprep.subr.mxu0 0.0
    %9546 = vmatpush1.xpose.msra.mxu0 0.0
    %9547 = vmatprep.subr.mxu0 0.0
    %9548 = vmatpush1.xpose.msra.mxu0 0.0
    %9549 = vmatprep.subr.mxu0 0.0
    %9550 = vmatpush1.xpose.msra.mxu0 0.0
    %9551 = vmatprep.subr.mxu0 0.0
    %9552 = vmatpush1.xpose.msra.mxu0 0.0
    %9553 = vmatprep.subr.mxu0 0.0
    %9554 = vmatpush1.xpose.msra.mxu0 0.0
    %9555 = vmatprep.subr.mxu0 0.0
    %9556 = vmatpush1.xpose.msra.mxu0 0.0
    %9557 = vmatprep.subr.mxu0 0.0
    %9558 = vmatpush1.xpose.msra.mxu0 0.0
    %9559 = vmatprep.subr.mxu0 0.0
    %9560 = vmatpush1.xpose.msra.mxu0 0.0
    %9561 = vmatprep.subr.mxu0 0.0
    %9562 = vmatpush1.xpose.msra.mxu0 0.0
    %9563 = vmatprep.subr.mxu0 0.0
    %9564 = vmatpush1.xpose.msra.mxu0 0.0
    %9565 = vmatprep.subr.mxu0 0.0
    %9566 = vmatpush1.xpose.msra.mxu0 0.0
    %9567 = vmatprep.mubr.f32.mxu0 %v7649
    %9568 = vmatmul.mubr.f32.gmra.mrb[0].mxu0 %v7647
    %v9569 = vpop.f32.mrb[0].mxu0
    %v9570 = vadd.f32 %v225, %v9569
    %v9571 = vpop.f32.mrb[0].mxu0
    %9572 = vdwg.mxu0
    %v9573 = vsel %vm8952, %v9500, -inf
    %9574 = vmax.xlane.f32.xlu0 %v9573
    %v9575 = vpop.xlane.xlu0 %9574
    %v9576 = vsel %vm8952, %v9570, -inf
    %9577 = vmax.xlane.f32.xlu0 %v9576
    %v9578 = vpop.xlane.xlu0 %9577
    %v9579 = vsub.f32 %v9500, %v9575
    %v9580 = vsub.f32 %v9570, %v9578
    %v9581 = vmul.f32 %v9579, 1.442695
    %v9582 = vpow.pop %v9581
    %v9583 = vmul.f32 %v9580, 1.442695
    %v9584 = vpow.pop %v9583
    %v9585 = vsel %vm8952, %v9582, 0.0
    %9586 = vadd.xlane.f32.xlu0 %v9585
    %v9587 = vpop.xlane.xlu0 %9586
    %v9588 = vsel %vm8952, %v9584, 0.0
    %9589 = vadd.xlane.f32.xlu0 %v9588
    %v9590 = vpop.xlane.xlu0 %9589
    %v9591 = vrcp.pop %v9587
    %v9592 = vrcp.pop %v9590
    %v9593 = vmul.f32 %v9582, %v9591
    %v9594 = vmul.f32 %v9584, %v9592
    %v9596 = vsel %vm8952, %v9593, 0
    %9598 = vmatprep.subr.mxu0 %v8677
    %9599 = vmatpush1.msra.mxu0 %v8675
    %9600 = vmatprep.subr.mxu0 0.0
    %9601 = vmatpush1.msra.mxu0 0.0
    %9602 = vmatprep.subr.mxu0 0.0
    %9603 = vmatpush1.msra.mxu0 0.0
    %9604 = vmatprep.subr.mxu0 0.0
    %9605 = vmatpush1.msra.mxu0 0.0
    %9606 = vmatprep.subr.mxu0 0.0
    %9607 = vmatpush1.msra.mxu0 0.0
    %9608 = vmatprep.subr.mxu0 0.0
    %9609 = vmatpush1.msra.mxu0 0.0
    %9610 = vmatprep.subr.mxu0 0.0
    %9611 = vmatpush1.msra.mxu0 0.0
    %9612 = vmatprep.subr.mxu0 0.0
    %9613 = vmatpush1.msra.mxu0 0.0
    %9614 = vmatprep.subr.mxu0 0.0
    %9615 = vmatpush1.msra.mxu0 0.0
    %9616 = vmatprep.subr.mxu0 0.0
    %9617 = vmatpush1.msra.mxu0 0.0
    %9618 = vmatprep.subr.mxu0 0.0
    %9619 = vmatpush1.msra.mxu0 0.0
    %9620 = vmatprep.subr.mxu0 0.0
    %9621 = vmatpush1.msra.mxu0 0.0
    %9622 = vmatprep.subr.mxu0 0.0
    %9623 = vmatpush1.msra.mxu0 0.0
    %9624 = vmatprep.subr.mxu0 0.0
    %9625 = vmatpush1.msra.mxu0 0.0
    %9626 = vmatprep.subr.mxu0 0.0
    %9627 = vmatpush1.msra.mxu0 0.0
    %9628 = vmatprep.subr.mxu0 0.0
    %9629 = vmatpush1.msra.mxu0 0.0
    %9630 = vmatprep.subr.mxu0 0.0
    %9631 = vmatpush1.msra.mxu0 0.0
    %9632 = vmatprep.subr.mxu0 0.0
    %9633 = vmatpush1.msra.mxu0 0.0
    %9634 = vmatprep.subr.mxu0 0.0
    %9635 = vmatpush1.msra.mxu0 0.0
    %9636 = vmatprep.subr.mxu0 0.0
    %9637 = vmatpush1.msra.mxu0 0.0
    %9638 = vmatprep.subr.mxu0 0.0
    %9639 = vmatpush1.msra.mxu0 0.0
    %9640 = vmatprep.subr.mxu0 0.0
    %9641 = vmatpush1.msra.mxu0 0.0
    %9642 = vmatprep.subr.mxu0 0.0
    %9643 = vmatpush1.msra.mxu0 0.0
    %9644 = vmatprep.subr.mxu0 0.0
    %9645 = vmatpush1.msra.mxu0 0.0
    %9646 = vmatprep.subr.mxu0 0.0
    %9647 = vmatpush1.msra.mxu0 0.0
    %9648 = vmatprep.subr.mxu0 0.0
    %9649 = vmatpush1.msra.mxu0 0.0
    %9650 = vmatprep.subr.mxu0 0.0
    %9651 = vmatpush1.msra.mxu0 0.0
    %9652 = vmatprep.subr.mxu0 0.0
    %9653 = vmatpush1.msra.mxu0 0.0
    %9654 = vmatprep.subr.mxu0 0.0
    %9655 = vmatpush1.msra.mxu0 0.0
    %9656 = vmatprep.subr.mxu0 0.0
    %9657 = vmatpush1.msra.mxu0 0.0
    %9658 = vmatprep.subr.mxu0 0.0
    %9659 = vmatpush1.msra.mxu0 0.0
    %9660 = vmatprep.subr.mxu0 0.0
    %9661 = vmatpush1.msra.mxu0 0.0
    %9662 = vmatprep.mubr.f32.mxu0 0.0
    %9663 = vmatmul.mubr.f32.gmra.mrb[0].mxu0 %v9596
    %v9664 = vpop.f32.mrb[0].mxu0
    %v9665 = vadd.f32 0.0, %v9664
    %v9666 = vpop.f32.mrb[0].mxu0
    %v9667 = vadd.f32 0.0, %v9666
    %9668 = vdwg.mxu0
    %v9670 = vsel %vm8952, %v9594, 0
    %9672 = vmatprep.subr.mxu0 %v8681
    %9673 = vmatpush1.msra.mxu0 %v8679
    %9674 = vmatprep.subr.mxu0 0.0
    %9675 = vmatpush1.msra.mxu0 0.0
    %9676 = vmatprep.subr.mxu0 0.0
    %9677 = vmatpush1.msra.mxu0 0.0
    %9678 = vmatprep.subr.mxu0 0.0
    %9679 = vmatpush1.msra.mxu0 0.0
    %9680 = vmatprep.subr.mxu0 0.0
    %9681 = vmatpush1.msra.mxu0 0.0
    %9682 = vmatprep.subr.mxu0 0.0
    %9683 = vmatpush1.msra.mxu0 0.0
    %9684 = vmatprep.subr.mxu0 0.0
    %9685 = vmatpush1.msra.mxu0 0.0
    %9686 = vmatprep.subr.mxu0 0.0
    %9687 = vmatpush1.msra.mxu0 0.0
    %9688 = vmatprep.subr.mxu0 0.0
    %9689 = vmatpush1.msra.mxu0 0.0
    %9690 = vmatprep.subr.mxu0 0.0
    %9691 = vmatpush1.msra.mxu0 0.0
    %9692 = vmatprep.subr.mxu0 0.0
    %9693 = vmatpush1.msra.mxu0 0.0
    %9694 = vmatprep.subr.mxu0 0.0
    %9695 = vmatpush1.msra.mxu0 0.0
    %9696 = vmatprep.subr.mxu0 0.0
    %9697 = vmatpush1.msra.mxu0 0.0
    %9698 = vmatprep.subr.mxu0 0.0
    %9699 = vmatpush1.msra.mxu0 0.0
    %9700 = vmatprep.subr.mxu0 0.0
    %9701 = vmatpush1.msra.mxu0 0.0
    %9702 = vmatprep.subr.mxu0 0.0
    %9703 = vmatpush1.msra.mxu0 0.0
    %9704 = vmatprep.subr.mxu0 0.0
    %9705 = vmatpush1.msra.mxu0 0.0
    %9706 = vmatprep.subr.mxu0 0.0
    %9707 = vmatpush1.msra.mxu0 0.0
    %9708 = vmatprep.subr.mxu0 0.0
    %9709 = vmatpush1.msra.mxu0 0.0
    %9710 = vmatprep.subr.mxu0 0.0
    %9711 = vmatpush1.msra.mxu0 0.0
    %9712 = vmatprep.subr.mxu0 0.0
    %9713 = vmatpush1.msra.mxu0 0.0
    %9714 = vmatprep.subr.mxu0 0.0
    %9715 = vmatpush1.msra.mxu0 0.0
    %9716 = vmatprep.subr.mxu0 0.0
    %9717 = vmatpush1.msra.mxu0 0.0
    %9718 = vmatprep.subr.mxu0 0.0
    %9719 = vmatpush1.msra.mxu0 0.0
    %9720 = vmatprep.subr.mxu0 0.0
    %9721 = vmatpush1.msra.mxu0 0.0
    %9722 = vmatprep.subr.mxu0 0.0
    %9723 = vmatpush1.msra.mxu0 0.0
    %9724 = vmatprep.subr.mxu0 0.0
    %9725 = vmatpush1.msra.mxu0 0.0
    %9726 = vmatprep.subr.mxu0 0.0
    %9727 = vmatpush1.msra.mxu0 0.0
    %9728 = vmatprep.subr.mxu0 0.0
    %9729 = vmatpush1.msra.mxu0 0.0
    %9730 = vmatprep.subr.mxu0 0.0
    %9731 = vmatpush1.msra.mxu0 0.0
    %9732 = vmatprep.subr.mxu0 0.0
    %9733 = vmatpush1.msra.mxu0 0.0
    %9734 = vmatprep.subr.mxu0 0.0
    %9735 = vmatpush1.msra.mxu0 0.0
    %9736 = vmatprep.mubr.f32.mxu0 0.0
    %9737 = vmatmul.mubr.f32.gmra.mrb[0].mxu0 %v9670
    %v9738 = vpop.f32.mrb[0].mxu0
    %v9739 = vadd.f32 0.0, %v9738
    %v9740 = vpop.f32.mrb[0].mxu0
    %v9741 = vadd.f32 0.0, %v9740
    %9742 = vdwg.mxu0
    %9743 = vmatprep.subr.mxu0 %v8290
    %9744 = vmatpush1.xpose.msra.mxu0 %v8288
    %9745 = vmatprep.subr.mxu0 0.0
    %9746 = vmatpush1.xpose.msra.mxu0 0.0
    %9747 = vmatprep.subr.mxu0 0.0
    %9748 = vmatpush1.xpose.msra.mxu0 0.0
    %9749 = vmatprep.subr.mxu0 0.0
    %9750 = vmatpush1.xpose.msra.mxu0 0.0
    %9751 = vmatprep.subr.mxu0 0.0
    %9752 = vmatpush1.xpose.msra.mxu0 0.0
    %9753 = vmatprep.subr.mxu0 0.0
    %9754 = vmatpush1.xpose.msra.mxu0 0.0
    %9755 = vmatprep.subr.mxu0 0.0
    %9756 = vmatpush1.xpose.msra.mxu0 0.0
    %9757 = vmatprep.subr.mxu0 0.0
    %9758 = vmatpush1.xpose.msra.mxu0 0.0
    %9759 = vmatprep.subr.mxu0 0.0
    %9760 = vmatpush1.xpose.msra.mxu0 0.0
    %9761 = vmatprep.subr.mxu0 0.0
    %9762 = vmatpush1.xpose.msra.mxu0 0.0
    %9763 = vmatprep.subr.mxu0 0.0
    %9764 = vmatpush1.xpose.msra.mxu0 0.0
    %9765 = vmatprep.subr.mxu0 0.0
    %9766 = vmatpush1.xpose.msra.mxu0 0.0
    %9767 = vmatprep.subr.mxu0 0.0
    %9768 = vmatpush1.xpose.msra.mxu0 0.0
    %9769 = vmatprep.subr.mxu0 0.0
    %9770 = vmatpush1.xpose.msra.mxu0 0.0
    %9771 = vmatprep.subr.mxu0 0.0
    %9772 = vmatpush1.xpose.msra.mxu0 0.0
    %9773 = vmatprep.subr.mxu0 0.0
    %9774 = vmatpush1.xpose.msra.mxu0 0.0
    %9775 = vmatprep.subr.mxu0 0.0
    %9776 = vmatpush1.xpose.msra.mxu0 0.0
    %9777 = vmatprep.subr.mxu0 0.0
    %9778 = vmatpush1.xpose.msra.mxu0 0.0
    %9779 = vmatprep.subr.mxu0 0.0
    %9780 = vmatpush1.xpose.msra.mxu0 0.0
    %9781 = vmatprep.subr.mxu0 0.0
    %9782 = vmatpush1.xpose.msra.mxu0 0.0
    %9783 = vmatprep.subr.mxu0 0.0
    %9784 = vmatpush1.xpose.msra.mxu0 0.0
    %9785 = vmatprep.subr.mxu0 0.0
    %9786 = vmatpush1.xpose.msra.mxu0 0.0
    %9787 = vmatprep.subr.mxu0 0.0
    %9788 = vmatpush1.xpose.msra.mxu0 0.0
    %9789 = vmatprep.subr.mxu0 0.0
    %9790 = vmatpush1.xpose.msra.mxu0 0.0
    %9791 = vmatprep.subr.mxu0 0.0
    %9792 = vmatpush1.xpose.msra.mxu0 0.0
    %9793 = vmatprep.subr.mxu0 0.0
    %9794 = vmatpush1.xpose.msra.mxu0 0.0
    %9795 = vmatprep.subr.mxu0 0.0
    %9796 = vmatpush1.xpose.msra.mxu0 0.0
    %9797 = vmatprep.subr.mxu0 0.0
    %9798 = vmatpush1.xpose.msra.mxu0 0.0
    %9799 = vmatprep.subr.mxu0 0.0
    %9800 = vmatpush1.xpose.msra.mxu0 0.0
    %9801 = vmatprep.subr.mxu0 0.0
    %9802 = vmatpush1.xpose.msra.mxu0 0.0
    %9803 = vmatprep.subr.mxu0 0.0
    %9804 = vmatpush1.xpose.msra.mxu0 0.0
    %9805 = vmatprep.subr.mxu0 0.0
    %9806 = vmatpush1.xpose.msra.mxu0 0.0
    %9807 = vmatprep.mubr.f32.mxu0 %v7774
    %9808 = vmatmul.mubr.f32.gmra.mrb[0].mxu0 %v7772
    %v9809 = vpop.f32.mrb[0].mxu0
    %v9810 = vadd.f32 %v224, %v9809
    %v9811 = vpop.f32.mrb[0].mxu0
    %9812 = vdwg.mxu0
    %9813 = vmatprep.subr.mxu0 %v8294
    %9814 = vmatpush1.xpose.msra.mxu0 %v8292
    %9815 = vmatprep.subr.mxu0 0.0
    %9816 = vmatpush1.xpose.msra.mxu0 0.0
    %9817 = vmatprep.subr.mxu0 0.0
    %9818 = vmatpush1.xpose.msra.mxu0 0.0
    %9819 = vmatprep.subr.mxu0 0.0
    %9820 = vmatpush1.xpose.msra.mxu0 0.0
    %9821 = vmatprep.subr.mxu0 0.0
    %9822 = vmatpush1.xpose.msra.mxu0 0.0
    %9823 = vmatprep.subr.mxu0 0.0
    %9824 = vmatpush1.xpose.msra.mxu0 0.0
    %9825 = vmatprep.subr.mxu0 0.0
    %9826 = vmatpush1.xpose.msra.mxu0 0.0
    %9827 = vmatprep.subr.mxu0 0.0
    %9828 = vmatpush1.xpose.msra.mxu0 0.0
    %9829 = vmatprep.subr.mxu0 0.0
    %9830 = vmatpush1.xpose.msra.mxu0 0.0
    %9831 = vmatprep.subr.mxu0 0.0
    %9832 = vmatpush1.xpose.msra.mxu0 0.0
    %9833 = vmatprep.subr.mxu0 0.0
    %9834 = vmatpush1.xpose.msra.mxu0 0.0
    %9835 = vmatprep.subr.mxu0 0.0
    %9836 = vmatpush1.xpose.msra.mxu0 0.0
    %9837 = vmatprep.subr.mxu0 0.0
    %9838 = vmatpush1.xpose.msra.mxu0 0.0
    %9839 = vmatprep.subr.mxu0 0.0
    %9840 = vmatpush1.xpose.msra.mxu0 0.0
    %9841 = vmatprep.subr.mxu0 0.0
    %9842 = vmatpush1.xpose.msra.mxu0 0.0
    %9843 = vmatprep.subr.mxu0 0.0
    %9844 = vmatpush1.xpose.msra.mxu0 0.0
    %9845 = vmatprep.subr.mxu0 0.0
    %9846 = vmatpush1.xpose.msra.mxu0 0.0
    %9847 = vmatprep.subr.mxu0 0.0
    %9848 = vmatpush1.xpose.msra.mxu0 0.0
    %9849 = vmatprep.subr.mxu0 0.0
    %9850 = vmatpush1.xpose.msra.mxu0 0.0
    %9851 = vmatprep.subr.mxu0 0.0
    %9852 = vmatpush1.xpose.msra.mxu0 0.0
    %9853 = vmatprep.subr.mxu0 0.0
    %9854 = vmatpush1.xpose.msra.mxu0 0.0
    %9855 = vmatprep.subr.mxu0 0.0
    %9856 = vmatpush1.xpose.msra.mxu0 0.0
    %9857 = vmatprep.subr.mxu0 0.0
    %9858 = vmatpush1.xpose.msra.mxu0 0.0
    %9859 = vmatprep.subr.mxu0 0.0
    %9860 = vmatpush1.xpose.msra.mxu0 0.0
    %9861 = vmatprep.subr.mxu0 0.0
    %9862 = vmatpush1.xpose.msra.mxu0 0.0
    %9863 = vmatprep.subr.mxu0 0.0
    %9864 = vmatpush1.xpose.msra.mxu0 0.0
    %9865 = vmatprep.subr.mxu0 0.0
    %9866 = vmatpush1.xpose.msra.mxu0 0.0
    %9867 = vmatprep.subr.mxu0 0.0
    %9868 = vmatpush1.xpose.msra.mxu0 0.0
    %9869 = vmatprep.subr.mxu0 0.0
    %9870 = vmatpush1.xpose.msra.mxu0 0.0
    %9871 = vmatprep.subr.mxu0 0.0
    %9872 = vmatpush1.xpose.msra.mxu0 0.0
    %9873 = vmatprep.subr.mxu0 0.0
    %9874 = vmatpush1.xpose.msra.mxu0 0.0
    %9875 = vmatprep.subr.mxu0 0.0
    %9876 = vmatpush1.xpose.msra.mxu0 0.0
    %9877 = vmatprep.mubr.f32.mxu0 %v7778
    %9878 = vmatmul.mubr.f32.gmra.mrb[0].mxu0 %v7776
    %v9879 = vpop.f32.mrb[0].mxu0
    %v9880 = vadd.f32 %v225, %v9879
    %v9881 = vpop.f32.mrb[0].mxu0
    %9882 = vdwg.mxu0
    %v9883 = vsel %vm8952, %v9810, -inf
    %9884 = vmax.xlane.f32.xlu0 %v9883
    %v9885 = vpop.xlane.xlu0 %9884
    %v9886 = vsel %vm8952, %v9880, -inf
    %9887 = vmax.xlane.f32.xlu0 %v9886
    %v9888 = vpop.xlane.xlu0 %9887
    %v9889 = vsub.f32 %v9810, %v9885
    %v9890 = vsub.f32 %v9880, %v9888
    %v9891 = vmul.f32 %v9889, 1.442695
    %v9892 = vpow.pop %v9891
    %v9893 = vmul.f32 %v9890, 1.442695
    %v9894 = vpow.pop %v9893
    %v9895 = vsel %vm8952, %v9892, 0.0
    %9896 = vadd.xlane.f32.xlu0 %v9895
    %v9897 = vpop.xlane.xlu0 %9896
    %v9898 = vsel %vm8952, %v9894, 0.0
    %9899 = vadd.xlane.f32.xlu0 %v9898
    %v9900 = vpop.xlane.xlu0 %9899
    %v9901 = vrcp.pop %v9897
    %v9902 = vrcp.pop %v9900
    %v9903 = vmul.f32 %v9892, %v9901
    %v9904 = vmul.f32 %v9894, %v9902
    %v9906 = vsel %vm8952, %v9903, 0
    %9908 = vmatprep.subr.mxu0 %v8806
    %9909 = vmatpush1.msra.mxu0 %v8804
    %9910 = vmatprep.subr.mxu0 0.0
    %9911 = vmatpush1.msra.mxu0 0.0
    %9912 = vmatprep.subr.mxu0 0.0
    %9913 = vmatpush1.msra.mxu0 0.0
    %9914 = vmatprep.subr.mxu0 0.0
    %9915 = vmatpush1.msra.mxu0 0.0
    %9916 = vmatprep.subr.mxu0 0.0
    %9917 = vmatpush1.msra.mxu0 0.0
    %9918 = vmatprep.subr.mxu0 0.0
    %9919 = vmatpush1.msra.mxu0 0.0
    %9920 = vmatprep.subr.mxu0 0.0
    %9921 = vmatpush1.msra.mxu0 0.0
    %9922 = vmatprep.subr.mxu0 0.0
    %9923 = vmatpush1.msra.mxu0 0.0
    %9924 = vmatprep.subr.mxu0 0.0
    %9925 = vmatpush1.msra.mxu0 0.0
    %9926 = vmatprep.subr.mxu0 0.0
    %9927 = vmatpush1.msra.mxu0 0.0
    %9928 = vmatprep.subr.mxu0 0.0
    %9929 = vmatpush1.msra.mxu0 0.0
    %9930 = vmatprep.subr.mxu0 0.0
    %9931 = vmatpush1.msra.mxu0 0.0
    %9932 = vmatprep.subr.mxu0 0.0
    %9933 = vmatpush1.msra.mxu0 0.0
    %9934 = vmatprep.subr.mxu0 0.0
    %9935 = vmatpush1.msra.mxu0 0.0
    %9936 = vmatprep.subr.mxu0 0.0
    %9937 = vmatpush1.msra.mxu0 0.0
    %9938 = vmatprep.subr.mxu0 0.0
    %9939 = vmatpush1.msra.mxu0 0.0
    %9940 = vmatprep.subr.mxu0 0.0
    %9941 = vmatpush1.msra.mxu0 0.0
    %9942 = vmatprep.subr.mxu0 0.0
    %9943 = vmatpush1.msra.mxu0 0.0
    %9944 = vmatprep.subr.mxu0 0.0
    %9945 = vmatpush1.msra.mxu0 0.0
    %9946 = vmatprep.subr.mxu0 0.0
    %9947 = vmatpush1.msra.mxu0 0.0
    %9948 = vmatprep.subr.mxu0 0.0
    %9949 = vmatpush1.msra.mxu0 0.0
    %9950 = vmatprep.subr.mxu0 0.0
    %9951 = vmatpush1.msra.mxu0 0.0
    %9952 = vmatprep.subr.mxu0 0.0
    %9953 = vmatpush1.msra.mxu0 0.0
    %9954 = vmatprep.subr.mxu0 0.0
    %9955 = vmatpush1.msra.mxu0 0.0
    %9956 = vmatprep.subr.mxu0 0.0
    %9957 = vmatpush1.msra.mxu0 0.0
    %9958 = vmatprep.subr.mxu0 0.0
    %9959 = vmatpush1.msra.mxu0 0.0
    %9960 = vmatprep.subr.mxu0 0.0
    %9961 = vmatpush1.msra.mxu0 0.0
    %9962 = vmatprep.subr.mxu0 0.0
    %9963 = vmatpush1.msra.mxu0 0.0
    %9964 = vmatprep.subr.mxu0 0.0
    %9965 = vmatpush1.msra.mxu0 0.0
    %9966 = vmatprep.subr.mxu0 0.0
    %9967 = vmatpush1.msra.mxu0 0.0
    %9968 = vmatprep.subr.mxu0 0.0
    %9969 = vmatpush1.msra.mxu0 0.0
    %9970 = vmatprep.subr.mxu0 0.0
    %9971 = vmatpush1.msra.mxu0 0.0
    %9972 = vmatprep.mubr.f32.mxu0 0.0
    %9973 = vmatmul.mubr.f32.gmra.mrb[0].mxu0 %v9906
    %v9974 = vpop.f32.mrb[0].mxu0
    %v9975 = vadd.f32 0.0, %v9974
    %v9976 = vpop.f32.mrb[0].mxu0
    %v9977 = vadd.f32 0.0, %v9976
    %9978 = vdwg.mxu0
    %v9980 = vsel %vm8952, %v9904, 0
    %9982 = vmatprep.subr.mxu0 %v8810
    %9983 = vmatpush1.msra.mxu0 %v8808
    %9984 = vmatprep.subr.mxu0 0.0
    %9985 = vmatpush1.msra.mxu0 0.0
    %9986 = vmatprep.subr.mxu0 0.0
    %9987 = vmatpush1.msra.mxu0 0.0
    %9988 = vmatprep.subr.mxu0 0.0
    %9989 = vmatpush1.msra.mxu0 0.0
    %9990 = vmatprep.subr.mxu0 0.0
    %9991 = vmatpush1.msra.mxu0 0.0
    %9992 = vmatprep.subr.mxu0 0.0
    %9993 = vmatpush1.msra.mxu0 0.0
    %9994 = vmatprep.subr.mxu0 0.0
    %9995 = vmatpush1.msra.mxu0 0.0
    %9996 = vmatprep.subr.mxu0 0.0
    %9997 = vmatpush1.msra.mxu0 0.0
    %9998 = vmatprep.subr.mxu0 0.0
    %9999 = vmatpush1.msra.mxu0 0.0
    %10000 = vmatprep.subr.mxu0 0.0
    %10001 = vmatpush1.msra.mxu0 0.0
    %10002 = vmatprep.subr.mxu0 0.0
    %10003 = vmatpush1.msra.mxu0 0.0
    %10004 = vmatprep.subr.mxu0 0.0
    %10005 = vmatpush1.msra.mxu0 0.0
    %10006 = vmatprep.subr.mxu0 0.0
    %10007 = vmatpush1.msra.mxu0 0.0
    %10008 = vmatprep.subr.mxu0 0.0
    %10009 = vmatpush1.msra.mxu0 0.0
    %10010 = vmatprep.subr.mxu0 0.0
    %10011 = vmatpush1.msra.mxu0 0.0
    %10012 = vmatprep.subr.mxu0 0.0
    %10013 = vmatpush1.msra.mxu0 0.0
    %10014 = vmatprep.subr.mxu0 0.0
    %10015 = vmatpush1.msra.mxu0 0.0
    %10016 = vmatprep.subr.mxu0 0.0
    %10017 = vmatpush1.msra.mxu0 0.0
    %10018 = vmatprep.subr.mxu0 0.0
    %10019 = vmatpush1.msra.mxu0 0.0
    %10020 = vmatprep.subr.mxu0 0.0
    %10021 = vmatpush1.msra.mxu0 0.0
    %10022 = vmatprep.subr.mxu0 0.0
    %10023 = vmatpush1.msra.mxu0 0.0
    %10024 = vmatprep.subr.mxu0 0.0
    %10025 = vmatpush1.msra.mxu0 0.0
    %10026 = vmatprep.subr.mxu0 0.0
    %10027 = vmatpush1.msra.mxu0 0.0
    %10028 = vmatprep.subr.mxu0 0.0
    %10029 = vmatpush1.msra.mxu0 0.0
    %10030 = vmatprep.subr.mxu0 0.0
    %10031 = vmatpush1.msra.mxu0 0.0
    %10032 = vmatprep.subr.mxu0 0.0
    %10033 = vmatpush1.msra.mxu0 0.0
    %10034 = vmatprep.subr.mxu0 0.0
    %10035 = vmatpush1.msra.mxu0 0.0
    %10036 = vmatprep.subr.mxu0 0.0
    %10037 = vmatpush1.msra.mxu0 0.0
    %10038 = vmatprep.subr.mxu0 0.0
    %10039 = vmatpush1.msra.mxu0 0.0
    %10040 = vmatprep.subr.mxu0 0.0
    %10041 = vmatpush1.msra.mxu0 0.0
    %10042 = vmatprep.subr.mxu0 0.0
    %10043 = vmatpush1.msra.mxu0 0.0
    %10044 = vmatprep.subr.mxu0 0.0
    %10045 = vmatpush1.msra.mxu0 0.0
    %10046 = vmatprep.mubr.f32.mxu0 0.0
    %10047 = vmatmul.mubr.f32.gmra.mrb[0].mxu0 %v9980
    %v10048 = vpop.f32.mrb[0].mxu0
    %v10049 = vadd.f32 0.0, %v10048
    %v10050 = vpop.f32.mrb[0].mxu0
    %v10051 = vadd.f32 0.0, %v10050
    %10052 = vdwg.mxu0
    %v10053 = vpack.c.bf16 %v9119, %v9045
    %v10054 = vpack.c.bf16 %v9121, %v9047
    %v10055 = vpack.c.bf16 %v9429, %v9355
    %v10056 = vpack.c.bf16 %v9431, %v9357
    %v10057 = vpack.c.bf16 %v9739, %v9665
    %v10058 = vpack.c.bf16 %v9741, %v9667
    %v10059 = vpack.c.bf16 %v10049, %v9975
    %v10060 = vpack.c.bf16 %v10051, %v9977
    %v10061 = vld [vmem:[#allocation8] sm:$0xff]
    %v10062 = vld [vmem:[#allocation8 + $0x8] sm:$0xff]
    %v10063 = vld [vmem:[#allocation8 + $0x10] sm:$0xff]
    %v10064 = vld [vmem:[#allocation8 + $0x18] sm:$0xff]
    %v10065 = vld [vmem:[#allocation8 + $0x20] sm:$0xff]
    %v10066 = vld [vmem:[#allocation8 + $0x28] sm:$0xff]
    %v10067 = vld [vmem:[#allocation8 + $0x30] sm:$0xff]
    %v10068 = vld [vmem:[#allocation8 + $0x38] sm:$0xff]
    %v10069 = vld [vmem:[#allocation8 + $0x40] sm:$0xff]
    %v10070 = vld [vmem:[#allocation8 + $0x48] sm:$0xff]
    %v10071 = vld [vmem:[#allocation8 + $0x50] sm:$0xff]
    %v10072 = vld [vmem:[#allocation8 + $0x58] sm:$0xff]
    %v10073 = vld [vmem:[#allocation8 + $0x60] sm:$0xff]
    %v10074 = vld [vmem:[#allocation8 + $0x68] sm:$0xff]
    %v10075 = vld [vmem:[#allocation8 + $0x70] sm:$0xff]
    %v10076 = vld [vmem:[#allocation8 + $0x78] sm:$0xff]
    %v10077 = vld [vmem:[#allocation8 + $0x80] sm:$0xff]
    %v10078 = vld [vmem:[#allocation8 + $0x88] sm:$0xff]
    %v10079 = vld [vmem:[#allocation8 + $0x90] sm:$0xff]
    %v10080 = vld [vmem:[#allocation8 + $0x98] sm:$0xff]
    %v10081 = vld [vmem:[#allocation8 + $0xa0] sm:$0xff]
    %v10082 = vld [vmem:[#allocation8 + $0xa8] sm:$0xff]
    %v10083 = vld [vmem:[#allocation8 + $0xb0] sm:$0xff]
    %v10084 = vld [vmem:[#allocation8 + $0xb8] sm:$0xff]
    %v10085 = vld [vmem:[#allocation8 + $0xc0] sm:$0xff]
    %v10086 = vld [vmem:[#allocation8 + $0xc8] sm:$0xff]
    %v10087 = vld [vmem:[#allocation8 + $0xd0] sm:$0xff]
    %v10088 = vld [vmem:[#allocation8 + $0xd8] sm:$0xff]
    %v10089 = vld [vmem:[#allocation8 + $0xe0] sm:$0xff]
    %v10090 = vld [vmem:[#allocation8 + $0xe8] sm:$0xff]
    %v10091 = vld [vmem:[#allocation8 + $0xf0] sm:$0xff]
    %v10092 = vld [vmem:[#allocation8 + $0xf8] sm:$0xff]
    %v10093 = vld [vmem:[#allocation8 + $0x100] sm:$0xff]
    %v10094 = vld [vmem:[#allocation8 + $0x108] sm:$0xff]
    %v10095 = vld [vmem:[#allocation8 + $0x110] sm:$0xff]
    %v10096 = vld [vmem:[#allocation8 + $0x118] sm:$0xff]
    %v10097 = vld [vmem:[#allocation8 + $0x120] sm:$0xff]
    %v10098 = vld [vmem:[#allocation8 + $0x128] sm:$0xff]
    %v10099 = vld [vmem:[#allocation8 + $0x130] sm:$0xff]
    %v10100 = vld [vmem:[#allocation8 + $0x138] sm:$0xff]
    %v10101 = vld [vmem:[#allocation8 + $0x140] sm:$0xff]
    %v10102 = vld [vmem:[#allocation8 + $0x148] sm:$0xff]
    %v10103 = vld [vmem:[#allocation8 + $0x150] sm:$0xff]
    %v10104 = vld [vmem:[#allocation8 + $0x158] sm:$0xff]
    %v10105 = vld [vmem:[#allocation8 + $0x160] sm:$0xff]
    %v10106 = vld [vmem:[#allocation8 + $0x168] sm:$0xff]
    %v10107 = vld [vmem:[#allocation8 + $0x170] sm:$0xff]
    %v10108 = vld [vmem:[#allocation8 + $0x178] sm:$0xff]
    %v10109 = vld [vmem:[#allocation8 + $0x180] sm:$0xff]
    %v10110 = vld [vmem:[#allocation8 + $0x188] sm:$0xff]
    %v10111 = vld [vmem:[#allocation8 + $0x190] sm:$0xff]
    %v10112 = vld [vmem:[#allocation8 + $0x198] sm:$0xff]
    %v10113 = vld [vmem:[#allocation8 + $0x1a0] sm:$0xff]
    %v10114 = vld [vmem:[#allocation8 + $0x1a8] sm:$0xff]
    %v10115 = vld [vmem:[#allocation8 + $0x1b0] sm:$0xff]
    %v10116 = vld [vmem:[#allocation8 + $0x1b8] sm:$0xff]
    %v10117 = vld [vmem:[#allocation8 + $0x1c0] sm:$0xff]
    %v10118 = vld [vmem:[#allocation8 + $0x1c8] sm:$0xff]
    %v10119 = vld [vmem:[#allocation8 + $0x1d0] sm:$0xff]
    %v10120 = vld [vmem:[#allocation8 + $0x1d8] sm:$0xff]
    %v10121 = vld [vmem:[#allocation8 + $0x1e0] sm:$0xff]
    %v10122 = vld [vmem:[#allocation8 + $0x1e8] sm:$0xff]
    %v10123 = vld [vmem:[#allocation8 + $0x1f0] sm:$0xff]
    %v10124 = vld [vmem:[#allocation8 + $0x1f8] sm:$0xff]
    %v10125 = vld [vmem:[#allocation8 + $0x200] sm:$0xff]
    %v10126 = vld [vmem:[#allocation8 + $0x208] sm:$0xff]
    %v10127 = vld [vmem:[#allocation8 + $0x210] sm:$0xff]
    %v10128 = vld [vmem:[#allocation8 + $0x218] sm:$0xff]
    %v10129 = vld [vmem:[#allocation8 + $0x220] sm:$0xff]
    %v10130 = vld [vmem:[#allocation8 + $0x228] sm:$0xff]
    %v10131 = vld [vmem:[#allocation8 + $0x230] sm:$0xff]
    %v10132 = vld [vmem:[#allocation8 + $0x238] sm:$0xff]
    %v10133 = vld [vmem:[#allocation8 + $0x240] sm:$0xff]
    %v10134 = vld [vmem:[#allocation8 + $0x248] sm:$0xff]
    %v10135 = vld [vmem:[#allocation8 + $0x250] sm:$0xff]
    %v10136 = vld [vmem:[#allocation8 + $0x258] sm:$0xff]
    %v10137 = vld [vmem:[#allocation8 + $0x260] sm:$0xff]
    %v10138 = vld [vmem:[#allocation8 + $0x268] sm:$0xff]
    %v10139 = vld [vmem:[#allocation8 + $0x270] sm:$0xff]
    %v10140 = vld [vmem:[#allocation8 + $0x278] sm:$0xff]
    %v10141 = vld [vmem:[#allocation8 + $0x280] sm:$0xff]
    %v10142 = vld [vmem:[#allocation8 + $0x288] sm:$0xff]
    %v10143 = vld [vmem:[#allocation8 + $0x290] sm:$0xff]
    %v10144 = vld [vmem:[#allocation8 + $0x298] sm:$0xff]
    %v10145 = vld [vmem:[#allocation8 + $0x2a0] sm:$0xff]
    %v10146 = vld [vmem:[#allocation8 + $0x2a8] sm:$0xff]
    %v10147 = vld [vmem:[#allocation8 + $0x2b0] sm:$0xff]
    %v10148 = vld [vmem:[#allocation8 + $0x2b8] sm:$0xff]
    %v10149 = vld [vmem:[#allocation8 + $0x2c0] sm:$0xff]
    %v10150 = vld [vmem:[#allocation8 + $0x2c8] sm:$0xff]
    %v10151 = vld [vmem:[#allocation8 + $0x2d0] sm:$0xff]
    %v10152 = vld [vmem:[#allocation8 + $0x2d8] sm:$0xff]
    %v10153 = vld [vmem:[#allocation8 + $0x2e0] sm:$0xff]
    %v10154 = vld [vmem:[#allocation8 + $0x2e8] sm:$0xff]
    %v10155 = vld [vmem:[#allocation8 + $0x2f0] sm:$0xff]
    %v10156 = vld [vmem:[#allocation8 + $0x2f8] sm:$0xff]
    %v10157 = vld [vmem:[#allocation8 + $0x300] sm:$0xff]
    %v10158 = vld [vmem:[#allocation8 + $0x308] sm:$0xff]
    %v10159 = vld [vmem:[#allocation8 + $0x310] sm:$0xff]
    %v10160 = vld [vmem:[#allocation8 + $0x318] sm:$0xff]
    %v10161 = vld [vmem:[#allocation8 + $0x320] sm:$0xff]
    %v10162 = vld [vmem:[#allocation8 + $0x328] sm:$0xff]
    %v10163 = vld [vmem:[#allocation8 + $0x330] sm:$0xff]
    %v10164 = vld [vmem:[#allocation8 + $0x338] sm:$0xff]
    %v10165 = vld [vmem:[#allocation8 + $0x340] sm:$0xff]
    %v10166 = vld [vmem:[#allocation8 + $0x348] sm:$0xff]
    %v10167 = vld [vmem:[#allocation8 + $0x350] sm:$0xff]
    %v10168 = vld [vmem:[#allocation8 + $0x358] sm:$0xff]
    %v10169 = vld [vmem:[#allocation8 + $0x360] sm:$0xff]
    %v10170 = vld [vmem:[#allocation8 + $0x368] sm:$0xff]
    %v10171 = vld [vmem:[#allocation8 + $0x370] sm:$0xff]
    %v10172 = vld [vmem:[#allocation8 + $0x378] sm:$0xff]
    %v10173 = vld [vmem:[#allocation8 + $0x380] sm:$0xff]
    %v10174 = vld [vmem:[#allocation8 + $0x388] sm:$0xff]
    %v10175 = vld [vmem:[#allocation8 + $0x390] sm:$0xff]
    %v10176 = vld [vmem:[#allocation8 + $0x398] sm:$0xff]
    %v10177 = vld [vmem:[#allocation8 + $0x3a0] sm:$0xff]
    %v10178 = vld [vmem:[#allocation8 + $0x3a8] sm:$0xff]
    %v10179 = vld [vmem:[#allocation8 + $0x3b0] sm:$0xff]
    %v10180 = vld [vmem:[#allocation8 + $0x3b8] sm:$0xff]
    %v10181 = vld [vmem:[#allocation8 + $0x3c0] sm:$0xff]
    %v10182 = vld [vmem:[#allocation8 + $0x3c8] sm:$0xff]
    %v10183 = vld [vmem:[#allocation8 + $0x3d0] sm:$0xff]
    %v10184 = vld [vmem:[#allocation8 + $0x3d8] sm:$0xff]
    %v10185 = vld [vmem:[#allocation8 + $0x3e0] sm:$0xff]
    %v10186 = vld [vmem:[#allocation8 + $0x3e8] sm:$0xff]
    %v10187 = vld [vmem:[#allocation8 + $0x3f0] sm:$0xff]
    %v10188 = vld [vmem:[#allocation8 + $0x3f8] sm:$0xff]
    %v10189 = vld [vmem:[#allocation8 + $0x400] sm:$0xff]
    %v10190 = vld [vmem:[#allocation8 + $0x408] sm:$0xff]
    %v10191 = vld [vmem:[#allocation8 + $0x410] sm:$0xff]
    %v10192 = vld [vmem:[#allocation8 + $0x418] sm:$0xff]
    %v10193 = vld [vmem:[#allocation8 + $0x420] sm:$0xff]
    %v10194 = vld [vmem:[#allocation8 + $0x428] sm:$0xff]
    %v10195 = vld [vmem:[#allocation8 + $0x430] sm:$0xff]
    %v10196 = vld [vmem:[#allocation8 + $0x438] sm:$0xff]
    %v10197 = vld [vmem:[#allocation8 + $0x440] sm:$0xff]
    %v10198 = vld [vmem:[#allocation8 + $0x448] sm:$0xff]
    %v10199 = vld [vmem:[#allocation8 + $0x450] sm:$0xff]
    %v10200 = vld [vmem:[#allocation8 + $0x458] sm:$0xff]
    %v10201 = vld [vmem:[#allocation8 + $0x460] sm:$0xff]
    %v10202 = vld [vmem:[#allocation8 + $0x468] sm:$0xff]
    %v10203 = vld [vmem:[#allocation8 + $0x470] sm:$0xff]
    %v10204 = vld [vmem:[#allocation8 + $0x478] sm:$0xff]
    %v10205 = vld [vmem:[#allocation8 + $0x480] sm:$0xff]
    %v10206 = vld [vmem:[#allocation8 + $0x488] sm:$0xff]
    %v10207 = vld [vmem:[#allocation8 + $0x490] sm:$0xff]
    %v10208 = vld [vmem:[#allocation8 + $0x498] sm:$0xff]
    %v10209 = vld [vmem:[#allocation8 + $0x4a0] sm:$0xff]
    %v10210 = vld [vmem:[#allocation8 + $0x4a8] sm:$0xff]
    %v10211 = vld [vmem:[#allocation8 + $0x4b0] sm:$0xff]
    %v10212 = vld [vmem:[#allocation8 + $0x4b8] sm:$0xff]
    %v10213 = vld [vmem:[#allocation8 + $0x4c0] sm:$0xff]
    %v10214 = vld [vmem:[#allocation8 + $0x4c8] sm:$0xff]
    %v10215 = vld [vmem:[#allocation8 + $0x4d0] sm:$0xff]
    %v10216 = vld [vmem:[#allocation8 + $0x4d8] sm:$0xff]
    %v10217 = vld [vmem:[#allocation8 + $0x4e0] sm:$0xff]
    %v10218 = vld [vmem:[#allocation8 + $0x4e8] sm:$0xff]
    %v10219 = vld [vmem:[#allocation8 + $0x4f0] sm:$0xff]
    %v10220 = vld [vmem:[#allocation8 + $0x4f8] sm:$0xff]
    %v10221 = vld [vmem:[#allocation8 + $0x500] sm:$0xff]
    %v10222 = vld [vmem:[#allocation8 + $0x508] sm:$0xff]
    %v10223 = vld [vmem:[#allocation8 + $0x510] sm:$0xff]
    %v10224 = vld [vmem:[#allocation8 + $0x518] sm:$0xff]
    %v10225 = vld [vmem:[#allocation8 + $0x520] sm:$0xff]
    %v10226 = vld [vmem:[#allocation8 + $0x528] sm:$0xff]
    %v10227 = vld [vmem:[#allocation8 + $0x530] sm:$0xff]
    %v10228 = vld [vmem:[#allocation8 + $0x538] sm:$0xff]
    %v10229 = vld [vmem:[#allocation8 + $0x540] sm:$0xff]
    %v10230 = vld [vmem:[#allocation8 + $0x548] sm:$0xff]
    %v10231 = vld [vmem:[#allocation8 + $0x550] sm:$0xff]
    %v10232 = vld [vmem:[#allocation8 + $0x558] sm:$0xff]
    %v10233 = vld [vmem:[#allocation8 + $0x560] sm:$0xff]
    %v10234 = vld [vmem:[#allocation8 + $0x568] sm:$0xff]
    %v10235 = vld [vmem:[#allocation8 + $0x570] sm:$0xff]
    %v10236 = vld [vmem:[#allocation8 + $0x578] sm:$0xff]
    %v10237 = vld [vmem:[#allocation8 + $0x580] sm:$0xff]
    %v10238 = vld [vmem:[#allocation8 + $0x588] sm:$0xff]
    %v10239 = vld [vmem:[#allocation8 + $0x590] sm:$0xff]
    %v10240 = vld [vmem:[#allocation8 + $0x598] sm:$0xff]
    %v10241 = vld [vmem:[#allocation8 + $0x5a0] sm:$0xff]
    %v10242 = vld [vmem:[#allocation8 + $0x5a8] sm:$0xff]
    %v10243 = vld [vmem:[#allocation8 + $0x5b0] sm:$0xff]
    %v10244 = vld [vmem:[#allocation8 + $0x5b8] sm:$0xff]
    %v10245 = vld [vmem:[#allocation8 + $0x5c0] sm:$0xff]
    %v10246 = vld [vmem:[#allocation8 + $0x5c8] sm:$0xff]
    %v10247 = vld [vmem:[#allocation8 + $0x5d0] sm:$0xff]
    %v10248 = vld [vmem:[#allocation8 + $0x5d8] sm:$0xff]
    %v10249 = vld [vmem:[#allocation8 + $0x5e0] sm:$0xff]
    %v10250 = vld [vmem:[#allocation8 + $0x5e8] sm:$0xff]
    %v10251 = vld [vmem:[#allocation8 + $0x5f0] sm:$0xff]
    %v10252 = vld [vmem:[#allocation8 + $0x5f8] sm:$0xff]
    %v10253 = vld [vmem:[#allocation8 + $0x600] sm:$0xff]
    %v10254 = vld [vmem:[#allocation8 + $0x608] sm:$0xff]
    %v10255 = vld [vmem:[#allocation8 + $0x610] sm:$0xff]
    %v10256 = vld [vmem:[#allocation8 + $0x618] sm:$0xff]
    %v10257 = vld [vmem:[#allocation8 + $0x620] sm:$0xff]
    %v10258 = vld [vmem:[#allocation8 + $0x628] sm:$0xff]
    %v10259 = vld [vmem:[#allocation8 + $0x630] sm:$0xff]
    %v10260 = vld [vmem:[#allocation8 + $0x638] sm:$0xff]
    %v10261 = vld [vmem:[#allocation8 + $0x640] sm:$0xff]
    %v10262 = vld [vmem:[#allocation8 + $0x648] sm:$0xff]
    %v10263 = vld [vmem:[#allocation8 + $0x650] sm:$0xff]
    %v10264 = vld [vmem:[#allocation8 + $0x658] sm:$0xff]
    %v10265 = vld [vmem:[#allocation8 + $0x660] sm:$0xff]
    %v10266 = vld [vmem:[#allocation8 + $0x668] sm:$0xff]
    %v10267 = vld [vmem:[#allocation8 + $0x670] sm:$0xff]
    %v10268 = vld [vmem:[#allocation8 + $0x678] sm:$0xff]
    %v10269 = vld [vmem:[#allocation8 + $0x680] sm:$0xff]
    %v10270 = vld [vmem:[#allocation8 + $0x688] sm:$0xff]
    %v10271 = vld [vmem:[#allocation8 + $0x690] sm:$0xff]
    %v10272 = vld [vmem:[#allocation8 + $0x698] sm:$0xff]
    %v10273 = vld [vmem:[#allocation8 + $0x6a0] sm:$0xff]
    %v10274 = vld [vmem:[#allocation8 + $0x6a8] sm:$0xff]
    %v10275 = vld [vmem:[#allocation8 + $0x6b0] sm:$0xff]
    %v10276 = vld [vmem:[#allocation8 + $0x6b8] sm:$0xff]
    %v10277 = vld [vmem:[#allocation8 + $0x6c0] sm:$0xff]
    %v10278 = vld [vmem:[#allocation8 + $0x6c8] sm:$0xff]
    %v10279 = vld [vmem:[#allocation8 + $0x6d0] sm:$0xff]
    %v10280 = vld [vmem:[#allocation8 + $0x6d8] sm:$0xff]
    %v10281 = vld [vmem:[#allocation8 + $0x6e0] sm:$0xff]
    %v10282 = vld [vmem:[#allocation8 + $0x6e8] sm:$0xff]
    %v10283 = vld [vmem:[#allocation8 + $0x6f0] sm:$0xff]
    %v10284 = vld [vmem:[#allocation8 + $0x6f8] sm:$0xff]
    %v10285 = vld [vmem:[#allocation8 + $0x700] sm:$0xff]
    %v10286 = vld [vmem:[#allocation8 + $0x708] sm:$0xff]
    %v10287 = vld [vmem:[#allocation8 + $0x710] sm:$0xff]
    %v10288 = vld [vmem:[#allocation8 + $0x718] sm:$0xff]
    %v10289 = vld [vmem:[#allocation8 + $0x720] sm:$0xff]
    %v10290 = vld [vmem:[#allocation8 + $0x728] sm:$0xff]
    %v10291 = vld [vmem:[#allocation8 + $0x730] sm:$0xff]
    %v10292 = vld [vmem:[#allocation8 + $0x738] sm:$0xff]
    %v10293 = vld [vmem:[#allocation8 + $0x740] sm:$0xff]
    %v10294 = vld [vmem:[#allocation8 + $0x748] sm:$0xff]
    %v10295 = vld [vmem:[#allocation8 + $0x750] sm:$0xff]
    %v10296 = vld [vmem:[#allocation8 + $0x758] sm:$0xff]
    %v10297 = vld [vmem:[#allocation8 + $0x760] sm:$0xff]
    %v10298 = vld [vmem:[#allocation8 + $0x768] sm:$0xff]
    %v10299 = vld [vmem:[#allocation8 + $0x770] sm:$0xff]
    %v10300 = vld [vmem:[#allocation8 + $0x778] sm:$0xff]
    %v10301 = vld [vmem:[#allocation8 + $0x780] sm:$0xff]
    %v10302 = vld [vmem:[#allocation8 + $0x788] sm:$0xff]
    %v10303 = vld [vmem:[#allocation8 + $0x790] sm:$0xff]
    %v10304 = vld [vmem:[#allocation8 + $0x798] sm:$0xff]
    %v10305 = vld [vmem:[#allocation8 + $0x7a0] sm:$0xff]
    %v10306 = vld [vmem:[#allocation8 + $0x7a8] sm:$0xff]
    %v10307 = vld [vmem:[#allocation8 + $0x7b0] sm:$0xff]
    %v10308 = vld [vmem:[#allocation8 + $0x7b8] sm:$0xff]
    %v10309 = vld [vmem:[#allocation8 + $0x7c0] sm:$0xff]
    %v10310 = vld [vmem:[#allocation8 + $0x7c8] sm:$0xff]
    %v10311 = vld [vmem:[#allocation8 + $0x7d0] sm:$0xff]
    %v10312 = vld [vmem:[#allocation8 + $0x7d8] sm:$0xff]
    %v10313 = vld [vmem:[#allocation8 + $0x7e0] sm:$0xff]
    %v10314 = vld [vmem:[#allocation8 + $0x7e8] sm:$0xff]
    %v10315 = vld [vmem:[#allocation8 + $0x7f0] sm:$0xff]
    %v10316 = vld [vmem:[#allocation8 + $0x7f8] sm:$0xff]
    %v10317 = vld [vmem:[#allocation8 + $0x800] sm:$0xff]
    %v10318 = vld [vmem:[#allocation8 + $0x808] sm:$0xff]
    %v10319 = vld [vmem:[#allocation8 + $0x810] sm:$0xff]
    %v10320 = vld [vmem:[#allocation8 + $0x818] sm:$0xff]
    %v10321 = vld [vmem:[#allocation8 + $0x820] sm:$0xff]
    %v10322 = vld [vmem:[#allocation8 + $0x828] sm:$0xff]
    %v10323 = vld [vmem:[#allocation8 + $0x830] sm:$0xff]
    %v10324 = vld [vmem:[#allocation8 + $0x838] sm:$0xff]
    %v10325 = vld [vmem:[#allocation8 + $0x840] sm:$0xff]
    %v10326 = vld [vmem:[#allocation8 + $0x848] sm:$0xff]
    %v10327 = vld [vmem:[#allocation8 + $0x850] sm:$0xff]
    %v10328 = vld [vmem:[#allocation8 + $0x858] sm:$0xff]
    %v10329 = vld [vmem:[#allocation8 + $0x860] sm:$0xff]
    %v10330 = vld [vmem:[#allocation8 + $0x868] sm:$0xff]
    %v10331 = vld [vmem:[#allocation8 + $0x870] sm:$0xff]
    %v10332 = vld [vmem:[#allocation8 + $0x878] sm:$0xff]
    %v10333 = vld [vmem:[#allocation8 + $0x880] sm:$0xff]
    %v10334 = vld [vmem:[#allocation8 + $0x888] sm:$0xff]
    %v10335 = vld [vmem:[#allocation8 + $0x890] sm:$0xff]
    %v10336 = vld [vmem:[#allocation8 + $0x898] sm:$0xff]
    %v10337 = vld [vmem:[#allocation8 + $0x8a0] sm:$0xff]
    %v10338 = vld [vmem:[#allocation8 + $0x8a8] sm:$0xff]
    %v10339 = vld [vmem:[#allocation8 + $0x8b0] sm:$0xff]
    %v10340 = vld [vmem:[#allocation8 + $0x8b8] sm:$0xff]
    %v10341 = vld [vmem:[#allocation8 + $0x8c0] sm:$0xff]
    %v10342 = vld [vmem:[#allocation8 + $0x8c8] sm:$0xff]
    %v10343 = vld [vmem:[#allocation8 + $0x8d0] sm:$0xff]
    %v10344 = vld [vmem:[#allocation8 + $0x8d8] sm:$0xff]
    %v10345 = vld [vmem:[#allocation8 + $0x8e0] sm:$0xff]
    %v10346 = vld [vmem:[#allocation8 + $0x8e8] sm:$0xff]
    %v10347 = vld [vmem:[#allocation8 + $0x8f0] sm:$0xff]
    %v10348 = vld [vmem:[#allocation8 + $0x8f8] sm:$0xff]
    %v10349 = vld [vmem:[#allocation8 + $0x900] sm:$0xff]
    %v10350 = vld [vmem:[#allocation8 + $0x908] sm:$0xff]
    %v10351 = vld [vmem:[#allocation8 + $0x910] sm:$0xff]
    %v10352 = vld [vmem:[#allocation8 + $0x918] sm:$0xff]
    %v10353 = vld [vmem:[#allocation8 + $0x920] sm:$0xff]
    %v10354 = vld [vmem:[#allocation8 + $0x928] sm:$0xff]
    %v10355 = vld [vmem:[#allocation8 + $0x930] sm:$0xff]
    %v10356 = vld [vmem:[#allocation8 + $0x938] sm:$0xff]
    %v10357 = vld [vmem:[#allocation8 + $0x940] sm:$0xff]
    %v10358 = vld [vmem:[#allocation8 + $0x948] sm:$0xff]
    %v10359 = vld [vmem:[#allocation8 + $0x950] sm:$0xff]
    %v10360 = vld [vmem:[#allocation8 + $0x958] sm:$0xff]
    %v10361 = vld [vmem:[#allocation8 + $0x960] sm:$0xff]
    %v10362 = vld [vmem:[#allocation8 + $0x968] sm:$0xff]
    %v10363 = vld [vmem:[#allocation8 + $0x970] sm:$0xff]
    %v10364 = vld [vmem:[#allocation8 + $0x978] sm:$0xff]
    %v10365 = vld [vmem:[#allocation8 + $0x980] sm:$0xff]
    %v10366 = vld [vmem:[#allocation8 + $0x988] sm:$0xff]
    %v10367 = vld [vmem:[#allocation8 + $0x990] sm:$0xff]
    %v10368 = vld [vmem:[#allocation8 + $0x998] sm:$0xff]
    %v10369 = vld [vmem:[#allocation8 + $0x9a0] sm:$0xff]
    %v10370 = vld [vmem:[#allocation8 + $0x9a8] sm:$0xff]
    %v10371 = vld [vmem:[#allocation8 + $0x9b0] sm:$0xff]
    %v10372 = vld [vmem:[#allocation8 + $0x9b8] sm:$0xff]
    %v10373 = vld [vmem:[#allocation8 + $0x9c0] sm:$0xff]
    %v10374 = vld [vmem:[#allocation8 + $0x9c8] sm:$0xff]
    %v10375 = vld [vmem:[#allocation8 + $0x9d0] sm:$0xff]
    %v10376 = vld [vmem:[#allocation8 + $0x9d8] sm:$0xff]
    %v10377 = vld [vmem:[#allocation8 + $0x9e0] sm:$0xff]
    %v10378 = vld [vmem:[#allocation8 + $0x9e8] sm:$0xff]
    %v10379 = vld [vmem:[#allocation8 + $0x9f0] sm:$0xff]
    %v10380 = vld [vmem:[#allocation8 + $0x9f8] sm:$0xff]
    %v10381 = vld [vmem:[#allocation8 + $0xa00] sm:$0xff]
    %v10382 = vld [vmem:[#allocation8 + $0xa08] sm:$0xff]
    %v10383 = vld [vmem:[#allocation8 + $0xa10] sm:$0xff]
    %v10384 = vld [vmem:[#allocation8 + $0xa18] sm:$0xff]
    %v10385 = vld [vmem:[#allocation8 + $0xa20] sm:$0xff]
    %v10386 = vld [vmem:[#allocation8 + $0xa28] sm:$0xff]
    %v10387 = vld [vmem:[#allocation8 + $0xa30] sm:$0xff]
    %v10388 = vld [vmem:[#allocation8 + $0xa38] sm:$0xff]
    %v10389 = vld [vmem:[#allocation8 + $0xa40] sm:$0xff]
    %v10390 = vld [vmem:[#allocation8 + $0xa48] sm:$0xff]
    %v10391 = vld [vmem:[#allocation8 + $0xa50] sm:$0xff]
    %v10392 = vld [vmem:[#allocation8 + $0xa58] sm:$0xff]
    %v10393 = vld [vmem:[#allocation8 + $0xa60] sm:$0xff]
    %v10394 = vld [vmem:[#allocation8 + $0xa68] sm:$0xff]
    %v10395 = vld [vmem:[#allocation8 + $0xa70] sm:$0xff]
    %v10396 = vld [vmem:[#allocation8 + $0xa78] sm:$0xff]
    %v10397 = vld [vmem:[#allocation8 + $0xa80] sm:$0xff]
    %v10398 = vld [vmem:[#allocation8 + $0xa88] sm:$0xff]
    %v10399 = vld [vmem:[#allocation8 + $0xa90] sm:$0xff]
    %v10400 = vld [vmem:[#allocation8 + $0xa98] sm:$0xff]
    %v10401 = vld [vmem:[#allocation8 + $0xaa0] sm:$0xff]
    %v10402 = vld [vmem:[#allocation8 + $0xaa8] sm:$0xff]
    %v10403 = vld [vmem:[#allocation8 + $0xab0] sm:$0xff]
    %v10404 = vld [vmem:[#allocation8 + $0xab8] sm:$0xff]
    %v10405 = vld [vmem:[#allocation8 + $0xac0] sm:$0xff]
    %v10406 = vld [vmem:[#allocation8 + $0xac8] sm:$0xff]
    %v10407 = vld [vmem:[#allocation8 + $0xad0] sm:$0xff]
    %v10408 = vld [vmem:[#allocation8 + $0xad8] sm:$0xff]
    %v10409 = vld [vmem:[#allocation8 + $0xae0] sm:$0xff]
    %v10410 = vld [vmem:[#allocation8 + $0xae8] sm:$0xff]
    %v10411 = vld [vmem:[#allocation8 + $0xaf0] sm:$0xff]
    %v10412 = vld [vmem:[#allocation8 + $0xaf8] sm:$0xff]
    %v10413 = vld [vmem:[#allocation8 + $0xb00] sm:$0xff]
    %v10414 = vld [vmem:[#allocation8 + $0xb08] sm:$0xff]
    %v10415 = vld [vmem:[#allocation8 + $0xb10] sm:$0xff]
    %v10416 = vld [vmem:[#allocation8 + $0xb18] sm:$0xff]
    %v10417 = vld [vmem:[#allocation8 + $0xb20] sm:$0xff]
    %v10418 = vld [vmem:[#allocation8 + $0xb28] sm:$0xff]
    %v10419 = vld [vmem:[#allocation8 + $0xb30] sm:$0xff]
    %v10420 = vld [vmem:[#allocation8 + $0xb38] sm:$0xff]
    %v10421 = vld [vmem:[#allocation8 + $0xb40] sm:$0xff]
    %v10422 = vld [vmem:[#allocation8 + $0xb48] sm:$0xff]
    %v10423 = vld [vmem:[#allocation8 + $0xb50] sm:$0xff]
    %v10424 = vld [vmem:[#allocation8 + $0xb58] sm:$0xff]
    %v10425 = vld [vmem:[#allocation8 + $0xb60] sm:$0xff]
    %v10426 = vld [vmem:[#allocation8 + $0xb68] sm:$0xff]
    %v10427 = vld [vmem:[#allocation8 + $0xb70] sm:$0xff]
    %v10428 = vld [vmem:[#allocation8 + $0xb78] sm:$0xff]
    %v10429 = vld [vmem:[#allocation8 + $0xb80] sm:$0xff]
    %v10430 = vld [vmem:[#allocation8 + $0xb88] sm:$0xff]
    %v10431 = vld [vmem:[#allocation8 + $0xb90] sm:$0xff]
    %v10432 = vld [vmem:[#allocation8 + $0xb98] sm:$0xff]
    %v10433 = vld [vmem:[#allocation8 + $0xba0] sm:$0xff]
    %v10434 = vld [vmem:[#allocation8 + $0xba8] sm:$0xff]
    %v10435 = vld [vmem:[#allocation8 + $0xbb0] sm:$0xff]
    %v10436 = vld [vmem:[#allocation8 + $0xbb8] sm:$0xff]
    %v10437 = vld [vmem:[#allocation8 + $0xbc0] sm:$0xff]
    %v10438 = vld [vmem:[#allocation8 + $0xbc8] sm:$0xff]
    %v10439 = vld [vmem:[#allocation8 + $0xbd0] sm:$0xff]
    %v10440 = vld [vmem:[#allocation8 + $0xbd8] sm:$0xff]
    %v10441 = vld [vmem:[#allocation8 + $0xbe0] sm:$0xff]
    %v10442 = vld [vmem:[#allocation8 + $0xbe8] sm:$0xff]
    %v10443 = vld [vmem:[#allocation8 + $0xbf0] sm:$0xff]
    %v10444 = vld [vmem:[#allocation8 + $0xbf8] sm:$0xff]
    %v10445 = vld [vmem:[#allocation10] sm:$0x3f]
    %v10447 = vlaneseq
    %v10448 = vshrl.u32 %v10447, 7
    %v10449 = vsub.s32 0, %v10448
    %v10450 = vrot.slane %v10445, %v10449
    %v10451 = vlaneseq
    %v10452 = vshrl.u32 %v10451, 7
    %v10453 = vsub.s32 1, %v10452
    %v10454 = vrot.slane %v10445, %v10453
    %v10455 = vlaneseq
    %v10456 = vshrl.u32 %v10455, 7
    %v10457 = vsub.s32 2, %v10456
    %v10458 = vrot.slane %v10445, %v10457
    %v10459 = vlaneseq
    %v10460 = vshrl.u32 %v10459, 7
    %v10461 = vsub.s32 3, %v10460
    %v10462 = vrot.slane %v10445, %v10461
    %v10463 = vlaneseq
    %v10464 = vshrl.u32 %v10463, 7
    %v10465 = vsub.s32 4, %v10464
    %v10466 = vrot.slane %v10445, %v10465
    %v10467 = vlaneseq
    %v10468 = vshrl.u32 %v10467, 7
    %v10469 = vsub.s32 5, %v10468
    %v10470 = vrot.slane %v10445, %v10469
    %v10861 = vunpack.c.l.b16 %v10061
    %v10862 = vunpack.c.h.b16 %v10061
    %v10863 = vunpack.c.l.b16 %v10062
    %v10864 = vunpack.c.h.b16 %v10062
    %v10865 = vunpack.c.l.b16 %v10063
    %v10866 = vunpack.c.h.b16 %v10063
    %v10867 = vunpack.c.l.b16 %v10064
    %v10868 = vunpack.c.h.b16 %v10064
    %v10869 = vunpack.c.l.b16 %v10065
    %v10870 = vunpack.c.h.b16 %v10065
    %v10871 = vunpack.c.l.b16 %v10066
    %v10872 = vunpack.c.h.b16 %v10066
    %v10873 = vunpack.c.l.b16 %v10067
    %v10874 = vunpack.c.h.b16 %v10067
    %v10875 = vunpack.c.l.b16 %v10068
    %v10876 = vunpack.c.h.b16 %v10068
    %v10877 = vunpack.c.l.b16 %v10069
    %v10878 = vunpack.c.h.b16 %v10069
    %v10879 = vunpack.c.l.b16 %v10070
    %v10880 = vunpack.c.h.b16 %v10070
    %v10881 = vunpack.c.l.b16 %v10071
    %v10882 = vunpack.c.h.b16 %v10071
    %v10883 = vunpack.c.l.b16 %v10072
    %v10884 = vunpack.c.h.b16 %v10072
    %v10885 = vunpack.c.l.b16 %v10073
    %v10886 = vunpack.c.h.b16 %v10073
    %v10887 = vunpack.c.l.b16 %v10074
    %v10888 = vunpack.c.h.b16 %v10074
    %v10889 = vunpack.c.l.b16 %v10075
    %v10890 = vunpack.c.h.b16 %v10075
    %v10891 = vunpack.c.l.b16 %v10076
    %v10892 = vunpack.c.h.b16 %v10076
    %v10893 = vunpack.c.l.b16 %v10077
    %v10894 = vunpack.c.h.b16 %v10077
    %v10895 = vunpack.c.l.b16 %v10078
    %v10896 = vunpack.c.h.b16 %v10078
    %v10897 = vunpack.c.l.b16 %v10079
    %v10898 = vunpack.c.h.b16 %v10079
    %v10899 = vunpack.c.l.b16 %v10080
    %v10900 = vunpack.c.h.b16 %v10080
    %v10901 = vunpack.c.l.b16 %v10081
    %v10902 = vunpack.c.h.b16 %v10081
    %v10903 = vunpack.c.l.b16 %v10082
    %v10904 = vunpack.c.h.b16 %v10082
    %v10905 = vunpack.c.l.b16 %v10083
    %v10906 = vunpack.c.h.b16 %v10083
    %v10907 = vunpack.c.l.b16 %v10084
    %v10908 = vunpack.c.h.b16 %v10084
    %v10909 = vunpack.c.l.b16 %v10085
    %v10910 = vunpack.c.h.b16 %v10085
    %v10911 = vunpack.c.l.b16 %v10086
    %v10912 = vunpack.c.h.b16 %v10086
    %v10913 = vunpack.c.l.b16 %v10087
    %v10914 = vunpack.c.h.b16 %v10087
    %v10915 = vunpack.c.l.b16 %v10088
    %v10916 = vunpack.c.h.b16 %v10088
    %v10917 = vunpack.c.l.b16 %v10089
    %v10918 = vunpack.c.h.b16 %v10089
    %v10919 = vunpack.c.l.b16 %v10090
    %v10920 = vunpack.c.h.b16 %v10090
    %v10921 = vunpack.c.l.b16 %v10091
    %v10922 = vunpack.c.h.b16 %v10091
    %v10923 = vunpack.c.l.b16 %v10092
    %v10924 = vunpack.c.h.b16 %v10092
    %v10925 = vunpack.c.l.b16 %v10093
    %v10926 = vunpack.c.h.b16 %v10093
    %v10927 = vunpack.c.l.b16 %v10094
    %v10928 = vunpack.c.h.b16 %v10094
    %v10929 = vunpack.c.l.b16 %v10095
    %v10930 = vunpack.c.h.b16 %v10095
    %v10931 = vunpack.c.l.b16 %v10096
    %v10932 = vunpack.c.h.b16 %v10096
    %v10933 = vunpack.c.l.b16 %v10097
    %v10934 = vunpack.c.h.b16 %v10097
    %v10935 = vunpack.c.l.b16 %v10098
    %v10936 = vunpack.c.h.b16 %v10098
    %v10937 = vunpack.c.l.b16 %v10099
    %v10938 = vunpack.c.h.b16 %v10099
    %v10939 = vunpack.c.l.b16 %v10100
    %v10940 = vunpack.c.h.b16 %v10100
    %v10941 = vunpack.c.l.b16 %v10101
    %v10942 = vunpack.c.h.b16 %v10101
    %v10943 = vunpack.c.l.b16 %v10102
    %v10944 = vunpack.c.h.b16 %v10102
    %v10945 = vunpack.c.l.b16 %v10103
    %v10946 = vunpack.c.h.b16 %v10103
    %v10947 = vunpack.c.l.b16 %v10104
    %v10948 = vunpack.c.h.b16 %v10104
    %v10949 = vunpack.c.l.b16 %v10105
    %v10950 = vunpack.c.h.b16 %v10105
    %v10951 = vunpack.c.l.b16 %v10106
    %v10952 = vunpack.c.h.b16 %v10106
    %v10953 = vunpack.c.l.b16 %v10107
    %v10954 = vunpack.c.h.b16 %v10107
    %v10955 = vunpack.c.l.b16 %v10108
    %v10956 = vunpack.c.h.b16 %v10108
    %v10957 = vunpack.c.l.b16 %v10109
    %v10958 = vunpack.c.h.b16 %v10109
    %v10959 = vunpack.c.l.b16 %v10110
    %v10960 = vunpack.c.h.b16 %v10110
    %v10961 = vunpack.c.l.b16 %v10111
    %v10962 = vunpack.c.h.b16 %v10111
    %v10963 = vunpack.c.l.b16 %v10112
    %v10964 = vunpack.c.h.b16 %v10112
    %v10965 = vunpack.c.l.b16 %v10113
    %v10966 = vunpack.c.h.b16 %v10113
    %v10967 = vunpack.c.l.b16 %v10114
    %v10968 = vunpack.c.h.b16 %v10114
    %v10969 = vunpack.c.l.b16 %v10115
    %v10970 = vunpack.c.h.b16 %v10115
    %v10971 = vunpack.c.l.b16 %v10116
    %v10972 = vunpack.c.h.b16 %v10116
    %v10973 = vunpack.c.l.b16 %v10117
    %v10974 = vunpack.c.h.b16 %v10117
    %v10975 = vunpack.c.l.b16 %v10118
    %v10976 = vunpack.c.h.b16 %v10118
    %v10977 = vunpack.c.l.b16 %v10119
    %v10978 = vunpack.c.h.b16 %v10119
    %v10979 = vunpack.c.l.b16 %v10120
    %v10980 = vunpack.c.h.b16 %v10120
    %v10981 = vunpack.c.l.b16 %v10121
    %v10982 = vunpack.c.h.b16 %v10121
    %v10983 = vunpack.c.l.b16 %v10122
    %v10984 = vunpack.c.h.b16 %v10122
    %v10985 = vunpack.c.l.b16 %v10123
    %v10986 = vunpack.c.h.b16 %v10123
    %v10987 = vunpack.c.l.b16 %v10124
    %v10988 = vunpack.c.h.b16 %v10124
    %v10989 = vunpack.c.l.b16 %v10125
    %v10990 = vunpack.c.h.b16 %v10125
    %v10991 = vunpack.c.l.b16 %v10126
    %v10992 = vunpack.c.h.b16 %v10126
    %v10993 = vunpack.c.l.b16 %v10127
    %v10994 = vunpack.c.h.b16 %v10127
    %v10995 = vunpack.c.l.b16 %v10128
    %v10996 = vunpack.c.h.b16 %v10128
    %v10997 = vunpack.c.l.b16 %v10129
    %v10998 = vunpack.c.h.b16 %v10129
    %v10999 = vunpack.c.l.b16 %v10130
    %v11000 = vunpack.c.h.b16 %v10130
    %v11001 = vunpack.c.l.b16 %v10131
    %v11002 = vunpack.c.h.b16 %v10131
    %v11003 = vunpack.c.l.b16 %v10132
    %v11004 = vunpack.c.h.b16 %v10132
    %v11005 = vunpack.c.l.b16 %v10133
    %v11006 = vunpack.c.h.b16 %v10133
    %v11007 = vunpack.c.l.b16 %v10134
    %v11008 = vunpack.c.h.b16 %v10134
    %v11009 = vunpack.c.l.b16 %v10135
    %v11010 = vunpack.c.h.b16 %v10135
    %v11011 = vunpack.c.l.b16 %v10136
    %v11012 = vunpack.c.h.b16 %v10136
    %v11013 = vunpack.c.l.b16 %v10137
    %v11014 = vunpack.c.h.b16 %v10137
    %v11015 = vunpack.c.l.b16 %v10138
    %v11016 = vunpack.c.h.b16 %v10138
    %v11017 = vunpack.c.l.b16 %v10139
    %v11018 = vunpack.c.h.b16 %v10139
    %v11019 = vunpack.c.l.b16 %v10140
    %v11020 = vunpack.c.h.b16 %v10140
    %v11021 = vunpack.c.l.b16 %v10141
    %v11022 = vunpack.c.h.b16 %v10141
    %v11023 = vunpack.c.l.b16 %v10142
    %v11024 = vunpack.c.h.b16 %v10142
    %v11025 = vunpack.c.l.b16 %v10143
    %v11026 = vunpack.c.h.b16 %v10143
    %v11027 = vunpack.c.l.b16 %v10144
    %v11028 = vunpack.c.h.b16 %v10144
    %v11029 = vunpack.c.l.b16 %v10145
    %v11030 = vunpack.c.h.b16 %v10145
    %v11031 = vunpack.c.l.b16 %v10146
    %v11032 = vunpack.c.h.b16 %v10146
    %v11033 = vunpack.c.l.b16 %v10147
    %v11034 = vunpack.c.h.b16 %v10147
    %v11035 = vunpack.c.l.b16 %v10148
    %v11036 = vunpack.c.h.b16 %v10148
    %v11037 = vunpack.c.l.b16 %v10149
    %v11038 = vunpack.c.h.b16 %v10149
    %v11039 = vunpack.c.l.b16 %v10150
    %v11040 = vunpack.c.h.b16 %v10150
    %v11041 = vunpack.c.l.b16 %v10151
    %v11042 = vunpack.c.h.b16 %v10151
    %v11043 = vunpack.c.l.b16 %v10152
    %v11044 = vunpack.c.h.b16 %v10152
    %v11045 = vunpack.c.l.b16 %v10153
    %v11046 = vunpack.c.h.b16 %v10153
    %v11047 = vunpack.c.l.b16 %v10154
    %v11048 = vunpack.c.h.b16 %v10154
    %v11049 = vunpack.c.l.b16 %v10155
    %v11050 = vunpack.c.h.b16 %v10155
    %v11051 = vunpack.c.l.b16 %v10156
    %v11052 = vunpack.c.h.b16 %v10156
    %v11053 = vunpack.c.l.b16 %v10157
    %v11054 = vunpack.c.h.b16 %v10157
    %v11055 = vunpack.c.l.b16 %v10158
    %v11056 = vunpack.c.h.b16 %v10158
    %v11057 = vunpack.c.l.b16 %v10159
    %v11058 = vunpack.c.h.b16 %v10159
    %v11059 = vunpack.c.l.b16 %v10160
    %v11060 = vunpack.c.h.b16 %v10160
    %v11061 = vunpack.c.l.b16 %v10161
    %v11062 = vunpack.c.h.b16 %v10161
    %v11063 = vunpack.c.l.b16 %v10162
    %v11064 = vunpack.c.h.b16 %v10162
    %v11065 = vunpack.c.l.b16 %v10163
    %v11066 = vunpack.c.h.b16 %v10163
    %v11067 = vunpack.c.l.b16 %v10164
    %v11068 = vunpack.c.h.b16 %v10164
    %v11069 = vunpack.c.l.b16 %v10165
    %v11070 = vunpack.c.h.b16 %v10165
    %v11071 = vunpack.c.l.b16 %v10166
    %v11072 = vunpack.c.h.b16 %v10166
    %v11073 = vunpack.c.l.b16 %v10167
    %v11074 = vunpack.c.h.b16 %v10167
    %v11075 = vunpack.c.l.b16 %v10168
    %v11076 = vunpack.c.h.b16 %v10168
    %v11077 = vunpack.c.l.b16 %v10169
    %v11078 = vunpack.c.h.b16 %v10169
    %v11079 = vunpack.c.l.b16 %v10170
    %v11080 = vunpack.c.h.b16 %v10170
    %v11081 = vunpack.c.l.b16 %v10171
    %v11082 = vunpack.c.h.b16 %v10171
    %v11083 = vunpack.c.l.b16 %v10172
    %v11084 = vunpack.c.h.b16 %v10172
    %v11085 = vunpack.c.l.b16 %v10173
    %v11086 = vunpack.c.h.b16 %v10173
    %v11087 = vunpack.c.l.b16 %v10174
    %v11088 = vunpack.c.h.b16 %v10174
    %v11089 = vunpack.c.l.b16 %v10175
    %v11090 = vunpack.c.h.b16 %v10175
    %v11091 = vunpack.c.l.b16 %v10176
    %v11092 = vunpack.c.h.b16 %v10176
    %v11093 = vunpack.c.l.b16 %v10177
    %v11094 = vunpack.c.h.b16 %v10177
    %v11095 = vunpack.c.l.b16 %v10178
    %v11096 = vunpack.c.h.b16 %v10178
    %v11097 = vunpack.c.l.b16 %v10179
    %v11098 = vunpack.c.h.b16 %v10179
    %v11099 = vunpack.c.l.b16 %v10180
    %v11100 = vunpack.c.h.b16 %v10180
    %v11101 = vunpack.c.l.b16 %v10181
    %v11102 = vunpack.c.h.b16 %v10181
    %v11103 = vunpack.c.l.b16 %v10182
    %v11104 = vunpack.c.h.b16 %v10182
    %v11105 = vunpack.c.l.b16 %v10183
    %v11106 = vunpack.c.h.b16 %v10183
    %v11107 = vunpack.c.l.b16 %v10184
    %v11108 = vunpack.c.h.b16 %v10184
    %v11109 = vunpack.c.l.b16 %v10185
    %v11110 = vunpack.c.h.b16 %v10185
    %v11111 = vunpack.c.l.b16 %v10186
    %v11112 = vunpack.c.h.b16 %v10186
    %v11113 = vunpack.c.l.b16 %v10187
    %v11114 = vunpack.c.h.b16 %v10187
    %v11115 = vunpack.c.l.b16 %v10188
    %v11116 = vunpack.c.h.b16 %v10188
    %v11117 = vunpack.c.l.b16 %v10189
    %v11118 = vunpack.c.h.b16 %v10189
    %v11119 = vunpack.c.l.b16 %v10190
    %v11120 = vunpack.c.h.b16 %v10190
    %v11121 = vunpack.c.l.b16 %v10191
    %v11122 = vunpack.c.h.b16 %v10191
    %v11123 = vunpack.c.l.b16 %v10192
    %v11124 = vunpack.c.h.b16 %v10192
    %v11125 = vunpack.c.l.b16 %v10193
    %v11126 = vunpack.c.h.b16 %v10193
    %v11127 = vunpack.c.l.b16 %v10194
    %v11128 = vunpack.c.h.b16 %v10194
    %v11129 = vunpack.c.l.b16 %v10195
    %v11130 = vunpack.c.h.b16 %v10195
    %v11131 = vunpack.c.l.b16 %v10196
    %v11132 = vunpack.c.h.b16 %v10196
    %v11133 = vunpack.c.l.b16 %v10197
    %v11134 = vunpack.c.h.b16 %v10197
    %v11135 = vunpack.c.l.b16 %v10198
    %v11136 = vunpack.c.h.b16 %v10198
    %v11137 = vunpack.c.l.b16 %v10199
    %v11138 = vunpack.c.h.b16 %v10199
    %v11139 = vunpack.c.l.b16 %v10200
    %v11140 = vunpack.c.h.b16 %v10200
    %v11141 = vunpack.c.l.b16 %v10201
    %v11142 = vunpack.c.h.b16 %v10201
    %v11143 = vunpack.c.l.b16 %v10202
    %v11144 = vunpack.c.h.b16 %v10202
    %v11145 = vunpack.c.l.b16 %v10203
    %v11146 = vunpack.c.h.b16 %v10203
    %v11147 = vunpack.c.l.b16 %v10204
    %v11148 = vunpack.c.h.b16 %v10204
    %v11149 = vunpack.c.l.b16 %v10205
    %v11150 = vunpack.c.h.b16 %v10205
    %v11151 = vunpack.c.l.b16 %v10206
    %v11152 = vunpack.c.h.b16 %v10206
    %v11153 = vunpack.c.l.b16 %v10207
    %v11154 = vunpack.c.h.b16 %v10207
    %v11155 = vunpack.c.l.b16 %v10208
    %v11156 = vunpack.c.h.b16 %v10208
    %v11157 = vunpack.c.l.b16 %v10209
    %v11158 = vunpack.c.h.b16 %v10209
    %v11159 = vunpack.c.l.b16 %v10210
    %v11160 = vunpack.c.h.b16 %v10210
    %v11161 = vunpack.c.l.b16 %v10211
    %v11162 = vunpack.c.h.b16 %v10211
    %v11163 = vunpack.c.l.b16 %v10212
    %v11164 = vunpack.c.h.b16 %v10212
    %v11165 = vunpack.c.l.b16 %v10213
    %v11166 = vunpack.c.h.b16 %v10213
    %v11167 = vunpack.c.l.b16 %v10214
    %v11168 = vunpack.c.h.b16 %v10214
    %v11169 = vunpack.c.l.b16 %v10215
    %v11170 = vunpack.c.h.b16 %v10215
    %v11171 = vunpack.c.l.b16 %v10216
    %v11172 = vunpack.c.h.b16 %v10216
    %v11173 = vunpack.c.l.b16 %v10217
    %v11174 = vunpack.c.h.b16 %v10217
    %v11175 = vunpack.c.l.b16 %v10218
    %v11176 = vunpack.c.h.b16 %v10218
    %v11177 = vunpack.c.l.b16 %v10219
    %v11178 = vunpack.c.h.b16 %v10219
    %v11179 = vunpack.c.l.b16 %v10220
    %v11180 = vunpack.c.h.b16 %v10220
    %v11181 = vunpack.c.l.b16 %v10221
    %v11182 = vunpack.c.h.b16 %v10221
    %v11183 = vunpack.c.l.b16 %v10222
    %v11184 = vunpack.c.h.b16 %v10222
    %v11185 = vunpack.c.l.b16 %v10223
    %v11186 = vunpack.c.h.b16 %v10223
    %v11187 = vunpack.c.l.b16 %v10224
    %v11188 = vunpack.c.h.b16 %v10224
    %v11189 = vunpack.c.l.b16 %v10225
    %v11190 = vunpack.c.h.b16 %v10225
    %v11191 = vunpack.c.l.b16 %v10226
    %v11192 = vunpack.c.h.b16 %v10226
    %v11193 = vunpack.c.l.b16 %v10227
    %v11194 = vunpack.c.h.b16 %v10227
    %v11195 = vunpack.c.l.b16 %v10228
    %v11196 = vunpack.c.h.b16 %v10228
    %v11197 = vunpack.c.l.b16 %v10229
    %v11198 = vunpack.c.h.b16 %v10229
    %v11199 = vunpack.c.l.b16 %v10230
    %v11200 = vunpack.c.h.b16 %v10230
    %v11201 = vunpack.c.l.b16 %v10231
    %v11202 = vunpack.c.h.b16 %v10231
    %v11203 = vunpack.c.l.b16 %v10232
    %v11204 = vunpack.c.h.b16 %v10232
    %v11205 = vunpack.c.l.b16 %v10233
    %v11206 = vunpack.c.h.b16 %v10233
    %v11207 = vunpack.c.l.b16 %v10234
    %v11208 = vunpack.c.h.b16 %v10234
    %v11209 = vunpack.c.l.b16 %v10235
    %v11210 = vunpack.c.h.b16 %v10235
    %v11211 = vunpack.c.l.b16 %v10236
    %v11212 = vunpack.c.h.b16 %v10236
    %v11213 = vunpack.c.l.b16 %v10237
    %v11214 = vunpack.c.h.b16 %v10237
    %v11215 = vunpack.c.l.b16 %v10238
    %v11216 = vunpack.c.h.b16 %v10238
    %v11217 = vunpack.c.l.b16 %v10239
    %v11218 = vunpack.c.h.b16 %v10239
    %v11219 = vunpack.c.l.b16 %v10240
    %v11220 = vunpack.c.h.b16 %v10240
    %v11221 = vunpack.c.l.b16 %v10241
    %v11222 = vunpack.c.h.b16 %v10241
    %v11223 = vunpack.c.l.b16 %v10242
    %v11224 = vunpack.c.h.b16 %v10242
    %v11225 = vunpack.c.l.b16 %v10243
    %v11226 = vunpack.c.h.b16 %v10243
    %v11227 = vunpack.c.l.b16 %v10244
    %v11228 = vunpack.c.h.b16 %v10244
    %v11229 = vunpack.c.l.b16 %v10245
    %v11230 = vunpack.c.h.b16 %v10245
    %v11231 = vunpack.c.l.b16 %v10246
    %v11232 = vunpack.c.h.b16 %v10246
    %v11233 = vunpack.c.l.b16 %v10247
    %v11234 = vunpack.c.h.b16 %v10247
    %v11235 = vunpack.c.l.b16 %v10248
    %v11236 = vunpack.c.h.b16 %v10248
    %v11237 = vunpack.c.l.b16 %v10249
    %v11238 = vunpack.c.h.b16 %v10249
    %v11239 = vunpack.c.l.b16 %v10250
    %v11240 = vunpack.c.h.b16 %v10250
    %v11241 = vunpack.c.l.b16 %v10251
    %v11242 = vunpack.c.h.b16 %v10251
    %v11243 = vunpack.c.l.b16 %v10252
    %v11244 = vunpack.c.h.b16 %v10252
    %v11245 = vunpack.c.l.b16 %v10253
    %v11246 = vunpack.c.h.b16 %v10253
    %v11247 = vunpack.c.l.b16 %v10254
    %v11248 = vunpack.c.h.b16 %v10254
    %v11249 = vunpack.c.l.b16 %v10255
    %v11250 = vunpack.c.h.b16 %v10255
    %v11251 = vunpack.c.l.b16 %v10256
    %v11252 = vunpack.c.h.b16 %v10256
    %v11253 = vunpack.c.l.b16 %v10257
    %v11254 = vunpack.c.h.b16 %v10257
    %v11255 = vunpack.c.l.b16 %v10258
    %v11256 = vunpack.c.h.b16 %v10258
    %v11257 = vunpack.c.l.b16 %v10259
    %v11258 = vunpack.c.h.b16 %v10259
    %v11259 = vunpack.c.l.b16 %v10260
    %v11260 = vunpack.c.h.b16 %v10260
    %v11261 = vunpack.c.l.b16 %v10261
    %v11262 = vunpack.c.h.b16 %v10261
    %v11263 = vunpack.c.l.b16 %v10262
    %v11264 = vunpack.c.h.b16 %v10262
    %v11265 = vunpack.c.l.b16 %v10263
    %v11266 = vunpack.c.h.b16 %v10263
    %v11267 = vunpack.c.l.b16 %v10264
    %v11268 = vunpack.c.h.b16 %v10264
    %v11269 = vunpack.c.l.b16 %v10265
    %v11270 = vunpack.c.h.b16 %v10265
    %v11271 = vunpack.c.l.b16 %v10266
    %v11272 = vunpack.c.h.b16 %v10266
    %v11273 = vunpack.c.l.b16 %v10267
    %v11274 = vunpack.c.h.b16 %v10267
    %v11275 = vunpack.c.l.b16 %v10268
    %v11276 = vunpack.c.h.b16 %v10268
    %v11277 = vunpack.c.l.b16 %v10269
    %v11278 = vunpack.c.h.b16 %v10269
    %v11279 = vunpack.c.l.b16 %v10270
    %v11280 = vunpack.c.h.b16 %v10270
    %v11281 = vunpack.c.l.b16 %v10271
    %v11282 = vunpack.c.h.b16 %v10271
    %v11283 = vunpack.c.l.b16 %v10272
    %v11284 = vunpack.c.h.b16 %v10272
    %v11285 = vunpack.c.l.b16 %v10273
    %v11286 = vunpack.c.h.b16 %v10273
    %v11287 = vunpack.c.l.b16 %v10274
    %v11288 = vunpack.c.h.b16 %v10274
    %v11289 = vunpack.c.l.b16 %v10275
    %v11290 = vunpack.c.h.b16 %v10275
    %v11291 = vunpack.c.l.b16 %v10276
    %v11292 = vunpack.c.h.b16 %v10276
    %v11293 = vunpack.c.l.b16 %v10277
    %v11294 = vunpack.c.h.b16 %v10277
    %v11295 = vunpack.c.l.b16 %v10278
    %v11296 = vunpack.c.h.b16 %v10278
    %v11297 = vunpack.c.l.b16 %v10279
    %v11298 = vunpack.c.h.b16 %v10279
    %v11299 = vunpack.c.l.b16 %v10280
    %v11300 = vunpack.c.h.b16 %v10280
    %v11301 = vunpack.c.l.b16 %v10281
    %v11302 = vunpack.c.h.b16 %v10281
    %v11303 = vunpack.c.l.b16 %v10282
    %v11304 = vunpack.c.h.b16 %v10282
    %v11305 = vunpack.c.l.b16 %v10283
    %v11306 = vunpack.c.h.b16 %v10283
    %v11307 = vunpack.c.l.b16 %v10284
    %v11308 = vunpack.c.h.b16 %v10284
    %v11309 = vunpack.c.l.b16 %v10285
    %v11310 = vunpack.c.h.b16 %v10285
    %v11311 = vunpack.c.l.b16 %v10286
    %v11312 = vunpack.c.h.b16 %v10286
    %v11313 = vunpack.c.l.b16 %v10287
    %v11314 = vunpack.c.h.b16 %v10287
    %v11315 = vunpack.c.l.b16 %v10288
    %v11316 = vunpack.c.h.b16 %v10288
    %v11317 = vunpack.c.l.b16 %v10289
    %v11318 = vunpack.c.h.b16 %v10289
    %v11319 = vunpack.c.l.b16 %v10290
    %v11320 = vunpack.c.h.b16 %v10290
    %v11321 = vunpack.c.l.b16 %v10291
    %v11322 = vunpack.c.h.b16 %v10291
    %v11323 = vunpack.c.l.b16 %v10292
    %v11324 = vunpack.c.h.b16 %v10292
    %v11325 = vunpack.c.l.b16 %v10293
    %v11326 = vunpack.c.h.b16 %v10293
    %v11327 = vunpack.c.l.b16 %v10294
    %v11328 = vunpack.c.h.b16 %v10294
    %v11329 = vunpack.c.l.b16 %v10295
    %v11330 = vunpack.c.h.b16 %v10295
    %v11331 = vunpack.c.l.b16 %v10296
    %v11332 = vunpack.c.h.b16 %v10296
    %v11333 = vunpack.c.l.b16 %v10297
    %v11334 = vunpack.c.h.b16 %v10297
    %v11335 = vunpack.c.l.b16 %v10298
    %v11336 = vunpack.c.h.b16 %v10298
    %v11337 = vunpack.c.l.b16 %v10299
    %v11338 = vunpack.c.h.b16 %v10299
    %v11339 = vunpack.c.l.b16 %v10300
    %v11340 = vunpack.c.h.b16 %v10300
    %v11341 = vunpack.c.l.b16 %v10301
    %v11342 = vunpack.c.h.b16 %v10301
    %v11343 = vunpack.c.l.b16 %v10302
    %v11344 = vunpack.c.h.b16 %v10302
    %v11345 = vunpack.c.l.b16 %v10303
    %v11346 = vunpack.c.h.b16 %v10303
    %v11347 = vunpack.c.l.b16 %v10304
    %v11348 = vunpack.c.h.b16 %v10304
    %v11349 = vunpack.c.l.b16 %v10305
    %v11350 = vunpack.c.h.b16 %v10305
    %v11351 = vunpack.c.l.b16 %v10306
    %v11352 = vunpack.c.h.b16 %v10306
    %v11353 = vunpack.c.l.b16 %v10307
    %v11354 = vunpack.c.h.b16 %v10307
    %v11355 = vunpack.c.l.b16 %v10308
    %v11356 = vunpack.c.h.b16 %v10308
    %v11357 = vunpack.c.l.b16 %v10309
    %v11358 = vunpack.c.h.b16 %v10309
    %v11359 = vunpack.c.l.b16 %v10310
    %v11360 = vunpack.c.h.b16 %v10310
    %v11361 = vunpack.c.l.b16 %v10311
    %v11362 = vunpack.c.h.b16 %v10311
    %v11363 = vunpack.c.l.b16 %v10312
    %v11364 = vunpack.c.h.b16 %v10312
    %v11365 = vunpack.c.l.b16 %v10313
    %v11366 = vunpack.c.h.b16 %v10313
    %v11367 = vunpack.c.l.b16 %v10314
    %v11368 = vunpack.c.h.b16 %v10314
    %v11369 = vunpack.c.l.b16 %v10315
    %v11370 = vunpack.c.h.b16 %v10315
    %v11371 = vunpack.c.l.b16 %v10316
    %v11372 = vunpack.c.h.b16 %v10316
    %v11373 = vunpack.c.l.b16 %v10317
    %v11374 = vunpack.c.h.b16 %v10317
    %v11375 = vunpack.c.l.b16 %v10318
    %v11376 = vunpack.c.h.b16 %v10318
    %v11377 = vunpack.c.l.b16 %v10319
    %v11378 = vunpack.c.h.b16 %v10319
    %v11379 = vunpack.c.l.b16 %v10320
    %v11380 = vunpack.c.h.b16 %v10320
    %v11381 = vunpack.c.l.b16 %v10321
    %v11382 = vunpack.c.h.b16 %v10321
    %v11383 = vunpack.c.l.b16 %v10322
    %v11384 = vunpack.c.h.b16 %v10322
    %v11385 = vunpack.c.l.b16 %v10323
    %v11386 = vunpack.c.h.b16 %v10323
    %v11387 = vunpack.c.l.b16 %v10324
    %v11388 = vunpack.c.h.b16 %v10324
    %v11389 = vunpack.c.l.b16 %v10325
    %v11390 = vunpack.c.h.b16 %v10325
    %v11391 = vunpack.c.l.b16 %v10326
    %v11392 = vunpack.c.h.b16 %v10326
    %v11393 = vunpack.c.l.b16 %v10327
    %v11394 = vunpack.c.h.b16 %v10327
    %v11395 = vunpack.c.l.b16 %v10328
    %v11396 = vunpack.c.h.b16 %v10328
    %v11397 = vunpack.c.l.b16 %v10329
    %v11398 = vunpack.c.h.b16 %v10329
    %v11399 = vunpack.c.l.b16 %v10330
    %v11400 = vunpack.c.h.b16 %v10330
    %v11401 = vunpack.c.l.b16 %v10331
    %v11402 = vunpack.c.h.b16 %v10331
    %v11403 = vunpack.c.l.b16 %v10332
    %v11404 = vunpack.c.h.b16 %v10332
    %v11405 = vunpack.c.l.b16 %v10333
    %v11406 = vunpack.c.h.b16 %v10333
    %v11407 = vunpack.c.l.b16 %v10334
    %v11408 = vunpack.c.h.b16 %v10334
    %v11409 = vunpack.c.l.b16 %v10335
    %v11410 = vunpack.c.h.b16 %v10335
    %v11411 = vunpack.c.l.b16 %v10336
    %v11412 = vunpack.c.h.b16 %v10336
    %v11413 = vunpack.c.l.b16 %v10337
    %v11414 = vunpack.c.h.b16 %v10337
    %v11415 = vunpack.c.l.b16 %v10338
    %v11416 = vunpack.c.h.b16 %v10338
    %v11417 = vunpack.c.l.b16 %v10339
    %v11418 = vunpack.c.h.b16 %v10339
    %v11419 = vunpack.c.l.b16 %v10340
    %v11420 = vunpack.c.h.b16 %v10340
    %v11421 = vunpack.c.l.b16 %v10341
    %v11422 = vunpack.c.h.b16 %v10341
    %v11423 = vunpack.c.l.b16 %v10342
    %v11424 = vunpack.c.h.b16 %v10342
    %v11425 = vunpack.c.l.b16 %v10343
    %v11426 = vunpack.c.h.b16 %v10343
    %v11427 = vunpack.c.l.b16 %v10344
    %v11428 = vunpack.c.h.b16 %v10344
    %v11429 = vunpack.c.l.b16 %v10345
    %v11430 = vunpack.c.h.b16 %v10345
    %v11431 = vunpack.c.l.b16 %v10346
    %v11432 = vunpack.c.h.b16 %v10346
    %v11433 = vunpack.c.l.b16 %v10347
    %v11434 = vunpack.c.h.b16 %v10347
    %v11435 = vunpack.c.l.b16 %v10348
    %v11436 = vunpack.c.h.b16 %v10348
    %v11437 = vunpack.c.l.b16 %v10349
    %v11438 = vunpack.c.h.b16 %v10349
    %v11439 = vunpack.c.l.b16 %v10350
    %v11440 = vunpack.c.h.b16 %v10350
    %v11441 = vunpack.c.l.b16 %v10351
    %v11442 = vunpack.c.h.b16 %v10351
    %v11443 = vunpack.c.l.b16 %v10352
    %v11444 = vunpack.c.h.b16 %v10352
    %v11445 = vunpack.c.l.b16 %v10353
    %v11446 = vunpack.c.h.b16 %v10353
    %v11447 = vunpack.c.l.b16 %v10354
    %v11448 = vunpack.c.h.b16 %v10354
    %v11449 = vunpack.c.l.b16 %v10355
    %v11450 = vunpack.c.h.b16 %v10355
    %v11451 = vunpack.c.l.b16 %v10356
    %v11452 = vunpack.c.h.b16 %v10356
    %v11453 = vunpack.c.l.b16 %v10357
    %v11454 = vunpack.c.h.b16 %v10357
    %v11455 = vunpack.c.l.b16 %v10358
    %v11456 = vunpack.c.h.b16 %v10358
    %v11457 = vunpack.c.l.b16 %v10359
    %v11458 = vunpack.c.h.b16 %v10359
    %v11459 = vunpack.c.l.b16 %v10360
    %v11460 = vunpack.c.h.b16 %v10360
    %v11461 = vunpack.c.l.b16 %v10361
    %v11462 = vunpack.c.h.b16 %v10361
    %v11463 = vunpack.c.l.b16 %v10362
    %v11464 = vunpack.c.h.b16 %v10362
    %v11465 = vunpack.c.l.b16 %v10363
    %v11466 = vunpack.c.h.b16 %v10363
    %v11467 = vunpack.c.l.b16 %v10364
    %v11468 = vunpack.c.h.b16 %v10364
    %v11469 = vunpack.c.l.b16 %v10365
    %v11470 = vunpack.c.h.b16 %v10365
    %v11471 = vunpack.c.l.b16 %v10366
    %v11472 = vunpack.c.h.b16 %v10366
    %v11473 = vunpack.c.l.b16 %v10367
    %v11474 = vunpack.c.h.b16 %v10367
    %v11475 = vunpack.c.l.b16 %v10368
    %v11476 = vunpack.c.h.b16 %v10368
    %v11477 = vunpack.c.l.b16 %v10369
    %v11478 = vunpack.c.h.b16 %v10369
    %v11479 = vunpack.c.l.b16 %v10370
    %v11480 = vunpack.c.h.b16 %v10370
    %v11481 = vunpack.c.l.b16 %v10371
    %v11482 = vunpack.c.h.b16 %v10371
    %v11483 = vunpack.c.l.b16 %v10372
    %v11484 = vunpack.c.h.b16 %v10372
    %v11485 = vunpack.c.l.b16 %v10373
    %v11486 = vunpack.c.h.b16 %v10373
    %v11487 = vunpack.c.l.b16 %v10374
    %v11488 = vunpack.c.h.b16 %v10374
    %v11489 = vunpack.c.l.b16 %v10375
    %v11490 = vunpack.c.h.b16 %v10375
    %v11491 = vunpack.c.l.b16 %v10376
    %v11492 = vunpack.c.h.b16 %v10376
    %v11493 = vunpack.c.l.b16 %v10377
    %v11494 = vunpack.c.h.b16 %v10377
    %v11495 = vunpack.c.l.b16 %v10378
    %v11496 = vunpack.c.h.b16 %v10378
    %v11497 = vunpack.c.l.b16 %v10379
    %v11498 = vunpack.c.h.b16 %v10379
    %v11499 = vunpack.c.l.b16 %v10380
    %v11500 = vunpack.c.h.b16 %v10380
    %v11501 = vunpack.c.l.b16 %v10381
    %v11502 = vunpack.c.h.b16 %v10381
    %v11503 = vunpack.c.l.b16 %v10382
    %v11504 = vunpack.c.h.b16 %v10382
    %v11505 = vunpack.c.l.b16 %v10383
    %v11506 = vunpack.c.h.b16 %v10383
    %v11507 = vunpack.c.l.b16 %v10384
    %v11508 = vunpack.c.h.b16 %v10384
    %v11509 = vunpack.c.l.b16 %v10385
    %v11510 = vunpack.c.h.b16 %v10385
    %v11511 = vunpack.c.l.b16 %v10386
    %v11512 = vunpack.c.h.b16 %v10386
    %v11513 = vunpack.c.l.b16 %v10387
    %v11514 = vunpack.c.h.b16 %v10387
    %v11515 = vunpack.c.l.b16 %v10388
    %v11516 = vunpack.c.h.b16 %v10388
    %v11517 = vunpack.c.l.b16 %v10389
    %v11518 = vunpack.c.h.b16 %v10389
    %v11519 = vunpack.c.l.b16 %v10390
    %v11520 = vunpack.c.h.b16 %v10390
    %v11521 = vunpack.c.l.b16 %v10391
    %v11522 = vunpack.c.h.b16 %v10391
    %v11523 = vunpack.c.l.b16 %v10392
    %v11524 = vunpack.c.h.b16 %v10392
    %v11525 = vunpack.c.l.b16 %v10393
    %v11526 = vunpack.c.h.b16 %v10393
    %v11527 = vunpack.c.l.b16 %v10394
    %v11528 = vunpack.c.h.b16 %v10394
    %v11529 = vunpack.c.l.b16 %v10395
    %v11530 = vunpack.c.h.b16 %v10395
    %v11531 = vunpack.c.l.b16 %v10396
    %v11532 = vunpack.c.h.b16 %v10396
    %v11533 = vunpack.c.l.b16 %v10397
    %v11534 = vunpack.c.h.b16 %v10397
    %v11535 = vunpack.c.l.b16 %v10398
    %v11536 = vunpack.c.h.b16 %v10398
    %v11537 = vunpack.c.l.b16 %v10399
    %v11538 = vunpack.c.h.b16 %v10399
    %v11539 = vunpack.c.l.b16 %v10400
    %v11540 = vunpack.c.h.b16 %v10400
    %v11541 = vunpack.c.l.b16 %v10401
    %v11542 = vunpack.c.h.b16 %v10401
    %v11543 = vunpack.c.l.b16 %v10402
    %v11544 = vunpack.c.h.b16 %v10402
    %v11545 = vunpack.c.l.b16 %v10403
    %v11546 = vunpack.c.h.b16 %v10403
    %v11547 = vunpack.c.l.b16 %v10404
    %v11548 = vunpack.c.h.b16 %v10404
    %v11549 = vunpack.c.l.b16 %v10405
    %v11550 = vunpack.c.h.b16 %v10405
    %v11551 = vunpack.c.l.b16 %v10406
    %v11552 = vunpack.c.h.b16 %v10406
    %v11553 = vunpack.c.l.b16 %v10407
    %v11554 = vunpack.c.h.b16 %v10407
    %v11555 = vunpack.c.l.b16 %v10408
    %v11556 = vunpack.c.h.b16 %v10408
    %v11557 = vunpack.c.l.b16 %v10409
    %v11558 = vunpack.c.h.b16 %v10409
    %v11559 = vunpack.c.l.b16 %v10410
    %v11560 = vunpack.c.h.b16 %v10410
    %v11561 = vunpack.c.l.b16 %v10411
    %v11562 = vunpack.c.h.b16 %v10411
    %v11563 = vunpack.c.l.b16 %v10412
    %v11564 = vunpack.c.h.b16 %v10412
    %v11565 = vunpack.c.l.b16 %v10413
    %v11566 = vunpack.c.h.b16 %v10413
    %v11567 = vunpack.c.l.b16 %v10414
    %v11568 = vunpack.c.h.b16 %v10414
    %v11569 = vunpack.c.l.b16 %v10415
    %v11570 = vunpack.c.h.b16 %v10415
    %v11571 = vunpack.c.l.b16 %v10416
    %v11572 = vunpack.c.h.b16 %v10416
    %v11573 = vunpack.c.l.b16 %v10417
    %v11574 = vunpack.c.h.b16 %v10417
    %v11575 = vunpack.c.l.b16 %v10418
    %v11576 = vunpack.c.h.b16 %v10418
    %v11577 = vunpack.c.l.b16 %v10419
    %v11578 = vunpack.c.h.b16 %v10419
    %v11579 = vunpack.c.l.b16 %v10420
    %v11580 = vunpack.c.h.b16 %v10420
    %v11581 = vunpack.c.l.b16 %v10421
    %v11582 = vunpack.c.h.b16 %v10421
    %v11583 = vunpack.c.l.b16 %v10422
    %v11584 = vunpack.c.h.b16 %v10422
    %v11585 = vunpack.c.l.b16 %v10423
    %v11586 = vunpack.c.h.b16 %v10423
    %v11587 = vunpack.c.l.b16 %v10424
    %v11588 = vunpack.c.h.b16 %v10424
    %v11589 = vunpack.c.l.b16 %v10425
    %v11590 = vunpack.c.h.b16 %v10425
    %v11591 = vunpack.c.l.b16 %v10426
    %v11592 = vunpack.c.h.b16 %v10426
    %v11593 = vunpack.c.l.b16 %v10427
    %v11594 = vunpack.c.h.b16 %v10427
    %v11595 = vunpack.c.l.b16 %v10428
    %v11596 = vunpack.c.h.b16 %v10428
    %v11597 = vunpack.c.l.b16 %v10429
    %v11598 = vunpack.c.h.b16 %v10429
    %v11599 = vunpack.c.l.b16 %v10430
    %v11600 = vunpack.c.h.b16 %v10430
    %v11601 = vunpack.c.l.b16 %v10431
    %v11602 = vunpack.c.h.b16 %v10431
    %v11603 = vunpack.c.l.b16 %v10432
    %v11604 = vunpack.c.h.b16 %v10432
    %v11605 = vunpack.c.l.b16 %v10433
    %v11606 = vunpack.c.h.b16 %v10433
    %v11607 = vunpack.c.l.b16 %v10434
    %v11608 = vunpack.c.h.b16 %v10434
    %v11609 = vunpack.c.l.b16 %v10435
    %v11610 = vunpack.c.h.b16 %v10435
    %v11611 = vunpack.c.l.b16 %v10436
    %v11612 = vunpack.c.h.b16 %v10436
    %v11613 = vunpack.c.l.b16 %v10437
    %v11614 = vunpack.c.h.b16 %v10437
    %v11615 = vunpack.c.l.b16 %v10438
    %v11616 = vunpack.c.h.b16 %v10438
    %v11617 = vunpack.c.l.b16 %v10439
    %v11618 = vunpack.c.h.b16 %v10439
    %v11619 = vunpack.c.l.b16 %v10440
    %v11620 = vunpack.c.h.b16 %v10440
    %v11621 = vunpack.c.l.b16 %v10441
    %v11622 = vunpack.c.h.b16 %v10441
    %v11623 = vunpack.c.l.b16 %v10442
    %v11624 = vunpack.c.h.b16 %v10442
    %v11625 = vunpack.c.l.b16 %v10443
    %v11626 = vunpack.c.h.b16 %v10443
    %v11627 = vunpack.c.l.b16 %v10444
    %v11628 = vunpack.c.h.b16 %v10444
    %v11629 = vpack.c.b16 %v10867, %v10861
    %v11630 = vpack.c.b16 %v10868, %v10862
    %v11631 = vpack.c.b16 %v10869, %v10863
    %v11632 = vpack.c.b16 %v10870, %v10864
    %v11633 = vpack.c.b16 %v10871, %v10865
    %v11634 = vpack.c.b16 %v10872, %v10866
    %v11635 = vpack.c.b16 %v10879, %v10873
    %v11636 = vpack.c.b16 %v10880, %v10874
    %v11637 = vpack.c.b16 %v10881, %v10875
    %v11638 = vpack.c.b16 %v10882, %v10876
    %v11639 = vpack.c.b16 %v10883, %v10877
    %v11640 = vpack.c.b16 %v10884, %v10878
    %v11641 = vpack.c.b16 %v10891, %v10885
    %v11642 = vpack.c.b16 %v10892, %v10886
    %v11643 = vpack.c.b16 %v10893, %v10887
    %v11644 = vpack.c.b16 %v10894, %v10888
    %v11645 = vpack.c.b16 %v10895, %v10889
    %v11646 = vpack.c.b16 %v10896, %v10890
    %v11647 = vpack.c.b16 %v10903, %v10897
    %v11648 = vpack.c.b16 %v10904, %v10898
    %v11649 = vpack.c.b16 %v10905, %v10899
    %v11650 = vpack.c.b16 %v10906, %v10900
    %v11651 = vpack.c.b16 %v10907, %v10901
    %v11652 = vpack.c.b16 %v10908, %v10902
    %v11653 = vpack.c.b16 %v10915, %v10909
    %v11654 = vpack.c.b16 %v10916, %v10910
    %v11655 = vpack.c.b16 %v10917, %v10911
    %v11656 = vpack.c.b16 %v10918, %v10912
    %v11657 = vpack.c.b16 %v10919, %v10913
    %v11658 = vpack.c.b16 %v10920, %v10914
    %v11659 = vpack.c.b16 %v10927, %v10921
    %v11660 = vpack.c.b16 %v10928, %v10922
    %v11661 = vpack.c.b16 %v10929, %v10923
    %v11662 = vpack.c.b16 %v10930, %v10924
    %v11663 = vpack.c.b16 %v10931, %v10925
    %v11664 = vpack.c.b16 %v10932, %v10926
    %v11665 = vpack.c.b16 %v10939, %v10933
    %v11666 = vpack.c.b16 %v10940, %v10934
    %v11667 = vpack.c.b16 %v10941, %v10935
    %v11668 = vpack.c.b16 %v10942, %v10936
    %v11669 = vpack.c.b16 %v10943, %v10937
    %v11670 = vpack.c.b16 %v10944, %v10938
    %v11671 = vpack.c.b16 %v10951, %v10945
    %v11672 = vpack.c.b16 %v10952, %v10946
    %v11673 = vpack.c.b16 %v10953, %v10947
    %v11674 = vpack.c.b16 %v10954, %v10948
    %v11675 = vpack.c.b16 %v10955, %v10949
    %v11676 = vpack.c.b16 %v10956, %v10950
    %v11677 = vpack.c.b16 %v10963, %v10957
    %v11678 = vpack.c.b16 %v10964, %v10958
    %v11679 = vpack.c.b16 %v10965, %v10959
    %v11680 = vpack.c.b16 %v10966, %v10960
    %v11681 = vpack.c.b16 %v10967, %v10961
    %v11682 = vpack.c.b16 %v10968, %v10962
    %v11683 = vpack.c.b16 %v10975, %v10969
    %v11684 = vpack.c.b16 %v10976, %v10970
    %v11685 = vpack.c.b16 %v10977, %v10971
    %v11686 = vpack.c.b16 %v10978, %v10972
    %v11687 = vpack.c.b16 %v10979, %v10973
    %v11688 = vpack.c.b16 %v10980, %v10974
    %v11689 = vpack.c.b16 %v10987, %v10981
    %v11690 = vpack.c.b16 %v10988, %v10982
    %v11691 = vpack.c.b16 %v10989, %v10983
    %v11692 = vpack.c.b16 %v10990, %v10984
    %v11693 = vpack.c.b16 %v10991, %v10985
    %v11694 = vpack.c.b16 %v10992, %v10986
    %v11695 = vpack.c.b16 %v10999, %v10993
    %v11696 = vpack.c.b16 %v11000, %v10994
    %v11697 = vpack.c.b16 %v11001, %v10995
    %v11698 = vpack.c.b16 %v11002, %v10996
    %v11699 = vpack.c.b16 %v11003, %v10997
    %v11700 = vpack.c.b16 %v11004, %v10998
    %v11701 = vpack.c.b16 %v11011, %v11005
    %v11702 = vpack.c.b16 %v11012, %v11006
    %v11703 = vpack.c.b16 %v11013, %v11007
    %v11704 = vpack.c.b16 %v11014, %v11008
    %v11705 = vpack.c.b16 %v11015, %v11009
    %v11706 = vpack.c.b16 %v11016, %v11010
    %v11707 = vpack.c.b16 %v11023, %v11017
    %v11708 = vpack.c.b16 %v11024, %v11018
    %v11709 = vpack.c.b16 %v11025, %v11019
    %v11710 = vpack.c.b16 %v11026, %v11020
    %v11711 = vpack.c.b16 %v11027, %v11021
    %v11712 = vpack.c.b16 %v11028, %v11022
    %v11713 = vpack.c.b16 %v11035, %v11029
    %v11714 = vpack.c.b16 %v11036, %v11030
    %v11715 = vpack.c.b16 %v11037, %v11031
    %v11716 = vpack.c.b16 %v11038, %v11032
    %v11717 = vpack.c.b16 %v11039, %v11033
    %v11718 = vpack.c.b16 %v11040, %v11034
    %v11719 = vpack.c.b16 %v11047, %v11041
    %v11720 = vpack.c.b16 %v11048, %v11042
    %v11721 = vpack.c.b16 %v11049, %v11043
    %v11722 = vpack.c.b16 %v11050, %v11044
    %v11723 = vpack.c.b16 %v11051, %v11045
    %v11724 = vpack.c.b16 %v11052, %v11046
    %v11725 = vpack.c.b16 %v11059, %v11053
    %v11726 = vpack.c.b16 %v11060, %v11054
    %v11727 = vpack.c.b16 %v11061, %v11055
    %v11728 = vpack.c.b16 %v11062, %v11056
    %v11729 = vpack.c.b16 %v11063, %v11057
    %v11730 = vpack.c.b16 %v11064, %v11058
    %v11731 = vpack.c.b16 %v11071, %v11065
    %v11732 = vpack.c.b16 %v11072, %v11066
    %v11733 = vpack.c.b16 %v11073, %v11067
    %v11734 = vpack.c.b16 %v11074, %v11068
    %v11735 = vpack.c.b16 %v11075, %v11069
    %v11736 = vpack.c.b16 %v11076, %v11070
    %v11737 = vpack.c.b16 %v11083, %v11077
    %v11738 = vpack.c.b16 %v11084, %v11078
    %v11739 = vpack.c.b16 %v11085, %v11079
    %v11740 = vpack.c.b16 %v11086, %v11080
    %v11741 = vpack.c.b16 %v11087, %v11081
    %v11742 = vpack.c.b16 %v11088, %v11082
    %v11743 = vpack.c.b16 %v11095, %v11089
    %v11744 = vpack.c.b16 %v11096, %v11090
    %v11745 = vpack.c.b16 %v11097, %v11091
    %v11746 = vpack.c.b16 %v11098, %v11092
    %v11747 = vpack.c.b16 %v11099, %v11093
    %v11748 = vpack.c.b16 %v11100, %v11094
    %v11749 = vpack.c.b16 %v11107, %v11101
    %v11750 = vpack.c.b16 %v11108, %v11102
    %v11751 = vpack.c.b16 %v11109, %v11103
    %v11752 = vpack.c.b16 %v11110, %v11104
    %v11753 = vpack.c.b16 %v11111, %v11105
    %v11754 = vpack.c.b16 %v11112, %v11106
    %v11755 = vpack.c.b16 %v11119, %v11113
    %v11756 = vpack.c.b16 %v11120, %v11114
    %v11757 = vpack.c.b16 %v11121, %v11115
    %v11758 = vpack.c.b16 %v11122, %v11116
    %v11759 = vpack.c.b16 %v11123, %v11117
    %v11760 = vpack.c.b16 %v11124, %v11118
    %v11761 = vpack.c.b16 %v11131, %v11125
    %v11762 = vpack.c.b16 %v11132, %v11126
    %v11763 = vpack.c.b16 %v11133, %v11127
    %v11764 = vpack.c.b16 %v11134, %v11128
    %v11765 = vpack.c.b16 %v11135, %v11129
    %v11766 = vpack.c.b16 %v11136, %v11130
    %v11767 = vpack.c.b16 %v11143, %v11137
    %v11768 = vpack.c.b16 %v11144, %v11138
    %v11769 = vpack.c.b16 %v11145, %v11139
    %v11770 = vpack.c.b16 %v11146, %v11140
    %v11771 = vpack.c.b16 %v11147, %v11141
    %v11772 = vpack.c.b16 %v11148, %v11142
    %v11773 = vpack.c.b16 %v11155, %v11149
    %v11774 = vpack.c.b16 %v11156, %v11150
    %v11775 = vpack.c.b16 %v11157, %v11151
    %v11776 = vpack.c.b16 %v11158, %v11152
    %v11777 = vpack.c.b16 %v11159, %v11153
    %v11778 = vpack.c.b16 %v11160, %v11154
    %v11779 = vpack.c.b16 %v11167, %v11161
    %v11780 = vpack.c.b16 %v11168, %v11162
    %v11781 = vpack.c.b16 %v11169, %v11163
    %v11782 = vpack.c.b16 %v11170, %v11164
    %v11783 = vpack.c.b16 %v11171, %v11165
    %v11784 = vpack.c.b16 %v11172, %v11166
    %v11785 = vpack.c.b16 %v11179, %v11173
    %v11786 = vpack.c.b16 %v11180, %v11174
    %v11787 = vpack.c.b16 %v11181, %v11175
    %v11788 = vpack.c.b16 %v11182, %v11176
    %v11789 = vpack.c.b16 %v11183, %v11177
    %v11790 = vpack.c.b16 %v11184, %v11178
    %v11791 = vpack.c.b16 %v11191, %v11185
    %v11792 = vpack.c.b16 %v11192, %v11186
    %v11793 = vpack.c.b16 %v11193, %v11187
    %v11794 = vpack.c.b16 %v11194, %v11188
    %v11795 = vpack.c.b16 %v11195, %v11189
    %v11796 = vpack.c.b16 %v11196, %v11190
    %v11797 = vpack.c.b16 %v11203, %v11197
    %v11798 = vpack.c.b16 %v11204, %v11198
    %v11799 = vpack.c.b16 %v11205, %v11199
    %v11800 = vpack.c.b16 %v11206, %v11200
    %v11801 = vpack.c.b16 %v11207, %v11201
    %v11802 = vpack.c.b16 %v11208, %v11202
    %v11803 = vpack.c.b16 %v11215, %v11209
    %v11804 = vpack.c.b16 %v11216, %v11210
    %v11805 = vpack.c.b16 %v11217, %v11211
    %v11806 = vpack.c.b16 %v11218, %v11212
    %v11807 = vpack.c.b16 %v11219, %v11213
    %v11808 = vpack.c.b16 %v11220, %v11214
    %v11809 = vpack.c.b16 %v11227, %v11221
    %v11810 = vpack.c.b16 %v11228, %v11222
    %v11811 = vpack.c.b16 %v11229, %v11223
    %v11812 = vpack.c.b16 %v11230, %v11224
    %v11813 = vpack.c.b16 %v11231, %v11225
    %v11814 = vpack.c.b16 %v11232, %v11226
    %v11815 = vpack.c.b16 %v11239, %v11233
    %v11816 = vpack.c.b16 %v11240, %v11234
    %v11817 = vpack.c.b16 %v11241, %v11235
    %v11818 = vpack.c.b16 %v11242, %v11236
    %v11819 = vpack.c.b16 %v11243, %v11237
    %v11820 = vpack.c.b16 %v11244, %v11238
    %v11821 = vpack.c.b16 %v11251, %v11245
    %v11822 = vpack.c.b16 %v11252, %v11246
    %v11823 = vpack.c.b16 %v11253, %v11247
    %v11824 = vpack.c.b16 %v11254, %v11248
    %v11825 = vpack.c.b16 %v11255, %v11249
    %v11826 = vpack.c.b16 %v11256, %v11250
    %v11827 = vpack.c.b16 %v11263, %v11257
    %v11828 = vpack.c.b16 %v11264, %v11258
    %v11829 = vpack.c.b16 %v11265, %v11259
    %v11830 = vpack.c.b16 %v11266, %v11260
    %v11831 = vpack.c.b16 %v11267, %v11261
    %v11832 = vpack.c.b16 %v11268, %v11262
    %v11833 = vpack.c.b16 %v11275, %v11269
    %v11834 = vpack.c.b16 %v11276, %v11270
    %v11835 = vpack.c.b16 %v11277, %v11271
    %v11836 = vpack.c.b16 %v11278, %v11272
    %v11837 = vpack.c.b16 %v11279, %v11273
    %v11838 = vpack.c.b16 %v11280, %v11274
    %v11839 = vpack.c.b16 %v11287, %v11281
    %v11840 = vpack.c.b16 %v11288, %v11282
    %v11841 = vpack.c.b16 %v11289, %v11283
    %v11842 = vpack.c.b16 %v11290, %v11284
    %v11843 = vpack.c.b16 %v11291, %v11285
    %v11844 = vpack.c.b16 %v11292, %v11286
    %v11845 = vpack.c.b16 %v11299, %v11293
    %v11846 = vpack.c.b16 %v11300, %v11294
    %v11847 = vpack.c.b16 %v11301, %v11295
    %v11848 = vpack.c.b16 %v11302, %v11296
    %v11849 = vpack.c.b16 %v11303, %v11297
    %v11850 = vpack.c.b16 %v11304, %v11298
    %v11851 = vpack.c.b16 %v11311, %v11305
    %v11852 = vpack.c.b16 %v11312, %v11306
    %v11853 = vpack.c.b16 %v11313, %v11307
    %v11854 = vpack.c.b16 %v11314, %v11308
    %v11855 = vpack.c.b16 %v11315, %v11309
    %v11856 = vpack.c.b16 %v11316, %v11310
    %v11857 = vpack.c.b16 %v11323, %v11317
    %v11858 = vpack.c.b16 %v11324, %v11318
    %v11859 = vpack.c.b16 %v11325, %v11319
    %v11860 = vpack.c.b16 %v11326, %v11320
    %v11861 = vpack.c.b16 %v11327, %v11321
    %v11862 = vpack.c.b16 %v11328, %v11322
    %v11863 = vpack.c.b16 %v11335, %v11329
    %v11864 = vpack.c.b16 %v11336, %v11330
    %v11865 = vpack.c.b16 %v11337, %v11331
    %v11866 = vpack.c.b16 %v11338, %v11332
    %v11867 = vpack.c.b16 %v11339, %v11333
    %v11868 = vpack.c.b16 %v11340, %v11334
    %v11869 = vpack.c.b16 %v11347, %v11341
    %v11870 = vpack.c.b16 %v11348, %v11342
    %v11871 = vpack.c.b16 %v11349, %v11343
    %v11872 = vpack.c.b16 %v11350, %v11344
    %v11873 = vpack.c.b16 %v11351, %v11345
    %v11874 = vpack.c.b16 %v11352, %v11346
    %v11875 = vpack.c.b16 %v11359, %v11353
    %v11876 = vpack.c.b16 %v11360, %v11354
    %v11877 = vpack.c.b16 %v11361, %v11355
    %v11878 = vpack.c.b16 %v11362, %v11356
    %v11879 = vpack.c.b16 %v11363, %v11357
    %v11880 = vpack.c.b16 %v11364, %v11358
    %v11881 = vpack.c.b16 %v11371, %v11365
    %v11882 = vpack.c.b16 %v11372, %v11366
    %v11883 = vpack.c.b16 %v11373, %v11367
    %v11884 = vpack.c.b16 %v11374, %v11368
    %v11885 = vpack.c.b16 %v11375, %v11369
    %v11886 = vpack.c.b16 %v11376, %v11370
    %v11887 = vpack.c.b16 %v11383, %v11377
    %v11888 = vpack.c.b16 %v11384, %v11378
    %v11889 = vpack.c.b16 %v11385, %v11379
    %v11890 = vpack.c.b16 %v11386, %v11380
    %v11891 = vpack.c.b16 %v11387, %v11381
    %v11892 = vpack.c.b16 %v11388, %v11382
    %v11893 = vpack.c.b16 %v11395, %v11389
    %v11894 = vpack.c.b16 %v11396, %v11390
    %v11895 = vpack.c.b16 %v11397, %v11391
    %v11896 = vpack.c.b16 %v11398, %v11392
    %v11897 = vpack.c.b16 %v11399, %v11393
    %v11898 = vpack.c.b16 %v11400, %v11394
    %v11899 = vpack.c.b16 %v11407, %v11401
    %v11900 = vpack.c.b16 %v11408, %v11402
    %v11901 = vpack.c.b16 %v11409, %v11403
    %v11902 = vpack.c.b16 %v11410, %v11404
    %v11903 = vpack.c.b16 %v11411, %v11405
    %v11904 = vpack.c.b16 %v11412, %v11406
    %v11905 = vpack.c.b16 %v11419, %v11413
    %v11906 = vpack.c.b16 %v11420, %v11414
    %v11907 = vpack.c.b16 %v11421, %v11415
    %v11908 = vpack.c.b16 %v11422, %v11416
    %v11909 = vpack.c.b16 %v11423, %v11417
    %v11910 = vpack.c.b16 %v11424, %v11418
    %v11911 = vpack.c.b16 %v11431, %v11425
    %v11912 = vpack.c.b16 %v11432, %v11426
    %v11913 = vpack.c.b16 %v11433, %v11427
    %v11914 = vpack.c.b16 %v11434, %v11428
    %v11915 = vpack.c.b16 %v11435, %v11429
    %v11916 = vpack.c.b16 %v11436, %v11430
    %v11917 = vpack.c.b16 %v11443, %v11437
    %v11918 = vpack.c.b16 %v11444, %v11438
    %v11919 = vpack.c.b16 %v11445, %v11439
    %v11920 = vpack.c.b16 %v11446, %v11440
    %v11921 = vpack.c.b16 %v11447, %v11441
    %v11922 = vpack.c.b16 %v11448, %v11442
    %v11923 = vpack.c.b16 %v11455, %v11449
    %v11924 = vpack.c.b16 %v11456, %v11450
    %v11925 = vpack.c.b16 %v11457, %v11451
    %v11926 = vpack.c.b16 %v11458, %v11452
    %v11927 = vpack.c.b16 %v11459, %v11453
    %v11928 = vpack.c.b16 %v11460, %v11454
    %v11929 = vpack.c.b16 %v11467, %v11461
    %v11930 = vpack.c.b16 %v11468, %v11462
    %v11931 = vpack.c.b16 %v11469, %v11463
    %v11932 = vpack.c.b16 %v11470, %v11464
    %v11933 = vpack.c.b16 %v11471, %v11465
    %v11934 = vpack.c.b16 %v11472, %v11466
    %v11935 = vpack.c.b16 %v11479, %v11473
    %v11936 = vpack.c.b16 %v11480, %v11474
    %v11937 = vpack.c.b16 %v11481, %v11475
    %v11938 = vpack.c.b16 %v11482, %v11476
    %v11939 = vpack.c.b16 %v11483, %v11477
    %v11940 = vpack.c.b16 %v11484, %v11478
    %v11941 = vpack.c.b16 %v11491, %v11485
    %v11942 = vpack.c.b16 %v11492, %v11486
    %v11943 = vpack.c.b16 %v11493, %v11487
    %v11944 = vpack.c.b16 %v11494, %v11488
    %v11945 = vpack.c.b16 %v11495, %v11489
    %v11946 = vpack.c.b16 %v11496, %v11490
    %v11947 = vpack.c.b16 %v11503, %v11497
    %v11948 = vpack.c.b16 %v11504, %v11498
    %v11949 = vpack.c.b16 %v11505, %v11499
    %v11950 = vpack.c.b16 %v11506, %v11500
    %v11951 = vpack.c.b16 %v11507, %v11501
    %v11952 = vpack.c.b16 %v11508, %v11502
    %v11953 = vpack.c.b16 %v11515, %v11509
    %v11954 = vpack.c.b16 %v11516, %v11510
    %v11955 = vpack.c.b16 %v11517, %v11511
    %v11956 = vpack.c.b16 %v11518, %v11512
    %v11957 = vpack.c.b16 %v11519, %v11513
    %v11958 = vpack.c.b16 %v11520, %v11514
    %v11959 = vpack.c.b16 %v11527, %v11521
    %v11960 = vpack.c.b16 %v11528, %v11522
    %v11961 = vpack.c.b16 %v11529, %v11523
    %v11962 = vpack.c.b16 %v11530, %v11524
    %v11963 = vpack.c.b16 %v11531, %v11525
    %v11964 = vpack.c.b16 %v11532, %v11526
    %v11965 = vpack.c.b16 %v11539, %v11533
    %v11966 = vpack.c.b16 %v11540, %v11534
    %v11967 = vpack.c.b16 %v11541, %v11535
    %v11968 = vpack.c.b16 %v11542, %v11536
    %v11969 = vpack.c.b16 %v11543, %v11537
    %v11970 = vpack.c.b16 %v11544, %v11538
    %v11971 = vpack.c.b16 %v11551, %v11545
    %v11972 = vpack.c.b16 %v11552, %v11546
    %v11973 = vpack.c.b16 %v11553, %v11547
    %v11974 = vpack.c.b16 %v11554, %v11548
    %v11975 = vpack.c.b16 %v11555, %v11549
    %v11976 = vpack.c.b16 %v11556, %v11550
    %v11977 = vpack.c.b16 %v11563, %v11557
    %v11978 = vpack.c.b16 %v11564, %v11558
    %v11979 = vpack.c.b16 %v11565, %v11559
    %v11980 = vpack.c.b16 %v11566, %v11560
    %v11981 = vpack.c.b16 %v11567, %v11561
    %v11982 = vpack.c.b16 %v11568, %v11562
    %v11983 = vpack.c.b16 %v11575, %v11569
    %v11984 = vpack.c.b16 %v11576, %v11570
    %v11985 = vpack.c.b16 %v11577, %v11571
    %v11986 = vpack.c.b16 %v11578, %v11572
    %v11987 = vpack.c.b16 %v11579, %v11573
    %v11988 = vpack.c.b16 %v11580, %v11574
    %v11989 = vpack.c.b16 %v11587, %v11581
    %v11990 = vpack.c.b16 %v11588, %v11582
    %v11991 = vpack.c.b16 %v11589, %v11583
    %v11992 = vpack.c.b16 %v11590, %v11584
    %v11993 = vpack.c.b16 %v11591, %v11585
    %v11994 = vpack.c.b16 %v11592, %v11586
    %v11995 = vpack.c.b16 %v11599, %v11593
    %v11996 = vpack.c.b16 %v11600, %v11594
    %v11997 = vpack.c.b16 %v11601, %v11595
    %v11998 = vpack.c.b16 %v11602, %v11596
    %v11999 = vpack.c.b16 %v11603, %v11597
    %v12000 = vpack.c.b16 %v11604, %v11598
    %v12001 = vpack.c.b16 %v11611, %v11605
    %v12002 = vpack.c.b16 %v11612, %v11606
    %v12003 = vpack.c.b16 %v11613, %v11607
    %v12004 = vpack.c.b16 %v11614, %v11608
    %v12005 = vpack.c.b16 %v11615, %v11609
    %v12006 = vpack.c.b16 %v11616, %v11610
    %v12007 = vpack.c.b16 %v11623, %v11617
    %v12008 = vpack.c.b16 %v11624, %v11618
    %v12009 = vpack.c.b16 %v11625, %v11619
    %v12010 = vpack.c.b16 %v11626, %v11620
    %v12011 = vpack.c.b16 %v11627, %v11621
    %v12012 = vpack.c.b16 %v11628, %v11622
    %12397 = vmatprep.subr.bf16.mxu0 %v11630
    %12398 = vmatpush1.bf16.msra.mxu0 %v11629
    %12399 = vmatprep.subr.bf16.mxu0 %v11636
    %12400 = vmatpush1.bf16.msra.mxu0 %v11635
    %12401 = vmatprep.subr.bf16.mxu0 %v11642
    %12402 = vmatpush1.bf16.msra.mxu0 %v11641
    %12403 = vmatprep.subr.bf16.mxu0 %v11648
    %12404 = vmatpush1.bf16.msra.mxu0 %v11647
    %12405 = vmatprep.subr.bf16.mxu0 %v11654
    %12406 = vmatpush1.bf16.msra.mxu0 %v11653
    %12407 = vmatprep.subr.bf16.mxu0 %v11660
    %12408 = vmatpush1.bf16.msra.mxu0 %v11659
    %12409 = vmatprep.subr.bf16.mxu0 %v11666
    %12410 = vmatpush1.bf16.msra.mxu0 %v11665
    %12411 = vmatprep.subr.bf16.mxu0 %v11672
    %12412 = vmatpush1.bf16.msra.mxu0 %v11671
    %12413 = vmatprep.subr.bf16.mxu0 %v11678
    %12414 = vmatpush1.bf16.msra.mxu0 %v11677
    %12415 = vmatprep.subr.bf16.mxu0 %v11684
    %12416 = vmatpush1.bf16.msra.mxu0 %v11683
    %12417 = vmatprep.subr.bf16.mxu0 %v11690
    %12418 = vmatpush1.bf16.msra.mxu0 %v11689
    %12419 = vmatprep.subr.bf16.mxu0 %v11696
    %12420 = vmatpush1.bf16.msra.mxu0 %v11695
    %12421 = vmatprep.subr.bf16.mxu0 %v11702
    %12422 = vmatpush1.bf16.msra.mxu0 %v11701
    %12423 = vmatprep.subr.bf16.mxu0 %v11708
    %12424 = vmatpush1.bf16.msra.mxu0 %v11707
    %12425 = vmatprep.subr.bf16.mxu0 %v11714
    %12426 = vmatpush1.bf16.msra.mxu0 %v11713
    %12427 = vmatprep.subr.bf16.mxu0 %v11720
    %12428 = vmatpush1.bf16.msra.mxu0 %v11719
    %12429 = vmatprep.mubr.bf16.mxu0 %v10054
    %12430 = vmatmul.mubr.bf16.gmra.mrb[0].mxu0 %v10053
    %v12431 = vpop.f32.mrb[0].mxu0
    %v12432 = vadd.f32 %v10450, %v12431
    %v12433 = vpop.f32.mrb[0].mxu0
    %v12434 = vadd.f32 %v10454, %v12433
    %v12435 = vpop.f32.mrb[0].mxu0
    %v12436 = vadd.f32 %v10450, %v12435
    %v12437 = vpop.f32.mrb[0].mxu0
    %v12438 = vadd.f32 %v10454, %v12437
    %12439 = vdwg.mxu0
    %12440 = vmatprep.subr.bf16.mxu0 %v11726
    %12441 = vmatpush1.bf16.msra.mxu0 %v11725
    %12442 = vmatprep.subr.bf16.mxu0 %v11732
    %12443 = vmatpush1.bf16.msra.mxu0 %v11731
    %12444 = vmatprep.subr.bf16.mxu0 %v11738
    %12445 = vmatpush1.bf16.msra.mxu0 %v11737
    %12446 = vmatprep.subr.bf16.mxu0 %v11744
    %12447 = vmatpush1.bf16.msra.mxu0 %v11743
    %12448 = vmatprep.subr.bf16.mxu0 %v11750
    %12449 = vmatpush1.bf16.msra.mxu0 %v11749
    %12450 = vmatprep.subr.bf16.mxu0 %v11756
    %12451 = vmatpush1.bf16.msra.mxu0 %v11755
    %12452 = vmatprep.subr.bf16.mxu0 %v11762
    %12453 = vmatpush1.bf16.msra.mxu0 %v11761
    %12454 = vmatprep.subr.bf16.mxu0 %v11768
    %12455 = vmatpush1.bf16.msra.mxu0 %v11767
    %12456 = vmatprep.subr.bf16.mxu0 %v11774
    %12457 = vmatpush1.bf16.msra.mxu0 %v11773
    %12458 = vmatprep.subr.bf16.mxu0 %v11780
    %12459 = vmatpush1.bf16.msra.mxu0 %v11779
    %12460 = vmatprep.subr.bf16.mxu0 %v11786
    %12461 = vmatpush1.bf16.msra.mxu0 %v11785
    %12462 = vmatprep.subr.bf16.mxu0 %v11792
    %12463 = vmatpush1.bf16.msra.mxu0 %v11791
    %12464 = vmatprep.subr.bf16.mxu0 %v11798
    %12465 = vmatpush1.bf16.msra.mxu0 %v11797
    %12466 = vmatprep.subr.bf16.mxu0 %v11804
    %12467 = vmatpush1.bf16.msra.mxu0 %v11803
    %12468 = vmatprep.subr.bf16.mxu0 %v11810
    %12469 = vmatpush1.bf16.msra.mxu0 %v11809
    %12470 = vmatprep.subr.bf16.mxu0 %v11816
    %12471 = vmatpush1.bf16.msra.mxu0 %v11815
    %12472 = vmatprep.mubr.bf16.mxu0 %v10056
    %12473 = vmatmul.mubr.bf16.gmra.mrb[0].mxu0 %v10055
    %v12474 = vpop.f32.mrb[0].mxu0
    %v12475 = vadd.f32 %v12432, %v12474
    %v12476 = vpop.f32.mrb[0].mxu0
    %v12477 = vadd.f32 %v12434, %v12476
    %v12478 = vpop.f32.mrb[0].mxu0
    %v12479 = vadd.f32 %v12436, %v12478
    %v12480 = vpop.f32.mrb[0].mxu0
    %v12481 = vadd.f32 %v12438, %v12480
    %12482 = vdwg.mxu0
    %12483 = vmatprep.subr.bf16.mxu0 %v11822
    %12484 = vmatpush1.bf16.msra.mxu0 %v11821
    %12485 = vmatprep.subr.bf16.mxu0 %v11828
    %12486 = vmatpush1.bf16.msra.mxu0 %v11827
    %12487 = vmatprep.subr.bf16.mxu0 %v11834
    %12488 = vmatpush1.bf16.msra.mxu0 %v11833
    %12489 = vmatprep.subr.bf16.mxu0 %v11840
    %12490 = vmatpush1.bf16.msra.mxu0 %v11839
    %12491 = vmatprep.subr.bf16.mxu0 %v11846
    %12492 = vmatpush1.bf16.msra.mxu0 %v11845
    %12493 = vmatprep.subr.bf16.mxu0 %v11852
    %12494 = vmatpush1.bf16.msra.mxu0 %v11851
    %12495 = vmatprep.subr.bf16.mxu0 %v11858
    %12496 = vmatpush1.bf16.msra.mxu0 %v11857
    %12497 = vmatprep.subr.bf16.mxu0 %v11864
    %12498 = vmatpush1.bf16.msra.mxu0 %v11863
    %12499 = vmatprep.subr.bf16.mxu0 %v11870
    %12500 = vmatpush1.bf16.msra.mxu0 %v11869
    %12501 = vmatprep.subr.bf16.mxu0 %v11876
    %12502 = vmatpush1.bf16.msra.mxu0 %v11875
    %12503 = vmatprep.subr.bf16.mxu0 %v11882
    %12504 = vmatpush1.bf16.msra.mxu0 %v11881
    %12505 = vmatprep.subr.bf16.mxu0 %v11888
    %12506 = vmatpush1.bf16.msra.mxu0 %v11887
    %12507 = vmatprep.subr.bf16.mxu0 %v11894
    %12508 = vmatpush1.bf16.msra.mxu0 %v11893
    %12509 = vmatprep.subr.bf16.mxu0 %v11900
    %12510 = vmatpush1.bf16.msra.mxu0 %v11899
    %12511 = vmatprep.subr.bf16.mxu0 %v11906
    %12512 = vmatpush1.bf16.msra.mxu0 %v11905
    %12513 = vmatprep.subr.bf16.mxu0 %v11912
    %12514 = vmatpush1.bf16.msra.mxu0 %v11911
    %12515 = vmatprep.mubr.bf16.mxu0 %v10058
    %12516 = vmatmul.mubr.bf16.gmra.mrb[0].mxu0 %v10057
    %v12517 = vpop.f32.mrb[0].mxu0
    %v12518 = vadd.f32 %v12475, %v12517
    %v12519 = vpop.f32.mrb[0].mxu0
    %v12520 = vadd.f32 %v12477, %v12519
    %v12521 = vpop.f32.mrb[0].mxu0
    %v12522 = vadd.f32 %v12479, %v12521
    %v12523 = vpop.f32.mrb[0].mxu0
    %v12524 = vadd.f32 %v12481, %v12523
    %12525 = vdwg.mxu0
    %12526 = vmatprep.subr.bf16.mxu0 %v11918
    %12527 = vmatpush1.bf16.msra.mxu0 %v11917
    %12528 = vmatprep.subr.bf16.mxu0 %v11924
    %12529 = vmatpush1.bf16.msra.mxu0 %v11923
    %12530 = vmatprep.subr.bf16.mxu0 %v11930
    %12531 = vmatpush1.bf16.msra.mxu0 %v11929
    %12532 = vmatprep.subr.bf16.mxu0 %v11936
    %12533 = vmatpush1.bf16.msra.mxu0 %v11935
    %12534 = vmatprep.subr.bf16.mxu0 %v11942
    %12535 = vmatpush1.bf16.msra.mxu0 %v11941
    %12536 = vmatprep.subr.bf16.mxu0 %v11948
    %12537 = vmatpush1.bf16.msra.mxu0 %v11947
    %12538 = vmatprep.subr.bf16.mxu0 %v11954
    %12539 = vmatpush1.bf16.msra.mxu0 %v11953
    %12540 = vmatprep.subr.bf16.mxu0 %v11960
    %12541 = vmatpush1.bf16.msra.mxu0 %v11959
    %12542 = vmatprep.subr.bf16.mxu0 %v11966
    %12543 = vmatpush1.bf16.msra.mxu0 %v11965
    %12544 = vmatprep.subr.bf16.mxu0 %v11972
    %12545 = vmatpush1.bf16.msra.mxu0 %v11971
    %12546 = vmatprep.subr.bf16.mxu0 %v11978
    %12547 = vmatpush1.bf16.msra.mxu0 %v11977
    %12548 = vmatprep.subr.bf16.mxu0 %v11984
    %12549 = vmatpush1.bf16.msra.mxu0 %v11983
    %12550 = vmatprep.subr.bf16.mxu0 %v11990
    %12551 = vmatpush1.bf16.msra.mxu0 %v11989
    %12552 = vmatprep.subr.bf16.mxu0 %v11996
    %12553 = vmatpush1.bf16.msra.mxu0 %v11995
    %12554 = vmatprep.subr.bf16.mxu0 %v12002
    %12555 = vmatpush1.bf16.msra.mxu0 %v12001
    %12556 = vmatprep.subr.bf16.mxu0 %v12008
    %12557 = vmatpush1.bf16.msra.mxu0 %v12007
    %12558 = vmatprep.mubr.bf16.mxu0 %v10060
    %12559 = vmatmul.mubr.bf16.gmra.mrb[0].mxu0 %v10059
    %v12560 = vpop.f32.mrb[0].mxu0
    %v12561 = vadd.f32 %v12518, %v12560
    %v12562 = vpop.f32.mrb[0].mxu0
    %v12563 = vadd.f32 %v12520, %v12562
    %v12564 = vpop.f32.mrb[0].mxu0
    %v12565 = vadd.f32 %v12522, %v12564
    %v12566 = vpop.f32.mrb[0].mxu0
    %v12567 = vadd.f32 %v12524, %v12566
    %12568 = vdwg.mxu0
    %12569 = vmatprep.subr.bf16.mxu0 %v11632
    %12570 = vmatpush1.bf16.msra.mxu0 %v11631
    %12571 = vmatprep.subr.bf16.mxu0 %v11638
    %12572 = vmatpush1.bf16.msra.mxu0 %v11637
    %12573 = vmatprep.subr.bf16.mxu0 %v11644
    %12574 = vmatpush1.bf16.msra.mxu0 %v11643
    %12575 = vmatprep.subr.bf16.mxu0 %v11650
    %12576 = vmatpush1.bf16.msra.mxu0 %v11649
    %12577 = vmatprep.subr.bf16.mxu0 %v11656
    %12578 = vmatpush1.bf16.msra.mxu0 %v11655
    %12579 = vmatprep.subr.bf16.mxu0 %v11662
    %12580 = vmatpush1.bf16.msra.mxu0 %v11661
    %12581 = vmatprep.subr.bf16.mxu0 %v11668
    %12582 = vmatpush1.bf16.msra.mxu0 %v11667
    %12583 = vmatprep.subr.bf16.mxu0 %v11674
    %12584 = vmatpush1.bf16.msra.mxu0 %v11673
    %12585 = vmatprep.subr.bf16.mxu0 %v11680
    %12586 = vmatpush1.bf16.msra.mxu0 %v11679
    %12587 = vmatprep.subr.bf16.mxu0 %v11686
    %12588 = vmatpush1.bf16.msra.mxu0 %v11685
    %12589 = vmatprep.subr.bf16.mxu0 %v11692
    %12590 = vmatpush1.bf16.msra.mxu0 %v11691
    %12591 = vmatprep.subr.bf16.mxu0 %v11698
    %12592 = vmatpush1.bf16.msra.mxu0 %v11697
    %12593 = vmatprep.subr.bf16.mxu0 %v11704
    %12594 = vmatpush1.bf16.msra.mxu0 %v11703
    %12595 = vmatprep.subr.bf16.mxu0 %v11710
    %12596 = vmatpush1.bf16.msra.mxu0 %v11709
    %12597 = vmatprep.subr.bf16.mxu0 %v11716
    %12598 = vmatpush1.bf16.msra.mxu0 %v11715
    %12599 = vmatprep.subr.bf16.mxu0 %v11722
    %12600 = vmatpush1.bf16.msra.mxu0 %v11721
    %12601 = vmatprep.mubr.bf16.mxu0 %v10054
    %12602 = vmatmul.mubr.bf16.gmra.mrb[0].mxu0 %v10053
    %v12603 = vpop.f32.mrb[0].mxu0
    %v12604 = vadd.f32 %v10458, %v12603
    %v12605 = vpop.f32.mrb[0].mxu0
    %v12606 = vadd.f32 %v10462, %v12605
    %v12607 = vpop.f32.mrb[0].mxu0
    %v12608 = vadd.f32 %v10458, %v12607
    %v12609 = vpop.f32.mrb[0].mxu0
    %v12610 = vadd.f32 %v10462, %v12609
    %12611 = vdwg.mxu0
    %12612 = vmatprep.subr.bf16.mxu0 %v11728
    %12613 = vmatpush1.bf16.msra.mxu0 %v11727
    %12614 = vmatprep.subr.bf16.mxu0 %v11734
    %12615 = vmatpush1.bf16.msra.mxu0 %v11733
    %12616 = vmatprep.subr.bf16.mxu0 %v11740
    %12617 = vmatpush1.bf16.msra.mxu0 %v11739
    %12618 = vmatprep.subr.bf16.mxu0 %v11746
    %12619 = vmatpush1.bf16.msra.mxu0 %v11745
    %12620 = vmatprep.subr.bf16.mxu0 %v11752
    %12621 = vmatpush1.bf16.msra.mxu0 %v11751
    %12622 = vmatprep.subr.bf16.mxu0 %v11758
    %12623 = vmatpush1.bf16.msra.mxu0 %v11757
    %12624 = vmatprep.subr.bf16.mxu0 %v11764
    %12625 = vmatpush1.bf16.msra.mxu0 %v11763
    %12626 = vmatprep.subr.bf16.mxu0 %v11770
    %12627 = vmatpush1.bf16.msra.mxu0 %v11769
    %12628 = vmatprep.subr.bf16.mxu0 %v11776
    %12629 = vmatpush1.bf16.msra.mxu0 %v11775
    %12630 = vmatprep.subr.bf16.mxu0 %v11782
    %12631 = vmatpush1.bf16.msra.mxu0 %v11781
    %12632 = vmatprep.subr.bf16.mxu0 %v11788
    %12633 = vmatpush1.bf16.msra.mxu0 %v11787
    %12634 = vmatprep.subr.bf16.mxu0 %v11794
    %12635 = vmatpush1.bf16.msra.mxu0 %v11793
    %12636 = vmatprep.subr.bf16.mxu0 %v11800
    %12637 = vmatpush1.bf16.msra.mxu0 %v11799
    %12638 = vmatprep.subr.bf16.mxu0 %v11806
    %12639 = vmatpush1.bf16.msra.mxu0 %v11805
    %12640 = vmatprep.subr.bf16.mxu0 %v11812
    %12641 = vmatpush1.bf16.msra.mxu0 %v11811
    %12642 = vmatprep.subr.bf16.mxu0 %v11818
    %12643 = vmatpush1.bf16.msra.mxu0 %v11817
    %12644 = vmatprep.mubr.bf16.mxu0 %v10056
    %12645 = vmatmul.mubr.bf16.gmra.mrb[0].mxu0 %v10055
    %v12646 = vpop.f32.mrb[0].mxu0
    %v12647 = vadd.f32 %v12604, %v12646
    %v12648 = vpop.f32.mrb[0].mxu0
    %v12649 = vadd.f32 %v12606, %v12648
    %v12650 = vpop.f32.mrb[0].mxu0
    %v12651 = vadd.f32 %v12608, %v12650
    %v12652 = vpop.f32.mrb[0].mxu0
    %v12653 = vadd.f32 %v12610, %v12652
    %12654 = vdwg.mxu0
    %12655 = vmatprep.subr.bf16.mxu0 %v11824
    %12656 = vmatpush1.bf16.msra.mxu0 %v11823
    %12657 = vmatprep.subr.bf16.mxu0 %v11830
    %12658 = vmatpush1.bf16.msra.mxu0 %v11829
    %12659 = vmatprep.subr.bf16.mxu0 %v11836
    %12660 = vmatpush1.bf16.msra.mxu0 %v11835
    %12661 = vmatprep.subr.bf16.mxu0 %v11842
    %12662 = vmatpush1.bf16.msra.mxu0 %v11841
    %12663 = vmatprep.subr.bf16.mxu0 %v11848
    %12664 = vmatpush1.bf16.msra.mxu0 %v11847
    %12665 = vmatprep.subr.bf16.mxu0 %v11854
    %12666 = vmatpush1.bf16.msra.mxu0 %v11853
    %12667 = vmatprep.subr.bf16.mxu0 %v11860
    %12668 = vmatpush1.bf16.msra.mxu0 %v11859
    %12669 = vmatprep.subr.bf16.mxu0 %v11866
    %12670 = vmatpush1.bf16.msra.mxu0 %v11865
    %12671 = vmatprep.subr.bf16.mxu0 %v11872
    %12672 = vmatpush1.bf16.msra.mxu0 %v11871
    %12673 = vmatprep.subr.bf16.mxu0 %v11878
    %12674 = vmatpush1.bf16.msra.mxu0 %v11877
    %12675 = vmatprep.subr.bf16.mxu0 %v11884
    %12676 = vmatpush1.bf16.msra.mxu0 %v11883
    %12677 = vmatprep.subr.bf16.mxu0 %v11890
    %12678 = vmatpush1.bf16.msra.mxu0 %v11889
    %12679 = vmatprep.subr.bf16.mxu0 %v11896
    %12680 = vmatpush1.bf16.msra.mxu0 %v11895
    %12681 = vmatprep.subr.bf16.mxu0 %v11902
    %12682 = vmatpush1.bf16.msra.mxu0 %v11901
    %12683 = vmatprep.subr.bf16.mxu0 %v11908
    %12684 = vmatpush1.bf16.msra.mxu0 %v11907
    %12685 = vmatprep.subr.bf16.mxu0 %v11914
    %12686 = vmatpush1.bf16.msra.mxu0 %v11913
    %12687 = vmatprep.mubr.bf16.mxu0 %v10058
    %12688 = vmatmul.mubr.bf16.gmra.mrb[0].mxu0 %v10057
    %v12689 = vpop.f32.mrb[0].mxu0
    %v12690 = vadd.f32 %v12647, %v12689
    %v12691 = vpop.f32.mrb[0].mxu0
    %v12692 = vadd.f32 %v12649, %v12691
    %v12693 = vpop.f32.mrb[0].mxu0
    %v12694 = vadd.f32 %v12651, %v12693
    %v12695 = vpop.f32.mrb[0].mxu0
    %v12696 = vadd.f32 %v12653, %v12695
    %12697 = vdwg.mxu0
    %12698 = vmatprep.subr.bf16.mxu0 %v11920
    %12699 = vmatpush1.bf16.msra.mxu0 %v11919
    %12700 = vmatprep.subr.bf16.mxu0 %v11926
    %12701 = vmatpush1.bf16.msra.mxu0 %v11925
    %12702 = vmatprep.subr.bf16.mxu0 %v11932
    %12703 = vmatpush1.bf16.msra.mxu0 %v11931
    %12704 = vmatprep.subr.bf16.mxu0 %v11938
    %12705 = vmatpush1.bf16.msra.mxu0 %v11937
    %12706 = vmatprep.subr.bf16.mxu0 %v11944
    %12707 = vmatpush1.bf16.msra.mxu0 %v11943
    %12708 = vmatprep.subr.bf16.mxu0 %v11950
    %12709 = vmatpush1.bf16.msra.mxu0 %v11949
    %12710 = vmatprep.subr.bf16.mxu0 %v11956
    %12711 = vmatpush1.bf16.msra.mxu0 %v11955
    %12712 = vmatprep.subr.bf16.mxu0 %v11962
    %12713 = vmatpush1.bf16.msra.mxu0 %v11961
    %12714 = vmatprep.subr.bf16.mxu0 %v11968
    %12715 = vmatpush1.bf16.msra.mxu0 %v11967
    %12716 = vmatprep.subr.bf16.mxu0 %v11974
    %12717 = vmatpush1.bf16.msra.mxu0 %v11973
    %12718 = vmatprep.subr.bf16.mxu0 %v11980
    %12719 = vmatpush1.bf16.msra.mxu0 %v11979
    %12720 = vmatprep.subr.bf16.mxu0 %v11986
    %12721 = vmatpush1.bf16.msra.mxu0 %v11985
    %12722 = vmatprep.subr.bf16.mxu0 %v11992
    %12723 = vmatpush1.bf16.msra.mxu0 %v11991
    %12724 = vmatprep.subr.bf16.mxu0 %v11998
    %12725 = vmatpush1.bf16.msra.mxu0 %v11997
    %12726 = vmatprep.subr.bf16.mxu0 %v12004
    %12727 = vmatpush1.bf16.msra.mxu0 %v12003
    %12728 = vmatprep.subr.bf16.mxu0 %v12010
    %12729 = vmatpush1.bf16.msra.mxu0 %v12009
    %12730 = vmatprep.mubr.bf16.mxu0 %v10060
    %12731 = vmatmul.mubr.bf16.gmra.mrb[0].mxu0 %v10059
    %v12732 = vpop.f32.mrb[0].mxu0
    %v12733 = vadd.f32 %v12690, %v12732
    %v12734 = vpop.f32.mrb[0].mxu0
    %v12735 = vadd.f32 %v12692, %v12734
    %v12736 = vpop.f32.mrb[0].mxu0
    %v12737 = vadd.f32 %v12694, %v12736
    %v12738 = vpop.f32.mrb[0].mxu0
    %v12739 = vadd.f32 %v12696, %v12738
    %12740 = vdwg.mxu0
    %12741 = vmatprep.subr.bf16.mxu0 %v11634
    %12742 = vmatpush1.bf16.msra.mxu0 %v11633
    %12743 = vmatprep.subr.bf16.mxu0 %v11640
    %12744 = vmatpush1.bf16.msra.mxu0 %v11639
    %12745 = vmatprep.subr.bf16.mxu0 %v11646
    %12746 = vmatpush1.bf16.msra.mxu0 %v11645
    %12747 = vmatprep.subr.bf16.mxu0 %v11652
    %12748 = vmatpush1.bf16.msra.mxu0 %v11651
    %12749 = vmatprep.subr.bf16.mxu0 %v11658
    %12750 = vmatpush1.bf16.msra.mxu0 %v11657
    %12751 = vmatprep.subr.bf16.mxu0 %v11664
    %12752 = vmatpush1.bf16.msra.mxu0 %v11663
    %12753 = vmatprep.subr.bf16.mxu0 %v11670
    %12754 = vmatpush1.bf16.msra.mxu0 %v11669
    %12755 = vmatprep.subr.bf16.mxu0 %v11676
    %12756 = vmatpush1.bf16.msra.mxu0 %v11675
    %12757 = vmatprep.subr.bf16.mxu0 %v11682
    %12758 = vmatpush1.bf16.msra.mxu0 %v11681
    %12759 = vmatprep.subr.bf16.mxu0 %v11688
    %12760 = vmatpush1.bf16.msra.mxu0 %v11687
    %12761 = vmatprep.subr.bf16.mxu0 %v11694
    %12762 = vmatpush1.bf16.msra.mxu0 %v11693
    %12763 = vmatprep.subr.bf16.mxu0 %v11700
    %12764 = vmatpush1.bf16.msra.mxu0 %v11699
    %12765 = vmatprep.subr.bf16.mxu0 %v11706
    %12766 = vmatpush1.bf16.msra.mxu0 %v11705
    %12767 = vmatprep.subr.bf16.mxu0 %v11712
    %12768 = vmatpush1.bf16.msra.mxu0 %v11711
    %12769 = vmatprep.subr.bf16.mxu0 %v11718
    %12770 = vmatpush1.bf16.msra.mxu0 %v11717
    %12771 = vmatprep.subr.bf16.mxu0 %v11724
    %12772 = vmatpush1.bf16.msra.mxu0 %v11723
    %12773 = vmatprep.mubr.bf16.mxu0 %v10054
    %12774 = vmatmul.mubr.bf16.gmra.mrb[0].mxu0 %v10053
    %v12775 = vpop.f32.mrb[0].mxu0
    %v12776 = vadd.f32 %v10466, %v12775
    %v12777 = vpop.f32.mrb[0].mxu0
    %v12778 = vadd.f32 %v10470, %v12777
    %v12779 = vpop.f32.mrb[0].mxu0
    %v12780 = vadd.f32 %v10466, %v12779
    %v12781 = vpop.f32.mrb[0].mxu0
    %v12782 = vadd.f32 %v10470, %v12781
    %12783 = vdwg.mxu0
    %12784 = vmatprep.subr.bf16.mxu0 %v11730
    %12785 = vmatpush1.bf16.msra.mxu0 %v11729
    %12786 = vmatprep.subr.bf16.mxu0 %v11736
    %12787 = vmatpush1.bf16.msra.mxu0 %v11735
    %12788 = vmatprep.subr.bf16.mxu0 %v11742
    %12789 = vmatpush1.bf16.msra.mxu0 %v11741
    %12790 = vmatprep.subr.bf16.mxu0 %v11748
    %12791 = vmatpush1.bf16.msra.mxu0 %v11747
    %12792 = vmatprep.subr.bf16.mxu0 %v11754
    %12793 = vmatpush1.bf16.msra.mxu0 %v11753
    %12794 = vmatprep.subr.bf16.mxu0 %v11760
    %12795 = vmatpush1.bf16.msra.mxu0 %v11759
    %12796 = vmatprep.subr.bf16.mxu0 %v11766
    %12797 = vmatpush1.bf16.msra.mxu0 %v11765
    %12798 = vmatprep.subr.bf16.mxu0 %v11772
    %12799 = vmatpush1.bf16.msra.mxu0 %v11771
    %12800 = vmatprep.subr.bf16.mxu0 %v11778
    %12801 = vmatpush1.bf16.msra.mxu0 %v11777
    %12802 = vmatprep.subr.bf16.mxu0 %v11784
    %12803 = vmatpush1.bf16.msra.mxu0 %v11783
    %12804 = vmatprep.subr.bf16.mxu0 %v11790
    %12805 = vmatpush1.bf16.msra.mxu0 %v11789
    %12806 = vmatprep.subr.bf16.mxu0 %v11796
    %12807 = vmatpush1.bf16.msra.mxu0 %v11795
    %12808 = vmatprep.subr.bf16.mxu0 %v11802
    %12809 = vmatpush1.bf16.msra.mxu0 %v11801
    %12810 = vmatprep.subr.bf16.mxu0 %v11808
    %12811 = vmatpush1.bf16.msra.mxu0 %v11807
    %12812 = vmatprep.subr.bf16.mxu0 %v11814
    %12813 = vmatpush1.bf16.msra.mxu0 %v11813
    %12814 = vmatprep.subr.bf16.mxu0 %v11820
    %12815 = vmatpush1.bf16.msra.mxu0 %v11819
    %12816 = vmatprep.mubr.bf16.mxu0 %v10056
    %12817 = vmatmul.mubr.bf16.gmra.mrb[0].mxu0 %v10055
    %v12818 = vpop.f32.mrb[0].mxu0
    %v12819 = vadd.f32 %v12776, %v12818
    %v12820 = vpop.f32.mrb[0].mxu0
    %v12821 = vadd.f32 %v12778, %v12820
    %v12822 = vpop.f32.mrb[0].mxu0
    %v12823 = vadd.f32 %v12780, %v12822
    %v12824 = vpop.f32.mrb[0].mxu0
    %v12825 = vadd.f32 %v12782, %v12824
    %12826 = vdwg.mxu0
    %12827 = vmatprep.subr.bf16.mxu0 %v11826
    %12828 = vmatpush1.bf16.msra.mxu0 %v11825
    %12829 = vmatprep.subr.bf16.mxu0 %v11832
    %12830 = vmatpush1.bf16.msra.mxu0 %v11831
    %12831 = vmatprep.subr.bf16.mxu0 %v11838
    %12832 = vmatpush1.bf16.msra.mxu0 %v11837
    %12833 = vmatprep.subr.bf16.mxu0 %v11844
    %12834 = vmatpush1.bf16.msra.mxu0 %v11843
    %12835 = vmatprep.subr.bf16.mxu0 %v11850
    %12836 = vmatpush1.bf16.msra.mxu0 %v11849
    %12837 = vmatprep.subr.bf16.mxu0 %v11856
    %12838 = vmatpush1.bf16.msra.mxu0 %v11855
    %12839 = vmatprep.subr.bf16.mxu0 %v11862
    %12840 = vmatpush1.bf16.msra.mxu0 %v11861
    %12841 = vmatprep.subr.bf16.mxu0 %v11868
    %12842 = vmatpush1.bf16.msra.mxu0 %v11867
    %12843 = vmatprep.subr.bf16.mxu0 %v11874
    %12844 = vmatpush1.bf16.msra.mxu0 %v11873
    %12845 = vmatprep.subr.bf16.mxu0 %v11880
    %12846 = vmatpush1.bf16.msra.mxu0 %v11879
    %12847 = vmatprep.subr.bf16.mxu0 %v11886
    %12848 = vmatpush1.bf16.msra.mxu0 %v11885
    %12849 = vmatprep.subr.bf16.mxu0 %v11892
    %12850 = vmatpush1.bf16.msra.mxu0 %v11891
    %12851 = vmatprep.subr.bf16.mxu0 %v11898
    %12852 = vmatpush1.bf16.msra.mxu0 %v11897
    %12853 = vmatprep.subr.bf16.mxu0 %v11904
    %12854 = vmatpush1.bf16.msra.mxu0 %v11903
    %12855 = vmatprep.subr.bf16.mxu0 %v11910
    %12856 = vmatpush1.bf16.msra.mxu0 %v11909
    %12857 = vmatprep.subr.bf16.mxu0 %v11916
    %12858 = vmatpush1.bf16.msra.mxu0 %v11915
    %12859 = vmatprep.mubr.bf16.mxu0 %v10058
    %12860 = vmatmul.mubr.bf16.gmra.mrb[0].mxu0 %v10057
    %v12861 = vpop.f32.mrb[0].mxu0
    %v12862 = vadd.f32 %v12819, %v12861
    %v12863 = vpop.f32.mrb[0].mxu0
    %v12864 = vadd.f32 %v12821, %v12863
    %v12865 = vpop.f32.mrb[0].mxu0
    %v12866 = vadd.f32 %v12823, %v12865
    %v12867 = vpop.f32.mrb[0].mxu0
    %v12868 = vadd.f32 %v12825, %v12867
    %12869 = vdwg.mxu0
    %12870 = vmatprep.subr.bf16.mxu0 %v11922
    %12871 = vmatpush1.bf16.msra.mxu0 %v11921
    %12872 = vmatprep.subr.bf16.mxu0 %v11928
    %12873 = vmatpush1.bf16.msra.mxu0 %v11927
    %12874 = vmatprep.subr.bf16.mxu0 %v11934
    %12875 = vmatpush1.bf16.msra.mxu0 %v11933
    %12876 = vmatprep.subr.bf16.mxu0 %v11940
    %12877 = vmatpush1.bf16.msra.mxu0 %v11939
    %12878 = vmatprep.subr.bf16.mxu0 %v11946
    %12879 = vmatpush1.bf16.msra.mxu0 %v11945
    %12880 = vmatprep.subr.bf16.mxu0 %v11952
    %12881 = vmatpush1.bf16.msra.mxu0 %v11951
    %12882 = vmatprep.subr.bf16.mxu0 %v11958
    %12883 = vmatpush1.bf16.msra.mxu0 %v11957
    %12884 = vmatprep.subr.bf16.mxu0 %v11964
    %12885 = vmatpush1.bf16.msra.mxu0 %v11963
    %12886 = vmatprep.subr.bf16.mxu0 %v11970
    %12887 = vmatpush1.bf16.msra.mxu0 %v11969
    %12888 = vmatprep.subr.bf16.mxu0 %v11976
    %12889 = vmatpush1.bf16.msra.mxu0 %v11975
    %12890 = vmatprep.subr.bf16.mxu0 %v11982
    %12891 = vmatpush1.bf16.msra.mxu0 %v11981
    %12892 = vmatprep.subr.bf16.mxu0 %v11988
    %12893 = vmatpush1.bf16.msra.mxu0 %v11987
    %12894 = vmatprep.subr.bf16.mxu0 %v11994
    %12895 = vmatpush1.bf16.msra.mxu0 %v11993
    %12896 = vmatprep.subr.bf16.mxu0 %v12000
    %12897 = vmatpush1.bf16.msra.mxu0 %v11999
    %12898 = vmatprep.subr.bf16.mxu0 %v12006
    %12899 = vmatpush1.bf16.msra.mxu0 %v12005
    %12900 = vmatprep.subr.bf16.mxu0 %v12012
    %12901 = vmatpush1.bf16.msra.mxu0 %v12011
    %12902 = vmatprep.mubr.bf16.mxu0 %v10060
    %12903 = vmatmul.mubr.bf16.gmra.mrb[0].mxu0 %v10059
    %v12904 = vpop.f32.mrb[0].mxu0
    %v12905 = vadd.f32 %v12862, %v12904
    %v12906 = vpop.f32.mrb[0].mxu0
    %v12907 = vadd.f32 %v12864, %v12906
    %v12908 = vpop.f32.mrb[0].mxu0
    %v12909 = vadd.f32 %v12866, %v12908
    %v12910 = vpop.f32.mrb[0].mxu0
    %v12911 = vadd.f32 %v12868, %v12910
    %12912 = vdwg.mxu0
    %v12913 = vadd.f32 %v12561, %v165
    %v12914 = vadd.f32 %v12563, %v166
    %v12915 = vadd.f32 %v12733, %v167
    %v12916 = vadd.f32 %v12735, %v168
    %v12917 = vadd.f32 %v12905, %v169
    %v12918 = vadd.f32 %v12907, %v170
    %v12919 = vadd.f32 %v12565, %v171
    %v12920 = vadd.f32 %v12567, %v172
    %v12921 = vadd.f32 %v12737, %v173
    %v12922 = vadd.f32 %v12739, %v174
    %v12923 = vadd.f32 %v12909, %v175
    %v12924 = vadd.f32 %v12911, %v176
    %v12925 = vadd.f32 %v12913, %v12914
    %v12926 = vadd.f32 %v12925, %v12915
    %v12927 = vadd.f32 %v12926, %v12916
    %v12928 = vadd.f32 %v12927, %v12917
    %v12929 = vadd.f32 %v12928, %v12918
    %12930 = vadd.xlane.f32.xlu0 %v12929
    %v12931 = vpop.xlane.xlu0 %12930
    %v12932 = vadd.f32 %v12919, %v12920
    %v12933 = vadd.f32 %v12932, %v12921
    %v12934 = vadd.f32 %v12933, %v12922
    %v12935 = vadd.f32 %v12934, %v12923
    %v12936 = vadd.f32 %v12935, %v12924
    %12937 = vadd.xlane.f32.xlu0 %v12936
    %v12938 = vpop.xlane.xlu0 %12937
    %v12939 = vrcp.pop 768.0
    %v12940 = vmul.f32 %v12931, %v12939
    %v12941 = vmul.f32 %v12938, %v12939
    %v12942 = vmul.f32 %v12913, %v12913
    %v12943 = vmul.f32 %v12914, %v12914
    %v12944 = vmul.f32 %v12915, %v12915
    %v12945 = vmul.f32 %v12916, %v12916
    %v12946 = vmul.f32 %v12917, %v12917
    %v12947 = vmul.f32 %v12918, %v12918
    %v12948 = vmul.f32 %v12919, %v12919
    %v12949 = vmul.f32 %v12920, %v12920
    %v12950 = vmul.f32 %v12921, %v12921
    %v12951 = vmul.f32 %v12922, %v12922
    %v12952 = vmul.f32 %v12923, %v12923
    %v12953 = vmul.f32 %v12924, %v12924
    %v12954 = vadd.f32 %v12942, %v12943
    %v12955 = vadd.f32 %v12954, %v12944
    %v12956 = vadd.f32 %v12955, %v12945
    %v12957 = vadd.f32 %v12956, %v12946
    %v12958 = vadd.f32 %v12957, %v12947
    %12959 = vadd.xlane.f32.xlu0 %v12958
    %v12960 = vpop.xlane.xlu0 %12959
    %v12961 = vadd.f32 %v12948, %v12949
    %v12962 = vadd.f32 %v12961, %v12950
    %v12963 = vadd.f32 %v12962, %v12951
    %v12964 = vadd.f32 %v12963, %v12952
    %v12965 = vadd.f32 %v12964, %v12953
    %12966 = vadd.xlane.f32.xlu0 %v12965
    %v12967 = vpop.xlane.xlu0 %12966
    %v12968 = vmul.f32 %v12960, %v12939
    %v12969 = vmul.f32 %v12967, %v12939
    %v12970 = vmul.f32 %v12940, %v12940
    %v12971 = vmul.f32 %v12941, %v12941
    %v12972 = vsub.f32 %v12968, %v12970
    %v12973 = vsub.f32 %v12969, %v12971
    %v12974 = vmax.f32 %v12972, 0.0
    %v12975 = vmax.f32 %v12973, 0.0
    %v12976 = vld [vmem:[#allocation11] sm:$0x3f]
    %v12977 = vsub.f32 %v12913, %v12940
    %v12978 = vsub.f32 %v12914, %v12940
    %v12979 = vsub.f32 %v12915, %v12940
    %v12980 = vsub.f32 %v12916, %v12940
    %v12981 = vsub.f32 %v12917, %v12940
    %v12982 = vsub.f32 %v12918, %v12940
    %v12983 = vsub.f32 %v12919, %v12941
    %v12984 = vsub.f32 %v12920, %v12941
    %v12985 = vsub.f32 %v12921, %v12941
    %v12986 = vsub.f32 %v12922, %v12941
    %v12987 = vsub.f32 %v12923, %v12941
    %v12988 = vsub.f32 %v12924, %v12941
    %v12989 = vadd.f32 %v12974, 1e-12
    %v12990 = vadd.f32 %v12975, 1e-12
    %v12991 = vrsqrt.pop %v12989
    %v12992 = vrsqrt.pop %v12990
    %v12993 = vmul.f32 %v12977, %v12991
    %v12994 = vmul.f32 %v12978, %v12991
    %v12995 = vmul.f32 %v12979, %v12991
    %v12996 = vmul.f32 %v12980, %v12991
    %v12997 = vmul.f32 %v12981, %v12991
    %v12998 = vmul.f32 %v12982, %v12991
    %v12999 = vmul.f32 %v12983, %v12992
    %v13000 = vmul.f32 %v12984, %v12992
    %v13001 = vmul.f32 %v12985, %v12992
    %v13002 = vmul.f32 %v12986, %v12992
    %v13003 = vmul.f32 %v12987, %v12992
    %v13004 = vmul.f32 %v12988, %v12992
    %v13006 = vlaneseq
    %v13007 = vshrl.u32 %v13006, 7
    %v13008 = vsub.s32 0, %v13007
    %v13009 = vrot.slane %v12976, %v13008
    %v13010 = vlaneseq
    %v13011 = vshrl.u32 %v13010, 7
    %v13012 = vsub.s32 1, %v13011
    %v13013 = vrot.slane %v12976, %v13012
    %v13014 = vlaneseq
    %v13015 = vshrl.u32 %v13014, 7
    %v13016 = vsub.s32 2, %v13015
    %v13017 = vrot.slane %v12976, %v13016
    %v13018 = vlaneseq
    %v13019 = vshrl.u32 %v13018, 7
    %v13020 = vsub.s32 3, %v13019
    %v13021 = vrot.slane %v12976, %v13020
    %v13022 = vlaneseq
    %v13023 = vshrl.u32 %v13022, 7
    %v13024 = vsub.s32 4, %v13023
    %v13025 = vrot.slane %v12976, %v13024
    %v13026 = vlaneseq
    %v13027 = vshrl.u32 %v13026, 7
    %v13028 = vsub.s32 5, %v13027
    %v13029 = vrot.slane %v12976, %v13028
    %v13036 = vmul.f32 %v13009, %v12993
    %v13037 = vmul.f32 %v13013, %v12994
    %v13038 = vmul.f32 %v13017, %v12995
    %v13039 = vmul.f32 %v13021, %v12996
    %v13040 = vmul.f32 %v13025, %v12997
    %v13041 = vmul.f32 %v13029, %v12998
    %v13042 = vmul.f32 %v13009, %v12999
    %v13043 = vmul.f32 %v13013, %v13000
    %v13044 = vmul.f32 %v13017, %v13001
    %v13045 = vmul.f32 %v13021, %v13002
    %v13046 = vmul.f32 %v13025, %v13003
    %v13047 = vmul.f32 %v13029, %v13004
    %v13048 = vld [vmem:[#allocation13] sm:$0x3f]
    %v13050 = vlaneseq
    %v13051 = vshrl.u32 %v13050, 7
    %v13052 = vsub.s32 0, %v13051
    %v13053 = vrot.slane %v13048, %v13052
    %v13054 = vlaneseq
    %v13055 = vshrl.u32 %v13054, 7
    %v13056 = vsub.s32 1, %v13055
    %v13057 = vrot.slane %v13048, %v13056
    %v13058 = vlaneseq
    %v13059 = vshrl.u32 %v13058, 7
    %v13060 = vsub.s32 2, %v13059
    %v13061 = vrot.slane %v13048, %v13060
    %v13062 = vlaneseq
    %v13063 = vshrl.u32 %v13062, 7
    %v13064 = vsub.s32 3, %v13063
    %v13065 = vrot.slane %v13048, %v13064
    %v13066 = vlaneseq
    %v13067 = vshrl.u32 %v13066, 7
    %v13068 = vsub.s32 4, %v13067
    %v13069 = vrot.slane %v13048, %v13068
    %v13070 = vlaneseq
    %v13071 = vshrl.u32 %v13070, 7
    %v13072 = vsub.s32 5, %v13071
    %v13073 = vrot.slane %v13048, %v13072
    %v13080 = vadd.f32 %v13036, %v13053
    %v13081 = vadd.f32 %v13037, %v13057
    %v13082 = vadd.f32 %v13038, %v13061
    %v13083 = vadd.f32 %v13039, %v13065
    %v13084 = vadd.f32 %v13040, %v13069
    %v13085 = vadd.f32 %v13041, %v13073
    %v13086 = vadd.f32 %v13042, %v13053
    %v13087 = vadd.f32 %v13043, %v13057
    %v13088 = vadd.f32 %v13044, %v13061
    %v13089 = vadd.f32 %v13045, %v13065
    %v13090 = vadd.f32 %v13046, %v13069
    %v13091 = vadd.f32 %v13047, %v13073
    %v13092 = vpack.c.bf16 %v13086, %v13080
    %v13093 = vpack.c.bf16 %v13087, %v13081
    %v13094 = vpack.c.bf16 %v13088, %v13082
    %v13095 = vpack.c.bf16 %v13089, %v13083
    %v13096 = vpack.c.bf16 %v13090, %v13084
    %v13097 = vpack.c.bf16 %v13091, %v13085
    %v13098 = vld [vmem:[%s8] sm:$0xf]
    %v13099 = vld [vmem:[%s8 + $0x4] sm:$0xf]
    %v13100 = vld [vmem:[%s8 + $0x8] sm:$0xf]
    %v13101 = vld [vmem:[%s8 + $0xc] sm:$0xf]
    %v13102 = vld [vmem:[%s8 + $0x10] sm:$0xf]
    %v13103 = vld [vmem:[%s8 + $0x14] sm:$0xf]
    %v13104 = vld [vmem:[%s8 + $0x18] sm:$0xf]
    %v13105 = vld [vmem:[%s8 + $0x1c] sm:$0xf]
    %v13106 = vld [vmem:[%s8 + $0x20] sm:$0xf]
    %v13107 = vld [vmem:[%s8 + $0x24] sm:$0xf]
    %v13108 = vld [vmem:[%s8 + $0x28] sm:$0xf]
    %v13109 = vld [vmem:[%s8 + $0x2c] sm:$0xf]
    %v13110 = vld [vmem:[%s8 + $0x30] sm:$0xf]
    %v13111 = vld [vmem:[%s8 + $0x34] sm:$0xf]
    %v13112 = vld [vmem:[%s8 + $0x38] sm:$0xf]
    %v13113 = vld [vmem:[%s8 + $0x3c] sm:$0xf]
    %v13114 = vld [vmem:[%s8 + $0x40] sm:$0xf]
    %v13115 = vld [vmem:[%s8 + $0x44] sm:$0xf]
    %v13116 = vld [vmem:[%s8 + $0x48] sm:$0xf]
    %v13117 = vld [vmem:[%s8 + $0x4c] sm:$0xf]
    %v13118 = vld [vmem:[%s8 + $0x50] sm:$0xf]
    %v13119 = vld [vmem:[%s8 + $0x54] sm:$0xf]
    %v13120 = vld [vmem:[%s8 + $0x58] sm:$0xf]
    %v13121 = vld [vmem:[%s8 + $0x5c] sm:$0xf]
    %v13122 = vld [vmem:[%s8 + $0x60] sm:$0xf]
    %v13123 = vld [vmem:[%s8 + $0x64] sm:$0xf]
    %v13124 = vld [vmem:[%s8 + $0x68] sm:$0xf]
    %v13125 = vld [vmem:[%s8 + $0x6c] sm:$0xf]
    %v13126 = vld [vmem:[%s8 + $0x70] sm:$0xf]
    %v13127 = vld [vmem:[%s8 + $0x74] sm:$0xf]
    %v13128 = vld [vmem:[%s8 + $0x78] sm:$0xf]
    %v13129 = vld [vmem:[%s8 + $0x7c] sm:$0xf]
    %v13130 = vld [vmem:[%s8 + $0x80] sm:$0xf]
    %v13131 = vld [vmem:[%s8 + $0x84] sm:$0xf]
    %v13132 = vld [vmem:[%s8 + $0x88] sm:$0xf]
    %v13133 = vld [vmem:[%s8 + $0x8c] sm:$0xf]
    %v13134 = vld [vmem:[%s8 + $0x90] sm:$0xf]
    %v13135 = vld [vmem:[%s8 + $0x94] sm:$0xf]
    %v13136 = vld [vmem:[%s8 + $0x98] sm:$0xf]
    %v13137 = vld [vmem:[%s8 + $0x9c] sm:$0xf]
    %v13138 = vld [vmem:[%s8 + $0xa0] sm:$0xf]
    %v13139 = vld [vmem:[%s8 + $0xa4] sm:$0xf]
    %v13140 = vld [vmem:[%s8 + $0xa8] sm:$0xf]
    %v13141 = vld [vmem:[%s8 + $0xac] sm:$0xf]
    %v13142 = vld [vmem:[%s8 + $0xb0] sm:$0xf]
    %v13143 = vld [vmem:[%s8 + $0xb4] sm:$0xf]
    %v13144 = vld [vmem:[%s8 + $0xb8] sm:$0xf]
    %v13145 = vld [vmem:[%s8 + $0xbc] sm:$0xf]
    %v13146 = vld [vmem:[%s8 + $0xc0] sm:$0xf]
    %v13147 = vld [vmem:[%s8 + $0xc4] sm:$0xf]
    %v13148 = vld [vmem:[%s8 + $0xc8] sm:$0xf]
    %v13149 = vld [vmem:[%s8 + $0xcc] sm:$0xf]
    %v13150 = vld [vmem:[%s8 + $0xd0] sm:$0xf]
    %v13151 = vld [vmem:[%s8 + $0xd4] sm:$0xf]
    %v13152 = vld [vmem:[%s8 + $0xd8] sm:$0xf]
    %v13153 = vld [vmem:[%s8 + $0xdc] sm:$0xf]
    %v13154 = vld [vmem:[%s8 + $0xe0] sm:$0xf]
    %v13155 = vld [vmem:[%s8 + $0xe4] sm:$0xf]
    %v13156 = vld [vmem:[%s8 + $0xe8] sm:$0xf]
    %v13157 = vld [vmem:[%s8 + $0xec] sm:$0xf]
    %v13158 = vld [vmem:[%s8 + $0xf0] sm:$0xf]
    %v13159 = vld [vmem:[%s8 + $0xf4] sm:$0xf]
    %v13160 = vld [vmem:[%s8 + $0xf8] sm:$0xf]
    %v13161 = vld [vmem:[%s8 + $0xfc] sm:$0xf]
    %v13162 = vld [vmem:[%s8 + $0x100] sm:$0xf]
    %v13163 = vld [vmem:[%s8 + $0x104] sm:$0xf]
    %v13164 = vld [vmem:[%s8 + $0x108] sm:$0xf]
    %v13165 = vld [vmem:[%s8 + $0x10c] sm:$0xf]
    %v13166 = vld [vmem:[%s8 + $0x110] sm:$0xf]
    %v13167 = vld [vmem:[%s8 + $0x114] sm:$0xf]
    %v13168 = vld [vmem:[%s8 + $0x118] sm:$0xf]
    %v13169 = vld [vmem:[%s8 + $0x11c] sm:$0xf]
    %v13170 = vld [vmem:[%s8 + $0x120] sm:$0xf]
    %v13171 = vld [vmem:[%s8 + $0x124] sm:$0xf]
    %v13172 = vld [vmem:[%s8 + $0x128] sm:$0xf]
    %v13173 = vld [vmem:[%s8 + $0x12c] sm:$0xf]
    %v13174 = vld [vmem:[%s8 + $0x130] sm:$0xf]
    %v13175 = vld [vmem:[%s8 + $0x134] sm:$0xf]
    %v13176 = vld [vmem:[%s8 + $0x138] sm:$0xf]
    %v13177 = vld [vmem:[%s8 + $0x13c] sm:$0xf]
    %v13178 = vld [vmem:[%s8 + $0x140] sm:$0xf]
    %v13179 = vld [vmem:[%s8 + $0x144] sm:$0xf]
    %v13180 = vld [vmem:[%s8 + $0x148] sm:$0xf]
    %v13181 = vld [vmem:[%s8 + $0x14c] sm:$0xf]
    %v13182 = vld [vmem:[%s8 + $0x150] sm:$0xf]
    %v13183 = vld [vmem:[%s8 + $0x154] sm:$0xf]
    %v13184 = vld [vmem:[%s8 + $0x158] sm:$0xf]
    %v13185 = vld [vmem:[%s8 + $0x15c] sm:$0xf]
    %v13186 = vld [vmem:[%s8 + $0x160] sm:$0xf]
    %v13187 = vld [vmem:[%s8 + $0x164] sm:$0xf]
    %v13188 = vld [vmem:[%s8 + $0x168] sm:$0xf]
    %v13189 = vld [vmem:[%s8 + $0x16c] sm:$0xf]
    %v13190 = vld [vmem:[%s8 + $0x170] sm:$0xf]
    %v13191 = vld [vmem:[%s8 + $0x174] sm:$0xf]
    %v13192 = vld [vmem:[%s8 + $0x178] sm:$0xf]
    %v13193 = vld [vmem:[%s8 + $0x17c] sm:$0xf]
    %v13290 = vunpack.c.l.b16 %v13098
    %v13291 = vunpack.c.l.b16 %v13099
    %v13292 = vunpack.c.l.b16 %v13100
    %v13293 = vunpack.c.l.b16 %v13101
    %v13294 = vunpack.c.l.b16 %v13102
    %v13295 = vunpack.c.l.b16 %v13103
    %v13296 = vunpack.c.l.b16 %v13104
    %v13297 = vunpack.c.l.b16 %v13105
    %v13298 = vunpack.c.l.b16 %v13106
    %v13299 = vunpack.c.l.b16 %v13107
    %v13300 = vunpack.c.l.b16 %v13108
    %v13301 = vunpack.c.l.b16 %v13109
    %v13302 = vunpack.c.l.b16 %v13110
    %v13303 = vunpack.c.l.b16 %v13111
    %v13304 = vunpack.c.l.b16 %v13112
    %v13305 = vunpack.c.l.b16 %v13113
    %v13306 = vunpack.c.l.b16 %v13114
    %v13307 = vunpack.c.l.b16 %v13115
    %v13308 = vunpack.c.l.b16 %v13116
    %v13309 = vunpack.c.l.b16 %v13117
    %v13310 = vunpack.c.l.b16 %v13118
    %v13311 = vunpack.c.l.b16 %v13119
    %v13312 = vunpack.c.l.b16 %v13120
    %v13313 = vunpack.c.l.b16 %v13121
    %v13314 = vunpack.c.l.b16 %v13122
    %v13315 = vunpack.c.l.b16 %v13123
    %v13316 = vunpack.c.l.b16 %v13124
    %v13317 = vunpack.c.l.b16 %v13125
    %v13318 = vunpack.c.l.b16 %v13126
    %v13319 = vunpack.c.l.b16 %v13127
    %v13320 = vunpack.c.l.b16 %v13128
    %v13321 = vunpack.c.l.b16 %v13129
    %v13322 = vunpack.c.l.b16 %v13130
    %v13323 = vunpack.c.l.b16 %v13131
    %v13324 = vunpack.c.l.b16 %v13132
    %v13325 = vunpack.c.l.b16 %v13133
    %v13326 = vunpack.c.l.b16 %v13134
    %v13327 = vunpack.c.l.b16 %v13135
    %v13328 = vunpack.c.l.b16 %v13136
    %v13329 = vunpack.c.l.b16 %v13137
    %v13330 = vunpack.c.l.b16 %v13138
    %v13331 = vunpack.c.l.b16 %v13139
    %v13332 = vunpack.c.l.b16 %v13140
    %v13333 = vunpack.c.l.b16 %v13141
    %v13334 = vunpack.c.l.b16 %v13142
    %v13335 = vunpack.c.l.b16 %v13143
    %v13336 = vunpack.c.l.b16 %v13144
    %v13337 = vunpack.c.l.b16 %v13145
    %v13338 = vunpack.c.l.b16 %v13146
    %v13339 = vunpack.c.l.b16 %v13147
    %v13340 = vunpack.c.l.b16 %v13148
    %v13341 = vunpack.c.l.b16 %v13149
    %v13342 = vunpack.c.l.b16 %v13150
    %v13343 = vunpack.c.l.b16 %v13151
    %v13344 = vunpack.c.l.b16 %v13152
    %v13345 = vunpack.c.l.b16 %v13153
    %v13346 = vunpack.c.l.b16 %v13154
    %v13347 = vunpack.c.l.b16 %v13155
    %v13348 = vunpack.c.l.b16 %v13156
    %v13349 = vunpack.c.l.b16 %v13157
    %v13350 = vunpack.c.l.b16 %v13158
    %v13351 = vunpack.c.l.b16 %v13159
    %v13352 = vunpack.c.l.b16 %v13160
    %v13353 = vunpack.c.l.b16 %v13161
    %v13354 = vunpack.c.l.b16 %v13162
    %v13355 = vunpack.c.l.b16 %v13163
    %v13356 = vunpack.c.l.b16 %v13164
    %v13357 = vunpack.c.l.b16 %v13165
    %v13358 = vunpack.c.l.b16 %v13166
    %v13359 = vunpack.c.l.b16 %v13167
    %v13360 = vunpack.c.l.b16 %v13168
    %v13361 = vunpack.c.l.b16 %v13169
    %v13362 = vunpack.c.l.b16 %v13170
    %v13363 = vunpack.c.l.b16 %v13171
    %v13364 = vunpack.c.l.b16 %v13172
    %v13365 = vunpack.c.l.b16 %v13173
    %v13366 = vunpack.c.l.b16 %v13174
    %v13367 = vunpack.c.l.b16 %v13175
    %v13368 = vunpack.c.l.b16 %v13176
    %v13369 = vunpack.c.l.b16 %v13177
    %v13370 = vunpack.c.l.b16 %v13178
    %v13371 = vunpack.c.l.b16 %v13179
    %v13372 = vunpack.c.l.b16 %v13180
    %v13373 = vunpack.c.l.b16 %v13181
    %v13374 = vunpack.c.l.b16 %v13182
    %v13375 = vunpack.c.l.b16 %v13183
    %v13376 = vunpack.c.l.b16 %v13184
    %v13377 = vunpack.c.l.b16 %v13185
    %v13378 = vunpack.c.l.b16 %v13186
    %v13379 = vunpack.c.l.b16 %v13187
    %v13380 = vunpack.c.l.b16 %v13188
    %v13381 = vunpack.c.l.b16 %v13189
    %v13382 = vunpack.c.l.b16 %v13190
    %v13383 = vunpack.c.l.b16 %v13191
    %v13384 = vunpack.c.l.b16 %v13192
    %v13385 = vunpack.c.l.b16 %v13193
    %v13386 = vpack.c.b16 %v13291, %v13290
    %v13387 = vpack.c.b16 %v13293, %v13292
    %v13388 = vpack.c.b16 %v13295, %v13294
    %v13389 = vpack.c.b16 %v13297, %v13296
    %v13390 = vpack.c.b16 %v13299, %v13298
    %v13391 = vpack.c.b16 %v13301, %v13300
    %v13392 = vpack.c.b16 %v13303, %v13302
    %v13393 = vpack.c.b16 %v13305, %v13304
    %v13394 = vpack.c.b16 %v13307, %v13306
    %v13395 = vpack.c.b16 %v13309, %v13308
    %v13396 = vpack.c.b16 %v13311, %v13310
    %v13397 = vpack.c.b16 %v13313, %v13312
    %v13398 = vpack.c.b16 %v13315, %v13314
    %v13399 = vpack.c.b16 %v13317, %v13316
    %v13400 = vpack.c.b16 %v13319, %v13318
    %v13401 = vpack.c.b16 %v13321, %v13320
    %v13402 = vpack.c.b16 %v13323, %v13322
    %v13403 = vpack.c.b16 %v13325, %v13324
    %v13404 = vpack.c.b16 %v13327, %v13326
    %v13405 = vpack.c.b16 %v13329, %v13328
    %v13406 = vpack.c.b16 %v13331, %v13330
    %v13407 = vpack.c.b16 %v13333, %v13332
    %v13408 = vpack.c.b16 %v13335, %v13334
    %v13409 = vpack.c.b16 %v13337, %v13336
    %v13410 = vpack.c.b16 %v13339, %v13338
    %v13411 = vpack.c.b16 %v13341, %v13340
    %v13412 = vpack.c.b16 %v13343, %v13342
    %v13413 = vpack.c.b16 %v13345, %v13344
    %v13414 = vpack.c.b16 %v13347, %v13346
    %v13415 = vpack.c.b16 %v13349, %v13348
    %v13416 = vpack.c.b16 %v13351, %v13350
    %v13417 = vpack.c.b16 %v13353, %v13352
    %v13418 = vpack.c.b16 %v13355, %v13354
    %v13419 = vpack.c.b16 %v13357, %v13356
    %v13420 = vpack.c.b16 %v13359, %v13358
    %v13421 = vpack.c.b16 %v13361, %v13360
    %v13422 = vpack.c.b16 %v13363, %v13362
    %v13423 = vpack.c.b16 %v13365, %v13364
    %v13424 = vpack.c.b16 %v13367, %v13366
    %v13425 = vpack.c.b16 %v13369, %v13368
    %v13426 = vpack.c.b16 %v13371, %v13370
    %v13427 = vpack.c.b16 %v13373, %v13372
    %v13428 = vpack.c.b16 %v13375, %v13374
    %v13429 = vpack.c.b16 %v13377, %v13376
    %v13430 = vpack.c.b16 %v13379, %v13378
    %v13431 = vpack.c.b16 %v13381, %v13380
    %v13432 = vpack.c.b16 %v13383, %v13382
    %v13433 = vpack.c.b16 %v13385, %v13384
    %13482 = vmatprep.subr.bf16.mxu0 0
    %13483 = vmatpush1.bf16.msra.mxu0 %v13386
    %13484 = vmatprep.subr.bf16.mxu0 0
    %13485 = vmatpush1.bf16.msra.mxu0 %v13387
    %13486 = vmatprep.subr.bf16.mxu0 0
    %13487 = vmatpush1.bf16.msra.mxu0 %v13388
    %13488 = vmatprep.subr.bf16.mxu0 0
    %13489 = vmatpush1.bf16.msra.mxu0 %v13389
    %13490 = vmatprep.subr.bf16.mxu0 0
    %13491 = vmatpush1.bf16.msra.mxu0 %v13390
    %13492 = vmatprep.subr.bf16.mxu0 0
    %13493 = vmatpush1.bf16.msra.mxu0 %v13391
    %13494 = vmatprep.subr.bf16.mxu0 0
    %13495 = vmatpush1.bf16.msra.mxu0 %v13392
    %13496 = vmatprep.subr.bf16.mxu0 0
    %13497 = vmatpush1.bf16.msra.mxu0 %v13393
    %13498 = vmatprep.subr.bf16.mxu0 0
    %13499 = vmatpush1.bf16.msra.mxu0 %v13394
    %13500 = vmatprep.subr.bf16.mxu0 0
    %13501 = vmatpush1.bf16.msra.mxu0 %v13395
    %13502 = vmatprep.subr.bf16.mxu0 0
    %13503 = vmatpush1.bf16.msra.mxu0 %v13396
    %13504 = vmatprep.subr.bf16.mxu0 0
    %13505 = vmatpush1.bf16.msra.mxu0 %v13397
    %13506 = vmatprep.subr.bf16.mxu0 0
    %13507 = vmatpush1.bf16.msra.mxu0 %v13398
    %13508 = vmatprep.subr.bf16.mxu0 0
    %13509 = vmatpush1.bf16.msra.mxu0 %v13399
    %13510 = vmatprep.subr.bf16.mxu0 0
    %13511 = vmatpush1.bf16.msra.mxu0 %v13400
    %13512 = vmatprep.subr.bf16.mxu0 0
    %13513 = vmatpush1.bf16.msra.mxu0 %v13401
    %13514 = vmatprep.mubr.bf16.mxu0 %v13093
    %13515 = vmatmul.mubr.bf16.gmra.mrb[0].mxu0 %v13092
    %v13516 = vpop.f32.mrb[0].mxu0
    %v13517 = vadd.f32 0.0, %v13516
    %v13518 = vpop.f32.mrb[0].mxu0
    %v13519 = vpop.f32.mrb[0].mxu0
    %v13520 = vadd.f32 0.0, %v13519
    %v13521 = vpop.f32.mrb[0].mxu0
    %13522 = vdwg.mxu0
    %13523 = vmatprep.subr.bf16.mxu0 0
    %13524 = vmatpush1.bf16.msra.mxu0 %v13402
    %13525 = vmatprep.subr.bf16.mxu0 0
    %13526 = vmatpush1.bf16.msra.mxu0 %v13403
    %13527 = vmatprep.subr.bf16.mxu0 0
    %13528 = vmatpush1.bf16.msra.mxu0 %v13404
    %13529 = vmatprep.subr.bf16.mxu0 0
    %13530 = vmatpush1.bf16.msra.mxu0 %v13405
    %13531 = vmatprep.subr.bf16.mxu0 0
    %13532 = vmatpush1.bf16.msra.mxu0 %v13406
    %13533 = vmatprep.subr.bf16.mxu0 0
    %13534 = vmatpush1.bf16.msra.mxu0 %v13407
    %13535 = vmatprep.subr.bf16.mxu0 0
    %13536 = vmatpush1.bf16.msra.mxu0 %v13408
    %13537 = vmatprep.subr.bf16.mxu0 0
    %13538 = vmatpush1.bf16.msra.mxu0 %v13409
    %13539 = vmatprep.subr.bf16.mxu0 0
    %13540 = vmatpush1.bf16.msra.mxu0 %v13410
    %13541 = vmatprep.subr.bf16.mxu0 0
    %13542 = vmatpush1.bf16.msra.mxu0 %v13411
    %13543 = vmatprep.subr.bf16.mxu0 0
    %13544 = vmatpush1.bf16.msra.mxu0 %v13412
    %13545 = vmatprep.subr.bf16.mxu0 0
    %13546 = vmatpush1.bf16.msra.mxu0 %v13413
    %13547 = vmatprep.subr.bf16.mxu0 0
    %13548 = vmatpush1.bf16.msra.mxu0 %v13414
    %13549 = vmatprep.subr.bf16.mxu0 0
    %13550 = vmatpush1.bf16.msra.mxu0 %v13415
    %13551 = vmatprep.subr.bf16.mxu0 0
    %13552 = vmatpush1.bf16.msra.mxu0 %v13416
    %13553 = vmatprep.subr.bf16.mxu0 0
    %13554 = vmatpush1.bf16.msra.mxu0 %v13417
    %13555 = vmatprep.mubr.bf16.mxu0 %v13095
    %13556 = vmatmul.mubr.bf16.gmra.mrb[0].mxu0 %v13094
    %v13557 = vpop.f32.mrb[0].mxu0
    %v13558 = vadd.f32 %v13517, %v13557
    %v13559 = vpop.f32.mrb[0].mxu0
    %v13560 = vpop.f32.mrb[0].mxu0
    %v13561 = vadd.f32 %v13520, %v13560
    %v13562 = vpop.f32.mrb[0].mxu0
    %13563 = vdwg.mxu0
    %13564 = vmatprep.subr.bf16.mxu0 0
    %13565 = vmatpush1.bf16.msra.mxu0 %v13418
    %13566 = vmatprep.subr.bf16.mxu0 0
    %13567 = vmatpush1.bf16.msra.mxu0 %v13419
    %13568 = vmatprep.subr.bf16.mxu0 0
    %13569 = vmatpush1.bf16.msra.mxu0 %v13420
    %13570 = vmatprep.subr.bf16.mxu0 0
    %13571 = vmatpush1.bf16.msra.mxu0 %v13421
    %13572 = vmatprep.subr.bf16.mxu0 0
    %13573 = vmatpush1.bf16.msra.mxu0 %v13422
    %13574 = vmatprep.subr.bf16.mxu0 0
    %13575 = vmatpush1.bf16.msra.mxu0 %v13423
    %13576 = vmatprep.subr.bf16.mxu0 0
    %13577 = vmatpush1.bf16.msra.mxu0 %v13424
    %13578 = vmatprep.subr.bf16.mxu0 0
    %13579 = vmatpush1.bf16.msra.mxu0 %v13425
    %13580 = vmatprep.subr.bf16.mxu0 0
    %13581 = vmatpush1.bf16.msra.mxu0 %v13426
    %13582 = vmatprep.subr.bf16.mxu0 0
    %13583 = vmatpush1.bf16.msra.mxu0 %v13427
    %13584 = vmatprep.subr.bf16.mxu0 0
    %13585 = vmatpush1.bf16.msra.mxu0 %v13428
    %13586 = vmatprep.subr.bf16.mxu0 0
    %13587 = vmatpush1.bf16.msra.mxu0 %v13429
    %13588 = vmatprep.subr.bf16.mxu0 0
    %13589 = vmatpush1.bf16.msra.mxu0 %v13430
    %13590 = vmatprep.subr.bf16.mxu0 0
    %13591 = vmatpush1.bf16.msra.mxu0 %v13431
    %13592 = vmatprep.subr.bf16.mxu0 0
    %13593 = vmatpush1.bf16.msra.mxu0 %v13432
    %13594 = vmatprep.subr.bf16.mxu0 0
    %13595 = vmatpush1.bf16.msra.mxu0 %v13433
    %13596 = vmatprep.mubr.bf16.mxu0 %v13097
    %13597 = vmatmul.mubr.bf16.gmra.mrb[0].mxu0 %v13096
    %v13598 = vpop.f32.mrb[0].mxu0
    %v13599 = vadd.f32 %v13558, %v13598
    %v13600 = vpop.f32.mrb[0].mxu0
    %v13601 = vpop.f32.mrb[0].mxu0
    %v13602 = vadd.f32 %v13561, %v13601
    %v13603 = vpop.f32.mrb[0].mxu0
    %13604 = vdwg.mxu0
    %v13605 = vadd.f32 %v13599, 0.0
    %v13606 = vadd.f32 %v13602, 0.0
    %v13609 = vrot.slane %v13599, 1
    %v13610 = vrot.slane %v13602, 1
    %13611 = vrot.lane.b32.xlu0 %v13609, 120
    %v13612 = vpop.permute.xlu0 %13611
    %13613 = vrot.lane.b32.xlu0 %v13610, 120
    %v13614 = vpop.permute.xlu0 %13613
    %v13617 = vadd.f32 %v13605, %v13612
    %v13618 = vadd.f32 %v13606, %v13614
    %v13619 = vrot.slane %v13599, 2
    %v13620 = vrot.slane %v13602, 2
    %13621 = vrot.lane.b32.xlu0 %v13619, 112
    %v13622 = vpop.permute.xlu0 %13621
    %13623 = vrot.lane.b32.xlu0 %v13620, 112
    %v13624 = vpop.permute.xlu0 %13623
    %v13627 = vadd.f32 %v13617, %v13622
    %v13628 = vadd.f32 %v13618, %v13624
    %v13629 = vld [vmem:[#allocation14] sm:$0x1]
    %v13631 = vlaneseq
    %v13632 = vshrl.u32 %v13631, 7
    %v13633 = vsub.s32 0, %v13632
    %v13634 = vrot.slane %v13629, %v13633
    %v13636 = vadd.f32 %v13627, %v13634
    %v13637 = vadd.f32 %v13628, %v13634
    %v13640 = vcombine.high %v13636, %v13636
    %v13642 = vunpack.c.l.s4 1983009808
    %v13643 = vunpack.c.0.s8 %v13642
    %v13644 = vlaneseq
    %v13645 = vshrl.u32 %v13644, 7
    %v13646 = vsub.s32 %v13643, %v13645
    %v13647 = vrot.slane %v13636, %v13646
    %v13649 = vunpack.c.l.s4 1983009808
    %v13650 = vunpack.c.0.s8 %v13649
    %v13651 = vlaneseq
    %v13652 = vshrl.u32 %v13651, 7
    %v13653 = vsub.s32 %v13650, %v13652
    %v13654 = vrot.slane %v13640, %v13653
    %v13655 = vcombine.high %v13647, %v13647
    %v13656 = vcombine.high %v13637, %v13637
    %v13658 = vunpack.c.l.s4 1983009808
    %v13659 = vunpack.c.0.s8 %v13658
    %v13660 = vlaneseq
    %v13661 = vshrl.u32 %v13660, 7
    %v13662 = vsub.s32 %v13659, %v13661
    %v13663 = vrot.slane %v13637, %v13662
    %v13665 = vunpack.c.l.s4 1983009808
    %v13666 = vunpack.c.0.s8 %v13665
    %v13667 = vlaneseq
    %v13668 = vshrl.u32 %v13667, 7
    %v13669 = vsub.s32 %v13666, %v13668
    %v13670 = vrot.slane %v13656, %v13669
    %v13671 = vcombine.high %v13663, %v13663
    %v13672 = vld [vmem:[#allocation16] sm:$0xff]
    %v13673 = vcombine.low %v13647, %v13655
    %v13674 = vcombine.low %v13654, %v13663
    %v13676 = vunpack.c.l.s4 1983009808
    %v13677 = vunpack.c.0.s8 %v13676
    %v13678 = vlaneseq
    %v13679 = vshrl.u32 %v13678, 7
    %v13680 = vsub.s32 %v13677, %v13679
    %v13681 = vrot.slane %v13673, %v13680
    %v13683 = vunpack.c.l.s4 1983009808
    %v13684 = vunpack.c.0.s8 %v13683
    %v13685 = vlaneseq
    %v13686 = vshrl.u32 %v13685, 7
    %v13687 = vsub.s32 %v13684, %v13686
    %v13688 = vrot.slane %v13674, %v13687
    %v13689 = vcombine.low %v13681, %v13688
    %v13690 = vcombine.low %v13671, %v13670
    %v13692 = vunpack.c.l.s4 1983009808
    %v13693 = vunpack.c.0.s8 %v13692
    %v13694 = vlaneseq
    %v13695 = vshrl.u32 %v13694, 7
    %v13696 = vsub.s32 %v13693, %v13695
    %v13697 = vrot.slane %v13690, %v13696
    %v13698 = vsel %vm8952, %v13689, 0
    %v13700 = vsel %vm8952, %v13697, 0
    %13702 = vmatprep.subr.mxu0 0.0
    %13703 = vmatpush1.msra.mxu0 %v13672
    %13704 = vmatprep.subr.mxu0 0.0
    %13705 = vmatpush1.msra.mxu0 0.0
    %13706 = vmatprep.subr.mxu0 0.0
    %13707 = vmatpush1.msra.mxu0 0.0
    %13708 = vmatprep.subr.mxu0 0.0
    %13709 = vmatpush1.msra.mxu0 0.0
    %13710 = vmatprep.subr.mxu0 0.0
    %13711 = vmatpush1.msra.mxu0 0.0
    %13712 = vmatprep.subr.mxu0 0.0
    %13713 = vmatpush1.msra.mxu0 0.0
    %13714 = vmatprep.subr.mxu0 0.0
    %13715 = vmatpush1.msra.mxu0 0.0
    %13716 = vmatprep.subr.mxu0 0.0
    %13717 = vmatpush1.msra.mxu0 0.0
    %13718 = vmatprep.subr.mxu0 0.0
    %13719 = vmatpush1.msra.mxu0 0.0
    %13720 = vmatprep.subr.mxu0 0.0
    %13721 = vmatpush1.msra.mxu0 0.0
    %13722 = vmatprep.subr.mxu0 0.0
    %13723 = vmatpush1.msra.mxu0 0.0
    %13724 = vmatprep.subr.mxu0 0.0
    %13725 = vmatpush1.msra.mxu0 0.0
    %13726 = vmatprep.subr.mxu0 0.0
    %13727 = vmatpush1.msra.mxu0 0.0
    %13728 = vmatprep.subr.mxu0 0.0
    %13729 = vmatpush1.msra.mxu0 0.0
    %13730 = vmatprep.subr.mxu0 0.0
    %13731 = vmatpush1.msra.mxu0 0.0
    %13732 = vmatprep.subr.mxu0 0.0
    %13733 = vmatpush1.msra.mxu0 0.0
    %13734 = vmatprep.subr.mxu0 0.0
    %13735 = vmatpush1.msra.mxu0 0.0
    %13736 = vmatprep.subr.mxu0 0.0
    %13737 = vmatpush1.msra.mxu0 0.0
    %13738 = vmatprep.subr.mxu0 0.0
    %13739 = vmatpush1.msra.mxu0 0.0
    %13740 = vmatprep.subr.mxu0 0.0
    %13741 = vmatpush1.msra.mxu0 0.0
    %13742 = vmatprep.subr.mxu0 0.0
    %13743 = vmatpush1.msra.mxu0 0.0
    %13744 = vmatprep.subr.mxu0 0.0
    %13745 = vmatpush1.msra.mxu0 0.0
    %13746 = vmatprep.subr.mxu0 0.0
    %13747 = vmatpush1.msra.mxu0 0.0
    %13748 = vmatprep.subr.mxu0 0.0
    %13749 = vmatpush1.msra.mxu0 0.0
    %13750 = vmatprep.subr.mxu0 0.0
    %13751 = vmatpush1.msra.mxu0 0.0
    %13752 = vmatprep.subr.mxu0 0.0
    %13753 = vmatpush1.msra.mxu0 0.0
    %13754 = vmatprep.subr.mxu0 0.0
    %13755 = vmatpush1.msra.mxu0 0.0
    %13756 = vmatprep.subr.mxu0 0.0
    %13757 = vmatpush1.msra.mxu0 0.0
    %13758 = vmatprep.subr.mxu0 0.0
    %13759 = vmatpush1.msra.mxu0 0.0
    %13760 = vmatprep.subr.mxu0 0.0
    %13761 = vmatpush1.msra.mxu0 0.0
    %13762 = vmatprep.subr.mxu0 0.0
    %13763 = vmatpush1.msra.mxu0 0.0
    %13764 = vmatprep.subr.mxu0 0.0
    %13765 = vmatpush1.msra.mxu0 0.0
    %13766 = vmatprep.mubr.f32.mxu0 0.0
    %13767 = vmatmul.mubr.f32.gmra.mrb[0].mxu0 %v13698
    %v13768 = vpop.f32.mrb[0].mxu0
    %v13769 = vadd.f32 0.0, %v13768
    %v13770 = vpop.f32.mrb[0].mxu0
    %13771 = vmatprep.mubr.f32.mxu0 0.0
    %13772 = vmatmul.mubr.f32.gmra.mrb[0].mxu0 %v13700
    %v13773 = vpop.f32.mrb[0].mxu0
    %v13774 = vadd.f32 0.0, %v13773
    %v13775 = vpop.f32.mrb[0].mxu0
    %13776 = vdwg.mxu0
    %v13779 = vcombine.high %v13769, %v13769
    %v13781 = vunpack.c.l.s4 1983009808
    %v13782 = vunpack.c.0.s8 %v13781
    %v13783 = vlaneseq
    %v13784 = vshrl.u32 %v13783, 7
    %v13785 = vsub.s32 %v13782, %v13784
    %v13786 = vrot.slane %v13769, %v13785
    %v13788 = vunpack.c.l.s4 1983009808
    %v13789 = vunpack.c.0.s8 %v13788
    %v13790 = vlaneseq
    %v13791 = vshrl.u32 %v13790, 7
    %v13792 = vsub.s32 %v13789, %v13791
    %v13793 = vrot.slane %v13779, %v13792
    %v13794 = vcombine.high %v13786, %v13786
    %v13795 = vcombine.high %v13793, %v13793
    %v13797 = vunpack.c.l.s4 1983009808
    %v13798 = vunpack.c.0.s8 %v13797
    %v13799 = vlaneseq
    %v13800 = vshrl.u32 %v13799, 7
    %v13801 = vsub.s32 %v13798, %v13800
    %v13802 = vrot.slane %v13774, %v13801
    %v13803 = vcombine.high %v13802, %v13802
    %v13808 = vadd.f32 %v13786, 0.0
    %v13809 = vadd.f32 %v13794, 0.0
    %v13810 = vadd.f32 %v13795, 0.0
    %v13811 = vadd.f32 %v13802, 0.0
    %vm13812 = vcmask 1040384
    %vm13813 = vcmask 1042434
    %vm13814 = vmor %vm13812, %vm13813
    %vm13815 = vcmask 1044484
    %vm13816 = vmor %vm13814, %vm13815
    %vm13817 = vcmask 1046534
    %vm13818 = vmor %vm13816, %vm13817
    %v13819 = vrot.slane %v13786, 7
    %v13820 = vrot.slane %v13819, 2
    %v13821 = vrot.slane %v13794, 7
    %v13822 = vsel %vm13818, %v13820, %v13821
    %v13823 = vrot.slane %v13821, 2
    %v13824 = vrot.slane %v13793, 7
    %v13825 = vsel %vm13818, %v13823, %v13824
    %v13826 = vrot.slane %v13795, 7
    %v13827 = vrot.slane %v13826, 2
    %v13828 = vrot.slane %v13802, 7
    %v13829 = vsel %vm13818, %v13827, %v13828
    %v13830 = vrot.slane %v13828, 2
    %v13831 = vrot.slane %v13803, 7
    %v13832 = vsel %vm13818, %v13830, %v13831
    %13833 = vrot.lane.b32.xlu0 %v13822, 120
    %v13834 = vpop.permute.xlu0 %13833
    %13835 = vrot.lane.b32.xlu0 %v13825, 120
    %v13836 = vpop.permute.xlu0 %13835
    %13837 = vrot.lane.b32.xlu0 %v13829, 120
    %v13838 = vpop.permute.xlu0 %13837
    %13839 = vrot.lane.b32.xlu0 %v13832, 120
    %v13840 = vpop.permute.xlu0 %13839
    %v13845 = vadd.f32 %v13808, %v13834
    %v13846 = vadd.f32 %v13809, %v13836
    %v13847 = vadd.f32 %v13810, %v13838
    %v13848 = vadd.f32 %v13811, %v13840
    %13849 = vrot.lane.b32.xlu0 %v13794, 112
    %v13850 = vpop.permute.xlu0 %13849
    %13851 = vrot.lane.b32.xlu0 %v13793, 112
    %v13852 = vpop.permute.xlu0 %13851
    %13853 = vrot.lane.b32.xlu0 %v13802, 112
    %v13854 = vpop.permute.xlu0 %13853
    %13855 = vrot.lane.b32.xlu0 %v13803, 112
    %v13856 = vpop.permute.xlu0 %13855
    %v13861 = vadd.f32 %v13845, %v13850
    %v13862 = vadd.f32 %v13846, %v13852
    %v13863 = vadd.f32 %v13847, %v13854
    %v13864 = vadd.f32 %v13848, %v13856
    %v13865 = vld [vmem:[#allocation17] sm:$0x1]
    %v13867 = vlaneseq
    %v13868 = vshrl.u32 %v13867, 7
    %v13869 = vsub.s32 0, %v13868
    %v13870 = vrot.slane %v13865, %v13869
    %v13872 = vunpack.c.l.s4 1983009808
    %v13873 = vunpack.c.0.s8 %v13872
    %v13874 = vlaneseq
    %v13875 = vshrl.u32 %v13874, 7
    %v13876 = vsub.s32 %v13873, %v13875
    %v13877 = vrot.slane %v13870, %v13876
    %v13878 = vcombine.high %v13877, %v13877
    %v13881 = vadd.f32 %v13861, %v13877
    %v13882 = vadd.f32 %v13862, %v13878
    %v13883 = vadd.f32 %v13863, %v13877
    %v13884 = vadd.f32 %v13864, %v13878
    %v13889 = vcombine.low %v13881, %v13882
    %v13891 = vunpack.c.l.s4 1983009808
    %v13892 = vunpack.c.0.s8 %v13891
    %v13893 = vlaneseq
    %v13894 = vshrl.u32 %v13893, 7
    %v13895 = vsub.s32 %v13892, %v13894
    %v13896 = vrot.slane %v13889, %v13895
    %v13897 = vcombine.low %v13883, %v13884
    %v13899 = vunpack.c.l.s4 1983009808
    %v13900 = vunpack.c.0.s8 %v13899
    %v13901 = vlaneseq
    %v13902 = vshrl.u32 %v13901, 7
    %v13903 = vsub.s32 %v13900, %v13902
    %v13904 = vrot.slane %v13897, %v13903
    %vm13907 = vcmask 60416
    %v13908 = vsel %vm13907, %v13896, 0.0
    %v13909 = vrot.slane %v13908, 4
    %v13910 = vadd.f32 %v13908, %v13909
    %v13911 = vrot.slane %v13910, 2
    %v13912 = vadd.f32 %v13910, %v13911
    %v13913 = vrot.slane %v13912, 1
    %v13914 = vadd.f32 %v13912, %v13913
    %v13915 = vsel %vm13907, %v13904, 0.0
    %v13916 = vrot.slane %v13915, 4
    %v13917 = vadd.f32 %v13915, %v13916
    %v13918 = vrot.slane %v13917, 2
    %v13919 = vadd.f32 %v13917, %v13918
    %v13920 = vrot.slane %v13919, 1
    %v13921 = vadd.f32 %v13919, %v13920
    %v13922 = vrcp.pop 4.0
    %v13923 = vmul.f32 %v13914, %v13922
    %v13924 = vmul.f32 %v13921, %v13922
    %vm13927 = vcmask 1041409
    %v13928 = vsel %vm13927, %v13924, %v13923
    %vm13930 = vcmask 58368
    %13931 = vst.msk [vmem:[#allocation19] sm:$0x3] %vm13930, %v13928
    // Predicated region
    $region90: #{tpu_custom_call.1} parent=1 // pred_check
      _
    $region91: #{tpu_custom_call.1} parent=1 // pred_check_branch
      %13933 = sbr.rel (0) target = $region93
    $region92: #{tpu_custom_call.1} parent=1 // pred_region
      %s13935 = ssub.s32 32, 32
      %13936 = vsyncadd [#allocation4], %s13935
      %s13938 = sshll.u32 [#allocation19], 4
      %s13939 = int_to_ptr.vmem [resolvable:$true] %s13938
      %13941 = dma.vmem_to_hbm [thread:$0]  %s13939, 32, %s12, [#allocation4]
    $region93: #{tpu_custom_call.1} parent=1 // pred_fallthru
      _
    // Predicated region
    $region94: #{tpu_custom_call.1} parent=1 // pred_check
      _
    $region95: #{tpu_custom_call.1} parent=1 // pred_check_branch
      %13943 = sbr.rel (0) target = $region97
    $region96: #{tpu_custom_call.1} parent=1 // pred_region
      %13944 = dma.done [#allocation4], 32
    $region97: #{tpu_custom_call.1} parent=1 // pred_fallthru
      _
    %13945 = vsyncpa [#allocation3], 1
    %13946 = vsyncpa [#allocation6], 1
    %13947 = vsyncpa [#allocation9], 1
    %13948 = vsyncpa [#allocation12], 1
    %13949 = vsyncpa [#allocation15], 1
    %13950 = vsyncpa [#allocation18], 1
    %13951 = vsyncpa [#allocation4], 1

</llo_original>
